<compile_context>
chip_gen: v7x
topology: tpu7x:2x2x1
jax: 0.10.0
libtpu: 0.0.40
codegen_flags: <defaults>
</compile_context>

<pallas_src>
import functools

import jax
import jax.numpy as jnp
import numpy as np
from jax.experimental import pallas as pl
from jax.experimental.pallas import tpu as pltpu


# ---------------------------------------------------------------------------
# Fused Pallas kernel: conv3x3+BN+ReLU -> conv3x3+BN -> +identity -> ReLU
# ---------------------------------------------------------------------------
def _fused_basic_block_kernel(x_ref, w1_ref, b1_ref, w2_ref, b2_ref, out_ref,
                              cbuf, lbuf, rbuf, *, W, HW, CP):
    """One batch element per grid step.

    x_ref          : (1, HW, CP) bf16  channel-padded, spatially flattened input
    w*_ref         : (9, CP, CP) bf16  per-tap weights, BN scale folded in
    b*_ref         : (1, CP)     f32   folded BN bias
    out_ref        : (1, HW, CP) bf16
    cbuf/lbuf/rbuf : (HW+2W, CP) bf16  row-padded center / left / right sources
    """
    # Column-position masks (row r of the flat activation is image column r % W),
    # generated in-kernel: no mask table DMA, no lane-broadcast.
    row = jax.lax.broadcasted_iota(jnp.int32, (HW, CP), 0)
    if (W & (W - 1)) == 0:
        col = row & (W - 1)
    else:
        col = jax.lax.rem(row, W)   # TODO(synk): only power-of-two W exercised here
    has_left = col != 0             # pixel has an in-image left neighbour
    has_right = col != (W - 1)      # pixel has an in-image right neighbour

    # Zero the halo rows each step (scratch persists across grid steps / cores;
    # the conv stores below never touch the halos). ~2*W rows per buffer: cheap.
    halo = jnp.zeros((W, CP), jnp.bfloat16)
    for buf in (cbuf, lbuf, rbuf):
        buf[pl.ds(0, W), :] = halo
        buf[pl.ds(W + HW, W), :] = halo

    def conv3x3(act_f32, w_ref):
        """3x3 SAME conv on the flattened activation as 9 aligned-tap matmuls."""
        # Three column states (kw = 0/1/2), each cast to bf16 once and written
        # into row-padded scratch; afterwards every tap is an aligned slice.
        cbuf[pl.ds(W, HW), :] = act_f32.astype(jnp.bfloat16)
        left = jnp.where(has_left, pltpu.roll(act_f32, 1, axis=0), 0.0)
        lbuf[pl.ds(W, HW), :] = left.astype(jnp.bfloat16)
        right = jnp.where(has_right, pltpu.roll(act_f32, HW - 1, axis=0), 0.0)
        rbuf[pl.ds(W, HW), :] = right.astype(jnp.bfloat16)

        srcs = (lbuf, cbuf, rbuf)                 # indexed by kw (0 = left tap)
        acc = None
        for kh in range(3):                       # fully unrolled: 9 static taps
            base = kh * W                         # static, sublane-aligned start
            for kw in range(3):
                tap = srcs[kw][pl.ds(base, HW), :]
                part = jnp.dot(tap, w_ref[kh * 3 + kw],
                               preferred_element_type=jnp.float32)
                acc = part if acc is None else acc + part
        return acc                                 # (HW, CP) f32 value

    # conv1 -> (folded) BN1 -> ReLU  (never leaves VMEM)
    y1 = jnp.maximum(conv3x3(x_ref[0].astype(jnp.float32), w1_ref) + b1_ref[...],
                     0.0)
    # conv2 -> (folded) BN2
    y2 = conv3x3(y1, w2_ref) + b2_ref[...]
    # residual add + ReLU, stored once as bf16
    out = jnp.maximum(y2 + x_ref[0].astype(jnp.float32), 0.0)
    out_ref[0] = out.astype(jnp.bfloat16)


# ---------------------------------------------------------------------------
# Wrapper: BN folding, channel padding, pallas_call
# ---------------------------------------------------------------------------
def basic_block_forward(x_nhwc, w1_oihw, w2_oihw, bn1, bn2, eps=1e-5):
    """Full BasicBlock forward (stride=1, no downsample). NHWC in / NHWC out (bf16)."""
    n, h, w, c_in = x_nhwc.shape
    c_out = w1_oihw.shape[0]
    assert c_in == c_out, "stride=1 / no-downsample path requires cin == cout"
    hw = h * w
    cp = max(128, ((c_in + 127) // 128) * 128)   # lane-pad channels
    # TODO(synk): for C << 128 (demo shape) the lane padding wastes ~cp/C of all
    # MXU/DMA work; a tap-packed-K or VPU direct-conv path would fix that.

    # Fold BatchNorm (eval mode): scale goes into the weights, bias stays f32.
    def fold(bn):
        g, b, m, v = bn
        s = g * jax.lax.rsqrt(v + eps)
        return s, b - m * s

    s1, bias1 = fold(bn1)
    s2, bias2 = fold(bn2)

    def prep_w(w_oihw, s, cin):
        # torch (Cout,Cin,kh,kw) -> (kh,kw,Cin,Cout) -> (9, Cin, Cout), scale, pad
        wt = jnp.transpose(w_oihw, (2, 3, 1, 0)).reshape(9, cin, c_out)
        wt = wt * s[None, None, :]
        wt = jnp.pad(wt, ((0, 0), (0, cp - cin), (0, cp - c_out)))
        return wt.astype(jnp.bfloat16)

    w1p = prep_w(w1_oihw, s1, c_in)
    w2p = prep_w(w2_oihw, s2, c_out)
    b1p = jnp.pad(bias1, (0, cp - c_out)).reshape(1, cp).astype(jnp.float32)
    b2p = jnp.pad(bias2, (0, cp - c_out)).reshape(1, cp).astype(jnp.float32)

    # bf16 cast + channel pad + spatial flatten (half the input HBM traffic).
    xp = jnp.pad(x_nhwc.astype(jnp.bfloat16),
                 ((0, 0), (0, 0), (0, 0), (0, cp - c_in))).reshape(n, hw, cp)

    kernel = functools.partial(_fused_basic_block_kernel, W=w, HW=hw, CP=cp)
    flops = n * 2 * 9 * 2 * hw * cp * cp          # 2 convs x 9 taps x 2*HW*Cp*Cp
    bytes_accessed = ((xp.size + w1p.size + w2p.size + n * hw * cp) * 2
                      + (b1p.size + b2p.size) * 4)

    out = pl.pallas_call(
        kernel,
        out_shape=jax.ShapeDtypeStruct((n, hw, cp), jnp.bfloat16),
        grid_spec=pltpu.PrefetchScalarGridSpec(
            num_scalar_prefetch=0,
            grid=(n,),
            in_specs=[
                pl.BlockSpec((1, hw, cp), lambda i: (i, 0, 0)),   # x (bf16)
                pl.BlockSpec((9, cp, cp), lambda i: (0, 0, 0)),   # w1 (resident)
                pl.BlockSpec((1, cp), lambda i: (0, 0)),          # b1
                pl.BlockSpec((9, cp, cp), lambda i: (0, 0, 0)),   # w2 (resident)
                pl.BlockSpec((1, cp), lambda i: (0, 0)),          # b2
            ],
            out_specs=pl.BlockSpec((1, hw, cp), lambda i: (i, 0, 0)),
            scratch_shapes=[
                pltpu.VMEM((hw + 2 * w, cp), jnp.bfloat16),   # center source
                pltpu.VMEM((hw + 2 * w, cp), jnp.bfloat16),   # left-shift source
                pltpu.VMEM((hw + 2 * w, cp), jnp.bfloat16),   # right-shift source
            ],
        ),
        compiler_params=pltpu.CompilerParams(
            dimension_semantics=("parallel",),
        ),
        cost_estimate=pl.CostEstimate(flops=flops, transcendentals=0,
                                      bytes_accessed=bytes_accessed),
        # TODO(synk): pl.Buffered(1) on the constant-index weight specs + an
        # HW-tiling grid axis (with halos) for large Cp / images on v7x.
    )(xp, w1p, b1p, w2p, b2p)

    # TODO(synk): the channel un-pad below is one extra small HBM pass; a
    # downstream consumer could take the padded bf16 layout directly.
    return out[:, :, :c_out].reshape(n, h, w, c_out)


# ---------------------------------------------------------------------------
# Pure-JAX reference (f32) for correctness check
# ---------------------------------------------------------------------------
def _ref_forward(x_nhwc, w1_oihw, w2_oihw, bn1, bn2, eps=1e-5):
    def conv(x, w_oihw):
        w_hwio = jnp.transpose(w_oihw, (2, 3, 1, 0))
        return jax.lax.conv_general_dilated(
            x, w_hwio, (1, 1), "SAME",
            dimension_numbers=("NHWC", "HWIO", "NHWC"))

    def bn(x, p):
        g, b, m, v = p
        return (x - m) / jnp.sqrt(v + eps) * g + b

    out = jax.nn.relu(bn(conv(x_nhwc, w1_oihw), bn1))
    out = bn(conv(out, w2_oihw), bn2)
    return jax.nn.relu(out + x_nhwc)


# ---------------------------------------------------------------------------
if __name__ == "__main__":
    N, C, H, W = 2, 4, 16, 16   # inplanes = outplanes = 4, stride = 1

    key = jax.random.PRNGKey(0)
    keys = jax.random.split(key, 11)

    x_nchw = jax.random.normal(keys[0], (N, C, H, W), jnp.float32)
    x_nhwc = jnp.transpose(x_nchw, (0, 2, 3, 1))

    # Conv weights in torch layout (Cout, Cin, kh, kw); conv bias omitted
    # (ResNet conv3x3 has bias=False; BN supplies the affine part).
    w1 = jax.random.normal(keys[1], (C, C, 3, 3), jnp.float32) * 0.1
    w2 = jax.random.normal(keys[2], (C, C, 3, 3), jnp.float32) * 0.1

    # BatchNorm params (eval mode): gamma, beta, running_mean, running_var
    bn1 = (jax.random.uniform(keys[3], (C,), jnp.float32, 0.5, 1.5),
           jax.random.normal(keys[4], (C,), jnp.float32) * 0.1,
           jax.random.normal(keys[5], (C,), jnp.float32) * 0.1,
           jax.random.uniform(keys[6], (C,), jnp.float32, 0.5, 1.5))
    bn2 = (jax.random.uniform(keys[7], (C,), jnp.float32, 0.5, 1.5),
           jax.random.normal(keys[8], (C,), jnp.float32) * 0.1,
           jax.random.normal(keys[9], (C,), jnp.float32) * 0.1,
           jax.random.uniform(keys[10], (C,), jnp.float32, 0.5, 1.5))

    out = basic_block_forward(x_nhwc, w1, w2, bn1, bn2)
    out = jax.block_until_ready(out)

    ref = _ref_forward(x_nhwc, w1, w2, bn1, bn2)
    # bf16 MXU operands + bf16 activations/output vs an f32 reference -> loose tol.
    np.testing.assert_allclose(np.asarray(out.astype(jnp.float32)),
                               np.asarray(ref), rtol=5e-2, atol=5e-2)

    print("KERNEL_OK")
</pallas_src>

<mosaic_0001>
module attributes {stable_mosaic.version = 11 : i64} {
  func.func @_fused_basic_block_kernel(%arg0: i32, %arg1: memref<1x256x128xbf16, #tpu.memory_space<vmem>>, %arg2: memref<9x128x128xbf16, #tpu.memory_space<vmem>>, %arg3: memref<1x128xf32, #tpu.memory_space<vmem>>, %arg4: memref<9x128x128xbf16, #tpu.memory_space<vmem>>, %arg5: memref<1x128xf32, #tpu.memory_space<vmem>>, %arg6: memref<1x256x128xbf16, #tpu.memory_space<vmem>>, %arg7: memref<288x128xbf16, #tpu.memory_space<vmem>>, %arg8: memref<288x128xbf16, #tpu.memory_space<vmem>>, %arg9: memref<288x128xbf16, #tpu.memory_space<vmem>>) attributes {dimension_semantics = [#tpu.dimension_semantics<parallel>], iteration_bounds = array<i64: 2>, scalar_prefetch = 0 : i64, scratch_operands = 3 : i64, tpu.core_type = #tpu.core_type<tc>, window_params = [{transform_indices = @transform_0, window_bounds = array<i64: 1, 256, 128>}, {pipeline_mode = #tpu.pipeline_mode<synchronous>, transform_indices = @transform_1, window_bounds = array<i64: 9, 128, 128>}, {pipeline_mode = #tpu.pipeline_mode<synchronous>, transform_indices = @transform_2, window_bounds = array<i64: 1, 128>}, {pipeline_mode = #tpu.pipeline_mode<synchronous>, transform_indices = @transform_3, window_bounds = array<i64: 9, 128, 128>}, {pipeline_mode = #tpu.pipeline_mode<synchronous>, transform_indices = @transform_4, window_bounds = array<i64: 1, 128>}, {transform_indices = @transform_5, window_bounds = array<i64: 1, 256, 128>}]} {
    %0 = tpu.iota {dimensions = array<i32: 0>} : vector<256x128xi32>
    %c15_i32 = arith.constant 15 : i32
    %1 = vector.broadcast %c15_i32 : i32 to vector<256x128xi32>
    %2 = arith.andi %0, %1 : vector<256x128xi32>
    %c0_i32 = arith.constant 0 : i32
    %3 = vector.broadcast %c0_i32 : i32 to vector<256x128xi32>
    %4 = arith.cmpi ne, %2, %3 : vector<256x128xi32>
    %c15_i32_0 = arith.constant 15 : i32
    %5 = vector.broadcast %c15_i32_0 : i32 to vector<256x128xi32>
    %6 = arith.cmpi ne, %2, %5 : vector<256x128xi32>
    %cst = arith.constant 0.000000e+00 : bf16
    %7 = vector.broadcast %cst : bf16 to vector<16x128xbf16>
    %c0 = arith.constant 0 : index
    %c0_1 = arith.constant 0 : index
    %8 = vector.load %arg7[%c0, %c0_1] : memref<288x128xbf16, #tpu.memory_space<vmem>>, vector<16x128xbf16>
    tpu.vector_store %arg7[%c0, %c0_1], %7 {strides = array<i32>} : memref<288x128xbf16, #tpu.memory_space<vmem>>, vector<16x128xbf16>,
    %c272 = arith.constant 272 : index
    %c0_2 = arith.constant 0 : index
    %9 = vector.load %arg7[%c272, %c0_2] : memref<288x128xbf16, #tpu.memory_space<vmem>>, vector<16x128xbf16>
    tpu.vector_store %arg7[%c272, %c0_2], %7 {strides = array<i32>} : memref<288x128xbf16, #tpu.memory_space<vmem>>, vector<16x128xbf16>,
    %c0_3 = arith.constant 0 : index
    %c0_4 = arith.constant 0 : index
    %10 = vector.load %arg8[%c0_3, %c0_4] : memref<288x128xbf16, #tpu.memory_space<vmem>>, vector<16x128xbf16>
    tpu.vector_store %arg8[%c0_3, %c0_4], %7 {strides = array<i32>} : memref<288x128xbf16, #tpu.memory_space<vmem>>, vector<16x128xbf16>,
    %c272_5 = arith.constant 272 : index
    %c0_6 = arith.constant 0 : index
    %11 = vector.load %arg8[%c272_5, %c0_6] : memref<288x128xbf16, #tpu.memory_space<vmem>>, vector<16x128xbf16>
    tpu.vector_store %arg8[%c272_5, %c0_6], %7 {strides = array<i32>} : memref<288x128xbf16, #tpu.memory_space<vmem>>, vector<16x128xbf16>,
    %c0_7 = arith.constant 0 : index
    %c0_8 = arith.constant 0 : index
    %12 = vector.load %arg9[%c0_7, %c0_8] : memref<288x128xbf16, #tpu.memory_space<vmem>>, vector<16x128xbf16>
    tpu.vector_store %arg9[%c0_7, %c0_8], %7 {strides = array<i32>} : memref<288x128xbf16, #tpu.memory_space<vmem>>, vector<16x128xbf16>,
    %c272_9 = arith.constant 272 : index
    %c0_10 = arith.constant 0 : index
    %13 = vector.load %arg9[%c272_9, %c0_10] : memref<288x128xbf16, #tpu.memory_space<vmem>>, vector<16x128xbf16>
    tpu.vector_store %arg9[%c272_9, %c0_10], %7 {strides = array<i32>} : memref<288x128xbf16, #tpu.memory_space<vmem>>, vector<16x128xbf16>,
    %c0_11 = arith.constant 0 : index
    %c0_12 = arith.constant 0 : index
    %c0_13 = arith.constant 0 : index
    %14 = vector.load %arg1[%c0_11, %c0_12, %c0_13] : memref<1x256x128xbf16, #tpu.memory_space<vmem>>, vector<1x256x128xbf16>
    %15 = vector.shape_cast %14 : vector<1x256x128xbf16> to vector<256x128xbf16>
    %16 = arith.extf %15 : vector<256x128xbf16> to vector<256x128xf32>
    %17 = arith.truncf %16 : vector<256x128xf32> to vector<256x128xbf16>
    %c16 = arith.constant 16 : index
    %c0_14 = arith.constant 0 : index
    %18 = vector.load %arg7[%c16, %c0_14] : memref<288x128xbf16, #tpu.memory_space<vmem>>, vector<256x128xbf16>
    tpu.vector_store %arg7[%c16, %c0_14], %17 {strides = array<i32>} : memref<288x128xbf16, #tpu.memory_space<vmem>>, vector<256x128xbf16>,
    %c1_i32 = arith.constant 1 : i32
    %19 = tpu.dynamic_rotate %16 by %c1_i32 dim 0 : vector<256x128xf32>, i32 -> vector<256x128xf32>
    %cst_15 = arith.constant 0.000000e+00 : f32
    %20 = vector.broadcast %cst_15 : f32 to vector<256x128xf32>
    %21 = arith.select %4, %19, %20 : vector<256x128xi1>, vector<256x128xf32>
    %22 = arith.truncf %21 : vector<256x128xf32> to vector<256x128xbf16>
    %c16_16 = arith.constant 16 : index
    %c0_17 = arith.constant 0 : index
    %23 = vector.load %arg8[%c16_16, %c0_17] : memref<288x128xbf16, #tpu.memory_space<vmem>>, vector<256x128xbf16>
    tpu.vector_store %arg8[%c16_16, %c0_17], %22 {strides = array<i32>} : memref<288x128xbf16, #tpu.memory_space<vmem>>, vector<256x128xbf16>,
    %c255_i32 = arith.constant 255 : i32
    %24 = tpu.dynamic_rotate %16 by %c255_i32 dim 0 : vector<256x128xf32>, i32 -> vector<256x128xf32>
    %cst_18 = arith.constant 0.000000e+00 : f32
    %25 = vector.broadcast %cst_18 : f32 to vector<256x128xf32>
    %26 = arith.select %6, %24, %25 : vector<256x128xi1>, vector<256x128xf32>
    %27 = arith.truncf %26 : vector<256x128xf32> to vector<256x128xbf16>
    %c16_19 = arith.constant 16 : index
    %c0_20 = arith.constant 0 : index
    %28 = vector.load %arg9[%c16_19, %c0_20] : memref<288x128xbf16, #tpu.memory_space<vmem>>, vector<256x128xbf16>
    tpu.vector_store %arg9[%c16_19, %c0_20], %27 {strides = array<i32>} : memref<288x128xbf16, #tpu.memory_space<vmem>>, vector<256x128xbf16>,
    %c0_21 = arith.constant 0 : index
    %c0_22 = arith.constant 0 : index
    %29 = vector.load %arg8[%c0_21, %c0_22] : memref<288x128xbf16, #tpu.memory_space<vmem>>, vector<256x128xbf16>
    %c0_23 = arith.constant 0 : index
    %c0_24 = arith.constant 0 : index
    %c0_25 = arith.constant 0 : index
    %30 = vector.load %arg2[%c0_23, %c0_24, %c0_25] : memref<9x128x128xbf16, #tpu.memory_space<vmem>>, vector<1x128x128xbf16>
    %31 = vector.shape_cast %30 : vector<1x128x128xbf16> to vector<128x128xbf16>
    %cst_26 = arith.constant dense<0.000000e+00> : vector<256x128xf32>
    %32 = tpu.matmul %29, %31, %cst_26 {dimension_numbers = #tpu.dot_dimension_numbers<[1], [0], [0], [1], [0, 0, 1, 1], [], []>} : vector<256x128xbf16>, vector<128x128xbf16>, vector<256x128xf32> -> vector<256x128xf32>
    %c0_27 = arith.constant 0 : index
    %c0_28 = arith.constant 0 : index
    %33 = vector.load %arg7[%c0_27, %c0_28] : memref<288x128xbf16, #tpu.memory_space<vmem>>, vector<256x128xbf16>
    %c1 = arith.constant 1 : index
    %c0_29 = arith.constant 0 : index
    %c0_30 = arith.constant 0 : index
    %34 = vector.load %arg2[%c1, %c0_29, %c0_30] : memref<9x128x128xbf16, #tpu.memory_space<vmem>>, vector<1x128x128xbf16>
    %35 = vector.shape_cast %34 : vector<1x128x128xbf16> to vector<128x128xbf16>
    %cst_31 = arith.constant dense<0.000000e+00> : vector<256x128xf32>
    %36 = tpu.matmul %33, %35, %cst_31 {dimension_numbers = #tpu.dot_dimension_numbers<[1], [0], [0], [1], [0, 0, 1, 1], [], []>} : vector<256x128xbf16>, vector<128x128xbf16>, vector<256x128xf32> -> vector<256x128xf32>
    %37 = arith.addf %32, %36 : vector<256x128xf32>
    %c0_32 = arith.constant 0 : index
    %c0_33 = arith.constant 0 : index
    %38 = vector.load %arg9[%c0_32, %c0_33] : memref<288x128xbf16, #tpu.memory_space<vmem>>, vector<256x128xbf16>
    %c2 = arith.constant 2 : index
    %c0_34 = arith.constant 0 : index
    %c0_35 = arith.constant 0 : index
    %39 = vector.load %arg2[%c2, %c0_34, %c0_35] : memref<9x128x128xbf16, #tpu.memory_space<vmem>>, vector<1x128x128xbf16>
    %40 = vector.shape_cast %39 : vector<1x128x128xbf16> to vector<128x128xbf16>
    %cst_36 = arith.constant dense<0.000000e+00> : vector<256x128xf32>
    %41 = tpu.matmul %38, %40, %cst_36 {dimension_numbers = #tpu.dot_dimension_numbers<[1], [0], [0], [1], [0, 0, 1, 1], [], []>} : vector<256x128xbf16>, vector<128x128xbf16>, vector<256x128xf32> -> vector<256x128xf32>
    %42 = arith.addf %37, %41 : vector<256x128xf32>
    %c16_37 = arith.constant 16 : index
    %c0_38 = arith.constant 0 : index
    %43 = vector.load %arg8[%c16_37, %c0_38] : memref<288x128xbf16, #tpu.memory_space<vmem>>, vector<256x128xbf16>
    %c3 = arith.constant 3 : index
    %c0_39 = arith.constant 0 : index
    %c0_40 = arith.constant 0 : index
    %44 = vector.load %arg2[%c3, %c0_39, %c0_40] : memref<9x128x128xbf16, #tpu.memory_space<vmem>>, vector<1x128x128xbf16>
    %45 = vector.shape_cast %44 : vector<1x128x128xbf16> to vector<128x128xbf16>
    %cst_41 = arith.constant dense<0.000000e+00> : vector<256x128xf32>
    %46 = tpu.matmul %43, %45, %cst_41 {dimension_numbers = #tpu.dot_dimension_numbers<[1], [0], [0], [1], [0, 0, 1, 1], [], []>} : vector<256x128xbf16>, vector<128x128xbf16>, vector<256x128xf32> -> vector<256x128xf32>
    %47 = arith.addf %42, %46 : vector<256x128xf32>
    %c16_42 = arith.constant 16 : index
    %c0_43 = arith.constant 0 : index
    %48 = vector.load %arg7[%c16_42, %c0_43] : memref<288x128xbf16, #tpu.memory_space<vmem>>, vector<256x128xbf16>
    %c4 = arith.constant 4 : index
    %c0_44 = arith.constant 0 : index
    %c0_45 = arith.constant 0 : index
    %49 = vector.load %arg2[%c4, %c0_44, %c0_45] : memref<9x128x128xbf16, #tpu.memory_space<vmem>>, vector<1x128x128xbf16>
    %50 = vector.shape_cast %49 : vector<1x128x128xbf16> to vector<128x128xbf16>
    %cst_46 = arith.constant dense<0.000000e+00> : vector<256x128xf32>
    %51 = tpu.matmul %48, %50, %cst_46 {dimension_numbers = #tpu.dot_dimension_numbers<[1], [0], [0], [1], [0, 0, 1, 1], [], []>} : vector<256x128xbf16>, vector<128x128xbf16>, vector<256x128xf32> -> vector<256x128xf32>
    %52 = arith.addf %47, %51 : vector<256x128xf32>
    %c16_47 = arith.constant 16 : index
    %c0_48 = arith.constant 0 : index
    %53 = vector.load %arg9[%c16_47, %c0_48] : memref<288x128xbf16, #tpu.memory_space<vmem>>, vector<256x128xbf16>
    %c5 = arith.constant 5 : index
    %c0_49 = arith.constant 0 : index
    %c0_50 = arith.constant 0 : index
    %54 = vector.load %arg2[%c5, %c0_49, %c0_50] : memref<9x128x128xbf16, #tpu.memory_space<vmem>>, vector<1x128x128xbf16>
    %55 = vector.shape_cast %54 : vector<1x128x128xbf16> to vector<128x128xbf16>
    %cst_51 = arith.constant dense<0.000000e+00> : vector<256x128xf32>
    %56 = tpu.matmul %53, %55, %cst_51 {dimension_numbers = #tpu.dot_dimension_numbers<[1], [0], [0], [1], [0, 0, 1, 1], [], []>} : vector<256x128xbf16>, vector<128x128xbf16>, vector<256x128xf32> -> vector<256x128xf32>
    %57 = arith.addf %52, %56 : vector<256x128xf32>
    %c32 = arith.constant 32 : index
    %c0_52 = arith.constant 0 : index
    %58 = vector.load %arg8[%c32, %c0_52] : memref<288x128xbf16, #tpu.memory_space<vmem>>, vector<256x128xbf16>
    %c6 = arith.constant 6 : index
    %c0_53 = arith.constant 0 : index
    %c0_54 = arith.constant 0 : index
    %59 = vector.load %arg2[%c6, %c0_53, %c0_54] : memref<9x128x128xbf16, #tpu.memory_space<vmem>>, vector<1x128x128xbf16>
    %60 = vector.shape_cast %59 : vector<1x128x128xbf16> to vector<128x128xbf16>
    %cst_55 = arith.constant dense<0.000000e+00> : vector<256x128xf32>
    %61 = tpu.matmul %58, %60, %cst_55 {dimension_numbers = #tpu.dot_dimension_numbers<[1], [0], [0], [1], [0, 0, 1, 1], [], []>} : vector<256x128xbf16>, vector<128x128xbf16>, vector<256x128xf32> -> vector<256x128xf32>
    %62 = arith.addf %57, %61 : vector<256x128xf32>
    %c32_56 = arith.constant 32 : index
    %c0_57 = arith.constant 0 : index
    %63 = vector.load %arg7[%c32_56, %c0_57] : memref<288x128xbf16, #tpu.memory_space<vmem>>, vector<256x128xbf16>
    %c7 = arith.constant 7 : index
    %c0_58 = arith.constant 0 : index
    %c0_59 = arith.constant 0 : index
    %64 = vector.load %arg2[%c7, %c0_58, %c0_59] : memref<9x128x128xbf16, #tpu.memory_space<vmem>>, vector<1x128x128xbf16>
    %65 = vector.shape_cast %64 : vector<1x128x128xbf16> to vector<128x128xbf16>
    %cst_60 = arith.constant dense<0.000000e+00> : vector<256x128xf32>
    %66 = tpu.matmul %63, %65, %cst_60 {dimension_numbers = #tpu.dot_dimension_numbers<[1], [0], [0], [1], [0, 0, 1, 1], [], []>} : vector<256x128xbf16>, vector<128x128xbf16>, vector<256x128xf32> -> vector<256x128xf32>
    %67 = arith.addf %62, %66 : vector<256x128xf32>
    %c32_61 = arith.constant 32 : index
    %c0_62 = arith.constant 0 : index
    %68 = vector.load %arg9[%c32_61, %c0_62] : memref<288x128xbf16, #tpu.memory_space<vmem>>, vector<256x128xbf16>
    %c8 = arith.constant 8 : index
    %c0_63 = arith.constant 0 : index
    %c0_64 = arith.constant 0 : index
    %69 = vector.load %arg2[%c8, %c0_63, %c0_64] : memref<9x128x128xbf16, #tpu.memory_space<vmem>>, vector<1x128x128xbf16>
    %70 = vector.shape_cast %69 : vector<1x128x128xbf16> to vector<128x128xbf16>
    %cst_65 = arith.constant dense<0.000000e+00> : vector<256x128xf32>
    %71 = tpu.matmul %68, %70, %cst_65 {dimension_numbers = #tpu.dot_dimension_numbers<[1], [0], [0], [1], [0, 0, 1, 1], [], []>} : vector<256x128xbf16>, vector<128x128xbf16>, vector<256x128xf32> -> vector<256x128xf32>
    %72 = arith.addf %67, %71 : vector<256x128xf32>
    %c0_66 = arith.constant 0 : index
    %c0_67 = arith.constant 0 : index
    %73 = vector.load %arg3[%c0_66, %c0_67] : memref<1x128xf32, #tpu.memory_space<vmem>>, vector<1x128xf32>
    %74 = vector.broadcast %73 : vector<1x128xf32> to vector<256x128xf32>
    %75 = arith.addf %72, %74 : vector<256x128xf32>
    %cst_68 = arith.constant 0.000000e+00 : f32
    %76 = vector.broadcast %cst_68 : f32 to vector<256x128xf32>
    %77 = arith.maximumf %75, %76 : vector<256x128xf32>
    %78 = arith.truncf %77 : vector<256x128xf32> to vector<256x128xbf16>
    %c16_69 = arith.constant 16 : index
    %c0_70 = arith.constant 0 : index
    %79 = vector.load %arg7[%c16_69, %c0_70] : memref<288x128xbf16, #tpu.memory_space<vmem>>, vector<256x128xbf16>
    tpu.vector_store %arg7[%c16_69, %c0_70], %78 {strides = array<i32>} : memref<288x128xbf16, #tpu.memory_space<vmem>>, vector<256x128xbf16>,
    %c1_i32_71 = arith.constant 1 : i32
    %80 = tpu.dynamic_rotate %77 by %c1_i32_71 dim 0 : vector<256x128xf32>, i32 -> vector<256x128xf32>
    %cst_72 = arith.constant 0.000000e+00 : f32
    %81 = vector.broadcast %cst_72 : f32 to vector<256x128xf32>
    %82 = arith.select %4, %80, %81 : vector<256x128xi1>, vector<256x128xf32>
    %83 = arith.truncf %82 : vector<256x128xf32> to vector<256x128xbf16>
    %c16_73 = arith.constant 16 : index
    %c0_74 = arith.constant 0 : index
    %84 = vector.load %arg8[%c16_73, %c0_74] : memref<288x128xbf16, #tpu.memory_space<vmem>>, vector<256x128xbf16>
    tpu.vector_store %arg8[%c16_73, %c0_74], %83 {strides = array<i32>} : memref<288x128xbf16, #tpu.memory_space<vmem>>, vector<256x128xbf16>,
    %c255_i32_75 = arith.constant 255 : i32
    %85 = tpu.dynamic_rotate %77 by %c255_i32_75 dim 0 : vector<256x128xf32>, i32 -> vector<256x128xf32>
    %cst_76 = arith.constant 0.000000e+00 : f32
    %86 = vector.broadcast %cst_76 : f32 to vector<256x128xf32>
    %87 = arith.select %6, %85, %86 : vector<256x128xi1>, vector<256x128xf32>
    %88 = arith.truncf %87 : vector<256x128xf32> to vector<256x128xbf16>
    %c16_77 = arith.constant 16 : index
    %c0_78 = arith.constant 0 : index
    %89 = vector.load %arg9[%c16_77, %c0_78] : memref<288x128xbf16, #tpu.memory_space<vmem>>, vector<256x128xbf16>
    tpu.vector_store %arg9[%c16_77, %c0_78], %88 {strides = array<i32>} : memref<288x128xbf16, #tpu.memory_space<vmem>>, vector<256x128xbf16>,
    %c0_79 = arith.constant 0 : index
    %c0_80 = arith.constant 0 : index
    %90 = vector.load %arg8[%c0_79, %c0_80] : memref<288x128xbf16, #tpu.memory_space<vmem>>, vector<256x128xbf16>
    %c0_81 = arith.constant 0 : index
    %c0_82 = arith.constant 0 : index
    %c0_83 = arith.constant 0 : index
    %91 = vector.load %arg4[%c0_81, %c0_82, %c0_83] : memref<9x128x128xbf16, #tpu.memory_space<vmem>>, vector<1x128x128xbf16>
    %92 = vector.shape_cast %91 : vector<1x128x128xbf16> to vector<128x128xbf16>
    %cst_84 = arith.constant dense<0.000000e+00> : vector<256x128xf32>
    %93 = tpu.matmul %90, %92, %cst_84 {dimension_numbers = #tpu.dot_dimension_numbers<[1], [0], [0], [1], [0, 0, 1, 1], [], []>} : vector<256x128xbf16>, vector<128x128xbf16>, vector<256x128xf32> -> vector<256x128xf32>
    %c0_85 = arith.constant 0 : index
    %c0_86 = arith.constant 0 : index
    %94 = vector.load %arg7[%c0_85, %c0_86] : memref<288x128xbf16, #tpu.memory_space<vmem>>, vector<256x128xbf16>
    %c1_87 = arith.constant 1 : index
    %c0_88 = arith.constant 0 : index
    %c0_89 = arith.constant 0 : index
    %95 = vector.load %arg4[%c1_87, %c0_88, %c0_89] : memref<9x128x128xbf16, #tpu.memory_space<vmem>>, vector<1x128x128xbf16>
    %96 = vector.shape_cast %95 : vector<1x128x128xbf16> to vector<128x128xbf16>
    %cst_90 = arith.constant dense<0.000000e+00> : vector<256x128xf32>
    %97 = tpu.matmul %94, %96, %cst_90 {dimension_numbers = #tpu.dot_dimension_numbers<[1], [0], [0], [1], [0, 0, 1, 1], [], []>} : vector<256x128xbf16>, vector<128x128xbf16>, vector<256x128xf32> -> vector<256x128xf32>
    %98 = arith.addf %93, %97 : vector<256x128xf32>
    %c0_91 = arith.constant 0 : index
    %c0_92 = arith.constant 0 : index
    %99 = vector.load %arg9[%c0_91, %c0_92] : memref<288x128xbf16, #tpu.memory_space<vmem>>, vector<256x128xbf16>
    %c2_93 = arith.constant 2 : index
    %c0_94 = arith.constant 0 : index
    %c0_95 = arith.constant 0 : index
    %100 = vector.load %arg4[%c2_93, %c0_94, %c0_95] : memref<9x128x128xbf16, #tpu.memory_space<vmem>>, vector<1x128x128xbf16>
    %101 = vector.shape_cast %100 : vector<1x128x128xbf16> to vector<128x128xbf16>
    %cst_96 = arith.constant dense<0.000000e+00> : vector<256x128xf32>
    %102 = tpu.matmul %99, %101, %cst_96 {dimension_numbers = #tpu.dot_dimension_numbers<[1], [0], [0], [1], [0, 0, 1, 1], [], []>} : vector<256x128xbf16>, vector<128x128xbf16>, vector<256x128xf32> -> vector<256x128xf32>
    %103 = arith.addf %98, %102 : vector<256x128xf32>
    %c16_97 = arith.constant 16 : index
    %c0_98 = arith.constant 0 : index
    %104 = vector.load %arg8[%c16_97, %c0_98] : memref<288x128xbf16, #tpu.memory_space<vmem>>, vector<256x128xbf16>
    %c3_99 = arith.constant 3 : index
    %c0_100 = arith.constant 0 : index
    %c0_101 = arith.constant 0 : index
    %105 = vector.load %arg4[%c3_99, %c0_100, %c0_101] : memref<9x128x128xbf16, #tpu.memory_space<vmem>>, vector<1x128x128xbf16>
    %106 = vector.shape_cast %105 : vector<1x128x128xbf16> to vector<128x128xbf16>
    %cst_102 = arith.constant dense<0.000000e+00> : vector<256x128xf32>
    %107 = tpu.matmul %104, %106, %cst_102 {dimension_numbers = #tpu.dot_dimension_numbers<[1], [0], [0], [1], [0, 0, 1, 1], [], []>} : vector<256x128xbf16>, vector<128x128xbf16>, vector<256x128xf32> -> vector<256x128xf32>
    %108 = arith.addf %103, %107 : vector<256x128xf32>
    %c16_103 = arith.constant 16 : index
    %c0_104 = arith.constant 0 : index
    %109 = vector.load %arg7[%c16_103, %c0_104] : memref<288x128xbf16, #tpu.memory_space<vmem>>, vector<256x128xbf16>
    %c4_105 = arith.constant 4 : index
    %c0_106 = arith.constant 0 : index
    %c0_107 = arith.constant 0 : index
    %110 = vector.load %arg4[%c4_105, %c0_106, %c0_107] : memref<9x128x128xbf16, #tpu.memory_space<vmem>>, vector<1x128x128xbf16>
    %111 = vector.shape_cast %110 : vector<1x128x128xbf16> to vector<128x128xbf16>
    %cst_108 = arith.constant dense<0.000000e+00> : vector<256x128xf32>
    %112 = tpu.matmul %109, %111, %cst_108 {dimension_numbers = #tpu.dot_dimension_numbers<[1], [0], [0], [1], [0, 0, 1, 1], [], []>} : vector<256x128xbf16>, vector<128x128xbf16>, vector<256x128xf32> -> vector<256x128xf32>
    %113 = arith.addf %108, %112 : vector<256x128xf32>
    %c16_109 = arith.constant 16 : index
    %c0_110 = arith.constant 0 : index
    %114 = vector.load %arg9[%c16_109, %c0_110] : memref<288x128xbf16, #tpu.memory_space<vmem>>, vector<256x128xbf16>
    %c5_111 = arith.constant 5 : index
    %c0_112 = arith.constant 0 : index
    %c0_113 = arith.constant 0 : index
    %115 = vector.load %arg4[%c5_111, %c0_112, %c0_113] : memref<9x128x128xbf16, #tpu.memory_space<vmem>>, vector<1x128x128xbf16>
    %116 = vector.shape_cast %115 : vector<1x128x128xbf16> to vector<128x128xbf16>
    %cst_114 = arith.constant dense<0.000000e+00> : vector<256x128xf32>
    %117 = tpu.matmul %114, %116, %cst_114 {dimension_numbers = #tpu.dot_dimension_numbers<[1], [0], [0], [1], [0, 0, 1, 1], [], []>} : vector<256x128xbf16>, vector<128x128xbf16>, vector<256x128xf32> -> vector<256x128xf32>
    %118 = arith.addf %113, %117 : vector<256x128xf32>
    %c32_115 = arith.constant 32 : index
    %c0_116 = arith.constant 0 : index
    %119 = vector.load %arg8[%c32_115, %c0_116] : memref<288x128xbf16, #tpu.memory_space<vmem>>, vector<256x128xbf16>
    %c6_117 = arith.constant 6 : index
    %c0_118 = arith.constant 0 : index
    %c0_119 = arith.constant 0 : index
    %120 = vector.load %arg4[%c6_117, %c0_118, %c0_119] : memref<9x128x128xbf16, #tpu.memory_space<vmem>>, vector<1x128x128xbf16>
    %121 = vector.shape_cast %120 : vector<1x128x128xbf16> to vector<128x128xbf16>
    %cst_120 = arith.constant dense<0.000000e+00> : vector<256x128xf32>
    %122 = tpu.matmul %119, %121, %cst_120 {dimension_numbers = #tpu.dot_dimension_numbers<[1], [0], [0], [1], [0, 0, 1, 1], [], []>} : vector<256x128xbf16>, vector<128x128xbf16>, vector<256x128xf32> -> vector<256x128xf32>
    %123 = arith.addf %118, %122 : vector<256x128xf32>
    %c32_121 = arith.constant 32 : index
    %c0_122 = arith.constant 0 : index
    %124 = vector.load %arg7[%c32_121, %c0_122] : memref<288x128xbf16, #tpu.memory_space<vmem>>, vector<256x128xbf16>
    %c7_123 = arith.constant 7 : index
    %c0_124 = arith.constant 0 : index
    %c0_125 = arith.constant 0 : index
    %125 = vector.load %arg4[%c7_123, %c0_124, %c0_125] : memref<9x128x128xbf16, #tpu.memory_space<vmem>>, vector<1x128x128xbf16>
    %126 = vector.shape_cast %125 : vector<1x128x128xbf16> to vector<128x128xbf16>
    %cst_126 = arith.constant dense<0.000000e+00> : vector<256x128xf32>
    %127 = tpu.matmul %124, %126, %cst_126 {dimension_numbers = #tpu.dot_dimension_numbers<[1], [0], [0], [1], [0, 0, 1, 1], [], []>} : vector<256x128xbf16>, vector<128x128xbf16>, vector<256x128xf32> -> vector<256x128xf32>
    %128 = arith.addf %123, %127 : vector<256x128xf32>
    %c32_127 = arith.constant 32 : index
    %c0_128 = arith.constant 0 : index
    %129 = vector.load %arg9[%c32_127, %c0_128] : memref<288x128xbf16, #tpu.memory_space<vmem>>, vector<256x128xbf16>
    %c8_129 = arith.constant 8 : index
    %c0_130 = arith.constant 0 : index
    %c0_131 = arith.constant 0 : index
    %130 = vector.load %arg4[%c8_129, %c0_130, %c0_131] : memref<9x128x128xbf16, #tpu.memory_space<vmem>>, vector<1x128x128xbf16>
    %131 = vector.shape_cast %130 : vector<1x128x128xbf16> to vector<128x128xbf16>
    %cst_132 = arith.constant dense<0.000000e+00> : vector<256x128xf32>
    %132 = tpu.matmul %129, %131, %cst_132 {dimension_numbers = #tpu.dot_dimension_numbers<[1], [0], [0], [1], [0, 0, 1, 1], [], []>} : vector<256x128xbf16>, vector<128x128xbf16>, vector<256x128xf32> -> vector<256x128xf32>
    %133 = arith.addf %128, %132 : vector<256x128xf32>
    %c0_133 = arith.constant 0 : index
    %c0_134 = arith.constant 0 : index
    %134 = vector.load %arg5[%c0_133, %c0_134] : memref<1x128xf32, #tpu.memory_space<vmem>>, vector<1x128xf32>
    %135 = vector.broadcast %134 : vector<1x128xf32> to vector<256x128xf32>
    %136 = arith.addf %133, %135 : vector<256x128xf32>
    %c0_135 = arith.constant 0 : index
    %c0_136 = arith.constant 0 : index
    %c0_137 = arith.constant 0 : index
    %137 = vector.load %arg1[%c0_135, %c0_136, %c0_137] : memref<1x256x128xbf16, #tpu.memory_space<vmem>>, vector<1x256x128xbf16>
    %138 = vector.shape_cast %137 : vector<1x256x128xbf16> to vector<256x128xbf16>
    %139 = arith.extf %138 : vector<256x128xbf16> to vector<256x128xf32>
    %140 = arith.addf %136, %139 : vector<256x128xf32>
    %cst_138 = arith.constant 0.000000e+00 : f32
    %141 = vector.broadcast %cst_138 : f32 to vector<256x128xf32>
    %142 = arith.maximumf %140, %141 : vector<256x128xf32>
    %143 = arith.truncf %142 : vector<256x128xf32> to vector<256x128xbf16>
    %c0_139 = arith.constant 0 : index
    %c0_140 = arith.constant 0 : index
    %c0_141 = arith.constant 0 : index
    %144 = vector.load %arg6[%c0_139, %c0_140, %c0_141] : memref<1x256x128xbf16, #tpu.memory_space<vmem>>, vector<1x256x128xbf16>
    %145 = vector.shape_cast %144 : vector<1x256x128xbf16> to vector<256x128xbf16>
    %146 = vector.shape_cast %143 : vector<256x128xbf16> to vector<1x256x128xbf16>
    tpu.vector_store %arg6[%c0_139, %c0_140, %c0_141], %146 {strides = array<i32>} : memref<1x256x128xbf16, #tpu.memory_space<vmem>>, vector<1x256x128xbf16>,
    return
  }
  func.func @transform_0(%arg0: i32) -> (i32, i32, i32) {
    %c0_i32 = arith.constant 0 : i32
    %c0_i32_0 = arith.constant 0 : i32
    %c0_i32_1 = arith.constant 0 : i32
    return %arg0, %c0_i32, %c0_i32_0 : i32, i32, i32
  }
  func.func @transform_1(%arg0: i32) -> (i32, i32, i32) {
    %c0_i32 = arith.constant 0 : i32
    %c0_i32_0 = arith.constant 0 : i32
    %c0_i32_1 = arith.constant 0 : i32
    %c0_i32_2 = arith.constant 0 : i32
    return %c0_i32, %c0_i32_0, %c0_i32_1 : i32, i32, i32
  }
  func.func @transform_2(%arg0: i32) -> (i32, i32) {
    %c0_i32 = arith.constant 0 : i32
    %c0_i32_0 = arith.constant 0 : i32
    %c0_i32_1 = arith.constant 0 : i32
    return %c0_i32, %c0_i32_0 : i32, i32
  }
  func.func @transform_3(%arg0: i32) -> (i32, i32, i32) {
    %c0_i32 = arith.constant 0 : i32
    %c0_i32_0 = arith.constant 0 : i32
    %c0_i32_1 = arith.constant 0 : i32
    %c0_i32_2 = arith.constant 0 : i32
    return %c0_i32, %c0_i32_0, %c0_i32_1 : i32, i32, i32
  }
  func.func @transform_4(%arg0: i32) -> (i32, i32) {
    %c0_i32 = arith.constant 0 : i32
    %c0_i32_0 = arith.constant 0 : i32
    %c0_i32_1 = arith.constant 0 : i32
    return %c0_i32, %c0_i32_0 : i32, i32
  }
  func.func @transform_5(%arg0: i32) -> (i32, i32, i32) {
    %c0_i32 = arith.constant 0 : i32
    %c0_i32_0 = arith.constant 0 : i32
    %c0_i32_1 = arith.constant 0 : i32
    return %arg0, %c0_i32, %c0_i32_0 : i32, i32, i32
  }
}

</mosaic_0001>

<llo_original>
// kernel: tpu_custom_call.1
$region0: #{tpu_custom_call.1}
  #allocation0 [shape = 'u32[]', space=smem, size = 0x4, offset = 0x4, fixed_abs, tag = 'smem constant byte address 0x4 - core index']
  #allocation1 [shape = 'u32[144,128]{1,0:T(1,128)}', space=vmem, size = 0x12000, scoped, tag = 'internal scratch']
  #allocation2 [shape = 'bf16[288,128]{1,0:T(16,128)(2,1)}', space=vmem, size = 0x12000, scoped, tag = 'scratch operand']
  #allocation3 [shape = 'bf16[288,128]{1,0:T(16,128)(2,1)}', space=vmem, size = 0x12000, scoped, tag = 'scratch operand']
  #allocation4 [shape = 'bf16[288,128]{1,0:T(16,128)(2,1)}', space=vmem, size = 0x12000, scoped, tag = 'scratch operand']
  %s0 = inlined_call_operand.hbm [shape: bf16[2,256,128], index: 0, kind: input, shape index: {}]
  %s1 = inlined_call_operand.hbm [shape: bf16[9,128,128], index: 1, kind: input, shape index: {}]
  %s2 = inlined_call_operand.vmem [shape: f32[1,128], index: 2, kind: input, shape index: {}]
  %s3 = inlined_call_operand.hbm [shape: bf16[9,128,128], index: 3, kind: input, shape index: {}]
  %s4 = inlined_call_operand.vmem [shape: f32[1,128], index: 4, kind: input, shape index: {}]
  %s5 = inlined_call_operand.hbm [shape: bf16[2,256,128], index: 5, kind: output, shape index: {}]
  %s6 = sld [smem:[#allocation0]]
  $region65: #{tpu_custom_call.1} parent=0
    _
  %s8 = ssub.s32 1, %s6
  %s9 = scalar_select 0, %s8, %s6
  $region1: #{tpu_custom_call.1} parent=0
    #allocation5 [shape = 'u8[131072]{0}', space=vmem, size = 0x20000, scoped, tag = 'input window, operand 0']
    #allocation6 [shape = 's32[2]{0}', space=sflag, size = 0x8, scoped, tag = 'scoped memory for tpu_custom_call.1']
    #allocation7 [shape = 's32[2]{0}', space=sflag, size = 0x8, scoped, tag = 'scoped memory for tpu_custom_call.1']
    #allocation8 [shape = 'u8[294912]{0}', space=vmem, size = 0x48000, scoped, tag = 'input window, operand 1, single buffered']
    #allocation9 [shape = 's32[1]{0}', space=sflag, size = 0x4, scoped, tag = 'scoped memory for tpu_custom_call.1']
    #allocation10 [shape = 'u8[294912]{0}', space=vmem, size = 0x48000, scoped, tag = 'input window, operand 3, single buffered']
    #allocation11 [shape = 'u8[131072]{0}', space=vmem, size = 0x20000, scoped, tag = 'output window, operand 0']
    %10 = vsyncpa [#allocation6], 0
    %s11 = scalar_lea.sflag [#allocation6], 1
    %12 = vsyncpa %s11, 0
    %13 = vsyncpa [#allocation9], 0
    %14 = vsyncpa [#allocation7], 0
    %s15 = scalar_lea.sflag [#allocation7], 1
    %16 = vsyncpa %s15, 0
    loop: start=0, step=1, limit=4
    $region2: #{tpu_custom_call.1} parent=1 // loop_pre_header
      _
    $region3: #{tpu_custom_call.1} parent=1 // loop_header
      %s18 = sphi 0, %s22
      %p19 = scmp.ge.s32.totalorder %s18, 4
      %s28 = sphi 0, %s30
      %s31 = sphi 0, %s28
      %s32 = sphi 0, %s31
      %s48 = sphi 0, %s32
      %s52 = sphi 0, %s52
      %s54 = sphi 0, %s52
      %s55 = sphi 0, %s54
      %s69 = sphi 0, %s55
      %s73 = sphi 0, %s73
      %s75 = sphi 0, %s73
      %s76 = sphi 0, %s75
      %s90 = sphi 0, %s76
      %s94 = sphi 0, %s94
      %s96 = sphi 0, %s94
      %s97 = sphi 0, %s96
      %s111 = sphi 0, %s97
      %s115 = sphi 0, %s115
      %s117 = sphi 0, %s115
      %s118 = sphi 0, %s117
      %s132 = sphi 0, %s118
      %s138 = sphi 0, %s140
      %s141 = sphi 0, %s138
      %s142 = sphi 0, %s141
      %s158 = sphi 0, %s142
    $region4: #{tpu_custom_call.1} parent=1 // loop_header_branch
      %21 = sbr.rel (%p19) target = $region8
    $region5: #{tpu_custom_call.1} parent=1 // loop_body
      %s23 = ssub.s32 %s18, 1
      %s24 = ssub.s32 %s18, 2
      %s25 = sadd.s32 %s18, 1
      %s26 = ssub.s32 %s18, %s25
      %p27 = scmp.eq.s32.totalorder %s26, 0
      %s29 = sadd.s32 %s28, 1
      %s30 = scalar_select %p27, %s28, %s29
      %p33 = pneg %p27
      %p34 = scmp.eq.s32.totalorder %s18, 1
      %p35 = por %p33, %p34
      %p36 = scmp.ne.s32.totalorder %s28, %s31
      %p37 = scmp.eq.s32.totalorder %s18, 0
      %p38 = por %p36, %p37
      %p39 = scmp.ne.s32.totalorder %s28, %s31
      %p40 = scmp.eq.s32.totalorder %s23, 1
      %p41 = por %p39, %p40
      %p42 = scmp.ne.s32.totalorder %s31, %s32
      %p43 = scmp.eq.s32.totalorder %s23, 0
      %p44 = por %p42, %p43
      %p45 = scmp.ne.s32.totalorder %s31, %s32
      %p46 = scmp.eq.s32.totalorder %s24, 1
      %p47 = por %p45, %p46
      %p49 = scmp.ne.s32.totalorder %s32, %s48
      %p50 = scmp.eq.s32.totalorder %s24, 0
      %p51 = por %p49, %p50
      %s53 = sadd.s32 %s52, 1
      %p56 = scmp.eq.s32.totalorder %s18, 1
      %p57 = scmp.ne.s32.totalorder %s52, %s54
      %p58 = scmp.eq.s32.totalorder %s18, 0
      %p59 = por %p57, %p58
      %p60 = scmp.ne.s32.totalorder %s52, %s54
      %p61 = scmp.eq.s32.totalorder %s23, 1
      %p62 = por %p60, %p61
      %p63 = scmp.ne.s32.totalorder %s54, %s55
      %p64 = scmp.eq.s32.totalorder %s23, 0
      %p65 = por %p63, %p64
      %p66 = scmp.ne.s32.totalorder %s54, %s55
      %p67 = scmp.eq.s32.totalorder %s24, 1
      %p68 = por %p66, %p67
      %p70 = scmp.ne.s32.totalorder %s55, %s69
      %p71 = scmp.eq.s32.totalorder %s24, 0
      %p72 = por %p70, %p71
      %s74 = sadd.s32 %s73, 1
      %p77 = scmp.eq.s32.totalorder %s18, 1
      %p78 = scmp.ne.s32.totalorder %s73, %s75
      %p79 = scmp.eq.s32.totalorder %s18, 0
      %p80 = por %p78, %p79
      %p81 = scmp.ne.s32.totalorder %s73, %s75
      %p82 = scmp.eq.s32.totalorder %s23, 1
      %p83 = por %p81, %p82
      %p84 = scmp.ne.s32.totalorder %s75, %s76
      %p85 = scmp.eq.s32.totalorder %s23, 0
      %p86 = por %p84, %p85
      %p87 = scmp.ne.s32.totalorder %s75, %s76
      %p88 = scmp.eq.s32.totalorder %s24, 1
      %p89 = por %p87, %p88
      %p91 = scmp.ne.s32.totalorder %s76, %s90
      %p92 = scmp.eq.s32.totalorder %s24, 0
      %p93 = por %p91, %p92
      %s95 = sadd.s32 %s94, 1
      %p98 = scmp.eq.s32.totalorder %s18, 1
      %p99 = scmp.ne.s32.totalorder %s94, %s96
      %p100 = scmp.eq.s32.totalorder %s18, 0
      %p101 = por %p99, %p100
      %p102 = scmp.ne.s32.totalorder %s94, %s96
      %p103 = scmp.eq.s32.totalorder %s23, 1
      %p104 = por %p102, %p103
      %p105 = scmp.ne.s32.totalorder %s96, %s97
      %p106 = scmp.eq.s32.totalorder %s23, 0
      %p107 = por %p105, %p106
      %p108 = scmp.ne.s32.totalorder %s96, %s97
      %p109 = scmp.eq.s32.totalorder %s24, 1
      %p110 = por %p108, %p109
      %p112 = scmp.ne.s32.totalorder %s97, %s111
      %p113 = scmp.eq.s32.totalorder %s24, 0
      %p114 = por %p112, %p113
      %s116 = sadd.s32 %s115, 1
      %p119 = scmp.eq.s32.totalorder %s18, 1
      %p120 = scmp.ne.s32.totalorder %s115, %s117
      %p121 = scmp.eq.s32.totalorder %s18, 0
      %p122 = por %p120, %p121
      %p123 = scmp.ne.s32.totalorder %s115, %s117
      %p124 = scmp.eq.s32.totalorder %s23, 1
      %p125 = por %p123, %p124
      %p126 = scmp.ne.s32.totalorder %s117, %s118
      %p127 = scmp.eq.s32.totalorder %s23, 0
      %p128 = por %p126, %p127
      %p129 = scmp.ne.s32.totalorder %s117, %s118
      %p130 = scmp.eq.s32.totalorder %s24, 1
      %p131 = por %p129, %p130
      %p133 = scmp.ne.s32.totalorder %s118, %s132
      %p134 = scmp.eq.s32.totalorder %s24, 0
      %p135 = por %p133, %p134
      %s136 = ssub.s32 %s18, %s25
      %p137 = scmp.eq.s32.totalorder %s136, 0
      %s139 = sadd.s32 %s138, 1
      %s140 = scalar_select %p137, %s138, %s139
      %p143 = pneg %p137
      %p144 = scmp.eq.s32.totalorder %s18, 1
      %p145 = por %p143, %p144
      %p146 = scmp.ne.s32.totalorder %s138, %s141
      %p147 = scmp.eq.s32.totalorder %s18, 0
      %p148 = por %p146, %p147
      %p149 = scmp.ne.s32.totalorder %s138, %s141
      %p150 = scmp.eq.s32.totalorder %s23, 1
      %p151 = por %p149, %p150
      %p152 = scmp.ne.s32.totalorder %s141, %s142
      %p153 = scmp.eq.s32.totalorder %s23, 0
      %p154 = por %p152, %p153
      %p155 = scmp.ne.s32.totalorder %s141, %s142
      %p156 = scmp.eq.s32.totalorder %s24, 1
      %p157 = por %p155, %p156
      %p159 = scmp.ne.s32.totalorder %s142, %s158
      %p160 = scmp.eq.s32.totalorder %s24, 0
      %p161 = por %p159, %p160
      %p162 = scmp.le.s32.totalorder 1, %s18
      %p163 = scmp.lt.s32.totalorder %s18, 3
      %p164 = pnand %p162, %p163
      %p165 = pneg %p164
      // Predicated region
      $region9: #{tpu_custom_call.1} parent=5 // pred_check
        _
      $region10: #{tpu_custom_call.1} parent=5 // pred_check_branch
        %167 = sbr.rel (%p164) target = $region12
      $region11: #{tpu_custom_call.1} parent=5 // pred_region
        %s168 = ssub.s32 %s18, 1
        // Predicated region
        $region13: #{tpu_custom_call.1} parent=11 // pred_check
          %p169 = pneg %p65
        $region14: #{tpu_custom_call.1} parent=11 // pred_check_branch
          %171 = sbr.rel (%p169) target = $region16
        $region15: #{tpu_custom_call.1} parent=11 // pred_region
          %s173 = ssub.s32 9216, 9216
          %174 = vsyncadd [#allocation9], %s173
          %s175 = sshll.u32 [#allocation8], 4
          %s176 = int_to_ptr.vmem [resolvable:$true] %s175
          %181 = dma.hbm_to_vmem [thread:$0]  %s1, 9216, %s176, [#allocation9], 64, 64, 4
        $region16: #{tpu_custom_call.1} parent=11 // pred_fallthru
          _
        // Predicated region
        $region17: #{tpu_custom_call.1} parent=11 // pred_check
          %p182 = pneg %p86
        $region18: #{tpu_custom_call.1} parent=11 // pred_check_branch
          %184 = sbr.rel (%p182) target = $region20
        $region19: #{tpu_custom_call.1} parent=11 // pred_region
          _
        $region20: #{tpu_custom_call.1} parent=11 // pred_fallthru
          _
        // Predicated region
        $region21: #{tpu_custom_call.1} parent=11 // pred_check
          %p185 = pneg %p107
        $region22: #{tpu_custom_call.1} parent=11 // pred_check_branch
          %187 = sbr.rel (%p185) target = $region24
        $region23: #{tpu_custom_call.1} parent=11 // pred_region
          %s189 = ssub.s32 9216, 9216
          %190 = vsyncadd [#allocation9], %s189
          %s191 = sshll.u32 [#allocation10], 4
          %s192 = int_to_ptr.vmem [resolvable:$true] %s191
          %197 = dma.hbm_to_vmem [thread:$0]  %s3, 9216, %s192, [#allocation9], 64, 64, 4
        $region24: #{tpu_custom_call.1} parent=11 // pred_fallthru
          _
        // Predicated region
        $region25: #{tpu_custom_call.1} parent=11 // pred_check
          %p198 = pneg %p128
        $region26: #{tpu_custom_call.1} parent=11 // pred_check_branch
          %200 = sbr.rel (%p198) target = $region28
        $region27: #{tpu_custom_call.1} parent=11 // pred_region
          _
        $region28: #{tpu_custom_call.1} parent=11 // pred_fallthru
          _
      $region12: #{tpu_custom_call.1} parent=5 // pred_fallthru
        _
      %p201 = scmp.lt.s32.totalorder %s18, 2
      // Predicated region
      $region29: #{tpu_custom_call.1} parent=5 // pred_check
        %p202 = pneg %p201
      $region30: #{tpu_custom_call.1} parent=5 // pred_check_branch
        %204 = sbr.rel (%p202) target = $region32
      $region31: #{tpu_custom_call.1} parent=5 // pred_region
        // Predicated region
        $region33: #{tpu_custom_call.1} parent=31 // pred_check
          %p205 = pneg %p38
        $region34: #{tpu_custom_call.1} parent=31 // pred_check_branch
          %207 = sbr.rel (%p205) target = $region36
        $region35: #{tpu_custom_call.1} parent=31 // pred_region
          %s208 = sand.u32 %s28, 1
          %s209 = scalar_lea.sflag [#allocation6], %s208
          %s210 = sand.u32 %s28, 1
          %s211 = smul.addr %s210, 128
          %s212 = scalar_lea.vmem [#allocation5], %s211
          %s214 = ssub.s32 2048, 2048
          %215 = vsyncadd %s209, %s214
          %s216 = smul.addr %s18, 32
          %s217 = smul.addr %s216, 64
          %s218 = scalar_lea.hbm %s0, %s217
          %s219 = sshll.u32 %s212, 4
          %s220 = int_to_ptr.vmem [resolvable:$true] %s219
          %225 = dma.hbm_to_vmem [thread:$0]  %s218, 2048, %s220, %s209, 64, 64, 4
        $region36: #{tpu_custom_call.1} parent=31 // pred_fallthru
          _
      $region32: #{tpu_custom_call.1} parent=5 // pred_fallthru
        _
      %p226 = scmp.le.s32.totalorder 1, %s18
      %p227 = scmp.lt.s32.totalorder %s18, 3
      %p228 = pnand %p226, %p227
      %p229 = pneg %p228
      // Predicated region
      $region37: #{tpu_custom_call.1} parent=5 // pred_check
        _
      $region38: #{tpu_custom_call.1} parent=5 // pred_check_branch
        %231 = sbr.rel (%p228) target = $region40
      $region39: #{tpu_custom_call.1} parent=5 // pred_region
        %s232 = ssub.s32 %s18, 1
        %s233 = sand.u32 %s31, 1
        %s234 = scalar_lea.sflag [#allocation6], %s233
        %s235 = sand.u32 %s31, 1
        %s236 = smul.addr %s235, 128
        %s237 = scalar_lea.vmem [#allocation5], %s236
        // Predicated region
        $region41: #{tpu_custom_call.1} parent=39 // pred_check
          %p238 = pneg %p44
        $region42: #{tpu_custom_call.1} parent=39 // pred_check_branch
          %240 = sbr.rel (%p238) target = $region44
        $region43: #{tpu_custom_call.1} parent=39 // pred_region
          %241 = dma.done %s234, 2048
        $region44: #{tpu_custom_call.1} parent=39 // pred_fallthru
          _
        // Predicated region
        $region45: #{tpu_custom_call.1} parent=39 // pred_check
          %p242 = pneg %p65
        $region46: #{tpu_custom_call.1} parent=39 // pred_check_branch
          %244 = sbr.rel (%p242) target = $region48
        $region47: #{tpu_custom_call.1} parent=39 // pred_region
          %245 = dma.done [#allocation9], 9216
        $region48: #{tpu_custom_call.1} parent=39 // pred_fallthru
          _
        // Predicated region
        $region49: #{tpu_custom_call.1} parent=39 // pred_check
          %p246 = pneg %p107
        $region50: #{tpu_custom_call.1} parent=39 // pred_check_branch
          %248 = sbr.rel (%p246) target = $region52
        $region51: #{tpu_custom_call.1} parent=39 // pred_region
          %249 = dma.done [#allocation9], 9216
        $region52: #{tpu_custom_call.1} parent=39 // pred_fallthru
          _
        %s250 = sand.u32 %s31, 1
        %s251 = scalar_lea.sflag [#allocation6], %s250
        %s252 = sand.u32 %s31, 1
        %s253 = smul.addr %s252, 128
        %s254 = scalar_lea.vmem [#allocation5], %s253
        %p255 = pneg %p44
        %p256 = pneg %p41
        %p257 = pneg %p65
        %p258 = pneg %p62
        %p259 = pneg %p86
        %p260 = pneg %p83
        %p261 = pneg %p107
        %p262 = pneg %p104
        %p263 = pneg %p128
        %p264 = pneg %p125
        %p265 = pneg %p154
        %p266 = pneg %p151
        %s267 = sand.u32 %s141, 1
        %s268 = scalar_lea.sflag [#allocation7], %s267
        %s269 = sand.u32 %s141, 1
        %s270 = smul.addr %s269, 128
        %s271 = scalar_lea.vmem [#allocation11], %s270
        %v273 = vlaneseq
        %v274 = vshrl.u32 %v273, 7
        %v275 = vadd.s32 %v274, 8
        %v276 = vadd.s32 %v274, 16
        %v277 = vadd.s32 %v274, 24
        %v278 = vadd.s32 %v274, 32
        %v279 = vadd.s32 %v274, 40
        %v280 = vadd.s32 %v274, 48
        %v281 = vadd.s32 %v274, 56
        %v282 = vadd.s32 %v274, 64
        %v283 = vadd.s32 %v274, 72
        %v284 = vadd.s32 %v274, 80
        %v285 = vadd.s32 %v274, 88
        %v286 = vadd.s32 %v274, 96
        %v287 = vadd.s32 %v274, 104
        %v288 = vadd.s32 %v274, 112
        %v289 = vadd.s32 %v274, 120
        %v290 = vadd.s32 %v274, 128
        %v291 = vadd.s32 %v274, 136
        %v292 = vadd.s32 %v274, 144
        %v293 = vadd.s32 %v274, 152
        %v294 = vadd.s32 %v274, 160
        %v295 = vadd.s32 %v274, 168
        %v296 = vadd.s32 %v274, 176
        %v297 = vadd.s32 %v274, 184
        %v298 = vadd.s32 %v274, 192
        %v299 = vadd.s32 %v274, 200
        %v300 = vadd.s32 %v274, 208
        %v301 = vadd.s32 %v274, 216
        %v302 = vadd.s32 %v274, 224
        %v303 = vadd.s32 %v274, 232
        %v304 = vadd.s32 %v274, 240
        %v305 = vadd.s32 %v274, 248
        %v306 = vand.u32 %v274, 15
        %v307 = vand.u32 %v275, 15
        %v308 = vand.u32 %v276, 15
        %v309 = vand.u32 %v277, 15
        %v310 = vand.u32 %v278, 15
        %v311 = vand.u32 %v279, 15
        %v312 = vand.u32 %v280, 15
        %v313 = vand.u32 %v281, 15
        %v314 = vand.u32 %v282, 15
        %v315 = vand.u32 %v283, 15
        %v316 = vand.u32 %v284, 15
        %v317 = vand.u32 %v285, 15
        %v318 = vand.u32 %v286, 15
        %v319 = vand.u32 %v287, 15
        %v320 = vand.u32 %v288, 15
        %v321 = vand.u32 %v289, 15
        %v322 = vand.u32 %v290, 15
        %v323 = vand.u32 %v291, 15
        %v324 = vand.u32 %v292, 15
        %v325 = vand.u32 %v293, 15
        %v326 = vand.u32 %v294, 15
        %v327 = vand.u32 %v295, 15
        %v328 = vand.u32 %v296, 15
        %v329 = vand.u32 %v297, 15
        %v330 = vand.u32 %v298, 15
        %v331 = vand.u32 %v299, 15
        %v332 = vand.u32 %v300, 15
        %v333 = vand.u32 %v301, 15
        %v334 = vand.u32 %v302, 15
        %v335 = vand.u32 %v303, 15
        %v336 = vand.u32 %v304, 15
        %v337 = vand.u32 %v305, 15
        %vm338 = vcmp.ne.s32.totalorder %v306, 0
        %vm339 = vcmp.ne.s32.totalorder %v307, 0
        %vm340 = vcmp.ne.s32.totalorder %v308, 0
        %vm341 = vcmp.ne.s32.totalorder %v309, 0
        %vm342 = vcmp.ne.s32.totalorder %v310, 0
        %vm343 = vcmp.ne.s32.totalorder %v311, 0
        %vm344 = vcmp.ne.s32.totalorder %v312, 0
        %vm345 = vcmp.ne.s32.totalorder %v313, 0
        %vm346 = vcmp.ne.s32.totalorder %v314, 0
        %vm347 = vcmp.ne.s32.totalorder %v315, 0
        %vm348 = vcmp.ne.s32.totalorder %v316, 0
        %vm349 = vcmp.ne.s32.totalorder %v317, 0
        %vm350 = vcmp.ne.s32.totalorder %v318, 0
        %vm351 = vcmp.ne.s32.totalorder %v319, 0
        %vm352 = vcmp.ne.s32.totalorder %v320, 0
        %vm353 = vcmp.ne.s32.totalorder %v321, 0
        %vm354 = vcmp.ne.s32.totalorder %v322, 0
        %vm355 = vcmp.ne.s32.totalorder %v323, 0
        %vm356 = vcmp.ne.s32.totalorder %v324, 0
        %vm357 = vcmp.ne.s32.totalorder %v325, 0
        %vm358 = vcmp.ne.s32.totalorder %v326, 0
        %vm359 = vcmp.ne.s32.totalorder %v327, 0
        %vm360 = vcmp.ne.s32.totalorder %v328, 0
        %vm361 = vcmp.ne.s32.totalorder %v329, 0
        %vm362 = vcmp.ne.s32.totalorder %v330, 0
        %vm363 = vcmp.ne.s32.totalorder %v331, 0
        %vm364 = vcmp.ne.s32.totalorder %v332, 0
        %vm365 = vcmp.ne.s32.totalorder %v333, 0
        %vm366 = vcmp.ne.s32.totalorder %v334, 0
        %vm367 = vcmp.ne.s32.totalorder %v335, 0
        %vm368 = vcmp.ne.s32.totalorder %v336, 0
        %vm369 = vcmp.ne.s32.totalorder %v337, 0
        %vm370 = vcmp.ne.s32.totalorder %v306, 15
        %vm371 = vcmp.ne.s32.totalorder %v307, 15
        %vm372 = vcmp.ne.s32.totalorder %v308, 15
        %vm373 = vcmp.ne.s32.totalorder %v309, 15
        %vm374 = vcmp.ne.s32.totalorder %v310, 15
        %vm375 = vcmp.ne.s32.totalorder %v311, 15
        %vm376 = vcmp.ne.s32.totalorder %v312, 15
        %vm377 = vcmp.ne.s32.totalorder %v313, 15
        %vm378 = vcmp.ne.s32.totalorder %v314, 15
        %vm379 = vcmp.ne.s32.totalorder %v315, 15
        %vm380 = vcmp.ne.s32.totalorder %v316, 15
        %vm381 = vcmp.ne.s32.totalorder %v317, 15
        %vm382 = vcmp.ne.s32.totalorder %v318, 15
        %vm383 = vcmp.ne.s32.totalorder %v319, 15
        %vm384 = vcmp.ne.s32.totalorder %v320, 15
        %vm385 = vcmp.ne.s32.totalorder %v321, 15
        %vm386 = vcmp.ne.s32.totalorder %v322, 15
        %vm387 = vcmp.ne.s32.totalorder %v323, 15
        %vm388 = vcmp.ne.s32.totalorder %v324, 15
        %vm389 = vcmp.ne.s32.totalorder %v325, 15
        %vm390 = vcmp.ne.s32.totalorder %v326, 15
        %vm391 = vcmp.ne.s32.totalorder %v327, 15
        %vm392 = vcmp.ne.s32.totalorder %v328, 15
        %vm393 = vcmp.ne.s32.totalorder %v329, 15
        %vm394 = vcmp.ne.s32.totalorder %v330, 15
        %vm395 = vcmp.ne.s32.totalorder %v331, 15
        %vm396 = vcmp.ne.s32.totalorder %v332, 15
        %vm397 = vcmp.ne.s32.totalorder %v333, 15
        %vm398 = vcmp.ne.s32.totalorder %v334, 15
        %vm399 = vcmp.ne.s32.totalorder %v335, 15
        %vm400 = vcmp.ne.s32.totalorder %v336, 15
        %vm401 = vcmp.ne.s32.totalorder %v337, 15
        %402 = vst [vmem:[#allocation2] sm:$0xff] 0
        %403 = vst [vmem:[#allocation2 + $0x88] sm:$0xff] 0
        %404 = vst [vmem:[#allocation3] sm:$0xff] 0
        %405 = vst [vmem:[#allocation3 + $0x88] sm:$0xff] 0
        %406 = vst [vmem:[#allocation4] sm:$0xff] 0
        %407 = vst [vmem:[#allocation4 + $0x88] sm:$0xff] 0
        %v408 = vld [vmem:[%s237] sm:$0xf]
        %v409 = vld [vmem:[%s237 + $0x4] sm:$0xf]
        %v410 = vld [vmem:[%s237 + $0x8] sm:$0xf]
        %v411 = vld [vmem:[%s237 + $0xc] sm:$0xf]
        %v412 = vld [vmem:[%s237 + $0x10] sm:$0xf]
        %v413 = vld [vmem:[%s237 + $0x14] sm:$0xf]
        %v414 = vld [vmem:[%s237 + $0x18] sm:$0xf]
        %v415 = vld [vmem:[%s237 + $0x1c] sm:$0xf]
        %v416 = vld [vmem:[%s237 + $0x20] sm:$0xf]
        %v417 = vld [vmem:[%s237 + $0x24] sm:$0xf]
        %v418 = vld [vmem:[%s237 + $0x28] sm:$0xf]
        %v419 = vld [vmem:[%s237 + $0x2c] sm:$0xf]
        %v420 = vld [vmem:[%s237 + $0x30] sm:$0xf]
        %v421 = vld [vmem:[%s237 + $0x34] sm:$0xf]
        %v422 = vld [vmem:[%s237 + $0x38] sm:$0xf]
        %v423 = vld [vmem:[%s237 + $0x3c] sm:$0xf]
        %v424 = vld [vmem:[%s237 + $0x40] sm:$0xf]
        %v425 = vld [vmem:[%s237 + $0x44] sm:$0xf]
        %v426 = vld [vmem:[%s237 + $0x48] sm:$0xf]
        %v427 = vld [vmem:[%s237 + $0x4c] sm:$0xf]
        %v428 = vld [vmem:[%s237 + $0x50] sm:$0xf]
        %v429 = vld [vmem:[%s237 + $0x54] sm:$0xf]
        %v430 = vld [vmem:[%s237 + $0x58] sm:$0xf]
        %v431 = vld [vmem:[%s237 + $0x5c] sm:$0xf]
        %v432 = vld [vmem:[%s237 + $0x60] sm:$0xf]
        %v433 = vld [vmem:[%s237 + $0x64] sm:$0xf]
        %v434 = vld [vmem:[%s237 + $0x68] sm:$0xf]
        %v435 = vld [vmem:[%s237 + $0x6c] sm:$0xf]
        %v436 = vld [vmem:[%s237 + $0x70] sm:$0xf]
        %v437 = vld [vmem:[%s237 + $0x74] sm:$0xf]
        %v438 = vld [vmem:[%s237 + $0x78] sm:$0xf]
        %v439 = vld [vmem:[%s237 + $0x7c] sm:$0xf]
        %v440 = vunpack.c.l.bf16 %v408
        %v441 = vunpack.c.l.bf16 %v409
        %v442 = vunpack.c.l.bf16 %v410
        %v443 = vunpack.c.l.bf16 %v411
        %v444 = vunpack.c.l.bf16 %v412
        %v445 = vunpack.c.l.bf16 %v413
        %v446 = vunpack.c.l.bf16 %v414
        %v447 = vunpack.c.l.bf16 %v415
        %v448 = vunpack.c.l.bf16 %v416
        %v449 = vunpack.c.l.bf16 %v417
        %v450 = vunpack.c.l.bf16 %v418
        %v451 = vunpack.c.l.bf16 %v419
        %v452 = vunpack.c.l.bf16 %v420
        %v453 = vunpack.c.l.bf16 %v421
        %v454 = vunpack.c.l.bf16 %v422
        %v455 = vunpack.c.l.bf16 %v423
        %v456 = vunpack.c.l.bf16 %v424
        %v457 = vunpack.c.l.bf16 %v425
        %v458 = vunpack.c.l.bf16 %v426
        %v459 = vunpack.c.l.bf16 %v427
        %v460 = vunpack.c.l.bf16 %v428
        %v461 = vunpack.c.l.bf16 %v429
        %v462 = vunpack.c.l.bf16 %v430
        %v463 = vunpack.c.l.bf16 %v431
        %v464 = vunpack.c.l.bf16 %v432
        %v465 = vunpack.c.l.bf16 %v433
        %v466 = vunpack.c.l.bf16 %v434
        %v467 = vunpack.c.l.bf16 %v435
        %v468 = vunpack.c.l.bf16 %v436
        %v469 = vunpack.c.l.bf16 %v437
        %v470 = vunpack.c.l.bf16 %v438
        %v471 = vunpack.c.l.bf16 %v439
        %v504 = vunpack.c.l.b16 %v408
        %v505 = vunpack.c.l.b16 %v409
        %v506 = vunpack.c.l.b16 %v410
        %v507 = vunpack.c.l.b16 %v411
        %v508 = vunpack.c.l.b16 %v412
        %v509 = vunpack.c.l.b16 %v413
        %v510 = vunpack.c.l.b16 %v414
        %v511 = vunpack.c.l.b16 %v415
        %v512 = vunpack.c.l.b16 %v416
        %v513 = vunpack.c.l.b16 %v417
        %v514 = vunpack.c.l.b16 %v418
        %v515 = vunpack.c.l.b16 %v419
        %v516 = vunpack.c.l.b16 %v420
        %v517 = vunpack.c.l.b16 %v421
        %v518 = vunpack.c.l.b16 %v422
        %v519 = vunpack.c.l.b16 %v423
        %v520 = vunpack.c.l.b16 %v424
        %v521 = vunpack.c.l.b16 %v425
        %v522 = vunpack.c.l.b16 %v426
        %v523 = vunpack.c.l.b16 %v427
        %v524 = vunpack.c.l.b16 %v428
        %v525 = vunpack.c.l.b16 %v429
        %v526 = vunpack.c.l.b16 %v430
        %v527 = vunpack.c.l.b16 %v431
        %v528 = vunpack.c.l.b16 %v432
        %v529 = vunpack.c.l.b16 %v433
        %v530 = vunpack.c.l.b16 %v434
        %v531 = vunpack.c.l.b16 %v435
        %v532 = vunpack.c.l.b16 %v436
        %v533 = vunpack.c.l.b16 %v437
        %v534 = vunpack.c.l.b16 %v438
        %v535 = vunpack.c.l.b16 %v439
        %v536 = vpack.c.b16 %v505, %v504
        %v537 = vpack.c.b16 %v507, %v506
        %v538 = vpack.c.b16 %v509, %v508
        %v539 = vpack.c.b16 %v511, %v510
        %v540 = vpack.c.b16 %v513, %v512
        %v541 = vpack.c.b16 %v515, %v514
        %v542 = vpack.c.b16 %v517, %v516
        %v543 = vpack.c.b16 %v519, %v518
        %v544 = vpack.c.b16 %v521, %v520
        %v545 = vpack.c.b16 %v523, %v522
        %v546 = vpack.c.b16 %v525, %v524
        %v547 = vpack.c.b16 %v527, %v526
        %v548 = vpack.c.b16 %v529, %v528
        %v549 = vpack.c.b16 %v531, %v530
        %v550 = vpack.c.b16 %v533, %v532
        %v551 = vpack.c.b16 %v535, %v534
        %568 = vst [vmem:[#allocation2 + $0x8] sm:$0xff] %v536
        %569 = vst [vmem:[#allocation2 + $0x10] sm:$0xff] %v537
        %570 = vst [vmem:[#allocation2 + $0x18] sm:$0xff] %v538
        %571 = vst [vmem:[#allocation2 + $0x20] sm:$0xff] %v539
        %572 = vst [vmem:[#allocation2 + $0x28] sm:$0xff] %v540
        %573 = vst [vmem:[#allocation2 + $0x30] sm:$0xff] %v541
        %574 = vst [vmem:[#allocation2 + $0x38] sm:$0xff] %v542
        %575 = vst [vmem:[#allocation2 + $0x40] sm:$0xff] %v543
        %576 = vst [vmem:[#allocation2 + $0x48] sm:$0xff] %v544
        %577 = vst [vmem:[#allocation2 + $0x50] sm:$0xff] %v545
        %578 = vst [vmem:[#allocation2 + $0x58] sm:$0xff] %v546
        %579 = vst [vmem:[#allocation2 + $0x60] sm:$0xff] %v547
        %580 = vst [vmem:[#allocation2 + $0x68] sm:$0xff] %v548
        %581 = vst [vmem:[#allocation2 + $0x70] sm:$0xff] %v549
        %582 = vst [vmem:[#allocation2 + $0x78] sm:$0xff] %v550
        %583 = vst [vmem:[#allocation2 + $0x80] sm:$0xff] %v551
        %v584 = vrot.slane %v440, 7
        %v585 = vrot.slane %v441, 7
        %v586 = vrot.slane %v442, 7
        %v587 = vrot.slane %v443, 7
        %v588 = vrot.slane %v444, 7
        %v589 = vrot.slane %v445, 7
        %v590 = vrot.slane %v446, 7
        %v591 = vrot.slane %v447, 7
        %v592 = vrot.slane %v448, 7
        %v593 = vrot.slane %v449, 7
        %v594 = vrot.slane %v450, 7
        %v595 = vrot.slane %v451, 7
        %v596 = vrot.slane %v452, 7
        %v597 = vrot.slane %v453, 7
        %v598 = vrot.slane %v454, 7
        %v599 = vrot.slane %v455, 7
        %v600 = vrot.slane %v456, 7
        %v601 = vrot.slane %v457, 7
        %v602 = vrot.slane %v458, 7
        %v603 = vrot.slane %v459, 7
        %v604 = vrot.slane %v460, 7
        %v605 = vrot.slane %v461, 7
        %v606 = vrot.slane %v462, 7
        %v607 = vrot.slane %v463, 7
        %v608 = vrot.slane %v464, 7
        %v609 = vrot.slane %v465, 7
        %v610 = vrot.slane %v466, 7
        %v611 = vrot.slane %v467, 7
        %v612 = vrot.slane %v468, 7
        %v613 = vrot.slane %v469, 7
        %v614 = vrot.slane %v470, 7
        %v615 = vrot.slane %v471, 7
        %vm616 = vcmp.lt.s32.totalorder %v274, 1
        %v617 = vsel %vm616, %v614, %v615
        %v618 = vsel %vm616, %v613, %v614
        %v619 = vsel %vm616, %v612, %v613
        %v620 = vsel %vm616, %v611, %v612
        %v621 = vsel %vm616, %v610, %v611
        %v622 = vsel %vm616, %v609, %v610
        %v623 = vsel %vm616, %v608, %v609
        %v624 = vsel %vm616, %v607, %v608
        %v625 = vsel %vm616, %v606, %v607
        %v626 = vsel %vm616, %v605, %v606
        %v627 = vsel %vm616, %v604, %v605
        %v628 = vsel %vm616, %v603, %v604
        %v629 = vsel %vm616, %v602, %v603
        %v630 = vsel %vm616, %v601, %v602
        %v631 = vsel %vm616, %v600, %v601
        %v632 = vsel %vm616, %v599, %v600
        %v633 = vsel %vm616, %v598, %v599
        %v634 = vsel %vm616, %v597, %v598
        %v635 = vsel %vm616, %v596, %v597
        %v636 = vsel %vm616, %v595, %v596
        %v637 = vsel %vm616, %v594, %v595
        %v638 = vsel %vm616, %v593, %v594
        %v639 = vsel %vm616, %v592, %v593
        %v640 = vsel %vm616, %v591, %v592
        %v641 = vsel %vm616, %v590, %v591
        %v642 = vsel %vm616, %v589, %v590
        %v643 = vsel %vm616, %v588, %v589
        %v644 = vsel %vm616, %v587, %v588
        %v645 = vsel %vm616, %v586, %v587
        %v646 = vsel %vm616, %v585, %v586
        %v647 = vsel %vm616, %v584, %v585
        %v648 = vsel %vm616, %v615, %v584
        %v649 = vsel %vm338, %v648, 0.0
        %v650 = vsel %vm339, %v647, 0.0
        %v651 = vsel %vm340, %v646, 0.0
        %v652 = vsel %vm341, %v645, 0.0
        %v653 = vsel %vm342, %v644, 0.0
        %v654 = vsel %vm343, %v643, 0.0
        %v655 = vsel %vm344, %v642, 0.0
        %v656 = vsel %vm345, %v641, 0.0
        %v657 = vsel %vm346, %v640, 0.0
        %v658 = vsel %vm347, %v639, 0.0
        %v659 = vsel %vm348, %v638, 0.0
        %v660 = vsel %vm349, %v637, 0.0
        %v661 = vsel %vm350, %v636, 0.0
        %v662 = vsel %vm351, %v635, 0.0
        %v663 = vsel %vm352, %v634, 0.0
        %v664 = vsel %vm353, %v633, 0.0
        %v665 = vsel %vm354, %v632, 0.0
        %v666 = vsel %vm355, %v631, 0.0
        %v667 = vsel %vm356, %v630, 0.0
        %v668 = vsel %vm357, %v629, 0.0
        %v669 = vsel %vm358, %v628, 0.0
        %v670 = vsel %vm359, %v627, 0.0
        %v671 = vsel %vm360, %v626, 0.0
        %v672 = vsel %vm361, %v625, 0.0
        %v673 = vsel %vm362, %v624, 0.0
        %v674 = vsel %vm363, %v623, 0.0
        %v675 = vsel %vm364, %v622, 0.0
        %v676 = vsel %vm365, %v621, 0.0
        %v677 = vsel %vm366, %v620, 0.0
        %v678 = vsel %vm367, %v619, 0.0
        %v679 = vsel %vm368, %v618, 0.0
        %v680 = vsel %vm369, %v617, 0.0
        %v681 = vpack.c.bf16 %v650, %v649
        %v682 = vpack.c.bf16 %v652, %v651
        %v683 = vpack.c.bf16 %v654, %v653
        %v684 = vpack.c.bf16 %v656, %v655
        %v685 = vpack.c.bf16 %v658, %v657
        %v686 = vpack.c.bf16 %v660, %v659
        %v687 = vpack.c.bf16 %v662, %v661
        %v688 = vpack.c.bf16 %v664, %v663
        %v689 = vpack.c.bf16 %v666, %v665
        %v690 = vpack.c.bf16 %v668, %v667
        %v691 = vpack.c.bf16 %v670, %v669
        %v692 = vpack.c.bf16 %v672, %v671
        %v693 = vpack.c.bf16 %v674, %v673
        %v694 = vpack.c.bf16 %v676, %v675
        %v695 = vpack.c.bf16 %v678, %v677
        %v696 = vpack.c.bf16 %v680, %v679
        %697 = vst [vmem:[#allocation3 + $0x8] sm:$0xff] %v681
        %698 = vst [vmem:[#allocation3 + $0x10] sm:$0xff] %v682
        %699 = vst [vmem:[#allocation3 + $0x18] sm:$0xff] %v683
        %700 = vst [vmem:[#allocation3 + $0x20] sm:$0xff] %v684
        %701 = vst [vmem:[#allocation3 + $0x28] sm:$0xff] %v685
        %702 = vst [vmem:[#allocation3 + $0x30] sm:$0xff] %v686
        %703 = vst [vmem:[#allocation3 + $0x38] sm:$0xff] %v687
        %704 = vst [vmem:[#allocation3 + $0x40] sm:$0xff] %v688
        %705 = vst [vmem:[#allocation3 + $0x48] sm:$0xff] %v689
        %706 = vst [vmem:[#allocation3 + $0x50] sm:$0xff] %v690
        %707 = vst [vmem:[#allocation3 + $0x58] sm:$0xff] %v691
        %708 = vst [vmem:[#allocation3 + $0x60] sm:$0xff] %v692
        %709 = vst [vmem:[#allocation3 + $0x68] sm:$0xff] %v693
        %710 = vst [vmem:[#allocation3 + $0x70] sm:$0xff] %v694
        %711 = vst [vmem:[#allocation3 + $0x78] sm:$0xff] %v695
        %712 = vst [vmem:[#allocation3 + $0x80] sm:$0xff] %v696
        %v713 = vrot.slane %v440, 1
        %v714 = vrot.slane %v441, 1
        %v715 = vrot.slane %v442, 1
        %v716 = vrot.slane %v443, 1
        %v717 = vrot.slane %v444, 1
        %v718 = vrot.slane %v445, 1
        %v719 = vrot.slane %v446, 1
        %v720 = vrot.slane %v447, 1
        %v721 = vrot.slane %v448, 1
        %v722 = vrot.slane %v449, 1
        %v723 = vrot.slane %v450, 1
        %v724 = vrot.slane %v451, 1
        %v725 = vrot.slane %v452, 1
        %v726 = vrot.slane %v453, 1
        %v727 = vrot.slane %v454, 1
        %v728 = vrot.slane %v455, 1
        %v729 = vrot.slane %v456, 1
        %v730 = vrot.slane %v457, 1
        %v731 = vrot.slane %v458, 1
        %v732 = vrot.slane %v459, 1
        %v733 = vrot.slane %v460, 1
        %v734 = vrot.slane %v461, 1
        %v735 = vrot.slane %v462, 1
        %v736 = vrot.slane %v463, 1
        %v737 = vrot.slane %v464, 1
        %v738 = vrot.slane %v465, 1
        %v739 = vrot.slane %v466, 1
        %v740 = vrot.slane %v467, 1
        %v741 = vrot.slane %v468, 1
        %v742 = vrot.slane %v469, 1
        %v743 = vrot.slane %v470, 1
        %v744 = vrot.slane %v471, 1
        %vm745 = vcmp.lt.s32.totalorder %v274, 7
        %v746 = vsel %vm745, %v743, %v744
        %v747 = vsel %vm745, %v742, %v743
        %v748 = vsel %vm745, %v741, %v742
        %v749 = vsel %vm745, %v740, %v741
        %v750 = vsel %vm745, %v739, %v740
        %v751 = vsel %vm745, %v738, %v739
        %v752 = vsel %vm745, %v737, %v738
        %v753 = vsel %vm745, %v736, %v737
        %v754 = vsel %vm745, %v735, %v736
        %v755 = vsel %vm745, %v734, %v735
        %v756 = vsel %vm745, %v733, %v734
        %v757 = vsel %vm745, %v732, %v733
        %v758 = vsel %vm745, %v731, %v732
        %v759 = vsel %vm745, %v730, %v731
        %v760 = vsel %vm745, %v729, %v730
        %v761 = vsel %vm745, %v728, %v729
        %v762 = vsel %vm745, %v727, %v728
        %v763 = vsel %vm745, %v726, %v727
        %v764 = vsel %vm745, %v725, %v726
        %v765 = vsel %vm745, %v724, %v725
        %v766 = vsel %vm745, %v723, %v724
        %v767 = vsel %vm745, %v722, %v723
        %v768 = vsel %vm745, %v721, %v722
        %v769 = vsel %vm745, %v720, %v721
        %v770 = vsel %vm745, %v719, %v720
        %v771 = vsel %vm745, %v718, %v719
        %v772 = vsel %vm745, %v717, %v718
        %v773 = vsel %vm745, %v716, %v717
        %v774 = vsel %vm745, %v715, %v716
        %v775 = vsel %vm745, %v714, %v715
        %v776 = vsel %vm745, %v713, %v714
        %v777 = vsel %vm745, %v744, %v713
        %v778 = vsel %vm370, %v776, 0.0
        %v779 = vsel %vm371, %v775, 0.0
        %v780 = vsel %vm372, %v774, 0.0
        %v781 = vsel %vm373, %v773, 0.0
        %v782 = vsel %vm374, %v772, 0.0
        %v783 = vsel %vm375, %v771, 0.0
        %v784 = vsel %vm376, %v770, 0.0
        %v785 = vsel %vm377, %v769, 0.0
        %v786 = vsel %vm378, %v768, 0.0
        %v787 = vsel %vm379, %v767, 0.0
        %v788 = vsel %vm380, %v766, 0.0
        %v789 = vsel %vm381, %v765, 0.0
        %v790 = vsel %vm382, %v764, 0.0
        %v791 = vsel %vm383, %v763, 0.0
        %v792 = vsel %vm384, %v762, 0.0
        %v793 = vsel %vm385, %v761, 0.0
        %v794 = vsel %vm386, %v760, 0.0
        %v795 = vsel %vm387, %v759, 0.0
        %v796 = vsel %vm388, %v758, 0.0
        %v797 = vsel %vm389, %v757, 0.0
        %v798 = vsel %vm390, %v756, 0.0
        %v799 = vsel %vm391, %v755, 0.0
        %v800 = vsel %vm392, %v754, 0.0
        %v801 = vsel %vm393, %v753, 0.0
        %v802 = vsel %vm394, %v752, 0.0
        %v803 = vsel %vm395, %v751, 0.0
        %v804 = vsel %vm396, %v750, 0.0
        %v805 = vsel %vm397, %v749, 0.0
        %v806 = vsel %vm398, %v748, 0.0
        %v807 = vsel %vm399, %v747, 0.0
        %v808 = vsel %vm400, %v746, 0.0
        %v809 = vsel %vm401, %v777, 0.0
        %v810 = vpack.c.bf16 %v779, %v778
        %v811 = vpack.c.bf16 %v781, %v780
        %v812 = vpack.c.bf16 %v783, %v782
        %v813 = vpack.c.bf16 %v785, %v784
        %v814 = vpack.c.bf16 %v787, %v786
        %v815 = vpack.c.bf16 %v789, %v788
        %v816 = vpack.c.bf16 %v791, %v790
        %v817 = vpack.c.bf16 %v793, %v792
        %v818 = vpack.c.bf16 %v795, %v794
        %v819 = vpack.c.bf16 %v797, %v796
        %v820 = vpack.c.bf16 %v799, %v798
        %v821 = vpack.c.bf16 %v801, %v800
        %v822 = vpack.c.bf16 %v803, %v802
        %v823 = vpack.c.bf16 %v805, %v804
        %v824 = vpack.c.bf16 %v807, %v806
        %v825 = vpack.c.bf16 %v809, %v808
        %826 = vst [vmem:[#allocation4 + $0x8] sm:$0xff] %v810
        %827 = vst [vmem:[#allocation4 + $0x10] sm:$0xff] %v811
        %828 = vst [vmem:[#allocation4 + $0x18] sm:$0xff] %v812
        %829 = vst [vmem:[#allocation4 + $0x20] sm:$0xff] %v813
        %830 = vst [vmem:[#allocation4 + $0x28] sm:$0xff] %v814
        %831 = vst [vmem:[#allocation4 + $0x30] sm:$0xff] %v815
        %832 = vst [vmem:[#allocation4 + $0x38] sm:$0xff] %v816
        %833 = vst [vmem:[#allocation4 + $0x40] sm:$0xff] %v817
        %834 = vst [vmem:[#allocation4 + $0x48] sm:$0xff] %v818
        %835 = vst [vmem:[#allocation4 + $0x50] sm:$0xff] %v819
        %836 = vst [vmem:[#allocation4 + $0x58] sm:$0xff] %v820
        %837 = vst [vmem:[#allocation4 + $0x60] sm:$0xff] %v821
        %838 = vst [vmem:[#allocation4 + $0x68] sm:$0xff] %v822
        %839 = vst [vmem:[#allocation4 + $0x70] sm:$0xff] %v823
        %840 = vst [vmem:[#allocation4 + $0x78] sm:$0xff] %v824
        %841 = vst [vmem:[#allocation4 + $0x80] sm:$0xff] %v825
        %v842 = vld [vmem:[#allocation3] sm:$0xff]
        %v843 = vld [vmem:[#allocation3 + $0x8] sm:$0xff]
        %v844 = vld [vmem:[#allocation3 + $0x10] sm:$0xff]
        %v845 = vld [vmem:[#allocation3 + $0x18] sm:$0xff]
        %v846 = vld [vmem:[#allocation3 + $0x20] sm:$0xff]
        %v847 = vld [vmem:[#allocation3 + $0x28] sm:$0xff]
        %v848 = vld [vmem:[#allocation3 + $0x30] sm:$0xff]
        %v849 = vld [vmem:[#allocation3 + $0x38] sm:$0xff]
        %v850 = vld [vmem:[#allocation3 + $0x40] sm:$0xff]
        %v851 = vld [vmem:[#allocation3 + $0x48] sm:$0xff]
        %v852 = vld [vmem:[#allocation3 + $0x50] sm:$0xff]
        %v853 = vld [vmem:[#allocation3 + $0x58] sm:$0xff]
        %v854 = vld [vmem:[#allocation3 + $0x60] sm:$0xff]
        %v855 = vld [vmem:[#allocation3 + $0x68] sm:$0xff]
        %v856 = vld [vmem:[#allocation3 + $0x70] sm:$0xff]
        %v857 = vld [vmem:[#allocation3 + $0x78] sm:$0xff]
        %v858 = vld [vmem:[#allocation8] sm:$0xf]
        %v859 = vld [vmem:[#allocation8 + $0x4] sm:$0xf]
        %v860 = vld [vmem:[#allocation8 + $0x8] sm:$0xf]
        %v861 = vld [vmem:[#allocation8 + $0xc] sm:$0xf]
        %v862 = vld [vmem:[#allocation8 + $0x10] sm:$0xf]
        %v863 = vld [vmem:[#allocation8 + $0x14] sm:$0xf]
        %v864 = vld [vmem:[#allocation8 + $0x18] sm:$0xf]
        %v865 = vld [vmem:[#allocation8 + $0x1c] sm:$0xf]
        %v866 = vld [vmem:[#allocation8 + $0x20] sm:$0xf]
        %v867 = vld [vmem:[#allocation8 + $0x24] sm:$0xf]
        %v868 = vld [vmem:[#allocation8 + $0x28] sm:$0xf]
        %v869 = vld [vmem:[#allocation8 + $0x2c] sm:$0xf]
        %v870 = vld [vmem:[#allocation8 + $0x30] sm:$0xf]
        %v871 = vld [vmem:[#allocation8 + $0x34] sm:$0xf]
        %v872 = vld [vmem:[#allocation8 + $0x38] sm:$0xf]
        %v873 = vld [vmem:[#allocation8 + $0x3c] sm:$0xf]
        %v874 = vld [vmem:[#allocation2] sm:$0xff]
        %v875 = vld [vmem:[#allocation2 + $0x8] sm:$0xff]
        %v876 = vld [vmem:[#allocation2 + $0x10] sm:$0xff]
        %v877 = vld [vmem:[#allocation2 + $0x18] sm:$0xff]
        %v878 = vld [vmem:[#allocation2 + $0x20] sm:$0xff]
        %v879 = vld [vmem:[#allocation2 + $0x28] sm:$0xff]
        %v880 = vld [vmem:[#allocation2 + $0x30] sm:$0xff]
        %v881 = vld [vmem:[#allocation2 + $0x38] sm:$0xff]
        %v882 = vld [vmem:[#allocation2 + $0x40] sm:$0xff]
        %v883 = vld [vmem:[#allocation2 + $0x48] sm:$0xff]
        %v884 = vld [vmem:[#allocation2 + $0x50] sm:$0xff]
        %v885 = vld [vmem:[#allocation2 + $0x58] sm:$0xff]
        %v886 = vld [vmem:[#allocation2 + $0x60] sm:$0xff]
        %v887 = vld [vmem:[#allocation2 + $0x68] sm:$0xff]
        %v888 = vld [vmem:[#allocation2 + $0x70] sm:$0xff]
        %v889 = vld [vmem:[#allocation2 + $0x78] sm:$0xff]
        %s890 = scalar_lea.vmem [#allocation8], 64
        %v891 = vld [vmem:[%s890] sm:$0xf]
        %v892 = vld [vmem:[%s890 + $0x4] sm:$0xf]
        %v893 = vld [vmem:[%s890 + $0x8] sm:$0xf]
        %v894 = vld [vmem:[%s890 + $0xc] sm:$0xf]
        %v895 = vld [vmem:[%s890 + $0x10] sm:$0xf]
        %v896 = vld [vmem:[%s890 + $0x14] sm:$0xf]
        %v897 = vld [vmem:[%s890 + $0x18] sm:$0xf]
        %v898 = vld [vmem:[%s890 + $0x1c] sm:$0xf]
        %v899 = vld [vmem:[%s890 + $0x20] sm:$0xf]
        %v900 = vld [vmem:[%s890 + $0x24] sm:$0xf]
        %v901 = vld [vmem:[%s890 + $0x28] sm:$0xf]
        %v902 = vld [vmem:[%s890 + $0x2c] sm:$0xf]
        %v903 = vld [vmem:[%s890 + $0x30] sm:$0xf]
        %v904 = vld [vmem:[%s890 + $0x34] sm:$0xf]
        %v905 = vld [vmem:[%s890 + $0x38] sm:$0xf]
        %v906 = vld [vmem:[%s890 + $0x3c] sm:$0xf]
        %v923 = vunpack.c.l.b16 %v891
        %v924 = vunpack.c.l.b16 %v892
        %v925 = vunpack.c.l.b16 %v893
        %v926 = vunpack.c.l.b16 %v894
        %v927 = vunpack.c.l.b16 %v895
        %v928 = vunpack.c.l.b16 %v896
        %v929 = vunpack.c.l.b16 %v897
        %v930 = vunpack.c.l.b16 %v898
        %v931 = vunpack.c.l.b16 %v899
        %v932 = vunpack.c.l.b16 %v900
        %v933 = vunpack.c.l.b16 %v901
        %v934 = vunpack.c.l.b16 %v902
        %v935 = vunpack.c.l.b16 %v903
        %v936 = vunpack.c.l.b16 %v904
        %v937 = vunpack.c.l.b16 %v905
        %v938 = vunpack.c.l.b16 %v906
        %v939 = vpack.c.b16 %v924, %v923
        %v940 = vpack.c.b16 %v926, %v925
        %v941 = vpack.c.b16 %v928, %v927
        %v942 = vpack.c.b16 %v930, %v929
        %v943 = vpack.c.b16 %v932, %v931
        %v944 = vpack.c.b16 %v934, %v933
        %v945 = vpack.c.b16 %v936, %v935
        %v946 = vpack.c.b16 %v938, %v937
        %955 = vmatprep.subr.bf16.mxu0 0
        %956 = vmatpush1.bf16.msra.mxu0 %v939
        %957 = vmatprep.subr.bf16.mxu0 0
        %958 = vmatpush1.bf16.msra.mxu0 %v940
        %959 = vmatprep.subr.bf16.mxu0 0
        %960 = vmatpush1.bf16.msra.mxu0 %v941
        %961 = vmatprep.subr.bf16.mxu0 0
        %962 = vmatpush1.bf16.msra.mxu0 %v942
        %963 = vmatprep.subr.bf16.mxu0 0
        %964 = vmatpush1.bf16.msra.mxu0 %v943
        %965 = vmatprep.subr.bf16.mxu0 0
        %966 = vmatpush1.bf16.msra.mxu0 %v944
        %967 = vmatprep.subr.bf16.mxu0 0
        %968 = vmatpush1.bf16.msra.mxu0 %v945
        %969 = vmatprep.subr.bf16.mxu0 0
        %970 = vmatpush1.bf16.msra.mxu0 %v946
        %971 = vmatprep.subr.bf16.mxu0 0
        %972 = vmatpush1.bf16.msra.mxu0 0
        %973 = vmatprep.subr.bf16.mxu0 0
        %974 = vmatpush1.bf16.msra.mxu0 0
        %975 = vmatprep.subr.bf16.mxu0 0
        %976 = vmatpush1.bf16.msra.mxu0 0
        %977 = vmatprep.subr.bf16.mxu0 0
        %978 = vmatpush1.bf16.msra.mxu0 0
        %979 = vmatprep.subr.bf16.mxu0 0
        %980 = vmatpush1.bf16.msra.mxu0 0
        %981 = vmatprep.subr.bf16.mxu0 0
        %982 = vmatpush1.bf16.msra.mxu0 0
        %983 = vmatprep.subr.bf16.mxu0 0
        %984 = vmatpush1.bf16.msra.mxu0 0
        %985 = vmatprep.subr.bf16.mxu0 0
        %986 = vmatpush1.bf16.msra.mxu0 0
        %987 = vmatprep.mubr.bf16.mxu0 0
        %988 = vmatmul.mubr.bf16.gmra.mrb[0].mxu0 %v874
        %v989 = vpop.f32.mrb[0].mxu0
        %v990 = vadd.f32 0.0, %v989
        %v991 = vpop.f32.mrb[0].mxu0
        %v992 = vpop.f32.mrb[0].mxu0
        %v993 = vadd.f32 0.0, %v992
        %v994 = vpop.f32.mrb[0].mxu0
        %995 = vmatprep.mubr.bf16.mxu0 0
        %996 = vmatmul.mubr.bf16.gmra.mrb[0].mxu0 %v875
        %v997 = vpop.f32.mrb[0].mxu0
        %v998 = vadd.f32 0.0, %v997
        %v999 = vpop.f32.mrb[0].mxu0
        %v1000 = vpop.f32.mrb[0].mxu0
        %v1001 = vadd.f32 0.0, %v1000
        %v1002 = vpop.f32.mrb[0].mxu0
        %1003 = vmatprep.mubr.bf16.mxu0 0
        %1004 = vmatmul.mubr.bf16.gmra.mrb[0].mxu0 %v876
        %v1005 = vpop.f32.mrb[0].mxu0
        %v1006 = vadd.f32 0.0, %v1005
        %v1007 = vpop.f32.mrb[0].mxu0
        %v1008 = vpop.f32.mrb[0].mxu0
        %v1009 = vadd.f32 0.0, %v1008
        %v1010 = vpop.f32.mrb[0].mxu0
        %1011 = vmatprep.mubr.bf16.mxu0 0
        %1012 = vmatmul.mubr.bf16.gmra.mrb[0].mxu0 %v877
        %v1013 = vpop.f32.mrb[0].mxu0
        %v1014 = vadd.f32 0.0, %v1013
        %v1015 = vpop.f32.mrb[0].mxu0
        %v1016 = vpop.f32.mrb[0].mxu0
        %v1017 = vadd.f32 0.0, %v1016
        %v1018 = vpop.f32.mrb[0].mxu0
        %1019 = vmatprep.mubr.bf16.mxu0 0
        %1020 = vmatmul.mubr.bf16.gmra.mrb[0].mxu0 %v878
        %v1021 = vpop.f32.mrb[0].mxu0
        %v1022 = vadd.f32 0.0, %v1021
        %v1023 = vpop.f32.mrb[0].mxu0
        %v1024 = vpop.f32.mrb[0].mxu0
        %v1025 = vadd.f32 0.0, %v1024
        %v1026 = vpop.f32.mrb[0].mxu0
        %1027 = vmatprep.mubr.bf16.mxu0 0
        %1028 = vmatmul.mubr.bf16.gmra.mrb[0].mxu0 %v879
        %v1029 = vpop.f32.mrb[0].mxu0
        %v1030 = vadd.f32 0.0, %v1029
        %v1031 = vpop.f32.mrb[0].mxu0
        %v1032 = vpop.f32.mrb[0].mxu0
        %v1033 = vadd.f32 0.0, %v1032
        %v1034 = vpop.f32.mrb[0].mxu0
        %1035 = vmatprep.mubr.bf16.mxu0 0
        %1036 = vmatmul.mubr.bf16.gmra.mrb[0].mxu0 %v880
        %v1037 = vpop.f32.mrb[0].mxu0
        %v1038 = vadd.f32 0.0, %v1037
        %v1039 = vpop.f32.mrb[0].mxu0
        %v1040 = vpop.f32.mrb[0].mxu0
        %v1041 = vadd.f32 0.0, %v1040
        %v1042 = vpop.f32.mrb[0].mxu0
        %1043 = vmatprep.mubr.bf16.mxu0 0
        %1044 = vmatmul.mubr.bf16.gmra.mrb[0].mxu0 %v881
        %v1045 = vpop.f32.mrb[0].mxu0
        %v1046 = vadd.f32 0.0, %v1045
        %v1047 = vpop.f32.mrb[0].mxu0
        %v1048 = vpop.f32.mrb[0].mxu0
        %v1049 = vadd.f32 0.0, %v1048
        %v1050 = vpop.f32.mrb[0].mxu0
        %1051 = vmatprep.mubr.bf16.mxu0 0
        %1052 = vmatmul.mubr.bf16.gmra.mrb[0].mxu0 %v882
        %v1053 = vpop.f32.mrb[0].mxu0
        %v1054 = vadd.f32 0.0, %v1053
        %v1055 = vpop.f32.mrb[0].mxu0
        %v1056 = vpop.f32.mrb[0].mxu0
        %v1057 = vadd.f32 0.0, %v1056
        %v1058 = vpop.f32.mrb[0].mxu0
        %1059 = vmatprep.mubr.bf16.mxu0 0
        %1060 = vmatmul.mubr.bf16.gmra.mrb[0].mxu0 %v883
        %v1061 = vpop.f32.mrb[0].mxu0
        %v1062 = vadd.f32 0.0, %v1061
        %v1063 = vpop.f32.mrb[0].mxu0
        %v1064 = vpop.f32.mrb[0].mxu0
        %v1065 = vadd.f32 0.0, %v1064
        %v1066 = vpop.f32.mrb[0].mxu0
        %1067 = vmatprep.mubr.bf16.mxu0 0
        %1068 = vmatmul.mubr.bf16.gmra.mrb[0].mxu0 %v884
        %v1069 = vpop.f32.mrb[0].mxu0
        %v1070 = vadd.f32 0.0, %v1069
        %v1071 = vpop.f32.mrb[0].mxu0
        %v1072 = vpop.f32.mrb[0].mxu0
        %v1073 = vadd.f32 0.0, %v1072
        %v1074 = vpop.f32.mrb[0].mxu0
        %1075 = vmatprep.mubr.bf16.mxu0 0
        %1076 = vmatmul.mubr.bf16.gmra.mrb[0].mxu0 %v885
        %v1077 = vpop.f32.mrb[0].mxu0
        %v1078 = vadd.f32 0.0, %v1077
        %v1079 = vpop.f32.mrb[0].mxu0
        %v1080 = vpop.f32.mrb[0].mxu0
        %v1081 = vadd.f32 0.0, %v1080
        %v1082 = vpop.f32.mrb[0].mxu0
        %1083 = vmatprep.mubr.bf16.mxu0 0
        %1084 = vmatmul.mubr.bf16.gmra.mrb[0].mxu0 %v886
        %v1085 = vpop.f32.mrb[0].mxu0
        %v1086 = vadd.f32 0.0, %v1085
        %v1087 = vpop.f32.mrb[0].mxu0
        %v1088 = vpop.f32.mrb[0].mxu0
        %v1089 = vadd.f32 0.0, %v1088
        %v1090 = vpop.f32.mrb[0].mxu0
        %1091 = vmatprep.mubr.bf16.mxu0 0
        %1092 = vmatmul.mubr.bf16.gmra.mrb[0].mxu0 %v887
        %v1093 = vpop.f32.mrb[0].mxu0
        %v1094 = vadd.f32 0.0, %v1093
        %v1095 = vpop.f32.mrb[0].mxu0
        %v1096 = vpop.f32.mrb[0].mxu0
        %v1097 = vadd.f32 0.0, %v1096
        %v1098 = vpop.f32.mrb[0].mxu0
        %1099 = vmatprep.mubr.bf16.mxu0 0
        %1100 = vmatmul.mubr.bf16.gmra.mrb[0].mxu0 %v888
        %v1101 = vpop.f32.mrb[0].mxu0
        %v1102 = vadd.f32 0.0, %v1101
        %v1103 = vpop.f32.mrb[0].mxu0
        %v1104 = vpop.f32.mrb[0].mxu0
        %v1105 = vadd.f32 0.0, %v1104
        %v1106 = vpop.f32.mrb[0].mxu0
        %1107 = vmatprep.mubr.bf16.mxu0 0
        %1108 = vmatmul.mubr.bf16.gmra.mrb[0].mxu0 %v889
        %v1109 = vpop.f32.mrb[0].mxu0
        %v1110 = vadd.f32 0.0, %v1109
        %v1111 = vpop.f32.mrb[0].mxu0
        %v1112 = vpop.f32.mrb[0].mxu0
        %v1113 = vadd.f32 0.0, %v1112
        %v1114 = vpop.f32.mrb[0].mxu0
        %1115 = vdwg.mxu0
        %v1132 = vunpack.c.l.b16 %v858
        %v1133 = vunpack.c.l.b16 %v859
        %v1134 = vunpack.c.l.b16 %v860
        %v1135 = vunpack.c.l.b16 %v861
        %v1136 = vunpack.c.l.b16 %v862
        %v1137 = vunpack.c.l.b16 %v863
        %v1138 = vunpack.c.l.b16 %v864
        %v1139 = vunpack.c.l.b16 %v865
        %v1140 = vunpack.c.l.b16 %v866
        %v1141 = vunpack.c.l.b16 %v867
        %v1142 = vunpack.c.l.b16 %v868
        %v1143 = vunpack.c.l.b16 %v869
        %v1144 = vunpack.c.l.b16 %v870
        %v1145 = vunpack.c.l.b16 %v871
        %v1146 = vunpack.c.l.b16 %v872
        %v1147 = vunpack.c.l.b16 %v873
        %v1148 = vpack.c.b16 %v1133, %v1132
        %v1149 = vpack.c.b16 %v1135, %v1134
        %v1150 = vpack.c.b16 %v1137, %v1136
        %v1151 = vpack.c.b16 %v1139, %v1138
        %v1152 = vpack.c.b16 %v1141, %v1140
        %v1153 = vpack.c.b16 %v1143, %v1142
        %v1154 = vpack.c.b16 %v1145, %v1144
        %v1155 = vpack.c.b16 %v1147, %v1146
        %1164 = vmatprep.subr.bf16.mxu0 0
        %1165 = vmatpush1.bf16.msra.mxu0 %v1148
        %1166 = vmatprep.subr.bf16.mxu0 0
        %1167 = vmatpush1.bf16.msra.mxu0 %v1149
        %1168 = vmatprep.subr.bf16.mxu0 0
        %1169 = vmatpush1.bf16.msra.mxu0 %v1150
        %1170 = vmatprep.subr.bf16.mxu0 0
        %1171 = vmatpush1.bf16.msra.mxu0 %v1151
        %1172 = vmatprep.subr.bf16.mxu0 0
        %1173 = vmatpush1.bf16.msra.mxu0 %v1152
        %1174 = vmatprep.subr.bf16.mxu0 0
        %1175 = vmatpush1.bf16.msra.mxu0 %v1153
        %1176 = vmatprep.subr.bf16.mxu0 0
        %1177 = vmatpush1.bf16.msra.mxu0 %v1154
        %1178 = vmatprep.subr.bf16.mxu0 0
        %1179 = vmatpush1.bf16.msra.mxu0 %v1155
        %1180 = vmatprep.subr.bf16.mxu0 0
        %1181 = vmatpush1.bf16.msra.mxu0 0
        %1182 = vmatprep.subr.bf16.mxu0 0
        %1183 = vmatpush1.bf16.msra.mxu0 0
        %1184 = vmatprep.subr.bf16.mxu0 0
        %1185 = vmatpush1.bf16.msra.mxu0 0
        %1186 = vmatprep.subr.bf16.mxu0 0
        %1187 = vmatpush1.bf16.msra.mxu0 0
        %1188 = vmatprep.subr.bf16.mxu0 0
        %1189 = vmatpush1.bf16.msra.mxu0 0
        %1190 = vmatprep.subr.bf16.mxu0 0
        %1191 = vmatpush1.bf16.msra.mxu0 0
        %1192 = vmatprep.subr.bf16.mxu0 0
        %1193 = vmatpush1.bf16.msra.mxu0 0
        %1194 = vmatprep.subr.bf16.mxu0 0
        %1195 = vmatpush1.bf16.msra.mxu0 0
        %1196 = vmatprep.mubr.bf16.mxu0 0
        %1197 = vmatmul.mubr.bf16.gmra.mrb[0].mxu0 %v842
        %v1198 = vpop.f32.mrb[0].mxu0
        %v1199 = vadd.f32 %v990, %v1198
        %v1200 = vpop.f32.mrb[0].mxu0
        %v1201 = vpop.f32.mrb[0].mxu0
        %v1202 = vadd.f32 %v993, %v1201
        %v1203 = vpop.f32.mrb[0].mxu0
        %1204 = vmatprep.mubr.bf16.mxu0 0
        %1205 = vmatmul.mubr.bf16.gmra.mrb[0].mxu0 %v843
        %v1206 = vpop.f32.mrb[0].mxu0
        %v1207 = vadd.f32 %v998, %v1206
        %v1208 = vpop.f32.mrb[0].mxu0
        %v1209 = vpop.f32.mrb[0].mxu0
        %v1210 = vadd.f32 %v1001, %v1209
        %v1211 = vpop.f32.mrb[0].mxu0
        %1212 = vmatprep.mubr.bf16.mxu0 0
        %1213 = vmatmul.mubr.bf16.gmra.mrb[0].mxu0 %v844
        %v1214 = vpop.f32.mrb[0].mxu0
        %v1215 = vadd.f32 %v1006, %v1214
        %v1216 = vpop.f32.mrb[0].mxu0
        %v1217 = vpop.f32.mrb[0].mxu0
        %v1218 = vadd.f32 %v1009, %v1217
        %v1219 = vpop.f32.mrb[0].mxu0
        %1220 = vmatprep.mubr.bf16.mxu0 0
        %1221 = vmatmul.mubr.bf16.gmra.mrb[0].mxu0 %v845
        %v1222 = vpop.f32.mrb[0].mxu0
        %v1223 = vadd.f32 %v1014, %v1222
        %v1224 = vpop.f32.mrb[0].mxu0
        %v1225 = vpop.f32.mrb[0].mxu0
        %v1226 = vadd.f32 %v1017, %v1225
        %v1227 = vpop.f32.mrb[0].mxu0
        %1228 = vmatprep.mubr.bf16.mxu0 0
        %1229 = vmatmul.mubr.bf16.gmra.mrb[0].mxu0 %v846
        %v1230 = vpop.f32.mrb[0].mxu0
        %v1231 = vadd.f32 %v1022, %v1230
        %v1232 = vpop.f32.mrb[0].mxu0
        %v1233 = vpop.f32.mrb[0].mxu0
        %v1234 = vadd.f32 %v1025, %v1233
        %v1235 = vpop.f32.mrb[0].mxu0
        %1236 = vmatprep.mubr.bf16.mxu0 0
        %1237 = vmatmul.mubr.bf16.gmra.mrb[0].mxu0 %v847
        %v1238 = vpop.f32.mrb[0].mxu0
        %v1239 = vadd.f32 %v1030, %v1238
        %v1240 = vpop.f32.mrb[0].mxu0
        %v1241 = vpop.f32.mrb[0].mxu0
        %v1242 = vadd.f32 %v1033, %v1241
        %v1243 = vpop.f32.mrb[0].mxu0
        %1244 = vmatprep.mubr.bf16.mxu0 0
        %1245 = vmatmul.mubr.bf16.gmra.mrb[0].mxu0 %v848
        %v1246 = vpop.f32.mrb[0].mxu0
        %v1247 = vadd.f32 %v1038, %v1246
        %v1248 = vpop.f32.mrb[0].mxu0
        %v1249 = vpop.f32.mrb[0].mxu0
        %v1250 = vadd.f32 %v1041, %v1249
        %v1251 = vpop.f32.mrb[0].mxu0
        %1252 = vmatprep.mubr.bf16.mxu0 0
        %1253 = vmatmul.mubr.bf16.gmra.mrb[0].mxu0 %v849
        %v1254 = vpop.f32.mrb[0].mxu0
        %v1255 = vadd.f32 %v1046, %v1254
        %v1256 = vpop.f32.mrb[0].mxu0
        %v1257 = vpop.f32.mrb[0].mxu0
        %v1258 = vadd.f32 %v1049, %v1257
        %v1259 = vpop.f32.mrb[0].mxu0
        %1260 = vmatprep.mubr.bf16.mxu0 0
        %1261 = vmatmul.mubr.bf16.gmra.mrb[0].mxu0 %v850
        %v1262 = vpop.f32.mrb[0].mxu0
        %v1263 = vadd.f32 %v1054, %v1262
        %v1264 = vpop.f32.mrb[0].mxu0
        %v1265 = vpop.f32.mrb[0].mxu0
        %v1266 = vadd.f32 %v1057, %v1265
        %v1267 = vpop.f32.mrb[0].mxu0
        %1268 = vmatprep.mubr.bf16.mxu0 0
        %1269 = vmatmul.mubr.bf16.gmra.mrb[0].mxu0 %v851
        %v1270 = vpop.f32.mrb[0].mxu0
        %v1271 = vadd.f32 %v1062, %v1270
        %v1272 = vpop.f32.mrb[0].mxu0
        %v1273 = vpop.f32.mrb[0].mxu0
        %v1274 = vadd.f32 %v1065, %v1273
        %v1275 = vpop.f32.mrb[0].mxu0
        %1276 = vmatprep.mubr.bf16.mxu0 0
        %1277 = vmatmul.mubr.bf16.gmra.mrb[0].mxu0 %v852
        %v1278 = vpop.f32.mrb[0].mxu0
        %v1279 = vadd.f32 %v1070, %v1278
        %v1280 = vpop.f32.mrb[0].mxu0
        %v1281 = vpop.f32.mrb[0].mxu0
        %v1282 = vadd.f32 %v1073, %v1281
        %v1283 = vpop.f32.mrb[0].mxu0
        %1284 = vmatprep.mubr.bf16.mxu0 0
        %1285 = vmatmul.mubr.bf16.gmra.mrb[0].mxu0 %v853
        %v1286 = vpop.f32.mrb[0].mxu0
        %v1287 = vadd.f32 %v1078, %v1286
        %v1288 = vpop.f32.mrb[0].mxu0
        %v1289 = vpop.f32.mrb[0].mxu0
        %v1290 = vadd.f32 %v1081, %v1289
        %v1291 = vpop.f32.mrb[0].mxu0
        %1292 = vmatprep.mubr.bf16.mxu0 0
        %1293 = vmatmul.mubr.bf16.gmra.mrb[0].mxu0 %v854
        %v1294 = vpop.f32.mrb[0].mxu0
        %v1295 = vadd.f32 %v1086, %v1294
        %v1296 = vpop.f32.mrb[0].mxu0
        %v1297 = vpop.f32.mrb[0].mxu0
        %v1298 = vadd.f32 %v1089, %v1297
        %v1299 = vpop.f32.mrb[0].mxu0
        %1300 = vmatprep.mubr.bf16.mxu0 0
        %1301 = vmatmul.mubr.bf16.gmra.mrb[0].mxu0 %v855
        %v1302 = vpop.f32.mrb[0].mxu0
        %v1303 = vadd.f32 %v1094, %v1302
        %v1304 = vpop.f32.mrb[0].mxu0
        %v1305 = vpop.f32.mrb[0].mxu0
        %v1306 = vadd.f32 %v1097, %v1305
        %v1307 = vpop.f32.mrb[0].mxu0
        %1308 = vmatprep.mubr.bf16.mxu0 0
        %1309 = vmatmul.mubr.bf16.gmra.mrb[0].mxu0 %v856
        %v1310 = vpop.f32.mrb[0].mxu0
        %v1311 = vadd.f32 %v1102, %v1310
        %v1312 = vpop.f32.mrb[0].mxu0
        %v1313 = vpop.f32.mrb[0].mxu0
        %v1314 = vadd.f32 %v1105, %v1313
        %v1315 = vpop.f32.mrb[0].mxu0
        %1316 = vmatprep.mubr.bf16.mxu0 0
        %1317 = vmatmul.mubr.bf16.gmra.mrb[0].mxu0 %v857
        %v1318 = vpop.f32.mrb[0].mxu0
        %v1319 = vadd.f32 %v1110, %v1318
        %v1320 = vpop.f32.mrb[0].mxu0
        %v1321 = vpop.f32.mrb[0].mxu0
        %v1322 = vadd.f32 %v1113, %v1321
        %v1323 = vpop.f32.mrb[0].mxu0
        %1324 = vdwg.mxu0
        %v1325 = vld [vmem:[#allocation4] sm:$0xff]
        %v1326 = vld [vmem:[#allocation4 + $0x8] sm:$0xff]
        %v1327 = vld [vmem:[#allocation4 + $0x10] sm:$0xff]
        %v1328 = vld [vmem:[#allocation4 + $0x18] sm:$0xff]
        %v1329 = vld [vmem:[#allocation4 + $0x20] sm:$0xff]
        %v1330 = vld [vmem:[#allocation4 + $0x28] sm:$0xff]
        %v1331 = vld [vmem:[#allocation4 + $0x30] sm:$0xff]
        %v1332 = vld [vmem:[#allocation4 + $0x38] sm:$0xff]
        %v1333 = vld [vmem:[#allocation4 + $0x40] sm:$0xff]
        %v1334 = vld [vmem:[#allocation4 + $0x48] sm:$0xff]
        %v1335 = vld [vmem:[#allocation4 + $0x50] sm:$0xff]
        %v1336 = vld [vmem:[#allocation4 + $0x58] sm:$0xff]
        %v1337 = vld [vmem:[#allocation4 + $0x60] sm:$0xff]
        %v1338 = vld [vmem:[#allocation4 + $0x68] sm:$0xff]
        %v1339 = vld [vmem:[#allocation4 + $0x70] sm:$0xff]
        %v1340 = vld [vmem:[#allocation4 + $0x78] sm:$0xff]
        %s1341 = scalar_lea.vmem [#allocation8], 128
        %v1342 = vld [vmem:[%s1341] sm:$0xf]
        %v1343 = vld [vmem:[%s1341 + $0x4] sm:$0xf]
        %v1344 = vld [vmem:[%s1341 + $0x8] sm:$0xf]
        %v1345 = vld [vmem:[%s1341 + $0xc] sm:$0xf]
        %v1346 = vld [vmem:[%s1341 + $0x10] sm:$0xf]
        %v1347 = vld [vmem:[%s1341 + $0x14] sm:$0xf]
        %v1348 = vld [vmem:[%s1341 + $0x18] sm:$0xf]
        %v1349 = vld [vmem:[%s1341 + $0x1c] sm:$0xf]
        %v1350 = vld [vmem:[%s1341 + $0x20] sm:$0xf]
        %v1351 = vld [vmem:[%s1341 + $0x24] sm:$0xf]
        %v1352 = vld [vmem:[%s1341 + $0x28] sm:$0xf]
        %v1353 = vld [vmem:[%s1341 + $0x2c] sm:$0xf]
        %v1354 = vld [vmem:[%s1341 + $0x30] sm:$0xf]
        %v1355 = vld [vmem:[%s1341 + $0x34] sm:$0xf]
        %v1356 = vld [vmem:[%s1341 + $0x38] sm:$0xf]
        %v1357 = vld [vmem:[%s1341 + $0x3c] sm:$0xf]
        %v1374 = vunpack.c.l.b16 %v1342
        %v1375 = vunpack.c.l.b16 %v1343
        %v1376 = vunpack.c.l.b16 %v1344
        %v1377 = vunpack.c.l.b16 %v1345
        %v1378 = vunpack.c.l.b16 %v1346
        %v1379 = vunpack.c.l.b16 %v1347
        %v1380 = vunpack.c.l.b16 %v1348
        %v1381 = vunpack.c.l.b16 %v1349
        %v1382 = vunpack.c.l.b16 %v1350
        %v1383 = vunpack.c.l.b16 %v1351
        %v1384 = vunpack.c.l.b16 %v1352
        %v1385 = vunpack.c.l.b16 %v1353
        %v1386 = vunpack.c.l.b16 %v1354
        %v1387 = vunpack.c.l.b16 %v1355
        %v1388 = vunpack.c.l.b16 %v1356
        %v1389 = vunpack.c.l.b16 %v1357
        %v1390 = vpack.c.b16 %v1375, %v1374
        %v1391 = vpack.c.b16 %v1377, %v1376
        %v1392 = vpack.c.b16 %v1379, %v1378
        %v1393 = vpack.c.b16 %v1381, %v1380
        %v1394 = vpack.c.b16 %v1383, %v1382
        %v1395 = vpack.c.b16 %v1385, %v1384
        %v1396 = vpack.c.b16 %v1387, %v1386
        %v1397 = vpack.c.b16 %v1389, %v1388
        %1406 = vmatprep.subr.bf16.mxu0 0
        %1407 = vmatpush1.bf16.msra.mxu0 %v1390
        %1408 = vmatprep.subr.bf16.mxu0 0
        %1409 = vmatpush1.bf16.msra.mxu0 %v1391
        %1410 = vmatprep.subr.bf16.mxu0 0
        %1411 = vmatpush1.bf16.msra.mxu0 %v1392
        %1412 = vmatprep.subr.bf16.mxu0 0
        %1413 = vmatpush1.bf16.msra.mxu0 %v1393
        %1414 = vmatprep.subr.bf16.mxu0 0
        %1415 = vmatpush1.bf16.msra.mxu0 %v1394
        %1416 = vmatprep.subr.bf16.mxu0 0
        %1417 = vmatpush1.bf16.msra.mxu0 %v1395
        %1418 = vmatprep.subr.bf16.mxu0 0
        %1419 = vmatpush1.bf16.msra.mxu0 %v1396
        %1420 = vmatprep.subr.bf16.mxu0 0
        %1421 = vmatpush1.bf16.msra.mxu0 %v1397
        %1422 = vmatprep.subr.bf16.mxu0 0
        %1423 = vmatpush1.bf16.msra.mxu0 0
        %1424 = vmatprep.subr.bf16.mxu0 0
        %1425 = vmatpush1.bf16.msra.mxu0 0
        %1426 = vmatprep.subr.bf16.mxu0 0
        %1427 = vmatpush1.bf16.msra.mxu0 0
        %1428 = vmatprep.subr.bf16.mxu0 0
        %1429 = vmatpush1.bf16.msra.mxu0 0
        %1430 = vmatprep.subr.bf16.mxu0 0
        %1431 = vmatpush1.bf16.msra.mxu0 0
        %1432 = vmatprep.subr.bf16.mxu0 0
        %1433 = vmatpush1.bf16.msra.mxu0 0
        %1434 = vmatprep.subr.bf16.mxu0 0
        %1435 = vmatpush1.bf16.msra.mxu0 0
        %1436 = vmatprep.subr.bf16.mxu0 0
        %1437 = vmatpush1.bf16.msra.mxu0 0
        %1438 = vmatprep.mubr.bf16.mxu0 0
        %1439 = vmatmul.mubr.bf16.gmra.mrb[0].mxu0 %v1325
        %v1440 = vpop.f32.mrb[0].mxu0
        %v1441 = vadd.f32 0.0, %v1440
        %v1442 = vpop.f32.mrb[0].mxu0
        %v1443 = vpop.f32.mrb[0].mxu0
        %v1444 = vadd.f32 0.0, %v1443
        %v1445 = vpop.f32.mrb[0].mxu0
        %1446 = vmatprep.mubr.bf16.mxu0 0
        %1447 = vmatmul.mubr.bf16.gmra.mrb[0].mxu0 %v1326
        %v1448 = vpop.f32.mrb[0].mxu0
        %v1449 = vadd.f32 0.0, %v1448
        %v1450 = vpop.f32.mrb[0].mxu0
        %v1451 = vpop.f32.mrb[0].mxu0
        %v1452 = vadd.f32 0.0, %v1451
        %v1453 = vpop.f32.mrb[0].mxu0
        %1454 = vmatprep.mubr.bf16.mxu0 0
        %1455 = vmatmul.mubr.bf16.gmra.mrb[0].mxu0 %v1327
        %v1456 = vpop.f32.mrb[0].mxu0
        %v1457 = vadd.f32 0.0, %v1456
        %v1458 = vpop.f32.mrb[0].mxu0
        %v1459 = vpop.f32.mrb[0].mxu0
        %v1460 = vadd.f32 0.0, %v1459
        %v1461 = vpop.f32.mrb[0].mxu0
        %1462 = vmatprep.mubr.bf16.mxu0 0
        %1463 = vmatmul.mubr.bf16.gmra.mrb[0].mxu0 %v1328
        %v1464 = vpop.f32.mrb[0].mxu0
        %v1465 = vadd.f32 0.0, %v1464
        %v1466 = vpop.f32.mrb[0].mxu0
        %v1467 = vpop.f32.mrb[0].mxu0
        %v1468 = vadd.f32 0.0, %v1467
        %v1469 = vpop.f32.mrb[0].mxu0
        %1470 = vmatprep.mubr.bf16.mxu0 0
        %1471 = vmatmul.mubr.bf16.gmra.mrb[0].mxu0 %v1329
        %v1472 = vpop.f32.mrb[0].mxu0
        %v1473 = vadd.f32 0.0, %v1472
        %v1474 = vpop.f32.mrb[0].mxu0
        %v1475 = vpop.f32.mrb[0].mxu0
        %v1476 = vadd.f32 0.0, %v1475
        %v1477 = vpop.f32.mrb[0].mxu0
        %1478 = vmatprep.mubr.bf16.mxu0 0
        %1479 = vmatmul.mubr.bf16.gmra.mrb[0].mxu0 %v1330
        %v1480 = vpop.f32.mrb[0].mxu0
        %v1481 = vadd.f32 0.0, %v1480
        %v1482 = vpop.f32.mrb[0].mxu0
        %v1483 = vpop.f32.mrb[0].mxu0
        %v1484 = vadd.f32 0.0, %v1483
        %v1485 = vpop.f32.mrb[0].mxu0
        %1486 = vmatprep.mubr.bf16.mxu0 0
        %1487 = vmatmul.mubr.bf16.gmra.mrb[0].mxu0 %v1331
        %v1488 = vpop.f32.mrb[0].mxu0
        %v1489 = vadd.f32 0.0, %v1488
        %v1490 = vpop.f32.mrb[0].mxu0
        %v1491 = vpop.f32.mrb[0].mxu0
        %v1492 = vadd.f32 0.0, %v1491
        %v1493 = vpop.f32.mrb[0].mxu0
        %1494 = vmatprep.mubr.bf16.mxu0 0
        %1495 = vmatmul.mubr.bf16.gmra.mrb[0].mxu0 %v1332
        %v1496 = vpop.f32.mrb[0].mxu0
        %v1497 = vadd.f32 0.0, %v1496
        %v1498 = vpop.f32.mrb[0].mxu0
        %v1499 = vpop.f32.mrb[0].mxu0
        %v1500 = vadd.f32 0.0, %v1499
        %v1501 = vpop.f32.mrb[0].mxu0
        %1502 = vmatprep.mubr.bf16.mxu0 0
        %1503 = vmatmul.mubr.bf16.gmra.mrb[0].mxu0 %v1333
        %v1504 = vpop.f32.mrb[0].mxu0
        %v1505 = vadd.f32 0.0, %v1504
        %v1506 = vpop.f32.mrb[0].mxu0
        %v1507 = vpop.f32.mrb[0].mxu0
        %v1508 = vadd.f32 0.0, %v1507
        %v1509 = vpop.f32.mrb[0].mxu0
        %1510 = vmatprep.mubr.bf16.mxu0 0
        %1511 = vmatmul.mubr.bf16.gmra.mrb[0].mxu0 %v1334
        %v1512 = vpop.f32.mrb[0].mxu0
        %v1513 = vadd.f32 0.0, %v1512
        %v1514 = vpop.f32.mrb[0].mxu0
        %v1515 = vpop.f32.mrb[0].mxu0
        %v1516 = vadd.f32 0.0, %v1515
        %v1517 = vpop.f32.mrb[0].mxu0
        %1518 = vmatprep.mubr.bf16.mxu0 0
        %1519 = vmatmul.mubr.bf16.gmra.mrb[0].mxu0 %v1335
        %v1520 = vpop.f32.mrb[0].mxu0
        %v1521 = vadd.f32 0.0, %v1520
        %v1522 = vpop.f32.mrb[0].mxu0
        %v1523 = vpop.f32.mrb[0].mxu0
        %v1524 = vadd.f32 0.0, %v1523
        %v1525 = vpop.f32.mrb[0].mxu0
        %1526 = vmatprep.mubr.bf16.mxu0 0
        %1527 = vmatmul.mubr.bf16.gmra.mrb[0].mxu0 %v1336
        %v1528 = vpop.f32.mrb[0].mxu0
        %v1529 = vadd.f32 0.0, %v1528
        %v1530 = vpop.f32.mrb[0].mxu0
        %v1531 = vpop.f32.mrb[0].mxu0
        %v1532 = vadd.f32 0.0, %v1531
        %v1533 = vpop.f32.mrb[0].mxu0
        %1534 = vmatprep.mubr.bf16.mxu0 0
        %1535 = vmatmul.mubr.bf16.gmra.mrb[0].mxu0 %v1337
        %v1536 = vpop.f32.mrb[0].mxu0
        %v1537 = vadd.f32 0.0, %v1536
        %v1538 = vpop.f32.mrb[0].mxu0
        %v1539 = vpop.f32.mrb[0].mxu0
        %v1540 = vadd.f32 0.0, %v1539
        %v1541 = vpop.f32.mrb[0].mxu0
        %1542 = vmatprep.mubr.bf16.mxu0 0
        %1543 = vmatmul.mubr.bf16.gmra.mrb[0].mxu0 %v1338
        %v1544 = vpop.f32.mrb[0].mxu0
        %v1545 = vadd.f32 0.0, %v1544
        %v1546 = vpop.f32.mrb[0].mxu0
        %v1547 = vpop.f32.mrb[0].mxu0
        %v1548 = vadd.f32 0.0, %v1547
        %v1549 = vpop.f32.mrb[0].mxu0
        %1550 = vmatprep.mubr.bf16.mxu0 0
        %1551 = vmatmul.mubr.bf16.gmra.mrb[0].mxu0 %v1339
        %v1552 = vpop.f32.mrb[0].mxu0
        %v1553 = vadd.f32 0.0, %v1552
        %v1554 = vpop.f32.mrb[0].mxu0
        %v1555 = vpop.f32.mrb[0].mxu0
        %v1556 = vadd.f32 0.0, %v1555
        %v1557 = vpop.f32.mrb[0].mxu0
        %1558 = vmatprep.mubr.bf16.mxu0 0
        %1559 = vmatmul.mubr.bf16.gmra.mrb[0].mxu0 %v1340
        %v1560 = vpop.f32.mrb[0].mxu0
        %v1561 = vadd.f32 0.0, %v1560
        %v1562 = vpop.f32.mrb[0].mxu0
        %v1563 = vpop.f32.mrb[0].mxu0
        %v1564 = vadd.f32 0.0, %v1563
        %v1565 = vpop.f32.mrb[0].mxu0
        %1566 = vdwg.mxu0
        %v1567 = vadd.f32 %v1199, %v1441
        %v1568 = vadd.f32 %v1202, %v1444
        %v1569 = vadd.f32 %v1207, %v1449
        %v1570 = vadd.f32 %v1210, %v1452
        %v1571 = vadd.f32 %v1215, %v1457
        %v1572 = vadd.f32 %v1218, %v1460
        %v1573 = vadd.f32 %v1223, %v1465
        %v1574 = vadd.f32 %v1226, %v1468
        %v1575 = vadd.f32 %v1231, %v1473
        %v1576 = vadd.f32 %v1234, %v1476
        %v1577 = vadd.f32 %v1239, %v1481
        %v1578 = vadd.f32 %v1242, %v1484
        %v1579 = vadd.f32 %v1247, %v1489
        %v1580 = vadd.f32 %v1250, %v1492
        %v1581 = vadd.f32 %v1255, %v1497
        %v1582 = vadd.f32 %v1258, %v1500
        %v1583 = vadd.f32 %v1263, %v1505
        %v1584 = vadd.f32 %v1266, %v1508
        %v1585 = vadd.f32 %v1271, %v1513
        %v1586 = vadd.f32 %v1274, %v1516
        %v1587 = vadd.f32 %v1279, %v1521
        %v1588 = vadd.f32 %v1282, %v1524
        %v1589 = vadd.f32 %v1287, %v1529
        %v1590 = vadd.f32 %v1290, %v1532
        %v1591 = vadd.f32 %v1295, %v1537
        %v1592 = vadd.f32 %v1298, %v1540
        %v1593 = vadd.f32 %v1303, %v1545
        %v1594 = vadd.f32 %v1306, %v1548
        %v1595 = vadd.f32 %v1311, %v1553
        %v1596 = vadd.f32 %v1314, %v1556
        %v1597 = vadd.f32 %v1319, %v1561
        %v1598 = vadd.f32 %v1322, %v1564
        %v1599 = vld [vmem:[#allocation3 + $0x8] sm:$0xff]
        %v1600 = vld [vmem:[#allocation3 + $0x10] sm:$0xff]
        %v1601 = vld [vmem:[#allocation3 + $0x18] sm:$0xff]
        %v1602 = vld [vmem:[#allocation3 + $0x20] sm:$0xff]
        %v1603 = vld [vmem:[#allocation3 + $0x28] sm:$0xff]
        %v1604 = vld [vmem:[#allocation3 + $0x30] sm:$0xff]
        %v1605 = vld [vmem:[#allocation3 + $0x38] sm:$0xff]
        %v1606 = vld [vmem:[#allocation3 + $0x40] sm:$0xff]
        %v1607 = vld [vmem:[#allocation3 + $0x48] sm:$0xff]
        %v1608 = vld [vmem:[#allocation3 + $0x50] sm:$0xff]
        %v1609 = vld [vmem:[#allocation3 + $0x58] sm:$0xff]
        %v1610 = vld [vmem:[#allocation3 + $0x60] sm:$0xff]
        %v1611 = vld [vmem:[#allocation3 + $0x68] sm:$0xff]
        %v1612 = vld [vmem:[#allocation3 + $0x70] sm:$0xff]
        %v1613 = vld [vmem:[#allocation3 + $0x78] sm:$0xff]
        %v1614 = vld [vmem:[#allocation3 + $0x80] sm:$0xff]
        %s1615 = scalar_lea.vmem [#allocation8], 192
        %v1616 = vld [vmem:[%s1615] sm:$0xf]
        %v1617 = vld [vmem:[%s1615 + $0x4] sm:$0xf]
        %v1618 = vld [vmem:[%s1615 + $0x8] sm:$0xf]
        %v1619 = vld [vmem:[%s1615 + $0xc] sm:$0xf]
        %v1620 = vld [vmem:[%s1615 + $0x10] sm:$0xf]
        %v1621 = vld [vmem:[%s1615 + $0x14] sm:$0xf]
        %v1622 = vld [vmem:[%s1615 + $0x18] sm:$0xf]
        %v1623 = vld [vmem:[%s1615 + $0x1c] sm:$0xf]
        %v1624 = vld [vmem:[%s1615 + $0x20] sm:$0xf]
        %v1625 = vld [vmem:[%s1615 + $0x24] sm:$0xf]
        %v1626 = vld [vmem:[%s1615 + $0x28] sm:$0xf]
        %v1627 = vld [vmem:[%s1615 + $0x2c] sm:$0xf]
        %v1628 = vld [vmem:[%s1615 + $0x30] sm:$0xf]
        %v1629 = vld [vmem:[%s1615 + $0x34] sm:$0xf]
        %v1630 = vld [vmem:[%s1615 + $0x38] sm:$0xf]
        %v1631 = vld [vmem:[%s1615 + $0x3c] sm:$0xf]
        %v1648 = vunpack.c.l.b16 %v1616
        %v1649 = vunpack.c.l.b16 %v1617
        %v1650 = vunpack.c.l.b16 %v1618
        %v1651 = vunpack.c.l.b16 %v1619
        %v1652 = vunpack.c.l.b16 %v1620
        %v1653 = vunpack.c.l.b16 %v1621
        %v1654 = vunpack.c.l.b16 %v1622
        %v1655 = vunpack.c.l.b16 %v1623
        %v1656 = vunpack.c.l.b16 %v1624
        %v1657 = vunpack.c.l.b16 %v1625
        %v1658 = vunpack.c.l.b16 %v1626
        %v1659 = vunpack.c.l.b16 %v1627
        %v1660 = vunpack.c.l.b16 %v1628
        %v1661 = vunpack.c.l.b16 %v1629
        %v1662 = vunpack.c.l.b16 %v1630
        %v1663 = vunpack.c.l.b16 %v1631
        %v1664 = vpack.c.b16 %v1649, %v1648
        %v1665 = vpack.c.b16 %v1651, %v1650
        %v1666 = vpack.c.b16 %v1653, %v1652
        %v1667 = vpack.c.b16 %v1655, %v1654
        %v1668 = vpack.c.b16 %v1657, %v1656
        %v1669 = vpack.c.b16 %v1659, %v1658
        %v1670 = vpack.c.b16 %v1661, %v1660
        %v1671 = vpack.c.b16 %v1663, %v1662
        %1680 = vmatprep.subr.bf16.mxu0 0
        %1681 = vmatpush1.bf16.msra.mxu0 %v1664
        %1682 = vmatprep.subr.bf16.mxu0 0
        %1683 = vmatpush1.bf16.msra.mxu0 %v1665
        %1684 = vmatprep.subr.bf16.mxu0 0
        %1685 = vmatpush1.bf16.msra.mxu0 %v1666
        %1686 = vmatprep.subr.bf16.mxu0 0
        %1687 = vmatpush1.bf16.msra.mxu0 %v1667
        %1688 = vmatprep.subr.bf16.mxu0 0
        %1689 = vmatpush1.bf16.msra.mxu0 %v1668
        %1690 = vmatprep.subr.bf16.mxu0 0
        %1691 = vmatpush1.bf16.msra.mxu0 %v1669
        %1692 = vmatprep.subr.bf16.mxu0 0
        %1693 = vmatpush1.bf16.msra.mxu0 %v1670
        %1694 = vmatprep.subr.bf16.mxu0 0
        %1695 = vmatpush1.bf16.msra.mxu0 %v1671
        %1696 = vmatprep.subr.bf16.mxu0 0
        %1697 = vmatpush1.bf16.msra.mxu0 0
        %1698 = vmatprep.subr.bf16.mxu0 0
        %1699 = vmatpush1.bf16.msra.mxu0 0
        %1700 = vmatprep.subr.bf16.mxu0 0
        %1701 = vmatpush1.bf16.msra.mxu0 0
        %1702 = vmatprep.subr.bf16.mxu0 0
        %1703 = vmatpush1.bf16.msra.mxu0 0
        %1704 = vmatprep.subr.bf16.mxu0 0
        %1705 = vmatpush1.bf16.msra.mxu0 0
        %1706 = vmatprep.subr.bf16.mxu0 0
        %1707 = vmatpush1.bf16.msra.mxu0 0
        %1708 = vmatprep.subr.bf16.mxu0 0
        %1709 = vmatpush1.bf16.msra.mxu0 0
        %1710 = vmatprep.subr.bf16.mxu0 0
        %1711 = vmatpush1.bf16.msra.mxu0 0
        %1712 = vmatprep.mubr.bf16.mxu0 0
        %1713 = vmatmul.mubr.bf16.gmra.mrb[0].mxu0 %v1599
        %v1714 = vpop.f32.mrb[0].mxu0
        %v1715 = vadd.f32 0.0, %v1714
        %v1716 = vpop.f32.mrb[0].mxu0
        %v1717 = vpop.f32.mrb[0].mxu0
        %v1718 = vadd.f32 0.0, %v1717
        %v1719 = vpop.f32.mrb[0].mxu0
        %1720 = vmatprep.mubr.bf16.mxu0 0
        %1721 = vmatmul.mubr.bf16.gmra.mrb[0].mxu0 %v1600
        %v1722 = vpop.f32.mrb[0].mxu0
        %v1723 = vadd.f32 0.0, %v1722
        %v1724 = vpop.f32.mrb[0].mxu0
        %v1725 = vpop.f32.mrb[0].mxu0
        %v1726 = vadd.f32 0.0, %v1725
        %v1727 = vpop.f32.mrb[0].mxu0
        %1728 = vmatprep.mubr.bf16.mxu0 0
        %1729 = vmatmul.mubr.bf16.gmra.mrb[0].mxu0 %v1601
        %v1730 = vpop.f32.mrb[0].mxu0
        %v1731 = vadd.f32 0.0, %v1730
        %v1732 = vpop.f32.mrb[0].mxu0
        %v1733 = vpop.f32.mrb[0].mxu0
        %v1734 = vadd.f32 0.0, %v1733
        %v1735 = vpop.f32.mrb[0].mxu0
        %1736 = vmatprep.mubr.bf16.mxu0 0
        %1737 = vmatmul.mubr.bf16.gmra.mrb[0].mxu0 %v1602
        %v1738 = vpop.f32.mrb[0].mxu0
        %v1739 = vadd.f32 0.0, %v1738
        %v1740 = vpop.f32.mrb[0].mxu0
        %v1741 = vpop.f32.mrb[0].mxu0
        %v1742 = vadd.f32 0.0, %v1741
        %v1743 = vpop.f32.mrb[0].mxu0
        %1744 = vmatprep.mubr.bf16.mxu0 0
        %1745 = vmatmul.mubr.bf16.gmra.mrb[0].mxu0 %v1603
        %v1746 = vpop.f32.mrb[0].mxu0
        %v1747 = vadd.f32 0.0, %v1746
        %v1748 = vpop.f32.mrb[0].mxu0
        %v1749 = vpop.f32.mrb[0].mxu0
        %v1750 = vadd.f32 0.0, %v1749
        %v1751 = vpop.f32.mrb[0].mxu0
        %1752 = vmatprep.mubr.bf16.mxu0 0
        %1753 = vmatmul.mubr.bf16.gmra.mrb[0].mxu0 %v1604
        %v1754 = vpop.f32.mrb[0].mxu0
        %v1755 = vadd.f32 0.0, %v1754
        %v1756 = vpop.f32.mrb[0].mxu0
        %v1757 = vpop.f32.mrb[0].mxu0
        %v1758 = vadd.f32 0.0, %v1757
        %v1759 = vpop.f32.mrb[0].mxu0
        %1760 = vmatprep.mubr.bf16.mxu0 0
        %1761 = vmatmul.mubr.bf16.gmra.mrb[0].mxu0 %v1605
        %v1762 = vpop.f32.mrb[0].mxu0
        %v1763 = vadd.f32 0.0, %v1762
        %v1764 = vpop.f32.mrb[0].mxu0
        %v1765 = vpop.f32.mrb[0].mxu0
        %v1766 = vadd.f32 0.0, %v1765
        %v1767 = vpop.f32.mrb[0].mxu0
        %1768 = vmatprep.mubr.bf16.mxu0 0
        %1769 = vmatmul.mubr.bf16.gmra.mrb[0].mxu0 %v1606
        %v1770 = vpop.f32.mrb[0].mxu0
        %v1771 = vadd.f32 0.0, %v1770
        %v1772 = vpop.f32.mrb[0].mxu0
        %v1773 = vpop.f32.mrb[0].mxu0
        %v1774 = vadd.f32 0.0, %v1773
        %v1775 = vpop.f32.mrb[0].mxu0
        %1776 = vmatprep.mubr.bf16.mxu0 0
        %1777 = vmatmul.mubr.bf16.gmra.mrb[0].mxu0 %v1607
        %v1778 = vpop.f32.mrb[0].mxu0
        %v1779 = vadd.f32 0.0, %v1778
        %v1780 = vpop.f32.mrb[0].mxu0
        %v1781 = vpop.f32.mrb[0].mxu0
        %v1782 = vadd.f32 0.0, %v1781
        %v1783 = vpop.f32.mrb[0].mxu0
        %1784 = vmatprep.mubr.bf16.mxu0 0
        %1785 = vmatmul.mubr.bf16.gmra.mrb[0].mxu0 %v1608
        %v1786 = vpop.f32.mrb[0].mxu0
        %v1787 = vadd.f32 0.0, %v1786
        %v1788 = vpop.f32.mrb[0].mxu0
        %v1789 = vpop.f32.mrb[0].mxu0
        %v1790 = vadd.f32 0.0, %v1789
        %v1791 = vpop.f32.mrb[0].mxu0
        %1792 = vmatprep.mubr.bf16.mxu0 0
        %1793 = vmatmul.mubr.bf16.gmra.mrb[0].mxu0 %v1609
        %v1794 = vpop.f32.mrb[0].mxu0
        %v1795 = vadd.f32 0.0, %v1794
        %v1796 = vpop.f32.mrb[0].mxu0
        %v1797 = vpop.f32.mrb[0].mxu0
        %v1798 = vadd.f32 0.0, %v1797
        %v1799 = vpop.f32.mrb[0].mxu0
        %1800 = vmatprep.mubr.bf16.mxu0 0
        %1801 = vmatmul.mubr.bf16.gmra.mrb[0].mxu0 %v1610
        %v1802 = vpop.f32.mrb[0].mxu0
        %v1803 = vadd.f32 0.0, %v1802
        %v1804 = vpop.f32.mrb[0].mxu0
        %v1805 = vpop.f32.mrb[0].mxu0
        %v1806 = vadd.f32 0.0, %v1805
        %v1807 = vpop.f32.mrb[0].mxu0
        %1808 = vmatprep.mubr.bf16.mxu0 0
        %1809 = vmatmul.mubr.bf16.gmra.mrb[0].mxu0 %v1611
        %v1810 = vpop.f32.mrb[0].mxu0
        %v1811 = vadd.f32 0.0, %v1810
        %v1812 = vpop.f32.mrb[0].mxu0
        %v1813 = vpop.f32.mrb[0].mxu0
        %v1814 = vadd.f32 0.0, %v1813
        %v1815 = vpop.f32.mrb[0].mxu0
        %1816 = vmatprep.mubr.bf16.mxu0 0
        %1817 = vmatmul.mubr.bf16.gmra.mrb[0].mxu0 %v1612
        %v1818 = vpop.f32.mrb[0].mxu0
        %v1819 = vadd.f32 0.0, %v1818
        %v1820 = vpop.f32.mrb[0].mxu0
        %v1821 = vpop.f32.mrb[0].mxu0
        %v1822 = vadd.f32 0.0, %v1821
        %v1823 = vpop.f32.mrb[0].mxu0
        %1824 = vmatprep.mubr.bf16.mxu0 0
        %1825 = vmatmul.mubr.bf16.gmra.mrb[0].mxu0 %v1613
        %v1826 = vpop.f32.mrb[0].mxu0
        %v1827 = vadd.f32 0.0, %v1826
        %v1828 = vpop.f32.mrb[0].mxu0
        %v1829 = vpop.f32.mrb[0].mxu0
        %v1830 = vadd.f32 0.0, %v1829
        %v1831 = vpop.f32.mrb[0].mxu0
        %1832 = vmatprep.mubr.bf16.mxu0 0
        %1833 = vmatmul.mubr.bf16.gmra.mrb[0].mxu0 %v1614
        %v1834 = vpop.f32.mrb[0].mxu0
        %v1835 = vadd.f32 0.0, %v1834
        %v1836 = vpop.f32.mrb[0].mxu0
        %v1837 = vpop.f32.mrb[0].mxu0
        %v1838 = vadd.f32 0.0, %v1837
        %v1839 = vpop.f32.mrb[0].mxu0
        %1840 = vdwg.mxu0
        %v1841 = vadd.f32 %v1567, %v1715
        %v1842 = vadd.f32 %v1568, %v1718
        %v1843 = vadd.f32 %v1569, %v1723
        %v1844 = vadd.f32 %v1570, %v1726
        %v1845 = vadd.f32 %v1571, %v1731
        %v1846 = vadd.f32 %v1572, %v1734
        %v1847 = vadd.f32 %v1573, %v1739
        %v1848 = vadd.f32 %v1574, %v1742
        %v1849 = vadd.f32 %v1575, %v1747
        %v1850 = vadd.f32 %v1576, %v1750
        %v1851 = vadd.f32 %v1577, %v1755
        %v1852 = vadd.f32 %v1578, %v1758
        %v1853 = vadd.f32 %v1579, %v1763
        %v1854 = vadd.f32 %v1580, %v1766
        %v1855 = vadd.f32 %v1581, %v1771
        %v1856 = vadd.f32 %v1582, %v1774
        %v1857 = vadd.f32 %v1583, %v1779
        %v1858 = vadd.f32 %v1584, %v1782
        %v1859 = vadd.f32 %v1585, %v1787
        %v1860 = vadd.f32 %v1586, %v1790
        %v1861 = vadd.f32 %v1587, %v1795
        %v1862 = vadd.f32 %v1588, %v1798
        %v1863 = vadd.f32 %v1589, %v1803
        %v1864 = vadd.f32 %v1590, %v1806
        %v1865 = vadd.f32 %v1591, %v1811
        %v1866 = vadd.f32 %v1592, %v1814
        %v1867 = vadd.f32 %v1593, %v1819
        %v1868 = vadd.f32 %v1594, %v1822
        %v1869 = vadd.f32 %v1595, %v1827
        %v1870 = vadd.f32 %v1596, %v1830
        %v1871 = vadd.f32 %v1597, %v1835
        %v1872 = vadd.f32 %v1598, %v1838
        %v1873 = vld [vmem:[#allocation2 + $0x8] sm:$0xff]
        %v1874 = vld [vmem:[#allocation2 + $0x10] sm:$0xff]
        %v1875 = vld [vmem:[#allocation2 + $0x18] sm:$0xff]
        %v1876 = vld [vmem:[#allocation2 + $0x20] sm:$0xff]
        %v1877 = vld [vmem:[#allocation2 + $0x28] sm:$0xff]
        %v1878 = vld [vmem:[#allocation2 + $0x30] sm:$0xff]
        %v1879 = vld [vmem:[#allocation2 + $0x38] sm:$0xff]
        %v1880 = vld [vmem:[#allocation2 + $0x40] sm:$0xff]
        %v1881 = vld [vmem:[#allocation2 + $0x48] sm:$0xff]
        %v1882 = vld [vmem:[#allocation2 + $0x50] sm:$0xff]
        %v1883 = vld [vmem:[#allocation2 + $0x58] sm:$0xff]
        %v1884 = vld [vmem:[#allocation2 + $0x60] sm:$0xff]
        %v1885 = vld [vmem:[#allocation2 + $0x68] sm:$0xff]
        %v1886 = vld [vmem:[#allocation2 + $0x70] sm:$0xff]
        %v1887 = vld [vmem:[#allocation2 + $0x78] sm:$0xff]
        %v1888 = vld [vmem:[#allocation2 + $0x80] sm:$0xff]
        %s1889 = scalar_lea.vmem [#allocation8], 256
        %v1890 = vld [vmem:[%s1889] sm:$0xf]
        %v1891 = vld [vmem:[%s1889 + $0x4] sm:$0xf]
        %v1892 = vld [vmem:[%s1889 + $0x8] sm:$0xf]
        %v1893 = vld [vmem:[%s1889 + $0xc] sm:$0xf]
        %v1894 = vld [vmem:[%s1889 + $0x10] sm:$0xf]
        %v1895 = vld [vmem:[%s1889 + $0x14] sm:$0xf]
        %v1896 = vld [vmem:[%s1889 + $0x18] sm:$0xf]
        %v1897 = vld [vmem:[%s1889 + $0x1c] sm:$0xf]
        %v1898 = vld [vmem:[%s1889 + $0x20] sm:$0xf]
        %v1899 = vld [vmem:[%s1889 + $0x24] sm:$0xf]
        %v1900 = vld [vmem:[%s1889 + $0x28] sm:$0xf]
        %v1901 = vld [vmem:[%s1889 + $0x2c] sm:$0xf]
        %v1902 = vld [vmem:[%s1889 + $0x30] sm:$0xf]
        %v1903 = vld [vmem:[%s1889 + $0x34] sm:$0xf]
        %v1904 = vld [vmem:[%s1889 + $0x38] sm:$0xf]
        %v1905 = vld [vmem:[%s1889 + $0x3c] sm:$0xf]
        %v1922 = vunpack.c.l.b16 %v1890
        %v1923 = vunpack.c.l.b16 %v1891
        %v1924 = vunpack.c.l.b16 %v1892
        %v1925 = vunpack.c.l.b16 %v1893
        %v1926 = vunpack.c.l.b16 %v1894
        %v1927 = vunpack.c.l.b16 %v1895
        %v1928 = vunpack.c.l.b16 %v1896
        %v1929 = vunpack.c.l.b16 %v1897
        %v1930 = vunpack.c.l.b16 %v1898
        %v1931 = vunpack.c.l.b16 %v1899
        %v1932 = vunpack.c.l.b16 %v1900
        %v1933 = vunpack.c.l.b16 %v1901
        %v1934 = vunpack.c.l.b16 %v1902
        %v1935 = vunpack.c.l.b16 %v1903
        %v1936 = vunpack.c.l.b16 %v1904
        %v1937 = vunpack.c.l.b16 %v1905
        %v1938 = vpack.c.b16 %v1923, %v1922
        %v1939 = vpack.c.b16 %v1925, %v1924
        %v1940 = vpack.c.b16 %v1927, %v1926
        %v1941 = vpack.c.b16 %v1929, %v1928
        %v1942 = vpack.c.b16 %v1931, %v1930
        %v1943 = vpack.c.b16 %v1933, %v1932
        %v1944 = vpack.c.b16 %v1935, %v1934
        %v1945 = vpack.c.b16 %v1937, %v1936
        %1954 = vmatprep.subr.bf16.mxu0 0
        %1955 = vmatpush1.bf16.msra.mxu0 %v1938
        %1956 = vmatprep.subr.bf16.mxu0 0
        %1957 = vmatpush1.bf16.msra.mxu0 %v1939
        %1958 = vmatprep.subr.bf16.mxu0 0
        %1959 = vmatpush1.bf16.msra.mxu0 %v1940
        %1960 = vmatprep.subr.bf16.mxu0 0
        %1961 = vmatpush1.bf16.msra.mxu0 %v1941
        %1962 = vmatprep.subr.bf16.mxu0 0
        %1963 = vmatpush1.bf16.msra.mxu0 %v1942
        %1964 = vmatprep.subr.bf16.mxu0 0
        %1965 = vmatpush1.bf16.msra.mxu0 %v1943
        %1966 = vmatprep.subr.bf16.mxu0 0
        %1967 = vmatpush1.bf16.msra.mxu0 %v1944
        %1968 = vmatprep.subr.bf16.mxu0 0
        %1969 = vmatpush1.bf16.msra.mxu0 %v1945
        %1970 = vmatprep.subr.bf16.mxu0 0
        %1971 = vmatpush1.bf16.msra.mxu0 0
        %1972 = vmatprep.subr.bf16.mxu0 0
        %1973 = vmatpush1.bf16.msra.mxu0 0
        %1974 = vmatprep.subr.bf16.mxu0 0
        %1975 = vmatpush1.bf16.msra.mxu0 0
        %1976 = vmatprep.subr.bf16.mxu0 0
        %1977 = vmatpush1.bf16.msra.mxu0 0
        %1978 = vmatprep.subr.bf16.mxu0 0
        %1979 = vmatpush1.bf16.msra.mxu0 0
        %1980 = vmatprep.subr.bf16.mxu0 0
        %1981 = vmatpush1.bf16.msra.mxu0 0
        %1982 = vmatprep.subr.bf16.mxu0 0
        %1983 = vmatpush1.bf16.msra.mxu0 0
        %1984 = vmatprep.subr.bf16.mxu0 0
        %1985 = vmatpush1.bf16.msra.mxu0 0
        %1986 = vmatprep.mubr.bf16.mxu0 0
        %1987 = vmatmul.mubr.bf16.gmra.mrb[0].mxu0 %v1873
        %v1988 = vpop.f32.mrb[0].mxu0
        %v1989 = vadd.f32 0.0, %v1988
        %v1990 = vpop.f32.mrb[0].mxu0
        %v1991 = vpop.f32.mrb[0].mxu0
        %v1992 = vadd.f32 0.0, %v1991
        %v1993 = vpop.f32.mrb[0].mxu0
        %1994 = vmatprep.mubr.bf16.mxu0 0
        %1995 = vmatmul.mubr.bf16.gmra.mrb[0].mxu0 %v1874
        %v1996 = vpop.f32.mrb[0].mxu0
        %v1997 = vadd.f32 0.0, %v1996
        %v1998 = vpop.f32.mrb[0].mxu0
        %v1999 = vpop.f32.mrb[0].mxu0
        %v2000 = vadd.f32 0.0, %v1999
        %v2001 = vpop.f32.mrb[0].mxu0
        %2002 = vmatprep.mubr.bf16.mxu0 0
        %2003 = vmatmul.mubr.bf16.gmra.mrb[0].mxu0 %v1875
        %v2004 = vpop.f32.mrb[0].mxu0
        %v2005 = vadd.f32 0.0, %v2004
        %v2006 = vpop.f32.mrb[0].mxu0
        %v2007 = vpop.f32.mrb[0].mxu0
        %v2008 = vadd.f32 0.0, %v2007
        %v2009 = vpop.f32.mrb[0].mxu0
        %2010 = vmatprep.mubr.bf16.mxu0 0
        %2011 = vmatmul.mubr.bf16.gmra.mrb[0].mxu0 %v1876
        %v2012 = vpop.f32.mrb[0].mxu0
        %v2013 = vadd.f32 0.0, %v2012
        %v2014 = vpop.f32.mrb[0].mxu0
        %v2015 = vpop.f32.mrb[0].mxu0
        %v2016 = vadd.f32 0.0, %v2015
        %v2017 = vpop.f32.mrb[0].mxu0
        %2018 = vmatprep.mubr.bf16.mxu0 0
        %2019 = vmatmul.mubr.bf16.gmra.mrb[0].mxu0 %v1877
        %v2020 = vpop.f32.mrb[0].mxu0
        %v2021 = vadd.f32 0.0, %v2020
        %v2022 = vpop.f32.mrb[0].mxu0
        %v2023 = vpop.f32.mrb[0].mxu0
        %v2024 = vadd.f32 0.0, %v2023
        %v2025 = vpop.f32.mrb[0].mxu0
        %2026 = vmatprep.mubr.bf16.mxu0 0
        %2027 = vmatmul.mubr.bf16.gmra.mrb[0].mxu0 %v1878
        %v2028 = vpop.f32.mrb[0].mxu0
        %v2029 = vadd.f32 0.0, %v2028
        %v2030 = vpop.f32.mrb[0].mxu0
        %v2031 = vpop.f32.mrb[0].mxu0
        %v2032 = vadd.f32 0.0, %v2031
        %v2033 = vpop.f32.mrb[0].mxu0
        %2034 = vmatprep.mubr.bf16.mxu0 0
        %2035 = vmatmul.mubr.bf16.gmra.mrb[0].mxu0 %v1879
        %v2036 = vpop.f32.mrb[0].mxu0
        %v2037 = vadd.f32 0.0, %v2036
        %v2038 = vpop.f32.mrb[0].mxu0
        %v2039 = vpop.f32.mrb[0].mxu0
        %v2040 = vadd.f32 0.0, %v2039
        %v2041 = vpop.f32.mrb[0].mxu0
        %2042 = vmatprep.mubr.bf16.mxu0 0
        %2043 = vmatmul.mubr.bf16.gmra.mrb[0].mxu0 %v1880
        %v2044 = vpop.f32.mrb[0].mxu0
        %v2045 = vadd.f32 0.0, %v2044
        %v2046 = vpop.f32.mrb[0].mxu0
        %v2047 = vpop.f32.mrb[0].mxu0
        %v2048 = vadd.f32 0.0, %v2047
        %v2049 = vpop.f32.mrb[0].mxu0
        %2050 = vmatprep.mubr.bf16.mxu0 0
        %2051 = vmatmul.mubr.bf16.gmra.mrb[0].mxu0 %v1881
        %v2052 = vpop.f32.mrb[0].mxu0
        %v2053 = vadd.f32 0.0, %v2052
        %v2054 = vpop.f32.mrb[0].mxu0
        %v2055 = vpop.f32.mrb[0].mxu0
        %v2056 = vadd.f32 0.0, %v2055
        %v2057 = vpop.f32.mrb[0].mxu0
        %2058 = vmatprep.mubr.bf16.mxu0 0
        %2059 = vmatmul.mubr.bf16.gmra.mrb[0].mxu0 %v1882
        %v2060 = vpop.f32.mrb[0].mxu0
        %v2061 = vadd.f32 0.0, %v2060
        %v2062 = vpop.f32.mrb[0].mxu0
        %v2063 = vpop.f32.mrb[0].mxu0
        %v2064 = vadd.f32 0.0, %v2063
        %v2065 = vpop.f32.mrb[0].mxu0
        %2066 = vmatprep.mubr.bf16.mxu0 0
        %2067 = vmatmul.mubr.bf16.gmra.mrb[0].mxu0 %v1883
        %v2068 = vpop.f32.mrb[0].mxu0
        %v2069 = vadd.f32 0.0, %v2068
        %v2070 = vpop.f32.mrb[0].mxu0
        %v2071 = vpop.f32.mrb[0].mxu0
        %v2072 = vadd.f32 0.0, %v2071
        %v2073 = vpop.f32.mrb[0].mxu0
        %2074 = vmatprep.mubr.bf16.mxu0 0
        %2075 = vmatmul.mubr.bf16.gmra.mrb[0].mxu0 %v1884
        %v2076 = vpop.f32.mrb[0].mxu0
        %v2077 = vadd.f32 0.0, %v2076
        %v2078 = vpop.f32.mrb[0].mxu0
        %v2079 = vpop.f32.mrb[0].mxu0
        %v2080 = vadd.f32 0.0, %v2079
        %v2081 = vpop.f32.mrb[0].mxu0
        %2082 = vmatprep.mubr.bf16.mxu0 0
        %2083 = vmatmul.mubr.bf16.gmra.mrb[0].mxu0 %v1885
        %v2084 = vpop.f32.mrb[0].mxu0
        %v2085 = vadd.f32 0.0, %v2084
        %v2086 = vpop.f32.mrb[0].mxu0
        %v2087 = vpop.f32.mrb[0].mxu0
        %v2088 = vadd.f32 0.0, %v2087
        %v2089 = vpop.f32.mrb[0].mxu0
        %2090 = vmatprep.mubr.bf16.mxu0 0
        %2091 = vmatmul.mubr.bf16.gmra.mrb[0].mxu0 %v1886
        %v2092 = vpop.f32.mrb[0].mxu0
        %v2093 = vadd.f32 0.0, %v2092
        %v2094 = vpop.f32.mrb[0].mxu0
        %v2095 = vpop.f32.mrb[0].mxu0
        %v2096 = vadd.f32 0.0, %v2095
        %v2097 = vpop.f32.mrb[0].mxu0
        %2098 = vmatprep.mubr.bf16.mxu0 0
        %2099 = vmatmul.mubr.bf16.gmra.mrb[0].mxu0 %v1887
        %v2100 = vpop.f32.mrb[0].mxu0
        %v2101 = vadd.f32 0.0, %v2100
        %v2102 = vpop.f32.mrb[0].mxu0
        %v2103 = vpop.f32.mrb[0].mxu0
        %v2104 = vadd.f32 0.0, %v2103
        %v2105 = vpop.f32.mrb[0].mxu0
        %2106 = vmatprep.mubr.bf16.mxu0 0
        %2107 = vmatmul.mubr.bf16.gmra.mrb[0].mxu0 %v1888
        %v2108 = vpop.f32.mrb[0].mxu0
        %v2109 = vadd.f32 0.0, %v2108
        %v2110 = vpop.f32.mrb[0].mxu0
        %v2111 = vpop.f32.mrb[0].mxu0
        %v2112 = vadd.f32 0.0, %v2111
        %v2113 = vpop.f32.mrb[0].mxu0
        %2114 = vdwg.mxu0
        %v2115 = vadd.f32 %v1841, %v1989
        %v2116 = vadd.f32 %v1842, %v1992
        %v2117 = vadd.f32 %v1843, %v1997
        %v2118 = vadd.f32 %v1844, %v2000
        %v2119 = vadd.f32 %v1845, %v2005
        %v2120 = vadd.f32 %v1846, %v2008
        %v2121 = vadd.f32 %v1847, %v2013
        %v2122 = vadd.f32 %v1848, %v2016
        %v2123 = vadd.f32 %v1849, %v2021
        %v2124 = vadd.f32 %v1850, %v2024
        %v2125 = vadd.f32 %v1851, %v2029
        %v2126 = vadd.f32 %v1852, %v2032
        %v2127 = vadd.f32 %v1853, %v2037
        %v2128 = vadd.f32 %v1854, %v2040
        %v2129 = vadd.f32 %v1855, %v2045
        %v2130 = vadd.f32 %v1856, %v2048
        %v2131 = vadd.f32 %v1857, %v2053
        %v2132 = vadd.f32 %v1858, %v2056
        %v2133 = vadd.f32 %v1859, %v2061
        %v2134 = vadd.f32 %v1860, %v2064
        %v2135 = vadd.f32 %v1861, %v2069
        %v2136 = vadd.f32 %v1862, %v2072
        %v2137 = vadd.f32 %v1863, %v2077
        %v2138 = vadd.f32 %v1864, %v2080
        %v2139 = vadd.f32 %v1865, %v2085
        %v2140 = vadd.f32 %v1866, %v2088
        %v2141 = vadd.f32 %v1867, %v2093
        %v2142 = vadd.f32 %v1868, %v2096
        %v2143 = vadd.f32 %v1869, %v2101
        %v2144 = vadd.f32 %v1870, %v2104
        %v2145 = vadd.f32 %v1871, %v2109
        %v2146 = vadd.f32 %v1872, %v2112
        %v2147 = vld [vmem:[#allocation4 + $0x8] sm:$0xff]
        %v2148 = vld [vmem:[#allocation4 + $0x10] sm:$0xff]
        %v2149 = vld [vmem:[#allocation4 + $0x18] sm:$0xff]
        %v2150 = vld [vmem:[#allocation4 + $0x20] sm:$0xff]
        %v2151 = vld [vmem:[#allocation4 + $0x28] sm:$0xff]
        %v2152 = vld [vmem:[#allocation4 + $0x30] sm:$0xff]
        %v2153 = vld [vmem:[#allocation4 + $0x38] sm:$0xff]
        %v2154 = vld [vmem:[#allocation4 + $0x40] sm:$0xff]
        %v2155 = vld [vmem:[#allocation4 + $0x48] sm:$0xff]
        %v2156 = vld [vmem:[#allocation4 + $0x50] sm:$0xff]
        %v2157 = vld [vmem:[#allocation4 + $0x58] sm:$0xff]
        %v2158 = vld [vmem:[#allocation4 + $0x60] sm:$0xff]
        %v2159 = vld [vmem:[#allocation4 + $0x68] sm:$0xff]
        %v2160 = vld [vmem:[#allocation4 + $0x70] sm:$0xff]
        %v2161 = vld [vmem:[#allocation4 + $0x78] sm:$0xff]
        %v2162 = vld [vmem:[#allocation4 + $0x80] sm:$0xff]
        %s2163 = scalar_lea.vmem [#allocation8], 320
        %v2164 = vld [vmem:[%s2163] sm:$0xf]
        %v2165 = vld [vmem:[%s2163 + $0x4] sm:$0xf]
        %v2166 = vld [vmem:[%s2163 + $0x8] sm:$0xf]
        %v2167 = vld [vmem:[%s2163 + $0xc] sm:$0xf]
        %v2168 = vld [vmem:[%s2163 + $0x10] sm:$0xf]
        %v2169 = vld [vmem:[%s2163 + $0x14] sm:$0xf]
        %v2170 = vld [vmem:[%s2163 + $0x18] sm:$0xf]
        %v2171 = vld [vmem:[%s2163 + $0x1c] sm:$0xf]
        %v2172 = vld [vmem:[%s2163 + $0x20] sm:$0xf]
        %v2173 = vld [vmem:[%s2163 + $0x24] sm:$0xf]
        %v2174 = vld [vmem:[%s2163 + $0x28] sm:$0xf]
        %v2175 = vld [vmem:[%s2163 + $0x2c] sm:$0xf]
        %v2176 = vld [vmem:[%s2163 + $0x30] sm:$0xf]
        %v2177 = vld [vmem:[%s2163 + $0x34] sm:$0xf]
        %v2178 = vld [vmem:[%s2163 + $0x38] sm:$0xf]
        %v2179 = vld [vmem:[%s2163 + $0x3c] sm:$0xf]
        %v2196 = vunpack.c.l.b16 %v2164
        %v2197 = vunpack.c.l.b16 %v2165
        %v2198 = vunpack.c.l.b16 %v2166
        %v2199 = vunpack.c.l.b16 %v2167
        %v2200 = vunpack.c.l.b16 %v2168
        %v2201 = vunpack.c.l.b16 %v2169
        %v2202 = vunpack.c.l.b16 %v2170
        %v2203 = vunpack.c.l.b16 %v2171
        %v2204 = vunpack.c.l.b16 %v2172
        %v2205 = vunpack.c.l.b16 %v2173
        %v2206 = vunpack.c.l.b16 %v2174
        %v2207 = vunpack.c.l.b16 %v2175
        %v2208 = vunpack.c.l.b16 %v2176
        %v2209 = vunpack.c.l.b16 %v2177
        %v2210 = vunpack.c.l.b16 %v2178
        %v2211 = vunpack.c.l.b16 %v2179
        %v2212 = vpack.c.b16 %v2197, %v2196
        %v2213 = vpack.c.b16 %v2199, %v2198
        %v2214 = vpack.c.b16 %v2201, %v2200
        %v2215 = vpack.c.b16 %v2203, %v2202
        %v2216 = vpack.c.b16 %v2205, %v2204
        %v2217 = vpack.c.b16 %v2207, %v2206
        %v2218 = vpack.c.b16 %v2209, %v2208
        %v2219 = vpack.c.b16 %v2211, %v2210
        %2228 = vmatprep.subr.bf16.mxu0 0
        %2229 = vmatpush1.bf16.msra.mxu0 %v2212
        %2230 = vmatprep.subr.bf16.mxu0 0
        %2231 = vmatpush1.bf16.msra.mxu0 %v2213
        %2232 = vmatprep.subr.bf16.mxu0 0
        %2233 = vmatpush1.bf16.msra.mxu0 %v2214
        %2234 = vmatprep.subr.bf16.mxu0 0
        %2235 = vmatpush1.bf16.msra.mxu0 %v2215
        %2236 = vmatprep.subr.bf16.mxu0 0
        %2237 = vmatpush1.bf16.msra.mxu0 %v2216
        %2238 = vmatprep.subr.bf16.mxu0 0
        %2239 = vmatpush1.bf16.msra.mxu0 %v2217
        %2240 = vmatprep.subr.bf16.mxu0 0
        %2241 = vmatpush1.bf16.msra.mxu0 %v2218
        %2242 = vmatprep.subr.bf16.mxu0 0
        %2243 = vmatpush1.bf16.msra.mxu0 %v2219
        %2244 = vmatprep.subr.bf16.mxu0 0
        %2245 = vmatpush1.bf16.msra.mxu0 0
        %2246 = vmatprep.subr.bf16.mxu0 0
        %2247 = vmatpush1.bf16.msra.mxu0 0
        %2248 = vmatprep.subr.bf16.mxu0 0
        %2249 = vmatpush1.bf16.msra.mxu0 0
        %2250 = vmatprep.subr.bf16.mxu0 0
        %2251 = vmatpush1.bf16.msra.mxu0 0
        %2252 = vmatprep.subr.bf16.mxu0 0
        %2253 = vmatpush1.bf16.msra.mxu0 0
        %2254 = vmatprep.subr.bf16.mxu0 0
        %2255 = vmatpush1.bf16.msra.mxu0 0
        %2256 = vmatprep.subr.bf16.mxu0 0
        %2257 = vmatpush1.bf16.msra.mxu0 0
        %2258 = vmatprep.subr.bf16.mxu0 0
        %2259 = vmatpush1.bf16.msra.mxu0 0
        %2260 = vmatprep.mubr.bf16.mxu0 0
        %2261 = vmatmul.mubr.bf16.gmra.mrb[0].mxu0 %v2147
        %v2262 = vpop.f32.mrb[0].mxu0
        %v2263 = vadd.f32 0.0, %v2262
        %v2264 = vpop.f32.mrb[0].mxu0
        %v2265 = vpop.f32.mrb[0].mxu0
        %v2266 = vadd.f32 0.0, %v2265
        %v2267 = vpop.f32.mrb[0].mxu0
        %2268 = vmatprep.mubr.bf16.mxu0 0
        %2269 = vmatmul.mubr.bf16.gmra.mrb[0].mxu0 %v2148
        %v2270 = vpop.f32.mrb[0].mxu0
        %v2271 = vadd.f32 0.0, %v2270
        %v2272 = vpop.f32.mrb[0].mxu0
        %v2273 = vpop.f32.mrb[0].mxu0
        %v2274 = vadd.f32 0.0, %v2273
        %v2275 = vpop.f32.mrb[0].mxu0
        %2276 = vmatprep.mubr.bf16.mxu0 0
        %2277 = vmatmul.mubr.bf16.gmra.mrb[0].mxu0 %v2149
        %v2278 = vpop.f32.mrb[0].mxu0
        %v2279 = vadd.f32 0.0, %v2278
        %v2280 = vpop.f32.mrb[0].mxu0
        %v2281 = vpop.f32.mrb[0].mxu0
        %v2282 = vadd.f32 0.0, %v2281
        %v2283 = vpop.f32.mrb[0].mxu0
        %2284 = vmatprep.mubr.bf16.mxu0 0
        %2285 = vmatmul.mubr.bf16.gmra.mrb[0].mxu0 %v2150
        %v2286 = vpop.f32.mrb[0].mxu0
        %v2287 = vadd.f32 0.0, %v2286
        %v2288 = vpop.f32.mrb[0].mxu0
        %v2289 = vpop.f32.mrb[0].mxu0
        %v2290 = vadd.f32 0.0, %v2289
        %v2291 = vpop.f32.mrb[0].mxu0
        %2292 = vmatprep.mubr.bf16.mxu0 0
        %2293 = vmatmul.mubr.bf16.gmra.mrb[0].mxu0 %v2151
        %v2294 = vpop.f32.mrb[0].mxu0
        %v2295 = vadd.f32 0.0, %v2294
        %v2296 = vpop.f32.mrb[0].mxu0
        %v2297 = vpop.f32.mrb[0].mxu0
        %v2298 = vadd.f32 0.0, %v2297
        %v2299 = vpop.f32.mrb[0].mxu0
        %2300 = vmatprep.mubr.bf16.mxu0 0
        %2301 = vmatmul.mubr.bf16.gmra.mrb[0].mxu0 %v2152
        %v2302 = vpop.f32.mrb[0].mxu0
        %v2303 = vadd.f32 0.0, %v2302
        %v2304 = vpop.f32.mrb[0].mxu0
        %v2305 = vpop.f32.mrb[0].mxu0
        %v2306 = vadd.f32 0.0, %v2305
        %v2307 = vpop.f32.mrb[0].mxu0
        %2308 = vmatprep.mubr.bf16.mxu0 0
        %2309 = vmatmul.mubr.bf16.gmra.mrb[0].mxu0 %v2153
        %v2310 = vpop.f32.mrb[0].mxu0
        %v2311 = vadd.f32 0.0, %v2310
        %v2312 = vpop.f32.mrb[0].mxu0
        %v2313 = vpop.f32.mrb[0].mxu0
        %v2314 = vadd.f32 0.0, %v2313
        %v2315 = vpop.f32.mrb[0].mxu0
        %2316 = vmatprep.mubr.bf16.mxu0 0
        %2317 = vmatmul.mubr.bf16.gmra.mrb[0].mxu0 %v2154
        %v2318 = vpop.f32.mrb[0].mxu0
        %v2319 = vadd.f32 0.0, %v2318
        %v2320 = vpop.f32.mrb[0].mxu0
        %v2321 = vpop.f32.mrb[0].mxu0
        %v2322 = vadd.f32 0.0, %v2321
        %v2323 = vpop.f32.mrb[0].mxu0
        %2324 = vmatprep.mubr.bf16.mxu0 0
        %2325 = vmatmul.mubr.bf16.gmra.mrb[0].mxu0 %v2155
        %v2326 = vpop.f32.mrb[0].mxu0
        %v2327 = vadd.f32 0.0, %v2326
        %v2328 = vpop.f32.mrb[0].mxu0
        %v2329 = vpop.f32.mrb[0].mxu0
        %v2330 = vadd.f32 0.0, %v2329
        %v2331 = vpop.f32.mrb[0].mxu0
        %2332 = vmatprep.mubr.bf16.mxu0 0
        %2333 = vmatmul.mubr.bf16.gmra.mrb[0].mxu0 %v2156
        %v2334 = vpop.f32.mrb[0].mxu0
        %v2335 = vadd.f32 0.0, %v2334
        %v2336 = vpop.f32.mrb[0].mxu0
        %v2337 = vpop.f32.mrb[0].mxu0
        %v2338 = vadd.f32 0.0, %v2337
        %v2339 = vpop.f32.mrb[0].mxu0
        %2340 = vmatprep.mubr.bf16.mxu0 0
        %2341 = vmatmul.mubr.bf16.gmra.mrb[0].mxu0 %v2157
        %v2342 = vpop.f32.mrb[0].mxu0
        %v2343 = vadd.f32 0.0, %v2342
        %v2344 = vpop.f32.mrb[0].mxu0
        %v2345 = vpop.f32.mrb[0].mxu0
        %v2346 = vadd.f32 0.0, %v2345
        %v2347 = vpop.f32.mrb[0].mxu0
        %2348 = vmatprep.mubr.bf16.mxu0 0
        %2349 = vmatmul.mubr.bf16.gmra.mrb[0].mxu0 %v2158
        %v2350 = vpop.f32.mrb[0].mxu0
        %v2351 = vadd.f32 0.0, %v2350
        %v2352 = vpop.f32.mrb[0].mxu0
        %v2353 = vpop.f32.mrb[0].mxu0
        %v2354 = vadd.f32 0.0, %v2353
        %v2355 = vpop.f32.mrb[0].mxu0
        %2356 = vmatprep.mubr.bf16.mxu0 0
        %2357 = vmatmul.mubr.bf16.gmra.mrb[0].mxu0 %v2159
        %v2358 = vpop.f32.mrb[0].mxu0
        %v2359 = vadd.f32 0.0, %v2358
        %v2360 = vpop.f32.mrb[0].mxu0
        %v2361 = vpop.f32.mrb[0].mxu0
        %v2362 = vadd.f32 0.0, %v2361
        %v2363 = vpop.f32.mrb[0].mxu0
        %2364 = vmatprep.mubr.bf16.mxu0 0
        %2365 = vmatmul.mubr.bf16.gmra.mrb[0].mxu0 %v2160
        %v2366 = vpop.f32.mrb[0].mxu0
        %v2367 = vadd.f32 0.0, %v2366
        %v2368 = vpop.f32.mrb[0].mxu0
        %v2369 = vpop.f32.mrb[0].mxu0
        %v2370 = vadd.f32 0.0, %v2369
        %v2371 = vpop.f32.mrb[0].mxu0
        %2372 = vmatprep.mubr.bf16.mxu0 0
        %2373 = vmatmul.mubr.bf16.gmra.mrb[0].mxu0 %v2161
        %v2374 = vpop.f32.mrb[0].mxu0
        %v2375 = vadd.f32 0.0, %v2374
        %v2376 = vpop.f32.mrb[0].mxu0
        %v2377 = vpop.f32.mrb[0].mxu0
        %v2378 = vadd.f32 0.0, %v2377
        %v2379 = vpop.f32.mrb[0].mxu0
        %2380 = vmatprep.mubr.bf16.mxu0 0
        %2381 = vmatmul.mubr.bf16.gmra.mrb[0].mxu0 %v2162
        %v2382 = vpop.f32.mrb[0].mxu0
        %v2383 = vadd.f32 0.0, %v2382
        %v2384 = vpop.f32.mrb[0].mxu0
        %v2385 = vpop.f32.mrb[0].mxu0
        %v2386 = vadd.f32 0.0, %v2385
        %v2387 = vpop.f32.mrb[0].mxu0
        %2388 = vdwg.mxu0
        %v2389 = vadd.f32 %v2115, %v2263
        %v2390 = vadd.f32 %v2116, %v2266
        %v2391 = vadd.f32 %v2117, %v2271
        %v2392 = vadd.f32 %v2118, %v2274
        %v2393 = vadd.f32 %v2119, %v2279
        %v2394 = vadd.f32 %v2120, %v2282
        %v2395 = vadd.f32 %v2121, %v2287
        %v2396 = vadd.f32 %v2122, %v2290
        %v2397 = vadd.f32 %v2123, %v2295
        %v2398 = vadd.f32 %v2124, %v2298
        %v2399 = vadd.f32 %v2125, %v2303
        %v2400 = vadd.f32 %v2126, %v2306
        %v2401 = vadd.f32 %v2127, %v2311
        %v2402 = vadd.f32 %v2128, %v2314
        %v2403 = vadd.f32 %v2129, %v2319
        %v2404 = vadd.f32 %v2130, %v2322
        %v2405 = vadd.f32 %v2131, %v2327
        %v2406 = vadd.f32 %v2132, %v2330
        %v2407 = vadd.f32 %v2133, %v2335
        %v2408 = vadd.f32 %v2134, %v2338
        %v2409 = vadd.f32 %v2135, %v2343
        %v2410 = vadd.f32 %v2136, %v2346
        %v2411 = vadd.f32 %v2137, %v2351
        %v2412 = vadd.f32 %v2138, %v2354
        %v2413 = vadd.f32 %v2139, %v2359
        %v2414 = vadd.f32 %v2140, %v2362
        %v2415 = vadd.f32 %v2141, %v2367
        %v2416 = vadd.f32 %v2142, %v2370
        %v2417 = vadd.f32 %v2143, %v2375
        %v2418 = vadd.f32 %v2144, %v2378
        %v2419 = vadd.f32 %v2145, %v2383
        %v2420 = vadd.f32 %v2146, %v2386
        %v2421 = vld [vmem:[#allocation3 + $0x10] sm:$0xff]
        %v2422 = vld [vmem:[#allocation3 + $0x18] sm:$0xff]
        %v2423 = vld [vmem:[#allocation3 + $0x20] sm:$0xff]
        %v2424 = vld [vmem:[#allocation3 + $0x28] sm:$0xff]
        %v2425 = vld [vmem:[#allocation3 + $0x30] sm:$0xff]
        %v2426 = vld [vmem:[#allocation3 + $0x38] sm:$0xff]
        %v2427 = vld [vmem:[#allocation3 + $0x40] sm:$0xff]
        %v2428 = vld [vmem:[#allocation3 + $0x48] sm:$0xff]
        %v2429 = vld [vmem:[#allocation3 + $0x50] sm:$0xff]
        %v2430 = vld [vmem:[#allocation3 + $0x58] sm:$0xff]
        %v2431 = vld [vmem:[#allocation3 + $0x60] sm:$0xff]
        %v2432 = vld [vmem:[#allocation3 + $0x68] sm:$0xff]
        %v2433 = vld [vmem:[#allocation3 + $0x70] sm:$0xff]
        %v2434 = vld [vmem:[#allocation3 + $0x78] sm:$0xff]
        %v2435 = vld [vmem:[#allocation3 + $0x80] sm:$0xff]
        %v2436 = vld [vmem:[#allocation3 + $0x88] sm:$0xff]
        %s2437 = scalar_lea.vmem [#allocation8], 384
        %v2438 = vld [vmem:[%s2437] sm:$0xf]
        %v2439 = vld [vmem:[%s2437 + $0x4] sm:$0xf]
        %v2440 = vld [vmem:[%s2437 + $0x8] sm:$0xf]
        %v2441 = vld [vmem:[%s2437 + $0xc] sm:$0xf]
        %v2442 = vld [vmem:[%s2437 + $0x10] sm:$0xf]
        %v2443 = vld [vmem:[%s2437 + $0x14] sm:$0xf]
        %v2444 = vld [vmem:[%s2437 + $0x18] sm:$0xf]
        %v2445 = vld [vmem:[%s2437 + $0x1c] sm:$0xf]
        %v2446 = vld [vmem:[%s2437 + $0x20] sm:$0xf]
        %v2447 = vld [vmem:[%s2437 + $0x24] sm:$0xf]
        %v2448 = vld [vmem:[%s2437 + $0x28] sm:$0xf]
        %v2449 = vld [vmem:[%s2437 + $0x2c] sm:$0xf]
        %v2450 = vld [vmem:[%s2437 + $0x30] sm:$0xf]
        %v2451 = vld [vmem:[%s2437 + $0x34] sm:$0xf]
        %v2452 = vld [vmem:[%s2437 + $0x38] sm:$0xf]
        %v2453 = vld [vmem:[%s2437 + $0x3c] sm:$0xf]
        %v2470 = vunpack.c.l.b16 %v2438
        %v2471 = vunpack.c.l.b16 %v2439
        %v2472 = vunpack.c.l.b16 %v2440
        %v2473 = vunpack.c.l.b16 %v2441
        %v2474 = vunpack.c.l.b16 %v2442
        %v2475 = vunpack.c.l.b16 %v2443
        %v2476 = vunpack.c.l.b16 %v2444
        %v2477 = vunpack.c.l.b16 %v2445
        %v2478 = vunpack.c.l.b16 %v2446
        %v2479 = vunpack.c.l.b16 %v2447
        %v2480 = vunpack.c.l.b16 %v2448
        %v2481 = vunpack.c.l.b16 %v2449
        %v2482 = vunpack.c.l.b16 %v2450
        %v2483 = vunpack.c.l.b16 %v2451
        %v2484 = vunpack.c.l.b16 %v2452
        %v2485 = vunpack.c.l.b16 %v2453
        %v2486 = vpack.c.b16 %v2471, %v2470
        %v2487 = vpack.c.b16 %v2473, %v2472
        %v2488 = vpack.c.b16 %v2475, %v2474
        %v2489 = vpack.c.b16 %v2477, %v2476
        %v2490 = vpack.c.b16 %v2479, %v2478
        %v2491 = vpack.c.b16 %v2481, %v2480
        %v2492 = vpack.c.b16 %v2483, %v2482
        %v2493 = vpack.c.b16 %v2485, %v2484
        %2502 = vmatprep.subr.bf16.mxu0 0
        %2503 = vmatpush1.bf16.msra.mxu0 %v2486
        %2504 = vmatprep.subr.bf16.mxu0 0
        %2505 = vmatpush1.bf16.msra.mxu0 %v2487
        %2506 = vmatprep.subr.bf16.mxu0 0
        %2507 = vmatpush1.bf16.msra.mxu0 %v2488
        %2508 = vmatprep.subr.bf16.mxu0 0
        %2509 = vmatpush1.bf16.msra.mxu0 %v2489
        %2510 = vmatprep.subr.bf16.mxu0 0
        %2511 = vmatpush1.bf16.msra.mxu0 %v2490
        %2512 = vmatprep.subr.bf16.mxu0 0
        %2513 = vmatpush1.bf16.msra.mxu0 %v2491
        %2514 = vmatprep.subr.bf16.mxu0 0
        %2515 = vmatpush1.bf16.msra.mxu0 %v2492
        %2516 = vmatprep.subr.bf16.mxu0 0
        %2517 = vmatpush1.bf16.msra.mxu0 %v2493
        %2518 = vmatprep.subr.bf16.mxu0 0
        %2519 = vmatpush1.bf16.msra.mxu0 0
        %2520 = vmatprep.subr.bf16.mxu0 0
        %2521 = vmatpush1.bf16.msra.mxu0 0
        %2522 = vmatprep.subr.bf16.mxu0 0
        %2523 = vmatpush1.bf16.msra.mxu0 0
        %2524 = vmatprep.subr.bf16.mxu0 0
        %2525 = vmatpush1.bf16.msra.mxu0 0
        %2526 = vmatprep.subr.bf16.mxu0 0
        %2527 = vmatpush1.bf16.msra.mxu0 0
        %2528 = vmatprep.subr.bf16.mxu0 0
        %2529 = vmatpush1.bf16.msra.mxu0 0
        %2530 = vmatprep.subr.bf16.mxu0 0
        %2531 = vmatpush1.bf16.msra.mxu0 0
        %2532 = vmatprep.subr.bf16.mxu0 0
        %2533 = vmatpush1.bf16.msra.mxu0 0
        %2534 = vmatprep.mubr.bf16.mxu0 0
        %2535 = vmatmul.mubr.bf16.gmra.mrb[0].mxu0 %v2421
        %v2536 = vpop.f32.mrb[0].mxu0
        %v2537 = vadd.f32 0.0, %v2536
        %v2538 = vpop.f32.mrb[0].mxu0
        %v2539 = vpop.f32.mrb[0].mxu0
        %v2540 = vadd.f32 0.0, %v2539
        %v2541 = vpop.f32.mrb[0].mxu0
        %2542 = vmatprep.mubr.bf16.mxu0 0
        %2543 = vmatmul.mubr.bf16.gmra.mrb[0].mxu0 %v2422
        %v2544 = vpop.f32.mrb[0].mxu0
        %v2545 = vadd.f32 0.0, %v2544
        %v2546 = vpop.f32.mrb[0].mxu0
        %v2547 = vpop.f32.mrb[0].mxu0
        %v2548 = vadd.f32 0.0, %v2547
        %v2549 = vpop.f32.mrb[0].mxu0
        %2550 = vmatprep.mubr.bf16.mxu0 0
        %2551 = vmatmul.mubr.bf16.gmra.mrb[0].mxu0 %v2423
        %v2552 = vpop.f32.mrb[0].mxu0
        %v2553 = vadd.f32 0.0, %v2552
        %v2554 = vpop.f32.mrb[0].mxu0
        %v2555 = vpop.f32.mrb[0].mxu0
        %v2556 = vadd.f32 0.0, %v2555
        %v2557 = vpop.f32.mrb[0].mxu0
        %2558 = vmatprep.mubr.bf16.mxu0 0
        %2559 = vmatmul.mubr.bf16.gmra.mrb[0].mxu0 %v2424
        %v2560 = vpop.f32.mrb[0].mxu0
        %v2561 = vadd.f32 0.0, %v2560
        %v2562 = vpop.f32.mrb[0].mxu0
        %v2563 = vpop.f32.mrb[0].mxu0
        %v2564 = vadd.f32 0.0, %v2563
        %v2565 = vpop.f32.mrb[0].mxu0
        %2566 = vmatprep.mubr.bf16.mxu0 0
        %2567 = vmatmul.mubr.bf16.gmra.mrb[0].mxu0 %v2425
        %v2568 = vpop.f32.mrb[0].mxu0
        %v2569 = vadd.f32 0.0, %v2568
        %v2570 = vpop.f32.mrb[0].mxu0
        %v2571 = vpop.f32.mrb[0].mxu0
        %v2572 = vadd.f32 0.0, %v2571
        %v2573 = vpop.f32.mrb[0].mxu0
        %2574 = vmatprep.mubr.bf16.mxu0 0
        %2575 = vmatmul.mubr.bf16.gmra.mrb[0].mxu0 %v2426
        %v2576 = vpop.f32.mrb[0].mxu0
        %v2577 = vadd.f32 0.0, %v2576
        %v2578 = vpop.f32.mrb[0].mxu0
        %v2579 = vpop.f32.mrb[0].mxu0
        %v2580 = vadd.f32 0.0, %v2579
        %v2581 = vpop.f32.mrb[0].mxu0
        %2582 = vmatprep.mubr.bf16.mxu0 0
        %2583 = vmatmul.mubr.bf16.gmra.mrb[0].mxu0 %v2427
        %v2584 = vpop.f32.mrb[0].mxu0
        %v2585 = vadd.f32 0.0, %v2584
        %v2586 = vpop.f32.mrb[0].mxu0
        %v2587 = vpop.f32.mrb[0].mxu0
        %v2588 = vadd.f32 0.0, %v2587
        %v2589 = vpop.f32.mrb[0].mxu0
        %2590 = vmatprep.mubr.bf16.mxu0 0
        %2591 = vmatmul.mubr.bf16.gmra.mrb[0].mxu0 %v2428
        %v2592 = vpop.f32.mrb[0].mxu0
        %v2593 = vadd.f32 0.0, %v2592
        %v2594 = vpop.f32.mrb[0].mxu0
        %v2595 = vpop.f32.mrb[0].mxu0
        %v2596 = vadd.f32 0.0, %v2595
        %v2597 = vpop.f32.mrb[0].mxu0
        %2598 = vmatprep.mubr.bf16.mxu0 0
        %2599 = vmatmul.mubr.bf16.gmra.mrb[0].mxu0 %v2429
        %v2600 = vpop.f32.mrb[0].mxu0
        %v2601 = vadd.f32 0.0, %v2600
        %v2602 = vpop.f32.mrb[0].mxu0
        %v2603 = vpop.f32.mrb[0].mxu0
        %v2604 = vadd.f32 0.0, %v2603
        %v2605 = vpop.f32.mrb[0].mxu0
        %2606 = vmatprep.mubr.bf16.mxu0 0
        %2607 = vmatmul.mubr.bf16.gmra.mrb[0].mxu0 %v2430
        %v2608 = vpop.f32.mrb[0].mxu0
        %v2609 = vadd.f32 0.0, %v2608
        %v2610 = vpop.f32.mrb[0].mxu0
        %v2611 = vpop.f32.mrb[0].mxu0
        %v2612 = vadd.f32 0.0, %v2611
        %v2613 = vpop.f32.mrb[0].mxu0
        %2614 = vmatprep.mubr.bf16.mxu0 0
        %2615 = vmatmul.mubr.bf16.gmra.mrb[0].mxu0 %v2431
        %v2616 = vpop.f32.mrb[0].mxu0
        %v2617 = vadd.f32 0.0, %v2616
        %v2618 = vpop.f32.mrb[0].mxu0
        %v2619 = vpop.f32.mrb[0].mxu0
        %v2620 = vadd.f32 0.0, %v2619
        %v2621 = vpop.f32.mrb[0].mxu0
        %2622 = vmatprep.mubr.bf16.mxu0 0
        %2623 = vmatmul.mubr.bf16.gmra.mrb[0].mxu0 %v2432
        %v2624 = vpop.f32.mrb[0].mxu0
        %v2625 = vadd.f32 0.0, %v2624
        %v2626 = vpop.f32.mrb[0].mxu0
        %v2627 = vpop.f32.mrb[0].mxu0
        %v2628 = vadd.f32 0.0, %v2627
        %v2629 = vpop.f32.mrb[0].mxu0
        %2630 = vmatprep.mubr.bf16.mxu0 0
        %2631 = vmatmul.mubr.bf16.gmra.mrb[0].mxu0 %v2433
        %v2632 = vpop.f32.mrb[0].mxu0
        %v2633 = vadd.f32 0.0, %v2632
        %v2634 = vpop.f32.mrb[0].mxu0
        %v2635 = vpop.f32.mrb[0].mxu0
        %v2636 = vadd.f32 0.0, %v2635
        %v2637 = vpop.f32.mrb[0].mxu0
        %2638 = vmatprep.mubr.bf16.mxu0 0
        %2639 = vmatmul.mubr.bf16.gmra.mrb[0].mxu0 %v2434
        %v2640 = vpop.f32.mrb[0].mxu0
        %v2641 = vadd.f32 0.0, %v2640
        %v2642 = vpop.f32.mrb[0].mxu0
        %v2643 = vpop.f32.mrb[0].mxu0
        %v2644 = vadd.f32 0.0, %v2643
        %v2645 = vpop.f32.mrb[0].mxu0
        %2646 = vmatprep.mubr.bf16.mxu0 0
        %2647 = vmatmul.mubr.bf16.gmra.mrb[0].mxu0 %v2435
        %v2648 = vpop.f32.mrb[0].mxu0
        %v2649 = vadd.f32 0.0, %v2648
        %v2650 = vpop.f32.mrb[0].mxu0
        %v2651 = vpop.f32.mrb[0].mxu0
        %v2652 = vadd.f32 0.0, %v2651
        %v2653 = vpop.f32.mrb[0].mxu0
        %2654 = vmatprep.mubr.bf16.mxu0 0
        %2655 = vmatmul.mubr.bf16.gmra.mrb[0].mxu0 %v2436
        %v2656 = vpop.f32.mrb[0].mxu0
        %v2657 = vadd.f32 0.0, %v2656
        %v2658 = vpop.f32.mrb[0].mxu0
        %v2659 = vpop.f32.mrb[0].mxu0
        %v2660 = vadd.f32 0.0, %v2659
        %v2661 = vpop.f32.mrb[0].mxu0
        %2662 = vdwg.mxu0
        %v2663 = vadd.f32 %v2389, %v2537
        %v2664 = vadd.f32 %v2390, %v2540
        %v2665 = vadd.f32 %v2391, %v2545
        %v2666 = vadd.f32 %v2392, %v2548
        %v2667 = vadd.f32 %v2393, %v2553
        %v2668 = vadd.f32 %v2394, %v2556
        %v2669 = vadd.f32 %v2395, %v2561
        %v2670 = vadd.f32 %v2396, %v2564
        %v2671 = vadd.f32 %v2397, %v2569
        %v2672 = vadd.f32 %v2398, %v2572
        %v2673 = vadd.f32 %v2399, %v2577
        %v2674 = vadd.f32 %v2400, %v2580
        %v2675 = vadd.f32 %v2401, %v2585
        %v2676 = vadd.f32 %v2402, %v2588
        %v2677 = vadd.f32 %v2403, %v2593
        %v2678 = vadd.f32 %v2404, %v2596
        %v2679 = vadd.f32 %v2405, %v2601
        %v2680 = vadd.f32 %v2406, %v2604
        %v2681 = vadd.f32 %v2407, %v2609
        %v2682 = vadd.f32 %v2408, %v2612
        %v2683 = vadd.f32 %v2409, %v2617
        %v2684 = vadd.f32 %v2410, %v2620
        %v2685 = vadd.f32 %v2411, %v2625
        %v2686 = vadd.f32 %v2412, %v2628
        %v2687 = vadd.f32 %v2413, %v2633
        %v2688 = vadd.f32 %v2414, %v2636
        %v2689 = vadd.f32 %v2415, %v2641
        %v2690 = vadd.f32 %v2416, %v2644
        %v2691 = vadd.f32 %v2417, %v2649
        %v2692 = vadd.f32 %v2418, %v2652
        %v2693 = vadd.f32 %v2419, %v2657
        %v2694 = vadd.f32 %v2420, %v2660
        %v2695 = vld [vmem:[#allocation2 + $0x10] sm:$0xff]
        %v2696 = vld [vmem:[#allocation2 + $0x18] sm:$0xff]
        %v2697 = vld [vmem:[#allocation2 + $0x20] sm:$0xff]
        %v2698 = vld [vmem:[#allocation2 + $0x28] sm:$0xff]
        %v2699 = vld [vmem:[#allocation2 + $0x30] sm:$0xff]
        %v2700 = vld [vmem:[#allocation2 + $0x38] sm:$0xff]
        %v2701 = vld [vmem:[#allocation2 + $0x40] sm:$0xff]
        %v2702 = vld [vmem:[#allocation2 + $0x48] sm:$0xff]
        %v2703 = vld [vmem:[#allocation2 + $0x50] sm:$0xff]
        %v2704 = vld [vmem:[#allocation2 + $0x58] sm:$0xff]
        %v2705 = vld [vmem:[#allocation2 + $0x60] sm:$0xff]
        %v2706 = vld [vmem:[#allocation2 + $0x68] sm:$0xff]
        %v2707 = vld [vmem:[#allocation2 + $0x70] sm:$0xff]
        %v2708 = vld [vmem:[#allocation2 + $0x78] sm:$0xff]
        %v2709 = vld [vmem:[#allocation2 + $0x80] sm:$0xff]
        %v2710 = vld [vmem:[#allocation2 + $0x88] sm:$0xff]
        %s2711 = scalar_lea.vmem [#allocation8], 448
        %v2712 = vld [vmem:[%s2711] sm:$0xf]
        %v2713 = vld [vmem:[%s2711 + $0x4] sm:$0xf]
        %v2714 = vld [vmem:[%s2711 + $0x8] sm:$0xf]
        %v2715 = vld [vmem:[%s2711 + $0xc] sm:$0xf]
        %v2716 = vld [vmem:[%s2711 + $0x10] sm:$0xf]
        %v2717 = vld [vmem:[%s2711 + $0x14] sm:$0xf]
        %v2718 = vld [vmem:[%s2711 + $0x18] sm:$0xf]
        %v2719 = vld [vmem:[%s2711 + $0x1c] sm:$0xf]
        %v2720 = vld [vmem:[%s2711 + $0x20] sm:$0xf]
        %v2721 = vld [vmem:[%s2711 + $0x24] sm:$0xf]
        %v2722 = vld [vmem:[%s2711 + $0x28] sm:$0xf]
        %v2723 = vld [vmem:[%s2711 + $0x2c] sm:$0xf]
        %v2724 = vld [vmem:[%s2711 + $0x30] sm:$0xf]
        %v2725 = vld [vmem:[%s2711 + $0x34] sm:$0xf]
        %v2726 = vld [vmem:[%s2711 + $0x38] sm:$0xf]
        %v2727 = vld [vmem:[%s2711 + $0x3c] sm:$0xf]
        %v2744 = vunpack.c.l.b16 %v2712
        %v2745 = vunpack.c.l.b16 %v2713
        %v2746 = vunpack.c.l.b16 %v2714
        %v2747 = vunpack.c.l.b16 %v2715
        %v2748 = vunpack.c.l.b16 %v2716
        %v2749 = vunpack.c.l.b16 %v2717
        %v2750 = vunpack.c.l.b16 %v2718
        %v2751 = vunpack.c.l.b16 %v2719
        %v2752 = vunpack.c.l.b16 %v2720
        %v2753 = vunpack.c.l.b16 %v2721
        %v2754 = vunpack.c.l.b16 %v2722
        %v2755 = vunpack.c.l.b16 %v2723
        %v2756 = vunpack.c.l.b16 %v2724
        %v2757 = vunpack.c.l.b16 %v2725
        %v2758 = vunpack.c.l.b16 %v2726
        %v2759 = vunpack.c.l.b16 %v2727
        %v2760 = vpack.c.b16 %v2745, %v2744
        %v2761 = vpack.c.b16 %v2747, %v2746
        %v2762 = vpack.c.b16 %v2749, %v2748
        %v2763 = vpack.c.b16 %v2751, %v2750
        %v2764 = vpack.c.b16 %v2753, %v2752
        %v2765 = vpack.c.b16 %v2755, %v2754
        %v2766 = vpack.c.b16 %v2757, %v2756
        %v2767 = vpack.c.b16 %v2759, %v2758
        %2776 = vmatprep.subr.bf16.mxu0 0
        %2777 = vmatpush1.bf16.msra.mxu0 %v2760
        %2778 = vmatprep.subr.bf16.mxu0 0
        %2779 = vmatpush1.bf16.msra.mxu0 %v2761
        %2780 = vmatprep.subr.bf16.mxu0 0
        %2781 = vmatpush1.bf16.msra.mxu0 %v2762
        %2782 = vmatprep.subr.bf16.mxu0 0
        %2783 = vmatpush1.bf16.msra.mxu0 %v2763
        %2784 = vmatprep.subr.bf16.mxu0 0
        %2785 = vmatpush1.bf16.msra.mxu0 %v2764
        %2786 = vmatprep.subr.bf16.mxu0 0
        %2787 = vmatpush1.bf16.msra.mxu0 %v2765
        %2788 = vmatprep.subr.bf16.mxu0 0
        %2789 = vmatpush1.bf16.msra.mxu0 %v2766
        %2790 = vmatprep.subr.bf16.mxu0 0
        %2791 = vmatpush1.bf16.msra.mxu0 %v2767
        %2792 = vmatprep.subr.bf16.mxu0 0
        %2793 = vmatpush1.bf16.msra.mxu0 0
        %2794 = vmatprep.subr.bf16.mxu0 0
        %2795 = vmatpush1.bf16.msra.mxu0 0
        %2796 = vmatprep.subr.bf16.mxu0 0
        %2797 = vmatpush1.bf16.msra.mxu0 0
        %2798 = vmatprep.subr.bf16.mxu0 0
        %2799 = vmatpush1.bf16.msra.mxu0 0
        %2800 = vmatprep.subr.bf16.mxu0 0
        %2801 = vmatpush1.bf16.msra.mxu0 0
        %2802 = vmatprep.subr.bf16.mxu0 0
        %2803 = vmatpush1.bf16.msra.mxu0 0
        %2804 = vmatprep.subr.bf16.mxu0 0
        %2805 = vmatpush1.bf16.msra.mxu0 0
        %2806 = vmatprep.subr.bf16.mxu0 0
        %2807 = vmatpush1.bf16.msra.mxu0 0
        %2808 = vmatprep.mubr.bf16.mxu0 0
        %2809 = vmatmul.mubr.bf16.gmra.mrb[0].mxu0 %v2695
        %v2810 = vpop.f32.mrb[0].mxu0
        %v2811 = vadd.f32 0.0, %v2810
        %v2812 = vpop.f32.mrb[0].mxu0
        %v2813 = vpop.f32.mrb[0].mxu0
        %v2814 = vadd.f32 0.0, %v2813
        %v2815 = vpop.f32.mrb[0].mxu0
        %2816 = vmatprep.mubr.bf16.mxu0 0
        %2817 = vmatmul.mubr.bf16.gmra.mrb[0].mxu0 %v2696
        %v2818 = vpop.f32.mrb[0].mxu0
        %v2819 = vadd.f32 0.0, %v2818
        %v2820 = vpop.f32.mrb[0].mxu0
        %v2821 = vpop.f32.mrb[0].mxu0
        %v2822 = vadd.f32 0.0, %v2821
        %v2823 = vpop.f32.mrb[0].mxu0
        %2824 = vmatprep.mubr.bf16.mxu0 0
        %2825 = vmatmul.mubr.bf16.gmra.mrb[0].mxu0 %v2697
        %v2826 = vpop.f32.mrb[0].mxu0
        %v2827 = vadd.f32 0.0, %v2826
        %v2828 = vpop.f32.mrb[0].mxu0
        %v2829 = vpop.f32.mrb[0].mxu0
        %v2830 = vadd.f32 0.0, %v2829
        %v2831 = vpop.f32.mrb[0].mxu0
        %2832 = vmatprep.mubr.bf16.mxu0 0
        %2833 = vmatmul.mubr.bf16.gmra.mrb[0].mxu0 %v2698
        %v2834 = vpop.f32.mrb[0].mxu0
        %v2835 = vadd.f32 0.0, %v2834
        %v2836 = vpop.f32.mrb[0].mxu0
        %v2837 = vpop.f32.mrb[0].mxu0
        %v2838 = vadd.f32 0.0, %v2837
        %v2839 = vpop.f32.mrb[0].mxu0
        %2840 = vmatprep.mubr.bf16.mxu0 0
        %2841 = vmatmul.mubr.bf16.gmra.mrb[0].mxu0 %v2699
        %v2842 = vpop.f32.mrb[0].mxu0
        %v2843 = vadd.f32 0.0, %v2842
        %v2844 = vpop.f32.mrb[0].mxu0
        %v2845 = vpop.f32.mrb[0].mxu0
        %v2846 = vadd.f32 0.0, %v2845
        %v2847 = vpop.f32.mrb[0].mxu0
        %2848 = vmatprep.mubr.bf16.mxu0 0
        %2849 = vmatmul.mubr.bf16.gmra.mrb[0].mxu0 %v2700
        %v2850 = vpop.f32.mrb[0].mxu0
        %v2851 = vadd.f32 0.0, %v2850
        %v2852 = vpop.f32.mrb[0].mxu0
        %v2853 = vpop.f32.mrb[0].mxu0
        %v2854 = vadd.f32 0.0, %v2853
        %v2855 = vpop.f32.mrb[0].mxu0
        %2856 = vmatprep.mubr.bf16.mxu0 0
        %2857 = vmatmul.mubr.bf16.gmra.mrb[0].mxu0 %v2701
        %v2858 = vpop.f32.mrb[0].mxu0
        %v2859 = vadd.f32 0.0, %v2858
        %v2860 = vpop.f32.mrb[0].mxu0
        %v2861 = vpop.f32.mrb[0].mxu0
        %v2862 = vadd.f32 0.0, %v2861
        %v2863 = vpop.f32.mrb[0].mxu0
        %2864 = vmatprep.mubr.bf16.mxu0 0
        %2865 = vmatmul.mubr.bf16.gmra.mrb[0].mxu0 %v2702
        %v2866 = vpop.f32.mrb[0].mxu0
        %v2867 = vadd.f32 0.0, %v2866
        %v2868 = vpop.f32.mrb[0].mxu0
        %v2869 = vpop.f32.mrb[0].mxu0
        %v2870 = vadd.f32 0.0, %v2869
        %v2871 = vpop.f32.mrb[0].mxu0
        %2872 = vmatprep.mubr.bf16.mxu0 0
        %2873 = vmatmul.mubr.bf16.gmra.mrb[0].mxu0 %v2703
        %v2874 = vpop.f32.mrb[0].mxu0
        %v2875 = vadd.f32 0.0, %v2874
        %v2876 = vpop.f32.mrb[0].mxu0
        %v2877 = vpop.f32.mrb[0].mxu0
        %v2878 = vadd.f32 0.0, %v2877
        %v2879 = vpop.f32.mrb[0].mxu0
        %2880 = vmatprep.mubr.bf16.mxu0 0
        %2881 = vmatmul.mubr.bf16.gmra.mrb[0].mxu0 %v2704
        %v2882 = vpop.f32.mrb[0].mxu0
        %v2883 = vadd.f32 0.0, %v2882
        %v2884 = vpop.f32.mrb[0].mxu0
        %v2885 = vpop.f32.mrb[0].mxu0
        %v2886 = vadd.f32 0.0, %v2885
        %v2887 = vpop.f32.mrb[0].mxu0
        %2888 = vmatprep.mubr.bf16.mxu0 0
        %2889 = vmatmul.mubr.bf16.gmra.mrb[0].mxu0 %v2705
        %v2890 = vpop.f32.mrb[0].mxu0
        %v2891 = vadd.f32 0.0, %v2890
        %v2892 = vpop.f32.mrb[0].mxu0
        %v2893 = vpop.f32.mrb[0].mxu0
        %v2894 = vadd.f32 0.0, %v2893
        %v2895 = vpop.f32.mrb[0].mxu0
        %2896 = vmatprep.mubr.bf16.mxu0 0
        %2897 = vmatmul.mubr.bf16.gmra.mrb[0].mxu0 %v2706
        %v2898 = vpop.f32.mrb[0].mxu0
        %v2899 = vadd.f32 0.0, %v2898
        %v2900 = vpop.f32.mrb[0].mxu0
        %v2901 = vpop.f32.mrb[0].mxu0
        %v2902 = vadd.f32 0.0, %v2901
        %v2903 = vpop.f32.mrb[0].mxu0
        %2904 = vmatprep.mubr.bf16.mxu0 0
        %2905 = vmatmul.mubr.bf16.gmra.mrb[0].mxu0 %v2707
        %v2906 = vpop.f32.mrb[0].mxu0
        %v2907 = vadd.f32 0.0, %v2906
        %v2908 = vpop.f32.mrb[0].mxu0
        %v2909 = vpop.f32.mrb[0].mxu0
        %v2910 = vadd.f32 0.0, %v2909
        %v2911 = vpop.f32.mrb[0].mxu0
        %2912 = vmatprep.mubr.bf16.mxu0 0
        %2913 = vmatmul.mubr.bf16.gmra.mrb[0].mxu0 %v2708
        %v2914 = vpop.f32.mrb[0].mxu0
        %v2915 = vadd.f32 0.0, %v2914
        %v2916 = vpop.f32.mrb[0].mxu0
        %v2917 = vpop.f32.mrb[0].mxu0
        %v2918 = vadd.f32 0.0, %v2917
        %v2919 = vpop.f32.mrb[0].mxu0
        %2920 = vmatprep.mubr.bf16.mxu0 0
        %2921 = vmatmul.mubr.bf16.gmra.mrb[0].mxu0 %v2709
        %v2922 = vpop.f32.mrb[0].mxu0
        %v2923 = vadd.f32 0.0, %v2922
        %v2924 = vpop.f32.mrb[0].mxu0
        %v2925 = vpop.f32.mrb[0].mxu0
        %v2926 = vadd.f32 0.0, %v2925
        %v2927 = vpop.f32.mrb[0].mxu0
        %2928 = vmatprep.mubr.bf16.mxu0 0
        %2929 = vmatmul.mubr.bf16.gmra.mrb[0].mxu0 %v2710
        %v2930 = vpop.f32.mrb[0].mxu0
        %v2931 = vadd.f32 0.0, %v2930
        %v2932 = vpop.f32.mrb[0].mxu0
        %v2933 = vpop.f32.mrb[0].mxu0
        %v2934 = vadd.f32 0.0, %v2933
        %v2935 = vpop.f32.mrb[0].mxu0
        %2936 = vdwg.mxu0
        %v2937 = vadd.f32 %v2663, %v2811
        %v2938 = vadd.f32 %v2664, %v2814
        %v2939 = vadd.f32 %v2665, %v2819
        %v2940 = vadd.f32 %v2666, %v2822
        %v2941 = vadd.f32 %v2667, %v2827
        %v2942 = vadd.f32 %v2668, %v2830
        %v2943 = vadd.f32 %v2669, %v2835
        %v2944 = vadd.f32 %v2670, %v2838
        %v2945 = vadd.f32 %v2671, %v2843
        %v2946 = vadd.f32 %v2672, %v2846
        %v2947 = vadd.f32 %v2673, %v2851
        %v2948 = vadd.f32 %v2674, %v2854
        %v2949 = vadd.f32 %v2675, %v2859
        %v2950 = vadd.f32 %v2676, %v2862
        %v2951 = vadd.f32 %v2677, %v2867
        %v2952 = vadd.f32 %v2678, %v2870
        %v2953 = vadd.f32 %v2679, %v2875
        %v2954 = vadd.f32 %v2680, %v2878
        %v2955 = vadd.f32 %v2681, %v2883
        %v2956 = vadd.f32 %v2682, %v2886
        %v2957 = vadd.f32 %v2683, %v2891
        %v2958 = vadd.f32 %v2684, %v2894
        %v2959 = vadd.f32 %v2685, %v2899
        %v2960 = vadd.f32 %v2686, %v2902
        %v2961 = vadd.f32 %v2687, %v2907
        %v2962 = vadd.f32 %v2688, %v2910
        %v2963 = vadd.f32 %v2689, %v2915
        %v2964 = vadd.f32 %v2690, %v2918
        %v2965 = vadd.f32 %v2691, %v2923
        %v2966 = vadd.f32 %v2692, %v2926
        %v2967 = vadd.f32 %v2693, %v2931
        %v2968 = vadd.f32 %v2694, %v2934
        %v2969 = vld [vmem:[#allocation4 + $0x10] sm:$0xff]
        %v2970 = vld [vmem:[#allocation4 + $0x18] sm:$0xff]
        %v2971 = vld [vmem:[#allocation4 + $0x20] sm:$0xff]
        %v2972 = vld [vmem:[#allocation4 + $0x28] sm:$0xff]
        %v2973 = vld [vmem:[#allocation4 + $0x30] sm:$0xff]
        %v2974 = vld [vmem:[#allocation4 + $0x38] sm:$0xff]
        %v2975 = vld [vmem:[#allocation4 + $0x40] sm:$0xff]
        %v2976 = vld [vmem:[#allocation4 + $0x48] sm:$0xff]
        %v2977 = vld [vmem:[#allocation4 + $0x50] sm:$0xff]
        %v2978 = vld [vmem:[#allocation4 + $0x58] sm:$0xff]
        %v2979 = vld [vmem:[#allocation4 + $0x60] sm:$0xff]
        %v2980 = vld [vmem:[#allocation4 + $0x68] sm:$0xff]
        %v2981 = vld [vmem:[#allocation4 + $0x70] sm:$0xff]
        %v2982 = vld [vmem:[#allocation4 + $0x78] sm:$0xff]
        %v2983 = vld [vmem:[#allocation4 + $0x80] sm:$0xff]
        %v2984 = vld [vmem:[#allocation4 + $0x88] sm:$0xff]
        %s2985 = scalar_lea.vmem [#allocation8], 512
        %v2986 = vld [vmem:[%s2985] sm:$0xf]
        %v2987 = vld [vmem:[%s2985 + $0x4] sm:$0xf]
        %v2988 = vld [vmem:[%s2985 + $0x8] sm:$0xf]
        %v2989 = vld [vmem:[%s2985 + $0xc] sm:$0xf]
        %v2990 = vld [vmem:[%s2985 + $0x10] sm:$0xf]
        %v2991 = vld [vmem:[%s2985 + $0x14] sm:$0xf]
        %v2992 = vld [vmem:[%s2985 + $0x18] sm:$0xf]
        %v2993 = vld [vmem:[%s2985 + $0x1c] sm:$0xf]
        %v2994 = vld [vmem:[%s2985 + $0x20] sm:$0xf]
        %v2995 = vld [vmem:[%s2985 + $0x24] sm:$0xf]
        %v2996 = vld [vmem:[%s2985 + $0x28] sm:$0xf]
        %v2997 = vld [vmem:[%s2985 + $0x2c] sm:$0xf]
        %v2998 = vld [vmem:[%s2985 + $0x30] sm:$0xf]
        %v2999 = vld [vmem:[%s2985 + $0x34] sm:$0xf]
        %v3000 = vld [vmem:[%s2985 + $0x38] sm:$0xf]
        %v3001 = vld [vmem:[%s2985 + $0x3c] sm:$0xf]
        %v3018 = vunpack.c.l.b16 %v2986
        %v3019 = vunpack.c.l.b16 %v2987
        %v3020 = vunpack.c.l.b16 %v2988
        %v3021 = vunpack.c.l.b16 %v2989
        %v3022 = vunpack.c.l.b16 %v2990
        %v3023 = vunpack.c.l.b16 %v2991
        %v3024 = vunpack.c.l.b16 %v2992
        %v3025 = vunpack.c.l.b16 %v2993
        %v3026 = vunpack.c.l.b16 %v2994
        %v3027 = vunpack.c.l.b16 %v2995
        %v3028 = vunpack.c.l.b16 %v2996
        %v3029 = vunpack.c.l.b16 %v2997
        %v3030 = vunpack.c.l.b16 %v2998
        %v3031 = vunpack.c.l.b16 %v2999
        %v3032 = vunpack.c.l.b16 %v3000
        %v3033 = vunpack.c.l.b16 %v3001
        %v3034 = vpack.c.b16 %v3019, %v3018
        %v3035 = vpack.c.b16 %v3021, %v3020
        %v3036 = vpack.c.b16 %v3023, %v3022
        %v3037 = vpack.c.b16 %v3025, %v3024
        %v3038 = vpack.c.b16 %v3027, %v3026
        %v3039 = vpack.c.b16 %v3029, %v3028
        %v3040 = vpack.c.b16 %v3031, %v3030
        %v3041 = vpack.c.b16 %v3033, %v3032
        %3050 = vmatprep.subr.bf16.mxu0 0
        %3051 = vmatpush1.bf16.msra.mxu0 %v3034
        %3052 = vmatprep.subr.bf16.mxu0 0
        %3053 = vmatpush1.bf16.msra.mxu0 %v3035
        %3054 = vmatprep.subr.bf16.mxu0 0
        %3055 = vmatpush1.bf16.msra.mxu0 %v3036
        %3056 = vmatprep.subr.bf16.mxu0 0
        %3057 = vmatpush1.bf16.msra.mxu0 %v3037
        %3058 = vmatprep.subr.bf16.mxu0 0
        %3059 = vmatpush1.bf16.msra.mxu0 %v3038
        %3060 = vmatprep.subr.bf16.mxu0 0
        %3061 = vmatpush1.bf16.msra.mxu0 %v3039
        %3062 = vmatprep.subr.bf16.mxu0 0
        %3063 = vmatpush1.bf16.msra.mxu0 %v3040
        %3064 = vmatprep.subr.bf16.mxu0 0
        %3065 = vmatpush1.bf16.msra.mxu0 %v3041
        %3066 = vmatprep.subr.bf16.mxu0 0
        %3067 = vmatpush1.bf16.msra.mxu0 0
        %3068 = vmatprep.subr.bf16.mxu0 0
        %3069 = vmatpush1.bf16.msra.mxu0 0
        %3070 = vmatprep.subr.bf16.mxu0 0
        %3071 = vmatpush1.bf16.msra.mxu0 0
        %3072 = vmatprep.subr.bf16.mxu0 0
        %3073 = vmatpush1.bf16.msra.mxu0 0
        %3074 = vmatprep.subr.bf16.mxu0 0
        %3075 = vmatpush1.bf16.msra.mxu0 0
        %3076 = vmatprep.subr.bf16.mxu0 0
        %3077 = vmatpush1.bf16.msra.mxu0 0
        %3078 = vmatprep.subr.bf16.mxu0 0
        %3079 = vmatpush1.bf16.msra.mxu0 0
        %3080 = vmatprep.subr.bf16.mxu0 0
        %3081 = vmatpush1.bf16.msra.mxu0 0
        %3082 = vmatprep.mubr.bf16.mxu0 0
        %3083 = vmatmul.mubr.bf16.gmra.mrb[0].mxu0 %v2969
        %v3084 = vpop.f32.mrb[0].mxu0
        %v3085 = vadd.f32 0.0, %v3084
        %v3086 = vpop.f32.mrb[0].mxu0
        %v3087 = vpop.f32.mrb[0].mxu0
        %v3088 = vadd.f32 0.0, %v3087
        %v3089 = vpop.f32.mrb[0].mxu0
        %3090 = vmatprep.mubr.bf16.mxu0 0
        %3091 = vmatmul.mubr.bf16.gmra.mrb[0].mxu0 %v2970
        %v3092 = vpop.f32.mrb[0].mxu0
        %v3093 = vadd.f32 0.0, %v3092
        %v3094 = vpop.f32.mrb[0].mxu0
        %v3095 = vpop.f32.mrb[0].mxu0
        %v3096 = vadd.f32 0.0, %v3095
        %v3097 = vpop.f32.mrb[0].mxu0
        %3098 = vmatprep.mubr.bf16.mxu0 0
        %3099 = vmatmul.mubr.bf16.gmra.mrb[0].mxu0 %v2971
        %v3100 = vpop.f32.mrb[0].mxu0
        %v3101 = vadd.f32 0.0, %v3100
        %v3102 = vpop.f32.mrb[0].mxu0
        %v3103 = vpop.f32.mrb[0].mxu0
        %v3104 = vadd.f32 0.0, %v3103
        %v3105 = vpop.f32.mrb[0].mxu0
        %3106 = vmatprep.mubr.bf16.mxu0 0
        %3107 = vmatmul.mubr.bf16.gmra.mrb[0].mxu0 %v2972
        %v3108 = vpop.f32.mrb[0].mxu0
        %v3109 = vadd.f32 0.0, %v3108
        %v3110 = vpop.f32.mrb[0].mxu0
        %v3111 = vpop.f32.mrb[0].mxu0
        %v3112 = vadd.f32 0.0, %v3111
        %v3113 = vpop.f32.mrb[0].mxu0
        %3114 = vmatprep.mubr.bf16.mxu0 0
        %3115 = vmatmul.mubr.bf16.gmra.mrb[0].mxu0 %v2973
        %v3116 = vpop.f32.mrb[0].mxu0
        %v3117 = vadd.f32 0.0, %v3116
        %v3118 = vpop.f32.mrb[0].mxu0
        %v3119 = vpop.f32.mrb[0].mxu0
        %v3120 = vadd.f32 0.0, %v3119
        %v3121 = vpop.f32.mrb[0].mxu0
        %3122 = vmatprep.mubr.bf16.mxu0 0
        %3123 = vmatmul.mubr.bf16.gmra.mrb[0].mxu0 %v2974
        %v3124 = vpop.f32.mrb[0].mxu0
        %v3125 = vadd.f32 0.0, %v3124
        %v3126 = vpop.f32.mrb[0].mxu0
        %v3127 = vpop.f32.mrb[0].mxu0
        %v3128 = vadd.f32 0.0, %v3127
        %v3129 = vpop.f32.mrb[0].mxu0
        %3130 = vmatprep.mubr.bf16.mxu0 0
        %3131 = vmatmul.mubr.bf16.gmra.mrb[0].mxu0 %v2975
        %v3132 = vpop.f32.mrb[0].mxu0
        %v3133 = vadd.f32 0.0, %v3132
        %v3134 = vpop.f32.mrb[0].mxu0
        %v3135 = vpop.f32.mrb[0].mxu0
        %v3136 = vadd.f32 0.0, %v3135
        %v3137 = vpop.f32.mrb[0].mxu0
        %3138 = vmatprep.mubr.bf16.mxu0 0
        %3139 = vmatmul.mubr.bf16.gmra.mrb[0].mxu0 %v2976
        %v3140 = vpop.f32.mrb[0].mxu0
        %v3141 = vadd.f32 0.0, %v3140
        %v3142 = vpop.f32.mrb[0].mxu0
        %v3143 = vpop.f32.mrb[0].mxu0
        %v3144 = vadd.f32 0.0, %v3143
        %v3145 = vpop.f32.mrb[0].mxu0
        %3146 = vmatprep.mubr.bf16.mxu0 0
        %3147 = vmatmul.mubr.bf16.gmra.mrb[0].mxu0 %v2977
        %v3148 = vpop.f32.mrb[0].mxu0
        %v3149 = vadd.f32 0.0, %v3148
        %v3150 = vpop.f32.mrb[0].mxu0
        %v3151 = vpop.f32.mrb[0].mxu0
        %v3152 = vadd.f32 0.0, %v3151
        %v3153 = vpop.f32.mrb[0].mxu0
        %3154 = vmatprep.mubr.bf16.mxu0 0
        %3155 = vmatmul.mubr.bf16.gmra.mrb[0].mxu0 %v2978
        %v3156 = vpop.f32.mrb[0].mxu0
        %v3157 = vadd.f32 0.0, %v3156
        %v3158 = vpop.f32.mrb[0].mxu0
        %v3159 = vpop.f32.mrb[0].mxu0
        %v3160 = vadd.f32 0.0, %v3159
        %v3161 = vpop.f32.mrb[0].mxu0
        %3162 = vmatprep.mubr.bf16.mxu0 0
        %3163 = vmatmul.mubr.bf16.gmra.mrb[0].mxu0 %v2979
        %v3164 = vpop.f32.mrb[0].mxu0
        %v3165 = vadd.f32 0.0, %v3164
        %v3166 = vpop.f32.mrb[0].mxu0
        %v3167 = vpop.f32.mrb[0].mxu0
        %v3168 = vadd.f32 0.0, %v3167
        %v3169 = vpop.f32.mrb[0].mxu0
        %3170 = vmatprep.mubr.bf16.mxu0 0
        %3171 = vmatmul.mubr.bf16.gmra.mrb[0].mxu0 %v2980
        %v3172 = vpop.f32.mrb[0].mxu0
        %v3173 = vadd.f32 0.0, %v3172
        %v3174 = vpop.f32.mrb[0].mxu0
        %v3175 = vpop.f32.mrb[0].mxu0
        %v3176 = vadd.f32 0.0, %v3175
        %v3177 = vpop.f32.mrb[0].mxu0
        %3178 = vmatprep.mubr.bf16.mxu0 0
        %3179 = vmatmul.mubr.bf16.gmra.mrb[0].mxu0 %v2981
        %v3180 = vpop.f32.mrb[0].mxu0
        %v3181 = vadd.f32 0.0, %v3180
        %v3182 = vpop.f32.mrb[0].mxu0
        %v3183 = vpop.f32.mrb[0].mxu0
        %v3184 = vadd.f32 0.0, %v3183
        %v3185 = vpop.f32.mrb[0].mxu0
        %3186 = vmatprep.mubr.bf16.mxu0 0
        %3187 = vmatmul.mubr.bf16.gmra.mrb[0].mxu0 %v2982
        %v3188 = vpop.f32.mrb[0].mxu0
        %v3189 = vadd.f32 0.0, %v3188
        %v3190 = vpop.f32.mrb[0].mxu0
        %v3191 = vpop.f32.mrb[0].mxu0
        %v3192 = vadd.f32 0.0, %v3191
        %v3193 = vpop.f32.mrb[0].mxu0
        %3194 = vmatprep.mubr.bf16.mxu0 0
        %3195 = vmatmul.mubr.bf16.gmra.mrb[0].mxu0 %v2983
        %v3196 = vpop.f32.mrb[0].mxu0
        %v3197 = vadd.f32 0.0, %v3196
        %v3198 = vpop.f32.mrb[0].mxu0
        %v3199 = vpop.f32.mrb[0].mxu0
        %v3200 = vadd.f32 0.0, %v3199
        %v3201 = vpop.f32.mrb[0].mxu0
        %3202 = vmatprep.mubr.bf16.mxu0 0
        %3203 = vmatmul.mubr.bf16.gmra.mrb[0].mxu0 %v2984
        %v3204 = vpop.f32.mrb[0].mxu0
        %v3205 = vadd.f32 0.0, %v3204
        %v3206 = vpop.f32.mrb[0].mxu0
        %v3207 = vpop.f32.mrb[0].mxu0
        %v3208 = vadd.f32 0.0, %v3207
        %v3209 = vpop.f32.mrb[0].mxu0
        %3210 = vdwg.mxu0
        %v3211 = vadd.f32 %v2937, %v3085
        %v3212 = vadd.f32 %v2938, %v3088
        %v3213 = vadd.f32 %v2939, %v3093
        %v3214 = vadd.f32 %v2940, %v3096
        %v3215 = vadd.f32 %v2941, %v3101
        %v3216 = vadd.f32 %v2942, %v3104
        %v3217 = vadd.f32 %v2943, %v3109
        %v3218 = vadd.f32 %v2944, %v3112
        %v3219 = vadd.f32 %v2945, %v3117
        %v3220 = vadd.f32 %v2946, %v3120
        %v3221 = vadd.f32 %v2947, %v3125
        %v3222 = vadd.f32 %v2948, %v3128
        %v3223 = vadd.f32 %v2949, %v3133
        %v3224 = vadd.f32 %v2950, %v3136
        %v3225 = vadd.f32 %v2951, %v3141
        %v3226 = vadd.f32 %v2952, %v3144
        %v3227 = vadd.f32 %v2953, %v3149
        %v3228 = vadd.f32 %v2954, %v3152
        %v3229 = vadd.f32 %v2955, %v3157
        %v3230 = vadd.f32 %v2956, %v3160
        %v3231 = vadd.f32 %v2957, %v3165
        %v3232 = vadd.f32 %v2958, %v3168
        %v3233 = vadd.f32 %v2959, %v3173
        %v3234 = vadd.f32 %v2960, %v3176
        %v3235 = vadd.f32 %v2961, %v3181
        %v3236 = vadd.f32 %v2962, %v3184
        %v3237 = vadd.f32 %v2963, %v3189
        %v3238 = vadd.f32 %v2964, %v3192
        %v3239 = vadd.f32 %v2965, %v3197
        %v3240 = vadd.f32 %v2966, %v3200
        %v3241 = vadd.f32 %v2967, %v3205
        %v3242 = vadd.f32 %v2968, %v3208
        %v3243 = vld [vmem:[%s2] sm:$0x1]
        %v3245 = vlaneseq
        %v3246 = vshrl.u32 %v3245, 7
        %v3247 = vsub.s32 0, %v3246
        %v3248 = vrot.slane %v3243, %v3247
        %v3250 = vadd.f32 %v3211, %v3248
        %v3251 = vadd.f32 %v3212, %v3248
        %v3252 = vadd.f32 %v3213, %v3248
        %v3253 = vadd.f32 %v3214, %v3248
        %v3254 = vadd.f32 %v3215, %v3248
        %v3255 = vadd.f32 %v3216, %v3248
        %v3256 = vadd.f32 %v3217, %v3248
        %v3257 = vadd.f32 %v3218, %v3248
        %v3258 = vadd.f32 %v3219, %v3248
        %v3259 = vadd.f32 %v3220, %v3248
        %v3260 = vadd.f32 %v3221, %v3248
        %v3261 = vadd.f32 %v3222, %v3248
        %v3262 = vadd.f32 %v3223, %v3248
        %v3263 = vadd.f32 %v3224, %v3248
        %v3264 = vadd.f32 %v3225, %v3248
        %v3265 = vadd.f32 %v3226, %v3248
        %v3266 = vadd.f32 %v3227, %v3248
        %v3267 = vadd.f32 %v3228, %v3248
        %v3268 = vadd.f32 %v3229, %v3248
        %v3269 = vadd.f32 %v3230, %v3248
        %v3270 = vadd.f32 %v3231, %v3248
        %v3271 = vadd.f32 %v3232, %v3248
        %v3272 = vadd.f32 %v3233, %v3248
        %v3273 = vadd.f32 %v3234, %v3248
        %v3274 = vadd.f32 %v3235, %v3248
        %v3275 = vadd.f32 %v3236, %v3248
        %v3276 = vadd.f32 %v3237, %v3248
        %v3277 = vadd.f32 %v3238, %v3248
        %v3278 = vadd.f32 %v3239, %v3248
        %v3279 = vadd.f32 %v3240, %v3248
        %v3280 = vadd.f32 %v3241, %v3248
        %v3281 = vadd.f32 %v3242, %v3248
        %v3282 = vmax.f32 %v3250, 0.0
        %v3283 = vmax.f32 %v3251, 0.0
        %v3284 = vmax.f32 %v3252, 0.0
        %v3285 = vmax.f32 %v3253, 0.0
        %v3286 = vmax.f32 %v3254, 0.0
        %v3287 = vmax.f32 %v3255, 0.0
        %v3288 = vmax.f32 %v3256, 0.0
        %v3289 = vmax.f32 %v3257, 0.0
        %v3290 = vmax.f32 %v3258, 0.0
        %v3291 = vmax.f32 %v3259, 0.0
        %v3292 = vmax.f32 %v3260, 0.0
        %v3293 = vmax.f32 %v3261, 0.0
        %v3294 = vmax.f32 %v3262, 0.0
        %v3295 = vmax.f32 %v3263, 0.0
        %v3296 = vmax.f32 %v3264, 0.0
        %v3297 = vmax.f32 %v3265, 0.0
        %v3298 = vmax.f32 %v3266, 0.0
        %v3299 = vmax.f32 %v3267, 0.0
        %v3300 = vmax.f32 %v3268, 0.0
        %v3301 = vmax.f32 %v3269, 0.0
        %v3302 = vmax.f32 %v3270, 0.0
        %v3303 = vmax.f32 %v3271, 0.0
        %v3304 = vmax.f32 %v3272, 0.0
        %v3305 = vmax.f32 %v3273, 0.0
        %v3306 = vmax.f32 %v3274, 0.0
        %v3307 = vmax.f32 %v3275, 0.0
        %v3308 = vmax.f32 %v3276, 0.0
        %v3309 = vmax.f32 %v3277, 0.0
        %v3310 = vmax.f32 %v3278, 0.0
        %v3311 = vmax.f32 %v3279, 0.0
        %v3312 = vmax.f32 %v3280, 0.0
        %v3313 = vmax.f32 %v3281, 0.0
        %v3314 = vpack.c.bf16 %v3283, %v3282
        %v3315 = vpack.c.bf16 %v3285, %v3284
        %v3316 = vpack.c.bf16 %v3287, %v3286
        %v3317 = vpack.c.bf16 %v3289, %v3288
        %v3318 = vpack.c.bf16 %v3291, %v3290
        %v3319 = vpack.c.bf16 %v3293, %v3292
        %v3320 = vpack.c.bf16 %v3295, %v3294
        %v3321 = vpack.c.bf16 %v3297, %v3296
        %v3322 = vpack.c.bf16 %v3299, %v3298
        %v3323 = vpack.c.bf16 %v3301, %v3300
        %v3324 = vpack.c.bf16 %v3303, %v3302
        %v3325 = vpack.c.bf16 %v3305, %v3304
        %v3326 = vpack.c.bf16 %v3307, %v3306
        %v3327 = vpack.c.bf16 %v3309, %v3308
        %v3328 = vpack.c.bf16 %v3311, %v3310
        %v3329 = vpack.c.bf16 %v3313, %v3312
        %3330 = vst [vmem:[#allocation2 + $0x8] sm:$0xff] %v3314
        %3331 = vst [vmem:[#allocation2 + $0x10] sm:$0xff] %v3315
        %3332 = vst [vmem:[#allocation2 + $0x18] sm:$0xff] %v3316
        %3333 = vst [vmem:[#allocation2 + $0x20] sm:$0xff] %v3317
        %3334 = vst [vmem:[#allocation2 + $0x28] sm:$0xff] %v3318
        %3335 = vst [vmem:[#allocation2 + $0x30] sm:$0xff] %v3319
        %3336 = vst [vmem:[#allocation2 + $0x38] sm:$0xff] %v3320
        %3337 = vst [vmem:[#allocation2 + $0x40] sm:$0xff] %v3321
        %3338 = vst [vmem:[#allocation2 + $0x48] sm:$0xff] %v3322
        %3339 = vst [vmem:[#allocation2 + $0x50] sm:$0xff] %v3323
        %3340 = vst [vmem:[#allocation2 + $0x58] sm:$0xff] %v3324
        %3341 = vst [vmem:[#allocation2 + $0x60] sm:$0xff] %v3325
        %3342 = vst [vmem:[#allocation2 + $0x68] sm:$0xff] %v3326
        %3343 = vst [vmem:[#allocation2 + $0x70] sm:$0xff] %v3327
        %3344 = vst [vmem:[#allocation2 + $0x78] sm:$0xff] %v3328
        %3345 = vst [vmem:[#allocation2 + $0x80] sm:$0xff] %v3329
        %v3346 = vrot.slane %v3282, 7
        %v3347 = vrot.slane %v3283, 7
        %v3348 = vrot.slane %v3284, 7
        %v3349 = vrot.slane %v3285, 7
        %v3350 = vrot.slane %v3286, 7
        %v3351 = vrot.slane %v3287, 7
        %v3352 = vrot.slane %v3288, 7
        %v3353 = vrot.slane %v3289, 7
        %v3354 = vrot.slane %v3290, 7
        %v3355 = vrot.slane %v3291, 7
        %v3356 = vrot.slane %v3292, 7
        %v3357 = vrot.slane %v3293, 7
        %v3358 = vrot.slane %v3294, 7
        %v3359 = vrot.slane %v3295, 7
        %v3360 = vrot.slane %v3296, 7
        %v3361 = vrot.slane %v3297, 7
        %v3362 = vrot.slane %v3298, 7
        %v3363 = vrot.slane %v3299, 7
        %v3364 = vrot.slane %v3300, 7
        %v3365 = vrot.slane %v3301, 7
        %v3366 = vrot.slane %v3302, 7
        %v3367 = vrot.slane %v3303, 7
        %v3368 = vrot.slane %v3304, 7
        %v3369 = vrot.slane %v3305, 7
        %v3370 = vrot.slane %v3306, 7
        %v3371 = vrot.slane %v3307, 7
        %v3372 = vrot.slane %v3308, 7
        %v3373 = vrot.slane %v3309, 7
        %v3374 = vrot.slane %v3310, 7
        %v3375 = vrot.slane %v3311, 7
        %v3376 = vrot.slane %v3312, 7
        %v3377 = vrot.slane %v3313, 7
        %v3378 = vsel %vm616, %v3376, %v3377
        %v3379 = vsel %vm616, %v3375, %v3376
        %v3380 = vsel %vm616, %v3374, %v3375
        %v3381 = vsel %vm616, %v3373, %v3374
        %v3382 = vsel %vm616, %v3372, %v3373
        %v3383 = vsel %vm616, %v3371, %v3372
        %v3384 = vsel %vm616, %v3370, %v3371
        %v3385 = vsel %vm616, %v3369, %v3370
        %v3386 = vsel %vm616, %v3368, %v3369
        %v3387 = vsel %vm616, %v3367, %v3368
        %v3388 = vsel %vm616, %v3366, %v3367
        %v3389 = vsel %vm616, %v3365, %v3366
        %v3390 = vsel %vm616, %v3364, %v3365
        %v3391 = vsel %vm616, %v3363, %v3364
        %v3392 = vsel %vm616, %v3362, %v3363
        %v3393 = vsel %vm616, %v3361, %v3362
        %v3394 = vsel %vm616, %v3360, %v3361
        %v3395 = vsel %vm616, %v3359, %v3360
        %v3396 = vsel %vm616, %v3358, %v3359
        %v3397 = vsel %vm616, %v3357, %v3358
        %v3398 = vsel %vm616, %v3356, %v3357
        %v3399 = vsel %vm616, %v3355, %v3356
        %v3400 = vsel %vm616, %v3354, %v3355
        %v3401 = vsel %vm616, %v3353, %v3354
        %v3402 = vsel %vm616, %v3352, %v3353
        %v3403 = vsel %vm616, %v3351, %v3352
        %v3404 = vsel %vm616, %v3350, %v3351
        %v3405 = vsel %vm616, %v3349, %v3350
        %v3406 = vsel %vm616, %v3348, %v3349
        %v3407 = vsel %vm616, %v3347, %v3348
        %v3408 = vsel %vm616, %v3346, %v3347
        %v3409 = vsel %vm616, %v3377, %v3346
        %v3410 = vsel %vm338, %v3409, 0.0
        %v3411 = vsel %vm339, %v3408, 0.0
        %v3412 = vsel %vm340, %v3407, 0.0
        %v3413 = vsel %vm341, %v3406, 0.0
        %v3414 = vsel %vm342, %v3405, 0.0
        %v3415 = vsel %vm343, %v3404, 0.0
        %v3416 = vsel %vm344, %v3403, 0.0
        %v3417 = vsel %vm345, %v3402, 0.0
        %v3418 = vsel %vm346, %v3401, 0.0
        %v3419 = vsel %vm347, %v3400, 0.0
        %v3420 = vsel %vm348, %v3399, 0.0
        %v3421 = vsel %vm349, %v3398, 0.0
        %v3422 = vsel %vm350, %v3397, 0.0
        %v3423 = vsel %vm351, %v3396, 0.0
        %v3424 = vsel %vm352, %v3395, 0.0
        %v3425 = vsel %vm353, %v3394, 0.0
        %v3426 = vsel %vm354, %v3393, 0.0
        %v3427 = vsel %vm355, %v3392, 0.0
        %v3428 = vsel %vm356, %v3391, 0.0
        %v3429 = vsel %vm357, %v3390, 0.0
        %v3430 = vsel %vm358, %v3389, 0.0
        %v3431 = vsel %vm359, %v3388, 0.0
        %v3432 = vsel %vm360, %v3387, 0.0
        %v3433 = vsel %vm361, %v3386, 0.0
        %v3434 = vsel %vm362, %v3385, 0.0
        %v3435 = vsel %vm363, %v3384, 0.0
        %v3436 = vsel %vm364, %v3383, 0.0
        %v3437 = vsel %vm365, %v3382, 0.0
        %v3438 = vsel %vm366, %v3381, 0.0
        %v3439 = vsel %vm367, %v3380, 0.0
        %v3440 = vsel %vm368, %v3379, 0.0
        %v3441 = vsel %vm369, %v3378, 0.0
        %v3442 = vpack.c.bf16 %v3411, %v3410
        %v3443 = vpack.c.bf16 %v3413, %v3412
        %v3444 = vpack.c.bf16 %v3415, %v3414
        %v3445 = vpack.c.bf16 %v3417, %v3416
        %v3446 = vpack.c.bf16 %v3419, %v3418
        %v3447 = vpack.c.bf16 %v3421, %v3420
        %v3448 = vpack.c.bf16 %v3423, %v3422
        %v3449 = vpack.c.bf16 %v3425, %v3424
        %v3450 = vpack.c.bf16 %v3427, %v3426
        %v3451 = vpack.c.bf16 %v3429, %v3428
        %v3452 = vpack.c.bf16 %v3431, %v3430
        %v3453 = vpack.c.bf16 %v3433, %v3432
        %v3454 = vpack.c.bf16 %v3435, %v3434
        %v3455 = vpack.c.bf16 %v3437, %v3436
        %v3456 = vpack.c.bf16 %v3439, %v3438
        %v3457 = vpack.c.bf16 %v3441, %v3440
        %3458 = vst [vmem:[#allocation3 + $0x8] sm:$0xff] %v3442
        %3459 = vst [vmem:[#allocation3 + $0x10] sm:$0xff] %v3443
        %3460 = vst [vmem:[#allocation3 + $0x18] sm:$0xff] %v3444
        %3461 = vst [vmem:[#allocation3 + $0x20] sm:$0xff] %v3445
        %3462 = vst [vmem:[#allocation3 + $0x28] sm:$0xff] %v3446
        %3463 = vst [vmem:[#allocation3 + $0x30] sm:$0xff] %v3447
        %3464 = vst [vmem:[#allocation3 + $0x38] sm:$0xff] %v3448
        %3465 = vst [vmem:[#allocation3 + $0x40] sm:$0xff] %v3449
        %3466 = vst [vmem:[#allocation3 + $0x48] sm:$0xff] %v3450
        %3467 = vst [vmem:[#allocation3 + $0x50] sm:$0xff] %v3451
        %3468 = vst [vmem:[#allocation3 + $0x58] sm:$0xff] %v3452
        %3469 = vst [vmem:[#allocation3 + $0x60] sm:$0xff] %v3453
        %3470 = vst [vmem:[#allocation3 + $0x68] sm:$0xff] %v3454
        %3471 = vst [vmem:[#allocation3 + $0x70] sm:$0xff] %v3455
        %3472 = vst [vmem:[#allocation3 + $0x78] sm:$0xff] %v3456
        %3473 = vst [vmem:[#allocation3 + $0x80] sm:$0xff] %v3457
        %v3474 = vrot.slane %v3282, 1
        %v3475 = vrot.slane %v3283, 1
        %v3476 = vrot.slane %v3284, 1
        %v3477 = vrot.slane %v3285, 1
        %v3478 = vrot.slane %v3286, 1
        %v3479 = vrot.slane %v3287, 1
        %v3480 = vrot.slane %v3288, 1
        %v3481 = vrot.slane %v3289, 1
        %v3482 = vrot.slane %v3290, 1
        %v3483 = vrot.slane %v3291, 1
        %v3484 = vrot.slane %v3292, 1
        %v3485 = vrot.slane %v3293, 1
        %v3486 = vrot.slane %v3294, 1
        %v3487 = vrot.slane %v3295, 1
        %v3488 = vrot.slane %v3296, 1
        %v3489 = vrot.slane %v3297, 1
        %v3490 = vrot.slane %v3298, 1
        %v3491 = vrot.slane %v3299, 1
        %v3492 = vrot.slane %v3300, 1
        %v3493 = vrot.slane %v3301, 1
        %v3494 = vrot.slane %v3302, 1
        %v3495 = vrot.slane %v3303, 1
        %v3496 = vrot.slane %v3304, 1
        %v3497 = vrot.slane %v3305, 1
        %v3498 = vrot.slane %v3306, 1
        %v3499 = vrot.slane %v3307, 1
        %v3500 = vrot.slane %v3308, 1
        %v3501 = vrot.slane %v3309, 1
        %v3502 = vrot.slane %v3310, 1
        %v3503 = vrot.slane %v3311, 1
        %v3504 = vrot.slane %v3312, 1
        %v3505 = vrot.slane %v3313, 1
        %v3506 = vsel %vm745, %v3504, %v3505
        %v3507 = vsel %vm745, %v3503, %v3504
        %v3508 = vsel %vm745, %v3502, %v3503
        %v3509 = vsel %vm745, %v3501, %v3502
        %v3510 = vsel %vm745, %v3500, %v3501
        %v3511 = vsel %vm745, %v3499, %v3500
        %v3512 = vsel %vm745, %v3498, %v3499
        %v3513 = vsel %vm745, %v3497, %v3498
        %v3514 = vsel %vm745, %v3496, %v3497
        %v3515 = vsel %vm745, %v3495, %v3496
        %v3516 = vsel %vm745, %v3494, %v3495
        %v3517 = vsel %vm745, %v3493, %v3494
        %v3518 = vsel %vm745, %v3492, %v3493
        %v3519 = vsel %vm745, %v3491, %v3492
        %v3520 = vsel %vm745, %v3490, %v3491
        %v3521 = vsel %vm745, %v3489, %v3490
        %v3522 = vsel %vm745, %v3488, %v3489
        %v3523 = vsel %vm745, %v3487, %v3488
        %v3524 = vsel %vm745, %v3486, %v3487
        %v3525 = vsel %vm745, %v3485, %v3486
        %v3526 = vsel %vm745, %v3484, %v3485
        %v3527 = vsel %vm745, %v3483, %v3484
        %v3528 = vsel %vm745, %v3482, %v3483
        %v3529 = vsel %vm745, %v3481, %v3482
        %v3530 = vsel %vm745, %v3480, %v3481
        %v3531 = vsel %vm745, %v3479, %v3480
        %v3532 = vsel %vm745, %v3478, %v3479
        %v3533 = vsel %vm745, %v3477, %v3478
        %v3534 = vsel %vm745, %v3476, %v3477
        %v3535 = vsel %vm745, %v3475, %v3476
        %v3536 = vsel %vm745, %v3474, %v3475
        %v3537 = vsel %vm745, %v3505, %v3474
        %v3538 = vsel %vm370, %v3536, 0.0
        %v3539 = vsel %vm371, %v3535, 0.0
        %v3540 = vsel %vm372, %v3534, 0.0
        %v3541 = vsel %vm373, %v3533, 0.0
        %v3542 = vsel %vm374, %v3532, 0.0
        %v3543 = vsel %vm375, %v3531, 0.0
        %v3544 = vsel %vm376, %v3530, 0.0
        %v3545 = vsel %vm377, %v3529, 0.0
        %v3546 = vsel %vm378, %v3528, 0.0
        %v3547 = vsel %vm379, %v3527, 0.0
        %v3548 = vsel %vm380, %v3526, 0.0
        %v3549 = vsel %vm381, %v3525, 0.0
        %v3550 = vsel %vm382, %v3524, 0.0
        %v3551 = vsel %vm383, %v3523, 0.0
        %v3552 = vsel %vm384, %v3522, 0.0
        %v3553 = vsel %vm385, %v3521, 0.0
        %v3554 = vsel %vm386, %v3520, 0.0
        %v3555 = vsel %vm387, %v3519, 0.0
        %v3556 = vsel %vm388, %v3518, 0.0
        %v3557 = vsel %vm389, %v3517, 0.0
        %v3558 = vsel %vm390, %v3516, 0.0
        %v3559 = vsel %vm391, %v3515, 0.0
        %v3560 = vsel %vm392, %v3514, 0.0
        %v3561 = vsel %vm393, %v3513, 0.0
        %v3562 = vsel %vm394, %v3512, 0.0
        %v3563 = vsel %vm395, %v3511, 0.0
        %v3564 = vsel %vm396, %v3510, 0.0
        %v3565 = vsel %vm397, %v3509, 0.0
        %v3566 = vsel %vm398, %v3508, 0.0
        %v3567 = vsel %vm399, %v3507, 0.0
        %v3568 = vsel %vm400, %v3506, 0.0
        %v3569 = vsel %vm401, %v3537, 0.0
        %v3570 = vpack.c.bf16 %v3539, %v3538
        %v3571 = vpack.c.bf16 %v3541, %v3540
        %v3572 = vpack.c.bf16 %v3543, %v3542
        %v3573 = vpack.c.bf16 %v3545, %v3544
        %v3574 = vpack.c.bf16 %v3547, %v3546
        %v3575 = vpack.c.bf16 %v3549, %v3548
        %v3576 = vpack.c.bf16 %v3551, %v3550
        %v3577 = vpack.c.bf16 %v3553, %v3552
        %v3578 = vpack.c.bf16 %v3555, %v3554
        %v3579 = vpack.c.bf16 %v3557, %v3556
        %v3580 = vpack.c.bf16 %v3559, %v3558
        %v3581 = vpack.c.bf16 %v3561, %v3560
        %v3582 = vpack.c.bf16 %v3563, %v3562
        %v3583 = vpack.c.bf16 %v3565, %v3564
        %v3584 = vpack.c.bf16 %v3567, %v3566
        %v3585 = vpack.c.bf16 %v3569, %v3568
        %3586 = vst [vmem:[#allocation4 + $0x8] sm:$0xff] %v3570
        %3587 = vst [vmem:[#allocation4 + $0x10] sm:$0xff] %v3571
        %3588 = vst [vmem:[#allocation4 + $0x18] sm:$0xff] %v3572
        %3589 = vst [vmem:[#allocation4 + $0x20] sm:$0xff] %v3573
        %3590 = vst [vmem:[#allocation4 + $0x28] sm:$0xff] %v3574
        %3591 = vst [vmem:[#allocation4 + $0x30] sm:$0xff] %v3575
        %3592 = vst [vmem:[#allocation4 + $0x38] sm:$0xff] %v3576
        %3593 = vst [vmem:[#allocation4 + $0x40] sm:$0xff] %v3577
        %3594 = vst [vmem:[#allocation4 + $0x48] sm:$0xff] %v3578
        %3595 = vst [vmem:[#allocation4 + $0x50] sm:$0xff] %v3579
        %3596 = vst [vmem:[#allocation4 + $0x58] sm:$0xff] %v3580
        %3597 = vst [vmem:[#allocation4 + $0x60] sm:$0xff] %v3581
        %3598 = vst [vmem:[#allocation4 + $0x68] sm:$0xff] %v3582
        %3599 = vst [vmem:[#allocation4 + $0x70] sm:$0xff] %v3583
        %3600 = vst [vmem:[#allocation4 + $0x78] sm:$0xff] %v3584
        %3601 = vst [vmem:[#allocation4 + $0x80] sm:$0xff] %v3585
        %v3602 = vld [vmem:[#allocation3] sm:$0xff]
        %v3603 = vld [vmem:[#allocation3 + $0x8] sm:$0xff]
        %v3604 = vld [vmem:[#allocation3 + $0x10] sm:$0xff]
        %v3605 = vld [vmem:[#allocation3 + $0x18] sm:$0xff]
        %v3606 = vld [vmem:[#allocation3 + $0x20] sm:$0xff]
        %v3607 = vld [vmem:[#allocation3 + $0x28] sm:$0xff]
        %v3608 = vld [vmem:[#allocation3 + $0x30] sm:$0xff]
        %v3609 = vld [vmem:[#allocation3 + $0x38] sm:$0xff]
        %v3610 = vld [vmem:[#allocation3 + $0x40] sm:$0xff]
        %v3611 = vld [vmem:[#allocation3 + $0x48] sm:$0xff]
        %v3612 = vld [vmem:[#allocation3 + $0x50] sm:$0xff]
        %v3613 = vld [vmem:[#allocation3 + $0x58] sm:$0xff]
        %v3614 = vld [vmem:[#allocation3 + $0x60] sm:$0xff]
        %v3615 = vld [vmem:[#allocation3 + $0x68] sm:$0xff]
        %v3616 = vld [vmem:[#allocation3 + $0x70] sm:$0xff]
        %v3617 = vld [vmem:[#allocation3 + $0x78] sm:$0xff]
        %v3618 = vld [vmem:[#allocation10] sm:$0xf]
        %v3619 = vld [vmem:[#allocation10 + $0x4] sm:$0xf]
        %v3620 = vld [vmem:[#allocation10 + $0x8] sm:$0xf]
        %v3621 = vld [vmem:[#allocation10 + $0xc] sm:$0xf]
        %v3622 = vld [vmem:[#allocation10 + $0x10] sm:$0xf]
        %v3623 = vld [vmem:[#allocation10 + $0x14] sm:$0xf]
        %v3624 = vld [vmem:[#allocation10 + $0x18] sm:$0xf]
        %v3625 = vld [vmem:[#allocation10 + $0x1c] sm:$0xf]
        %v3626 = vld [vmem:[#allocation10 + $0x20] sm:$0xf]
        %v3627 = vld [vmem:[#allocation10 + $0x24] sm:$0xf]
        %v3628 = vld [vmem:[#allocation10 + $0x28] sm:$0xf]
        %v3629 = vld [vmem:[#allocation10 + $0x2c] sm:$0xf]
        %v3630 = vld [vmem:[#allocation10 + $0x30] sm:$0xf]
        %v3631 = vld [vmem:[#allocation10 + $0x34] sm:$0xf]
        %v3632 = vld [vmem:[#allocation10 + $0x38] sm:$0xf]
        %v3633 = vld [vmem:[#allocation10 + $0x3c] sm:$0xf]
        %v3634 = vld [vmem:[#allocation2] sm:$0xff]
        %v3635 = vld [vmem:[#allocation2 + $0x8] sm:$0xff]
        %v3636 = vld [vmem:[#allocation2 + $0x10] sm:$0xff]
        %v3637 = vld [vmem:[#allocation2 + $0x18] sm:$0xff]
        %v3638 = vld [vmem:[#allocation2 + $0x20] sm:$0xff]
        %v3639 = vld [vmem:[#allocation2 + $0x28] sm:$0xff]
        %v3640 = vld [vmem:[#allocation2 + $0x30] sm:$0xff]
        %v3641 = vld [vmem:[#allocation2 + $0x38] sm:$0xff]
        %v3642 = vld [vmem:[#allocation2 + $0x40] sm:$0xff]
        %v3643 = vld [vmem:[#allocation2 + $0x48] sm:$0xff]
        %v3644 = vld [vmem:[#allocation2 + $0x50] sm:$0xff]
        %v3645 = vld [vmem:[#allocation2 + $0x58] sm:$0xff]
        %v3646 = vld [vmem:[#allocation2 + $0x60] sm:$0xff]
        %v3647 = vld [vmem:[#allocation2 + $0x68] sm:$0xff]
        %v3648 = vld [vmem:[#allocation2 + $0x70] sm:$0xff]
        %v3649 = vld [vmem:[#allocation2 + $0x78] sm:$0xff]
        %s3650 = scalar_lea.vmem [#allocation10], 64
        %v3651 = vld [vmem:[%s3650] sm:$0xf]
        %v3652 = vld [vmem:[%s3650 + $0x4] sm:$0xf]
        %v3653 = vld [vmem:[%s3650 + $0x8] sm:$0xf]
        %v3654 = vld [vmem:[%s3650 + $0xc] sm:$0xf]
        %v3655 = vld [vmem:[%s3650 + $0x10] sm:$0xf]
        %v3656 = vld [vmem:[%s3650 + $0x14] sm:$0xf]
        %v3657 = vld [vmem:[%s3650 + $0x18] sm:$0xf]
        %v3658 = vld [vmem:[%s3650 + $0x1c] sm:$0xf]
        %v3659 = vld [vmem:[%s3650 + $0x20] sm:$0xf]
        %v3660 = vld [vmem:[%s3650 + $0x24] sm:$0xf]
        %v3661 = vld [vmem:[%s3650 + $0x28] sm:$0xf]
        %v3662 = vld [vmem:[%s3650 + $0x2c] sm:$0xf]
        %v3663 = vld [vmem:[%s3650 + $0x30] sm:$0xf]
        %v3664 = vld [vmem:[%s3650 + $0x34] sm:$0xf]
        %v3665 = vld [vmem:[%s3650 + $0x38] sm:$0xf]
        %v3666 = vld [vmem:[%s3650 + $0x3c] sm:$0xf]
        %v3683 = vunpack.c.l.b16 %v3651
        %v3684 = vunpack.c.l.b16 %v3652
        %v3685 = vunpack.c.l.b16 %v3653
        %v3686 = vunpack.c.l.b16 %v3654
        %v3687 = vunpack.c.l.b16 %v3655
        %v3688 = vunpack.c.l.b16 %v3656
        %v3689 = vunpack.c.l.b16 %v3657
        %v3690 = vunpack.c.l.b16 %v3658
        %v3691 = vunpack.c.l.b16 %v3659
        %v3692 = vunpack.c.l.b16 %v3660
        %v3693 = vunpack.c.l.b16 %v3661
        %v3694 = vunpack.c.l.b16 %v3662
        %v3695 = vunpack.c.l.b16 %v3663
        %v3696 = vunpack.c.l.b16 %v3664
        %v3697 = vunpack.c.l.b16 %v3665
        %v3698 = vunpack.c.l.b16 %v3666
        %v3699 = vpack.c.b16 %v3684, %v3683
        %v3700 = vpack.c.b16 %v3686, %v3685
        %v3701 = vpack.c.b16 %v3688, %v3687
        %v3702 = vpack.c.b16 %v3690, %v3689
        %v3703 = vpack.c.b16 %v3692, %v3691
        %v3704 = vpack.c.b16 %v3694, %v3693
        %v3705 = vpack.c.b16 %v3696, %v3695
        %v3706 = vpack.c.b16 %v3698, %v3697
        %3715 = vmatprep.subr.bf16.mxu0 0
        %3716 = vmatpush1.bf16.msra.mxu0 %v3699
        %3717 = vmatprep.subr.bf16.mxu0 0
        %3718 = vmatpush1.bf16.msra.mxu0 %v3700
        %3719 = vmatprep.subr.bf16.mxu0 0
        %3720 = vmatpush1.bf16.msra.mxu0 %v3701
        %3721 = vmatprep.subr.bf16.mxu0 0
        %3722 = vmatpush1.bf16.msra.mxu0 %v3702
        %3723 = vmatprep.subr.bf16.mxu0 0
        %3724 = vmatpush1.bf16.msra.mxu0 %v3703
        %3725 = vmatprep.subr.bf16.mxu0 0
        %3726 = vmatpush1.bf16.msra.mxu0 %v3704
        %3727 = vmatprep.subr.bf16.mxu0 0
        %3728 = vmatpush1.bf16.msra.mxu0 %v3705
        %3729 = vmatprep.subr.bf16.mxu0 0
        %3730 = vmatpush1.bf16.msra.mxu0 %v3706
        %3731 = vmatprep.subr.bf16.mxu0 0
        %3732 = vmatpush1.bf16.msra.mxu0 0
        %3733 = vmatprep.subr.bf16.mxu0 0
        %3734 = vmatpush1.bf16.msra.mxu0 0
        %3735 = vmatprep.subr.bf16.mxu0 0
        %3736 = vmatpush1.bf16.msra.mxu0 0
        %3737 = vmatprep.subr.bf16.mxu0 0
        %3738 = vmatpush1.bf16.msra.mxu0 0
        %3739 = vmatprep.subr.bf16.mxu0 0
        %3740 = vmatpush1.bf16.msra.mxu0 0
        %3741 = vmatprep.subr.bf16.mxu0 0
        %3742 = vmatpush1.bf16.msra.mxu0 0
        %3743 = vmatprep.subr.bf16.mxu0 0
        %3744 = vmatpush1.bf16.msra.mxu0 0
        %3745 = vmatprep.subr.bf16.mxu0 0
        %3746 = vmatpush1.bf16.msra.mxu0 0
        %3747 = vmatprep.mubr.bf16.mxu0 0
        %3748 = vmatmul.mubr.bf16.gmra.mrb[0].mxu0 %v3634
        %v3749 = vpop.f32.mrb[0].mxu0
        %v3750 = vadd.f32 0.0, %v3749
        %v3751 = vpop.f32.mrb[0].mxu0
        %v3752 = vpop.f32.mrb[0].mxu0
        %v3753 = vadd.f32 0.0, %v3752
        %v3754 = vpop.f32.mrb[0].mxu0
        %3755 = vmatprep.mubr.bf16.mxu0 0
        %3756 = vmatmul.mubr.bf16.gmra.mrb[0].mxu0 %v3635
        %v3757 = vpop.f32.mrb[0].mxu0
        %v3758 = vadd.f32 0.0, %v3757
        %v3759 = vpop.f32.mrb[0].mxu0
        %v3760 = vpop.f32.mrb[0].mxu0
        %v3761 = vadd.f32 0.0, %v3760
        %v3762 = vpop.f32.mrb[0].mxu0
        %3763 = vmatprep.mubr.bf16.mxu0 0
        %3764 = vmatmul.mubr.bf16.gmra.mrb[0].mxu0 %v3636
        %v3765 = vpop.f32.mrb[0].mxu0
        %v3766 = vadd.f32 0.0, %v3765
        %v3767 = vpop.f32.mrb[0].mxu0
        %v3768 = vpop.f32.mrb[0].mxu0
        %v3769 = vadd.f32 0.0, %v3768
        %v3770 = vpop.f32.mrb[0].mxu0
        %3771 = vmatprep.mubr.bf16.mxu0 0
        %3772 = vmatmul.mubr.bf16.gmra.mrb[0].mxu0 %v3637
        %v3773 = vpop.f32.mrb[0].mxu0
        %v3774 = vadd.f32 0.0, %v3773
        %v3775 = vpop.f32.mrb[0].mxu0
        %v3776 = vpop.f32.mrb[0].mxu0
        %v3777 = vadd.f32 0.0, %v3776
        %v3778 = vpop.f32.mrb[0].mxu0
        %3779 = vmatprep.mubr.bf16.mxu0 0
        %3780 = vmatmul.mubr.bf16.gmra.mrb[0].mxu0 %v3638
        %v3781 = vpop.f32.mrb[0].mxu0
        %v3782 = vadd.f32 0.0, %v3781
        %v3783 = vpop.f32.mrb[0].mxu0
        %v3784 = vpop.f32.mrb[0].mxu0
        %v3785 = vadd.f32 0.0, %v3784
        %v3786 = vpop.f32.mrb[0].mxu0
        %3787 = vmatprep.mubr.bf16.mxu0 0
        %3788 = vmatmul.mubr.bf16.gmra.mrb[0].mxu0 %v3639
        %v3789 = vpop.f32.mrb[0].mxu0
        %v3790 = vadd.f32 0.0, %v3789
        %v3791 = vpop.f32.mrb[0].mxu0
        %v3792 = vpop.f32.mrb[0].mxu0
        %v3793 = vadd.f32 0.0, %v3792
        %v3794 = vpop.f32.mrb[0].mxu0
        %3795 = vmatprep.mubr.bf16.mxu0 0
        %3796 = vmatmul.mubr.bf16.gmra.mrb[0].mxu0 %v3640
        %v3797 = vpop.f32.mrb[0].mxu0
        %v3798 = vadd.f32 0.0, %v3797
        %v3799 = vpop.f32.mrb[0].mxu0
        %v3800 = vpop.f32.mrb[0].mxu0
        %v3801 = vadd.f32 0.0, %v3800
        %v3802 = vpop.f32.mrb[0].mxu0
        %3803 = vmatprep.mubr.bf16.mxu0 0
        %3804 = vmatmul.mubr.bf16.gmra.mrb[0].mxu0 %v3641
        %v3805 = vpop.f32.mrb[0].mxu0
        %v3806 = vadd.f32 0.0, %v3805
        %v3807 = vpop.f32.mrb[0].mxu0
        %v3808 = vpop.f32.mrb[0].mxu0
        %v3809 = vadd.f32 0.0, %v3808
        %v3810 = vpop.f32.mrb[0].mxu0
        %3811 = vmatprep.mubr.bf16.mxu0 0
        %3812 = vmatmul.mubr.bf16.gmra.mrb[0].mxu0 %v3642
        %v3813 = vpop.f32.mrb[0].mxu0
        %v3814 = vadd.f32 0.0, %v3813
        %v3815 = vpop.f32.mrb[0].mxu0
        %v3816 = vpop.f32.mrb[0].mxu0
        %v3817 = vadd.f32 0.0, %v3816
        %v3818 = vpop.f32.mrb[0].mxu0
        %3819 = vmatprep.mubr.bf16.mxu0 0
        %3820 = vmatmul.mubr.bf16.gmra.mrb[0].mxu0 %v3643
        %v3821 = vpop.f32.mrb[0].mxu0
        %v3822 = vadd.f32 0.0, %v3821
        %v3823 = vpop.f32.mrb[0].mxu0
        %v3824 = vpop.f32.mrb[0].mxu0
        %v3825 = vadd.f32 0.0, %v3824
        %v3826 = vpop.f32.mrb[0].mxu0
        %3827 = vmatprep.mubr.bf16.mxu0 0
        %3828 = vmatmul.mubr.bf16.gmra.mrb[0].mxu0 %v3644
        %v3829 = vpop.f32.mrb[0].mxu0
        %v3830 = vadd.f32 0.0, %v3829
        %v3831 = vpop.f32.mrb[0].mxu0
        %v3832 = vpop.f32.mrb[0].mxu0
        %v3833 = vadd.f32 0.0, %v3832
        %v3834 = vpop.f32.mrb[0].mxu0
        %3835 = vmatprep.mubr.bf16.mxu0 0
        %3836 = vmatmul.mubr.bf16.gmra.mrb[0].mxu0 %v3645
        %v3837 = vpop.f32.mrb[0].mxu0
        %v3838 = vadd.f32 0.0, %v3837
        %v3839 = vpop.f32.mrb[0].mxu0
        %v3840 = vpop.f32.mrb[0].mxu0
        %v3841 = vadd.f32 0.0, %v3840
        %v3842 = vpop.f32.mrb[0].mxu0
        %3843 = vmatprep.mubr.bf16.mxu0 0
        %3844 = vmatmul.mubr.bf16.gmra.mrb[0].mxu0 %v3646
        %v3845 = vpop.f32.mrb[0].mxu0
        %v3846 = vadd.f32 0.0, %v3845
        %v3847 = vpop.f32.mrb[0].mxu0
        %v3848 = vpop.f32.mrb[0].mxu0
        %v3849 = vadd.f32 0.0, %v3848
        %v3850 = vpop.f32.mrb[0].mxu0
        %3851 = vmatprep.mubr.bf16.mxu0 0
        %3852 = vmatmul.mubr.bf16.gmra.mrb[0].mxu0 %v3647
        %v3853 = vpop.f32.mrb[0].mxu0
        %v3854 = vadd.f32 0.0, %v3853
        %v3855 = vpop.f32.mrb[0].mxu0
        %v3856 = vpop.f32.mrb[0].mxu0
        %v3857 = vadd.f32 0.0, %v3856
        %v3858 = vpop.f32.mrb[0].mxu0
        %3859 = vmatprep.mubr.bf16.mxu0 0
        %3860 = vmatmul.mubr.bf16.gmra.mrb[0].mxu0 %v3648
        %v3861 = vpop.f32.mrb[0].mxu0
        %v3862 = vadd.f32 0.0, %v3861
        %v3863 = vpop.f32.mrb[0].mxu0
        %v3864 = vpop.f32.mrb[0].mxu0
        %v3865 = vadd.f32 0.0, %v3864
        %v3866 = vpop.f32.mrb[0].mxu0
        %3867 = vmatprep.mubr.bf16.mxu0 0
        %3868 = vmatmul.mubr.bf16.gmra.mrb[0].mxu0 %v3649
        %v3869 = vpop.f32.mrb[0].mxu0
        %v3870 = vadd.f32 0.0, %v3869
        %v3871 = vpop.f32.mrb[0].mxu0
        %v3872 = vpop.f32.mrb[0].mxu0
        %v3873 = vadd.f32 0.0, %v3872
        %v3874 = vpop.f32.mrb[0].mxu0
        %3875 = vdwg.mxu0
        %v3892 = vunpack.c.l.b16 %v3618
        %v3893 = vunpack.c.l.b16 %v3619
        %v3894 = vunpack.c.l.b16 %v3620
        %v3895 = vunpack.c.l.b16 %v3621
        %v3896 = vunpack.c.l.b16 %v3622
        %v3897 = vunpack.c.l.b16 %v3623
        %v3898 = vunpack.c.l.b16 %v3624
        %v3899 = vunpack.c.l.b16 %v3625
        %v3900 = vunpack.c.l.b16 %v3626
        %v3901 = vunpack.c.l.b16 %v3627
        %v3902 = vunpack.c.l.b16 %v3628
        %v3903 = vunpack.c.l.b16 %v3629
        %v3904 = vunpack.c.l.b16 %v3630
        %v3905 = vunpack.c.l.b16 %v3631
        %v3906 = vunpack.c.l.b16 %v3632
        %v3907 = vunpack.c.l.b16 %v3633
        %v3908 = vpack.c.b16 %v3893, %v3892
        %v3909 = vpack.c.b16 %v3895, %v3894
        %v3910 = vpack.c.b16 %v3897, %v3896
        %v3911 = vpack.c.b16 %v3899, %v3898
        %v3912 = vpack.c.b16 %v3901, %v3900
        %v3913 = vpack.c.b16 %v3903, %v3902
        %v3914 = vpack.c.b16 %v3905, %v3904
        %v3915 = vpack.c.b16 %v3907, %v3906
        %3924 = vmatprep.subr.bf16.mxu0 0
        %3925 = vmatpush1.bf16.msra.mxu0 %v3908
        %3926 = vmatprep.subr.bf16.mxu0 0
        %3927 = vmatpush1.bf16.msra.mxu0 %v3909
        %3928 = vmatprep.subr.bf16.mxu0 0
        %3929 = vmatpush1.bf16.msra.mxu0 %v3910
        %3930 = vmatprep.subr.bf16.mxu0 0
        %3931 = vmatpush1.bf16.msra.mxu0 %v3911
        %3932 = vmatprep.subr.bf16.mxu0 0
        %3933 = vmatpush1.bf16.msra.mxu0 %v3912
        %3934 = vmatprep.subr.bf16.mxu0 0
        %3935 = vmatpush1.bf16.msra.mxu0 %v3913
        %3936 = vmatprep.subr.bf16.mxu0 0
        %3937 = vmatpush1.bf16.msra.mxu0 %v3914
        %3938 = vmatprep.subr.bf16.mxu0 0
        %3939 = vmatpush1.bf16.msra.mxu0 %v3915
        %3940 = vmatprep.subr.bf16.mxu0 0
        %3941 = vmatpush1.bf16.msra.mxu0 0
        %3942 = vmatprep.subr.bf16.mxu0 0
        %3943 = vmatpush1.bf16.msra.mxu0 0
        %3944 = vmatprep.subr.bf16.mxu0 0
        %3945 = vmatpush1.bf16.msra.mxu0 0
        %3946 = vmatprep.subr.bf16.mxu0 0
        %3947 = vmatpush1.bf16.msra.mxu0 0
        %3948 = vmatprep.subr.bf16.mxu0 0
        %3949 = vmatpush1.bf16.msra.mxu0 0
        %3950 = vmatprep.subr.bf16.mxu0 0
        %3951 = vmatpush1.bf16.msra.mxu0 0
        %3952 = vmatprep.subr.bf16.mxu0 0
        %3953 = vmatpush1.bf16.msra.mxu0 0
        %3954 = vmatprep.subr.bf16.mxu0 0
        %3955 = vmatpush1.bf16.msra.mxu0 0
        %3956 = vmatprep.mubr.bf16.mxu0 0
        %3957 = vmatmul.mubr.bf16.gmra.mrb[0].mxu0 %v3602
        %v3958 = vpop.f32.mrb[0].mxu0
        %v3959 = vadd.f32 %v3750, %v3958
        %v3960 = vpop.f32.mrb[0].mxu0
        %v3961 = vpop.f32.mrb[0].mxu0
        %v3962 = vadd.f32 %v3753, %v3961
        %v3963 = vpop.f32.mrb[0].mxu0
        %3964 = vmatprep.mubr.bf16.mxu0 0
        %3965 = vmatmul.mubr.bf16.gmra.mrb[0].mxu0 %v3603
        %v3966 = vpop.f32.mrb[0].mxu0
        %v3967 = vadd.f32 %v3758, %v3966
        %v3968 = vpop.f32.mrb[0].mxu0
        %v3969 = vpop.f32.mrb[0].mxu0
        %v3970 = vadd.f32 %v3761, %v3969
        %v3971 = vpop.f32.mrb[0].mxu0
        %3972 = vmatprep.mubr.bf16.mxu0 0
        %3973 = vmatmul.mubr.bf16.gmra.mrb[0].mxu0 %v3604
        %v3974 = vpop.f32.mrb[0].mxu0
        %v3975 = vadd.f32 %v3766, %v3974
        %v3976 = vpop.f32.mrb[0].mxu0
        %v3977 = vpop.f32.mrb[0].mxu0
        %v3978 = vadd.f32 %v3769, %v3977
        %v3979 = vpop.f32.mrb[0].mxu0
        %3980 = vmatprep.mubr.bf16.mxu0 0
        %3981 = vmatmul.mubr.bf16.gmra.mrb[0].mxu0 %v3605
        %v3982 = vpop.f32.mrb[0].mxu0
        %v3983 = vadd.f32 %v3774, %v3982
        %v3984 = vpop.f32.mrb[0].mxu0
        %v3985 = vpop.f32.mrb[0].mxu0
        %v3986 = vadd.f32 %v3777, %v3985
        %v3987 = vpop.f32.mrb[0].mxu0
        %3988 = vmatprep.mubr.bf16.mxu0 0
        %3989 = vmatmul.mubr.bf16.gmra.mrb[0].mxu0 %v3606
        %v3990 = vpop.f32.mrb[0].mxu0
        %v3991 = vadd.f32 %v3782, %v3990
        %v3992 = vpop.f32.mrb[0].mxu0
        %v3993 = vpop.f32.mrb[0].mxu0
        %v3994 = vadd.f32 %v3785, %v3993
        %v3995 = vpop.f32.mrb[0].mxu0
        %3996 = vmatprep.mubr.bf16.mxu0 0
        %3997 = vmatmul.mubr.bf16.gmra.mrb[0].mxu0 %v3607
        %v3998 = vpop.f32.mrb[0].mxu0
        %v3999 = vadd.f32 %v3790, %v3998
        %v4000 = vpop.f32.mrb[0].mxu0
        %v4001 = vpop.f32.mrb[0].mxu0
        %v4002 = vadd.f32 %v3793, %v4001
        %v4003 = vpop.f32.mrb[0].mxu0
        %4004 = vmatprep.mubr.bf16.mxu0 0
        %4005 = vmatmul.mubr.bf16.gmra.mrb[0].mxu0 %v3608
        %v4006 = vpop.f32.mrb[0].mxu0
        %v4007 = vadd.f32 %v3798, %v4006
        %v4008 = vpop.f32.mrb[0].mxu0
        %v4009 = vpop.f32.mrb[0].mxu0
        %v4010 = vadd.f32 %v3801, %v4009
        %v4011 = vpop.f32.mrb[0].mxu0
        %4012 = vmatprep.mubr.bf16.mxu0 0
        %4013 = vmatmul.mubr.bf16.gmra.mrb[0].mxu0 %v3609
        %v4014 = vpop.f32.mrb[0].mxu0
        %v4015 = vadd.f32 %v3806, %v4014
        %v4016 = vpop.f32.mrb[0].mxu0
        %v4017 = vpop.f32.mrb[0].mxu0
        %v4018 = vadd.f32 %v3809, %v4017
        %v4019 = vpop.f32.mrb[0].mxu0
        %4020 = vmatprep.mubr.bf16.mxu0 0
        %4021 = vmatmul.mubr.bf16.gmra.mrb[0].mxu0 %v3610
        %v4022 = vpop.f32.mrb[0].mxu0
        %v4023 = vadd.f32 %v3814, %v4022
        %v4024 = vpop.f32.mrb[0].mxu0
        %v4025 = vpop.f32.mrb[0].mxu0
        %v4026 = vadd.f32 %v3817, %v4025
        %v4027 = vpop.f32.mrb[0].mxu0
        %4028 = vmatprep.mubr.bf16.mxu0 0
        %4029 = vmatmul.mubr.bf16.gmra.mrb[0].mxu0 %v3611
        %v4030 = vpop.f32.mrb[0].mxu0
        %v4031 = vadd.f32 %v3822, %v4030
        %v4032 = vpop.f32.mrb[0].mxu0
        %v4033 = vpop.f32.mrb[0].mxu0
        %v4034 = vadd.f32 %v3825, %v4033
        %v4035 = vpop.f32.mrb[0].mxu0
        %4036 = vmatprep.mubr.bf16.mxu0 0
        %4037 = vmatmul.mubr.bf16.gmra.mrb[0].mxu0 %v3612
        %v4038 = vpop.f32.mrb[0].mxu0
        %v4039 = vadd.f32 %v3830, %v4038
        %v4040 = vpop.f32.mrb[0].mxu0
        %v4041 = vpop.f32.mrb[0].mxu0
        %v4042 = vadd.f32 %v3833, %v4041
        %v4043 = vpop.f32.mrb[0].mxu0
        %4044 = vmatprep.mubr.bf16.mxu0 0
        %4045 = vmatmul.mubr.bf16.gmra.mrb[0].mxu0 %v3613
        %v4046 = vpop.f32.mrb[0].mxu0
        %v4047 = vadd.f32 %v3838, %v4046
        %v4048 = vpop.f32.mrb[0].mxu0
        %v4049 = vpop.f32.mrb[0].mxu0
        %v4050 = vadd.f32 %v3841, %v4049
        %v4051 = vpop.f32.mrb[0].mxu0
        %4052 = vmatprep.mubr.bf16.mxu0 0
        %4053 = vmatmul.mubr.bf16.gmra.mrb[0].mxu0 %v3614
        %v4054 = vpop.f32.mrb[0].mxu0
        %v4055 = vadd.f32 %v3846, %v4054
        %v4056 = vpop.f32.mrb[0].mxu0
        %v4057 = vpop.f32.mrb[0].mxu0
        %v4058 = vadd.f32 %v3849, %v4057
        %v4059 = vpop.f32.mrb[0].mxu0
        %4060 = vmatprep.mubr.bf16.mxu0 0
        %4061 = vmatmul.mubr.bf16.gmra.mrb[0].mxu0 %v3615
        %v4062 = vpop.f32.mrb[0].mxu0
        %v4063 = vadd.f32 %v3854, %v4062
        %v4064 = vpop.f32.mrb[0].mxu0
        %v4065 = vpop.f32.mrb[0].mxu0
        %v4066 = vadd.f32 %v3857, %v4065
        %v4067 = vpop.f32.mrb[0].mxu0
        %4068 = vmatprep.mubr.bf16.mxu0 0
        %4069 = vmatmul.mubr.bf16.gmra.mrb[0].mxu0 %v3616
        %v4070 = vpop.f32.mrb[0].mxu0
        %v4071 = vadd.f32 %v3862, %v4070
        %v4072 = vpop.f32.mrb[0].mxu0
        %v4073 = vpop.f32.mrb[0].mxu0
        %v4074 = vadd.f32 %v3865, %v4073
        %v4075 = vpop.f32.mrb[0].mxu0
        %4076 = vmatprep.mubr.bf16.mxu0 0
        %4077 = vmatmul.mubr.bf16.gmra.mrb[0].mxu0 %v3617
        %v4078 = vpop.f32.mrb[0].mxu0
        %v4079 = vadd.f32 %v3870, %v4078
        %v4080 = vpop.f32.mrb[0].mxu0
        %v4081 = vpop.f32.mrb[0].mxu0
        %v4082 = vadd.f32 %v3873, %v4081
        %v4083 = vpop.f32.mrb[0].mxu0
        %4084 = vdwg.mxu0
        %v4085 = vld [vmem:[#allocation4] sm:$0xff]
        %v4086 = vld [vmem:[#allocation4 + $0x8] sm:$0xff]
        %v4087 = vld [vmem:[#allocation4 + $0x10] sm:$0xff]
        %v4088 = vld [vmem:[#allocation4 + $0x18] sm:$0xff]
        %v4089 = vld [vmem:[#allocation4 + $0x20] sm:$0xff]
        %v4090 = vld [vmem:[#allocation4 + $0x28] sm:$0xff]
        %v4091 = vld [vmem:[#allocation4 + $0x30] sm:$0xff]
        %v4092 = vld [vmem:[#allocation4 + $0x38] sm:$0xff]
        %v4093 = vld [vmem:[#allocation4 + $0x40] sm:$0xff]
        %v4094 = vld [vmem:[#allocation4 + $0x48] sm:$0xff]
        %v4095 = vld [vmem:[#allocation4 + $0x50] sm:$0xff]
        %v4096 = vld [vmem:[#allocation4 + $0x58] sm:$0xff]
        %v4097 = vld [vmem:[#allocation4 + $0x60] sm:$0xff]
        %v4098 = vld [vmem:[#allocation4 + $0x68] sm:$0xff]
        %v4099 = vld [vmem:[#allocation4 + $0x70] sm:$0xff]
        %v4100 = vld [vmem:[#allocation4 + $0x78] sm:$0xff]
        %s4101 = scalar_lea.vmem [#allocation10], 128
        %v4102 = vld [vmem:[%s4101] sm:$0xf]
        %v4103 = vld [vmem:[%s4101 + $0x4] sm:$0xf]
        %v4104 = vld [vmem:[%s4101 + $0x8] sm:$0xf]
        %v4105 = vld [vmem:[%s4101 + $0xc] sm:$0xf]
        %v4106 = vld [vmem:[%s4101 + $0x10] sm:$0xf]
        %v4107 = vld [vmem:[%s4101 + $0x14] sm:$0xf]
        %v4108 = vld [vmem:[%s4101 + $0x18] sm:$0xf]
        %v4109 = vld [vmem:[%s4101 + $0x1c] sm:$0xf]
        %v4110 = vld [vmem:[%s4101 + $0x20] sm:$0xf]
        %v4111 = vld [vmem:[%s4101 + $0x24] sm:$0xf]
        %v4112 = vld [vmem:[%s4101 + $0x28] sm:$0xf]
        %v4113 = vld [vmem:[%s4101 + $0x2c] sm:$0xf]
        %v4114 = vld [vmem:[%s4101 + $0x30] sm:$0xf]
        %v4115 = vld [vmem:[%s4101 + $0x34] sm:$0xf]
        %v4116 = vld [vmem:[%s4101 + $0x38] sm:$0xf]
        %v4117 = vld [vmem:[%s4101 + $0x3c] sm:$0xf]
        %v4134 = vunpack.c.l.b16 %v4102
        %v4135 = vunpack.c.l.b16 %v4103
        %v4136 = vunpack.c.l.b16 %v4104
        %v4137 = vunpack.c.l.b16 %v4105
        %v4138 = vunpack.c.l.b16 %v4106
        %v4139 = vunpack.c.l.b16 %v4107
        %v4140 = vunpack.c.l.b16 %v4108
        %v4141 = vunpack.c.l.b16 %v4109
        %v4142 = vunpack.c.l.b16 %v4110
        %v4143 = vunpack.c.l.b16 %v4111
        %v4144 = vunpack.c.l.b16 %v4112
        %v4145 = vunpack.c.l.b16 %v4113
        %v4146 = vunpack.c.l.b16 %v4114
        %v4147 = vunpack.c.l.b16 %v4115
        %v4148 = vunpack.c.l.b16 %v4116
        %v4149 = vunpack.c.l.b16 %v4117
        %v4150 = vpack.c.b16 %v4135, %v4134
        %v4151 = vpack.c.b16 %v4137, %v4136
        %v4152 = vpack.c.b16 %v4139, %v4138
        %v4153 = vpack.c.b16 %v4141, %v4140
        %v4154 = vpack.c.b16 %v4143, %v4142
        %v4155 = vpack.c.b16 %v4145, %v4144
        %v4156 = vpack.c.b16 %v4147, %v4146
        %v4157 = vpack.c.b16 %v4149, %v4148
        %4166 = vmatprep.subr.bf16.mxu0 0
        %4167 = vmatpush1.bf16.msra.mxu0 %v4150
        %4168 = vmatprep.subr.bf16.mxu0 0
        %4169 = vmatpush1.bf16.msra.mxu0 %v4151
        %4170 = vmatprep.subr.bf16.mxu0 0
        %4171 = vmatpush1.bf16.msra.mxu0 %v4152
        %4172 = vmatprep.subr.bf16.mxu0 0
        %4173 = vmatpush1.bf16.msra.mxu0 %v4153
        %4174 = vmatprep.subr.bf16.mxu0 0
        %4175 = vmatpush1.bf16.msra.mxu0 %v4154
        %4176 = vmatprep.subr.bf16.mxu0 0
        %4177 = vmatpush1.bf16.msra.mxu0 %v4155
        %4178 = vmatprep.subr.bf16.mxu0 0
        %4179 = vmatpush1.bf16.msra.mxu0 %v4156
        %4180 = vmatprep.subr.bf16.mxu0 0
        %4181 = vmatpush1.bf16.msra.mxu0 %v4157
        %4182 = vmatprep.subr.bf16.mxu0 0
        %4183 = vmatpush1.bf16.msra.mxu0 0
        %4184 = vmatprep.subr.bf16.mxu0 0
        %4185 = vmatpush1.bf16.msra.mxu0 0
        %4186 = vmatprep.subr.bf16.mxu0 0
        %4187 = vmatpush1.bf16.msra.mxu0 0
        %4188 = vmatprep.subr.bf16.mxu0 0
        %4189 = vmatpush1.bf16.msra.mxu0 0
        %4190 = vmatprep.subr.bf16.mxu0 0
        %4191 = vmatpush1.bf16.msra.mxu0 0
        %4192 = vmatprep.subr.bf16.mxu0 0
        %4193 = vmatpush1.bf16.msra.mxu0 0
        %4194 = vmatprep.subr.bf16.mxu0 0
        %4195 = vmatpush1.bf16.msra.mxu0 0
        %4196 = vmatprep.subr.bf16.mxu0 0
        %4197 = vmatpush1.bf16.msra.mxu0 0
        %4198 = vmatprep.mubr.bf16.mxu0 0
        %4199 = vmatmul.mubr.bf16.gmra.mrb[0].mxu0 %v4085
        %v4200 = vpop.f32.mrb[0].mxu0
        %v4201 = vadd.f32 0.0, %v4200
        %v4202 = vpop.f32.mrb[0].mxu0
        %v4203 = vpop.f32.mrb[0].mxu0
        %v4204 = vadd.f32 0.0, %v4203
        %v4205 = vpop.f32.mrb[0].mxu0
        %4206 = vmatprep.mubr.bf16.mxu0 0
        %4207 = vmatmul.mubr.bf16.gmra.mrb[0].mxu0 %v4086
        %v4208 = vpop.f32.mrb[0].mxu0
        %v4209 = vadd.f32 0.0, %v4208
        %v4210 = vpop.f32.mrb[0].mxu0
        %v4211 = vpop.f32.mrb[0].mxu0
        %v4212 = vadd.f32 0.0, %v4211
        %v4213 = vpop.f32.mrb[0].mxu0
        %4214 = vmatprep.mubr.bf16.mxu0 0
        %4215 = vmatmul.mubr.bf16.gmra.mrb[0].mxu0 %v4087
        %v4216 = vpop.f32.mrb[0].mxu0
        %v4217 = vadd.f32 0.0, %v4216
        %v4218 = vpop.f32.mrb[0].mxu0
        %v4219 = vpop.f32.mrb[0].mxu0
        %v4220 = vadd.f32 0.0, %v4219
        %v4221 = vpop.f32.mrb[0].mxu0
        %4222 = vmatprep.mubr.bf16.mxu0 0
        %4223 = vmatmul.mubr.bf16.gmra.mrb[0].mxu0 %v4088
        %v4224 = vpop.f32.mrb[0].mxu0
        %v4225 = vadd.f32 0.0, %v4224
        %v4226 = vpop.f32.mrb[0].mxu0
        %v4227 = vpop.f32.mrb[0].mxu0
        %v4228 = vadd.f32 0.0, %v4227
        %v4229 = vpop.f32.mrb[0].mxu0
        %4230 = vmatprep.mubr.bf16.mxu0 0
        %4231 = vmatmul.mubr.bf16.gmra.mrb[0].mxu0 %v4089
        %v4232 = vpop.f32.mrb[0].mxu0
        %v4233 = vadd.f32 0.0, %v4232
        %v4234 = vpop.f32.mrb[0].mxu0
        %v4235 = vpop.f32.mrb[0].mxu0
        %v4236 = vadd.f32 0.0, %v4235
        %v4237 = vpop.f32.mrb[0].mxu0
        %4238 = vmatprep.mubr.bf16.mxu0 0
        %4239 = vmatmul.mubr.bf16.gmra.mrb[0].mxu0 %v4090
        %v4240 = vpop.f32.mrb[0].mxu0
        %v4241 = vadd.f32 0.0, %v4240
        %v4242 = vpop.f32.mrb[0].mxu0
        %v4243 = vpop.f32.mrb[0].mxu0
        %v4244 = vadd.f32 0.0, %v4243
        %v4245 = vpop.f32.mrb[0].mxu0
        %4246 = vmatprep.mubr.bf16.mxu0 0
        %4247 = vmatmul.mubr.bf16.gmra.mrb[0].mxu0 %v4091
        %v4248 = vpop.f32.mrb[0].mxu0
        %v4249 = vadd.f32 0.0, %v4248
        %v4250 = vpop.f32.mrb[0].mxu0
        %v4251 = vpop.f32.mrb[0].mxu0
        %v4252 = vadd.f32 0.0, %v4251
        %v4253 = vpop.f32.mrb[0].mxu0
        %4254 = vmatprep.mubr.bf16.mxu0 0
        %4255 = vmatmul.mubr.bf16.gmra.mrb[0].mxu0 %v4092
        %v4256 = vpop.f32.mrb[0].mxu0
        %v4257 = vadd.f32 0.0, %v4256
        %v4258 = vpop.f32.mrb[0].mxu0
        %v4259 = vpop.f32.mrb[0].mxu0
        %v4260 = vadd.f32 0.0, %v4259
        %v4261 = vpop.f32.mrb[0].mxu0
        %4262 = vmatprep.mubr.bf16.mxu0 0
        %4263 = vmatmul.mubr.bf16.gmra.mrb[0].mxu0 %v4093
        %v4264 = vpop.f32.mrb[0].mxu0
        %v4265 = vadd.f32 0.0, %v4264
        %v4266 = vpop.f32.mrb[0].mxu0
        %v4267 = vpop.f32.mrb[0].mxu0
        %v4268 = vadd.f32 0.0, %v4267
        %v4269 = vpop.f32.mrb[0].mxu0
        %4270 = vmatprep.mubr.bf16.mxu0 0
        %4271 = vmatmul.mubr.bf16.gmra.mrb[0].mxu0 %v4094
        %v4272 = vpop.f32.mrb[0].mxu0
        %v4273 = vadd.f32 0.0, %v4272
        %v4274 = vpop.f32.mrb[0].mxu0
        %v4275 = vpop.f32.mrb[0].mxu0
        %v4276 = vadd.f32 0.0, %v4275
        %v4277 = vpop.f32.mrb[0].mxu0
        %4278 = vmatprep.mubr.bf16.mxu0 0
        %4279 = vmatmul.mubr.bf16.gmra.mrb[0].mxu0 %v4095
        %v4280 = vpop.f32.mrb[0].mxu0
        %v4281 = vadd.f32 0.0, %v4280
        %v4282 = vpop.f32.mrb[0].mxu0
        %v4283 = vpop.f32.mrb[0].mxu0
        %v4284 = vadd.f32 0.0, %v4283
        %v4285 = vpop.f32.mrb[0].mxu0
        %4286 = vmatprep.mubr.bf16.mxu0 0
        %4287 = vmatmul.mubr.bf16.gmra.mrb[0].mxu0 %v4096
        %v4288 = vpop.f32.mrb[0].mxu0
        %v4289 = vadd.f32 0.0, %v4288
        %v4290 = vpop.f32.mrb[0].mxu0
        %v4291 = vpop.f32.mrb[0].mxu0
        %v4292 = vadd.f32 0.0, %v4291
        %v4293 = vpop.f32.mrb[0].mxu0
        %4294 = vmatprep.mubr.bf16.mxu0 0
        %4295 = vmatmul.mubr.bf16.gmra.mrb[0].mxu0 %v4097
        %v4296 = vpop.f32.mrb[0].mxu0
        %v4297 = vadd.f32 0.0, %v4296
        %v4298 = vpop.f32.mrb[0].mxu0
        %v4299 = vpop.f32.mrb[0].mxu0
        %v4300 = vadd.f32 0.0, %v4299
        %v4301 = vpop.f32.mrb[0].mxu0
        %4302 = vmatprep.mubr.bf16.mxu0 0
        %4303 = vmatmul.mubr.bf16.gmra.mrb[0].mxu0 %v4098
        %v4304 = vpop.f32.mrb[0].mxu0
        %v4305 = vadd.f32 0.0, %v4304
        %v4306 = vpop.f32.mrb[0].mxu0
        %v4307 = vpop.f32.mrb[0].mxu0
        %v4308 = vadd.f32 0.0, %v4307
        %v4309 = vpop.f32.mrb[0].mxu0
        %4310 = vmatprep.mubr.bf16.mxu0 0
        %4311 = vmatmul.mubr.bf16.gmra.mrb[0].mxu0 %v4099
        %v4312 = vpop.f32.mrb[0].mxu0
        %v4313 = vadd.f32 0.0, %v4312
        %v4314 = vpop.f32.mrb[0].mxu0
        %v4315 = vpop.f32.mrb[0].mxu0
        %v4316 = vadd.f32 0.0, %v4315
        %v4317 = vpop.f32.mrb[0].mxu0
        %4318 = vmatprep.mubr.bf16.mxu0 0
        %4319 = vmatmul.mubr.bf16.gmra.mrb[0].mxu0 %v4100
        %v4320 = vpop.f32.mrb[0].mxu0
        %v4321 = vadd.f32 0.0, %v4320
        %v4322 = vpop.f32.mrb[0].mxu0
        %v4323 = vpop.f32.mrb[0].mxu0
        %v4324 = vadd.f32 0.0, %v4323
        %v4325 = vpop.f32.mrb[0].mxu0
        %4326 = vdwg.mxu0
        %v4327 = vadd.f32 %v3959, %v4201
        %v4328 = vadd.f32 %v3962, %v4204
        %v4329 = vadd.f32 %v3967, %v4209
        %v4330 = vadd.f32 %v3970, %v4212
        %v4331 = vadd.f32 %v3975, %v4217
        %v4332 = vadd.f32 %v3978, %v4220
        %v4333 = vadd.f32 %v3983, %v4225
        %v4334 = vadd.f32 %v3986, %v4228
        %v4335 = vadd.f32 %v3991, %v4233
        %v4336 = vadd.f32 %v3994, %v4236
        %v4337 = vadd.f32 %v3999, %v4241
        %v4338 = vadd.f32 %v4002, %v4244
        %v4339 = vadd.f32 %v4007, %v4249
        %v4340 = vadd.f32 %v4010, %v4252
        %v4341 = vadd.f32 %v4015, %v4257
        %v4342 = vadd.f32 %v4018, %v4260
        %v4343 = vadd.f32 %v4023, %v4265
        %v4344 = vadd.f32 %v4026, %v4268
        %v4345 = vadd.f32 %v4031, %v4273
        %v4346 = vadd.f32 %v4034, %v4276
        %v4347 = vadd.f32 %v4039, %v4281
        %v4348 = vadd.f32 %v4042, %v4284
        %v4349 = vadd.f32 %v4047, %v4289
        %v4350 = vadd.f32 %v4050, %v4292
        %v4351 = vadd.f32 %v4055, %v4297
        %v4352 = vadd.f32 %v4058, %v4300
        %v4353 = vadd.f32 %v4063, %v4305
        %v4354 = vadd.f32 %v4066, %v4308
        %v4355 = vadd.f32 %v4071, %v4313
        %v4356 = vadd.f32 %v4074, %v4316
        %v4357 = vadd.f32 %v4079, %v4321
        %v4358 = vadd.f32 %v4082, %v4324
        %v4359 = vld [vmem:[#allocation3 + $0x8] sm:$0xff]
        %v4360 = vld [vmem:[#allocation3 + $0x10] sm:$0xff]
        %v4361 = vld [vmem:[#allocation3 + $0x18] sm:$0xff]
        %v4362 = vld [vmem:[#allocation3 + $0x20] sm:$0xff]
        %v4363 = vld [vmem:[#allocation3 + $0x28] sm:$0xff]
        %v4364 = vld [vmem:[#allocation3 + $0x30] sm:$0xff]
        %v4365 = vld [vmem:[#allocation3 + $0x38] sm:$0xff]
        %v4366 = vld [vmem:[#allocation3 + $0x40] sm:$0xff]
        %v4367 = vld [vmem:[#allocation3 + $0x48] sm:$0xff]
        %v4368 = vld [vmem:[#allocation3 + $0x50] sm:$0xff]
        %v4369 = vld [vmem:[#allocation3 + $0x58] sm:$0xff]
        %v4370 = vld [vmem:[#allocation3 + $0x60] sm:$0xff]
        %v4371 = vld [vmem:[#allocation3 + $0x68] sm:$0xff]
        %v4372 = vld [vmem:[#allocation3 + $0x70] sm:$0xff]
        %v4373 = vld [vmem:[#allocation3 + $0x78] sm:$0xff]
        %v4374 = vld [vmem:[#allocation3 + $0x80] sm:$0xff]
        %s4375 = scalar_lea.vmem [#allocation10], 192
        %v4376 = vld [vmem:[%s4375] sm:$0xf]
        %v4377 = vld [vmem:[%s4375 + $0x4] sm:$0xf]
        %v4378 = vld [vmem:[%s4375 + $0x8] sm:$0xf]
        %v4379 = vld [vmem:[%s4375 + $0xc] sm:$0xf]
        %v4380 = vld [vmem:[%s4375 + $0x10] sm:$0xf]
        %v4381 = vld [vmem:[%s4375 + $0x14] sm:$0xf]
        %v4382 = vld [vmem:[%s4375 + $0x18] sm:$0xf]
        %v4383 = vld [vmem:[%s4375 + $0x1c] sm:$0xf]
        %v4384 = vld [vmem:[%s4375 + $0x20] sm:$0xf]
        %v4385 = vld [vmem:[%s4375 + $0x24] sm:$0xf]
        %v4386 = vld [vmem:[%s4375 + $0x28] sm:$0xf]
        %v4387 = vld [vmem:[%s4375 + $0x2c] sm:$0xf]
        %v4388 = vld [vmem:[%s4375 + $0x30] sm:$0xf]
        %v4389 = vld [vmem:[%s4375 + $0x34] sm:$0xf]
        %v4390 = vld [vmem:[%s4375 + $0x38] sm:$0xf]
        %v4391 = vld [vmem:[%s4375 + $0x3c] sm:$0xf]
        %v4408 = vunpack.c.l.b16 %v4376
        %v4409 = vunpack.c.l.b16 %v4377
        %v4410 = vunpack.c.l.b16 %v4378
        %v4411 = vunpack.c.l.b16 %v4379
        %v4412 = vunpack.c.l.b16 %v4380
        %v4413 = vunpack.c.l.b16 %v4381
        %v4414 = vunpack.c.l.b16 %v4382
        %v4415 = vunpack.c.l.b16 %v4383
        %v4416 = vunpack.c.l.b16 %v4384
        %v4417 = vunpack.c.l.b16 %v4385
        %v4418 = vunpack.c.l.b16 %v4386
        %v4419 = vunpack.c.l.b16 %v4387
        %v4420 = vunpack.c.l.b16 %v4388
        %v4421 = vunpack.c.l.b16 %v4389
        %v4422 = vunpack.c.l.b16 %v4390
        %v4423 = vunpack.c.l.b16 %v4391
        %v4424 = vpack.c.b16 %v4409, %v4408
        %v4425 = vpack.c.b16 %v4411, %v4410
        %v4426 = vpack.c.b16 %v4413, %v4412
        %v4427 = vpack.c.b16 %v4415, %v4414
        %v4428 = vpack.c.b16 %v4417, %v4416
        %v4429 = vpack.c.b16 %v4419, %v4418
        %v4430 = vpack.c.b16 %v4421, %v4420
        %v4431 = vpack.c.b16 %v4423, %v4422
        %4440 = vmatprep.subr.bf16.mxu0 0
        %4441 = vmatpush1.bf16.msra.mxu0 %v4424
        %4442 = vmatprep.subr.bf16.mxu0 0
        %4443 = vmatpush1.bf16.msra.mxu0 %v4425
        %4444 = vmatprep.subr.bf16.mxu0 0
        %4445 = vmatpush1.bf16.msra.mxu0 %v4426
        %4446 = vmatprep.subr.bf16.mxu0 0
        %4447 = vmatpush1.bf16.msra.mxu0 %v4427
        %4448 = vmatprep.subr.bf16.mxu0 0
        %4449 = vmatpush1.bf16.msra.mxu0 %v4428
        %4450 = vmatprep.subr.bf16.mxu0 0
        %4451 = vmatpush1.bf16.msra.mxu0 %v4429
        %4452 = vmatprep.subr.bf16.mxu0 0
        %4453 = vmatpush1.bf16.msra.mxu0 %v4430
        %4454 = vmatprep.subr.bf16.mxu0 0
        %4455 = vmatpush1.bf16.msra.mxu0 %v4431
        %4456 = vmatprep.subr.bf16.mxu0 0
        %4457 = vmatpush1.bf16.msra.mxu0 0
        %4458 = vmatprep.subr.bf16.mxu0 0
        %4459 = vmatpush1.bf16.msra.mxu0 0
        %4460 = vmatprep.subr.bf16.mxu0 0
        %4461 = vmatpush1.bf16.msra.mxu0 0
        %4462 = vmatprep.subr.bf16.mxu0 0
        %4463 = vmatpush1.bf16.msra.mxu0 0
        %4464 = vmatprep.subr.bf16.mxu0 0
        %4465 = vmatpush1.bf16.msra.mxu0 0
        %4466 = vmatprep.subr.bf16.mxu0 0
        %4467 = vmatpush1.bf16.msra.mxu0 0
        %4468 = vmatprep.subr.bf16.mxu0 0
        %4469 = vmatpush1.bf16.msra.mxu0 0
        %4470 = vmatprep.subr.bf16.mxu0 0
        %4471 = vmatpush1.bf16.msra.mxu0 0
        %4472 = vmatprep.mubr.bf16.mxu0 0
        %4473 = vmatmul.mubr.bf16.gmra.mrb[0].mxu0 %v4359
        %v4474 = vpop.f32.mrb[0].mxu0
        %v4475 = vadd.f32 0.0, %v4474
        %v4476 = vpop.f32.mrb[0].mxu0
        %v4477 = vpop.f32.mrb[0].mxu0
        %v4478 = vadd.f32 0.0, %v4477
        %v4479 = vpop.f32.mrb[0].mxu0
        %4480 = vmatprep.mubr.bf16.mxu0 0
        %4481 = vmatmul.mubr.bf16.gmra.mrb[0].mxu0 %v4360
        %v4482 = vpop.f32.mrb[0].mxu0
        %v4483 = vadd.f32 0.0, %v4482
        %v4484 = vpop.f32.mrb[0].mxu0
        %v4485 = vpop.f32.mrb[0].mxu0
        %v4486 = vadd.f32 0.0, %v4485
        %v4487 = vpop.f32.mrb[0].mxu0
        %4488 = vmatprep.mubr.bf16.mxu0 0
        %4489 = vmatmul.mubr.bf16.gmra.mrb[0].mxu0 %v4361
        %v4490 = vpop.f32.mrb[0].mxu0
        %v4491 = vadd.f32 0.0, %v4490
        %v4492 = vpop.f32.mrb[0].mxu0
        %v4493 = vpop.f32.mrb[0].mxu0
        %v4494 = vadd.f32 0.0, %v4493
        %v4495 = vpop.f32.mrb[0].mxu0
        %4496 = vmatprep.mubr.bf16.mxu0 0
        %4497 = vmatmul.mubr.bf16.gmra.mrb[0].mxu0 %v4362
        %v4498 = vpop.f32.mrb[0].mxu0
        %v4499 = vadd.f32 0.0, %v4498
        %v4500 = vpop.f32.mrb[0].mxu0
        %v4501 = vpop.f32.mrb[0].mxu0
        %v4502 = vadd.f32 0.0, %v4501
        %v4503 = vpop.f32.mrb[0].mxu0
        %4504 = vmatprep.mubr.bf16.mxu0 0
        %4505 = vmatmul.mubr.bf16.gmra.mrb[0].mxu0 %v4363
        %v4506 = vpop.f32.mrb[0].mxu0
        %v4507 = vadd.f32 0.0, %v4506
        %v4508 = vpop.f32.mrb[0].mxu0
        %v4509 = vpop.f32.mrb[0].mxu0
        %v4510 = vadd.f32 0.0, %v4509
        %v4511 = vpop.f32.mrb[0].mxu0
        %4512 = vmatprep.mubr.bf16.mxu0 0
        %4513 = vmatmul.mubr.bf16.gmra.mrb[0].mxu0 %v4364
        %v4514 = vpop.f32.mrb[0].mxu0
        %v4515 = vadd.f32 0.0, %v4514
        %v4516 = vpop.f32.mrb[0].mxu0
        %v4517 = vpop.f32.mrb[0].mxu0
        %v4518 = vadd.f32 0.0, %v4517
        %v4519 = vpop.f32.mrb[0].mxu0
        %4520 = vmatprep.mubr.bf16.mxu0 0
        %4521 = vmatmul.mubr.bf16.gmra.mrb[0].mxu0 %v4365
        %v4522 = vpop.f32.mrb[0].mxu0
        %v4523 = vadd.f32 0.0, %v4522
        %v4524 = vpop.f32.mrb[0].mxu0
        %v4525 = vpop.f32.mrb[0].mxu0
        %v4526 = vadd.f32 0.0, %v4525
        %v4527 = vpop.f32.mrb[0].mxu0
        %4528 = vmatprep.mubr.bf16.mxu0 0
        %4529 = vmatmul.mubr.bf16.gmra.mrb[0].mxu0 %v4366
        %v4530 = vpop.f32.mrb[0].mxu0
        %v4531 = vadd.f32 0.0, %v4530
        %v4532 = vpop.f32.mrb[0].mxu0
        %v4533 = vpop.f32.mrb[0].mxu0
        %v4534 = vadd.f32 0.0, %v4533
        %v4535 = vpop.f32.mrb[0].mxu0
        %4536 = vmatprep.mubr.bf16.mxu0 0
        %4537 = vmatmul.mubr.bf16.gmra.mrb[0].mxu0 %v4367
        %v4538 = vpop.f32.mrb[0].mxu0
        %v4539 = vadd.f32 0.0, %v4538
        %v4540 = vpop.f32.mrb[0].mxu0
        %v4541 = vpop.f32.mrb[0].mxu0
        %v4542 = vadd.f32 0.0, %v4541
        %v4543 = vpop.f32.mrb[0].mxu0
        %4544 = vmatprep.mubr.bf16.mxu0 0
        %4545 = vmatmul.mubr.bf16.gmra.mrb[0].mxu0 %v4368
        %v4546 = vpop.f32.mrb[0].mxu0
        %v4547 = vadd.f32 0.0, %v4546
        %v4548 = vpop.f32.mrb[0].mxu0
        %v4549 = vpop.f32.mrb[0].mxu0
        %v4550 = vadd.f32 0.0, %v4549
        %v4551 = vpop.f32.mrb[0].mxu0
        %4552 = vmatprep.mubr.bf16.mxu0 0
        %4553 = vmatmul.mubr.bf16.gmra.mrb[0].mxu0 %v4369
        %v4554 = vpop.f32.mrb[0].mxu0
        %v4555 = vadd.f32 0.0, %v4554
        %v4556 = vpop.f32.mrb[0].mxu0
        %v4557 = vpop.f32.mrb[0].mxu0
        %v4558 = vadd.f32 0.0, %v4557
        %v4559 = vpop.f32.mrb[0].mxu0
        %4560 = vmatprep.mubr.bf16.mxu0 0
        %4561 = vmatmul.mubr.bf16.gmra.mrb[0].mxu0 %v4370
        %v4562 = vpop.f32.mrb[0].mxu0
        %v4563 = vadd.f32 0.0, %v4562
        %v4564 = vpop.f32.mrb[0].mxu0
        %v4565 = vpop.f32.mrb[0].mxu0
        %v4566 = vadd.f32 0.0, %v4565
        %v4567 = vpop.f32.mrb[0].mxu0
        %4568 = vmatprep.mubr.bf16.mxu0 0
        %4569 = vmatmul.mubr.bf16.gmra.mrb[0].mxu0 %v4371
        %v4570 = vpop.f32.mrb[0].mxu0
        %v4571 = vadd.f32 0.0, %v4570
        %v4572 = vpop.f32.mrb[0].mxu0
        %v4573 = vpop.f32.mrb[0].mxu0
        %v4574 = vadd.f32 0.0, %v4573
        %v4575 = vpop.f32.mrb[0].mxu0
        %4576 = vmatprep.mubr.bf16.mxu0 0
        %4577 = vmatmul.mubr.bf16.gmra.mrb[0].mxu0 %v4372
        %v4578 = vpop.f32.mrb[0].mxu0
        %v4579 = vadd.f32 0.0, %v4578
        %v4580 = vpop.f32.mrb[0].mxu0
        %v4581 = vpop.f32.mrb[0].mxu0
        %v4582 = vadd.f32 0.0, %v4581
        %v4583 = vpop.f32.mrb[0].mxu0
        %4584 = vmatprep.mubr.bf16.mxu0 0
        %4585 = vmatmul.mubr.bf16.gmra.mrb[0].mxu0 %v4373
        %v4586 = vpop.f32.mrb[0].mxu0
        %v4587 = vadd.f32 0.0, %v4586
        %v4588 = vpop.f32.mrb[0].mxu0
        %v4589 = vpop.f32.mrb[0].mxu0
        %v4590 = vadd.f32 0.0, %v4589
        %v4591 = vpop.f32.mrb[0].mxu0
        %4592 = vmatprep.mubr.bf16.mxu0 0
        %4593 = vmatmul.mubr.bf16.gmra.mrb[0].mxu0 %v4374
        %v4594 = vpop.f32.mrb[0].mxu0
        %v4595 = vadd.f32 0.0, %v4594
        %v4596 = vpop.f32.mrb[0].mxu0
        %v4597 = vpop.f32.mrb[0].mxu0
        %v4598 = vadd.f32 0.0, %v4597
        %v4599 = vpop.f32.mrb[0].mxu0
        %4600 = vdwg.mxu0
        %v4601 = vadd.f32 %v4327, %v4475
        %v4602 = vadd.f32 %v4328, %v4478
        %v4603 = vadd.f32 %v4329, %v4483
        %v4604 = vadd.f32 %v4330, %v4486
        %v4605 = vadd.f32 %v4331, %v4491
        %v4606 = vadd.f32 %v4332, %v4494
        %v4607 = vadd.f32 %v4333, %v4499
        %v4608 = vadd.f32 %v4334, %v4502
        %v4609 = vadd.f32 %v4335, %v4507
        %v4610 = vadd.f32 %v4336, %v4510
        %v4611 = vadd.f32 %v4337, %v4515
        %v4612 = vadd.f32 %v4338, %v4518
        %v4613 = vadd.f32 %v4339, %v4523
        %v4614 = vadd.f32 %v4340, %v4526
        %v4615 = vadd.f32 %v4341, %v4531
        %v4616 = vadd.f32 %v4342, %v4534
        %v4617 = vadd.f32 %v4343, %v4539
        %v4618 = vadd.f32 %v4344, %v4542
        %v4619 = vadd.f32 %v4345, %v4547
        %v4620 = vadd.f32 %v4346, %v4550
        %v4621 = vadd.f32 %v4347, %v4555
        %v4622 = vadd.f32 %v4348, %v4558
        %v4623 = vadd.f32 %v4349, %v4563
        %v4624 = vadd.f32 %v4350, %v4566
        %v4625 = vadd.f32 %v4351, %v4571
        %v4626 = vadd.f32 %v4352, %v4574
        %v4627 = vadd.f32 %v4353, %v4579
        %v4628 = vadd.f32 %v4354, %v4582
        %v4629 = vadd.f32 %v4355, %v4587
        %v4630 = vadd.f32 %v4356, %v4590
        %v4631 = vadd.f32 %v4357, %v4595
        %v4632 = vadd.f32 %v4358, %v4598
        %v4633 = vld [vmem:[#allocation2 + $0x8] sm:$0xff]
        %v4634 = vld [vmem:[#allocation2 + $0x10] sm:$0xff]
        %v4635 = vld [vmem:[#allocation2 + $0x18] sm:$0xff]
        %v4636 = vld [vmem:[#allocation2 + $0x20] sm:$0xff]
        %v4637 = vld [vmem:[#allocation2 + $0x28] sm:$0xff]
        %v4638 = vld [vmem:[#allocation2 + $0x30] sm:$0xff]
        %v4639 = vld [vmem:[#allocation2 + $0x38] sm:$0xff]
        %v4640 = vld [vmem:[#allocation2 + $0x40] sm:$0xff]
        %v4641 = vld [vmem:[#allocation2 + $0x48] sm:$0xff]
        %v4642 = vld [vmem:[#allocation2 + $0x50] sm:$0xff]
        %v4643 = vld [vmem:[#allocation2 + $0x58] sm:$0xff]
        %v4644 = vld [vmem:[#allocation2 + $0x60] sm:$0xff]
        %v4645 = vld [vmem:[#allocation2 + $0x68] sm:$0xff]
        %v4646 = vld [vmem:[#allocation2 + $0x70] sm:$0xff]
        %v4647 = vld [vmem:[#allocation2 + $0x78] sm:$0xff]
        %v4648 = vld [vmem:[#allocation2 + $0x80] sm:$0xff]
        %s4649 = scalar_lea.vmem [#allocation10], 256
        %v4650 = vld [vmem:[%s4649] sm:$0xf]
        %v4651 = vld [vmem:[%s4649 + $0x4] sm:$0xf]
        %v4652 = vld [vmem:[%s4649 + $0x8] sm:$0xf]
        %v4653 = vld [vmem:[%s4649 + $0xc] sm:$0xf]
        %v4654 = vld [vmem:[%s4649 + $0x10] sm:$0xf]
        %v4655 = vld [vmem:[%s4649 + $0x14] sm:$0xf]
        %v4656 = vld [vmem:[%s4649 + $0x18] sm:$0xf]
        %v4657 = vld [vmem:[%s4649 + $0x1c] sm:$0xf]
        %v4658 = vld [vmem:[%s4649 + $0x20] sm:$0xf]
        %v4659 = vld [vmem:[%s4649 + $0x24] sm:$0xf]
        %v4660 = vld [vmem:[%s4649 + $0x28] sm:$0xf]
        %v4661 = vld [vmem:[%s4649 + $0x2c] sm:$0xf]
        %v4662 = vld [vmem:[%s4649 + $0x30] sm:$0xf]
        %v4663 = vld [vmem:[%s4649 + $0x34] sm:$0xf]
        %v4664 = vld [vmem:[%s4649 + $0x38] sm:$0xf]
        %v4665 = vld [vmem:[%s4649 + $0x3c] sm:$0xf]
        %v4682 = vunpack.c.l.b16 %v4650
        %v4683 = vunpack.c.l.b16 %v4651
        %v4684 = vunpack.c.l.b16 %v4652
        %v4685 = vunpack.c.l.b16 %v4653
        %v4686 = vunpack.c.l.b16 %v4654
        %v4687 = vunpack.c.l.b16 %v4655
        %v4688 = vunpack.c.l.b16 %v4656
        %v4689 = vunpack.c.l.b16 %v4657
        %v4690 = vunpack.c.l.b16 %v4658
        %v4691 = vunpack.c.l.b16 %v4659
        %v4692 = vunpack.c.l.b16 %v4660
        %v4693 = vunpack.c.l.b16 %v4661
        %v4694 = vunpack.c.l.b16 %v4662
        %v4695 = vunpack.c.l.b16 %v4663
        %v4696 = vunpack.c.l.b16 %v4664
        %v4697 = vunpack.c.l.b16 %v4665
        %v4698 = vpack.c.b16 %v4683, %v4682
        %v4699 = vpack.c.b16 %v4685, %v4684
        %v4700 = vpack.c.b16 %v4687, %v4686
        %v4701 = vpack.c.b16 %v4689, %v4688
        %v4702 = vpack.c.b16 %v4691, %v4690
        %v4703 = vpack.c.b16 %v4693, %v4692
        %v4704 = vpack.c.b16 %v4695, %v4694
        %v4705 = vpack.c.b16 %v4697, %v4696
        %4714 = vmatprep.subr.bf16.mxu0 0
        %4715 = vmatpush1.bf16.msra.mxu0 %v4698
        %4716 = vmatprep.subr.bf16.mxu0 0
        %4717 = vmatpush1.bf16.msra.mxu0 %v4699
        %4718 = vmatprep.subr.bf16.mxu0 0
        %4719 = vmatpush1.bf16.msra.mxu0 %v4700
        %4720 = vmatprep.subr.bf16.mxu0 0
        %4721 = vmatpush1.bf16.msra.mxu0 %v4701
        %4722 = vmatprep.subr.bf16.mxu0 0
        %4723 = vmatpush1.bf16.msra.mxu0 %v4702
        %4724 = vmatprep.subr.bf16.mxu0 0
        %4725 = vmatpush1.bf16.msra.mxu0 %v4703
        %4726 = vmatprep.subr.bf16.mxu0 0
        %4727 = vmatpush1.bf16.msra.mxu0 %v4704
        %4728 = vmatprep.subr.bf16.mxu0 0
        %4729 = vmatpush1.bf16.msra.mxu0 %v4705
        %4730 = vmatprep.subr.bf16.mxu0 0
        %4731 = vmatpush1.bf16.msra.mxu0 0
        %4732 = vmatprep.subr.bf16.mxu0 0
        %4733 = vmatpush1.bf16.msra.mxu0 0
        %4734 = vmatprep.subr.bf16.mxu0 0
        %4735 = vmatpush1.bf16.msra.mxu0 0
        %4736 = vmatprep.subr.bf16.mxu0 0
        %4737 = vmatpush1.bf16.msra.mxu0 0
        %4738 = vmatprep.subr.bf16.mxu0 0
        %4739 = vmatpush1.bf16.msra.mxu0 0
        %4740 = vmatprep.subr.bf16.mxu0 0
        %4741 = vmatpush1.bf16.msra.mxu0 0
        %4742 = vmatprep.subr.bf16.mxu0 0
        %4743 = vmatpush1.bf16.msra.mxu0 0
        %4744 = vmatprep.subr.bf16.mxu0 0
        %4745 = vmatpush1.bf16.msra.mxu0 0
        %4746 = vmatprep.mubr.bf16.mxu0 0
        %4747 = vmatmul.mubr.bf16.gmra.mrb[0].mxu0 %v4633
        %v4748 = vpop.f32.mrb[0].mxu0
        %v4749 = vadd.f32 0.0, %v4748
        %v4750 = vpop.f32.mrb[0].mxu0
        %v4751 = vpop.f32.mrb[0].mxu0
        %v4752 = vadd.f32 0.0, %v4751
        %v4753 = vpop.f32.mrb[0].mxu0
        %4754 = vmatprep.mubr.bf16.mxu0 0
        %4755 = vmatmul.mubr.bf16.gmra.mrb[0].mxu0 %v4634
        %v4756 = vpop.f32.mrb[0].mxu0
        %v4757 = vadd.f32 0.0, %v4756
        %v4758 = vpop.f32.mrb[0].mxu0
        %v4759 = vpop.f32.mrb[0].mxu0
        %v4760 = vadd.f32 0.0, %v4759
        %v4761 = vpop.f32.mrb[0].mxu0
        %4762 = vmatprep.mubr.bf16.mxu0 0
        %4763 = vmatmul.mubr.bf16.gmra.mrb[0].mxu0 %v4635
        %v4764 = vpop.f32.mrb[0].mxu0
        %v4765 = vadd.f32 0.0, %v4764
        %v4766 = vpop.f32.mrb[0].mxu0
        %v4767 = vpop.f32.mrb[0].mxu0
        %v4768 = vadd.f32 0.0, %v4767
        %v4769 = vpop.f32.mrb[0].mxu0
        %4770 = vmatprep.mubr.bf16.mxu0 0
        %4771 = vmatmul.mubr.bf16.gmra.mrb[0].mxu0 %v4636
        %v4772 = vpop.f32.mrb[0].mxu0
        %v4773 = vadd.f32 0.0, %v4772
        %v4774 = vpop.f32.mrb[0].mxu0
        %v4775 = vpop.f32.mrb[0].mxu0
        %v4776 = vadd.f32 0.0, %v4775
        %v4777 = vpop.f32.mrb[0].mxu0
        %4778 = vmatprep.mubr.bf16.mxu0 0
        %4779 = vmatmul.mubr.bf16.gmra.mrb[0].mxu0 %v4637
        %v4780 = vpop.f32.mrb[0].mxu0
        %v4781 = vadd.f32 0.0, %v4780
        %v4782 = vpop.f32.mrb[0].mxu0
        %v4783 = vpop.f32.mrb[0].mxu0
        %v4784 = vadd.f32 0.0, %v4783
        %v4785 = vpop.f32.mrb[0].mxu0
        %4786 = vmatprep.mubr.bf16.mxu0 0
        %4787 = vmatmul.mubr.bf16.gmra.mrb[0].mxu0 %v4638
        %v4788 = vpop.f32.mrb[0].mxu0
        %v4789 = vadd.f32 0.0, %v4788
        %v4790 = vpop.f32.mrb[0].mxu0
        %v4791 = vpop.f32.mrb[0].mxu0
        %v4792 = vadd.f32 0.0, %v4791
        %v4793 = vpop.f32.mrb[0].mxu0
        %4794 = vmatprep.mubr.bf16.mxu0 0
        %4795 = vmatmul.mubr.bf16.gmra.mrb[0].mxu0 %v4639
        %v4796 = vpop.f32.mrb[0].mxu0
        %v4797 = vadd.f32 0.0, %v4796
        %v4798 = vpop.f32.mrb[0].mxu0
        %v4799 = vpop.f32.mrb[0].mxu0
        %v4800 = vadd.f32 0.0, %v4799
        %v4801 = vpop.f32.mrb[0].mxu0
        %4802 = vmatprep.mubr.bf16.mxu0 0
        %4803 = vmatmul.mubr.bf16.gmra.mrb[0].mxu0 %v4640
        %v4804 = vpop.f32.mrb[0].mxu0
        %v4805 = vadd.f32 0.0, %v4804
        %v4806 = vpop.f32.mrb[0].mxu0
        %v4807 = vpop.f32.mrb[0].mxu0
        %v4808 = vadd.f32 0.0, %v4807
        %v4809 = vpop.f32.mrb[0].mxu0
        %4810 = vmatprep.mubr.bf16.mxu0 0
        %4811 = vmatmul.mubr.bf16.gmra.mrb[0].mxu0 %v4641
        %v4812 = vpop.f32.mrb[0].mxu0
        %v4813 = vadd.f32 0.0, %v4812
        %v4814 = vpop.f32.mrb[0].mxu0
        %v4815 = vpop.f32.mrb[0].mxu0
        %v4816 = vadd.f32 0.0, %v4815
        %v4817 = vpop.f32.mrb[0].mxu0
        %4818 = vmatprep.mubr.bf16.mxu0 0
        %4819 = vmatmul.mubr.bf16.gmra.mrb[0].mxu0 %v4642
        %v4820 = vpop.f32.mrb[0].mxu0
        %v4821 = vadd.f32 0.0, %v4820
        %v4822 = vpop.f32.mrb[0].mxu0
        %v4823 = vpop.f32.mrb[0].mxu0
        %v4824 = vadd.f32 0.0, %v4823
        %v4825 = vpop.f32.mrb[0].mxu0
        %4826 = vmatprep.mubr.bf16.mxu0 0
        %4827 = vmatmul.mubr.bf16.gmra.mrb[0].mxu0 %v4643
        %v4828 = vpop.f32.mrb[0].mxu0
        %v4829 = vadd.f32 0.0, %v4828
        %v4830 = vpop.f32.mrb[0].mxu0
        %v4831 = vpop.f32.mrb[0].mxu0
        %v4832 = vadd.f32 0.0, %v4831
        %v4833 = vpop.f32.mrb[0].mxu0
        %4834 = vmatprep.mubr.bf16.mxu0 0
        %4835 = vmatmul.mubr.bf16.gmra.mrb[0].mxu0 %v4644
        %v4836 = vpop.f32.mrb[0].mxu0
        %v4837 = vadd.f32 0.0, %v4836
        %v4838 = vpop.f32.mrb[0].mxu0
        %v4839 = vpop.f32.mrb[0].mxu0
        %v4840 = vadd.f32 0.0, %v4839
        %v4841 = vpop.f32.mrb[0].mxu0
        %4842 = vmatprep.mubr.bf16.mxu0 0
        %4843 = vmatmul.mubr.bf16.gmra.mrb[0].mxu0 %v4645
        %v4844 = vpop.f32.mrb[0].mxu0
        %v4845 = vadd.f32 0.0, %v4844
        %v4846 = vpop.f32.mrb[0].mxu0
        %v4847 = vpop.f32.mrb[0].mxu0
        %v4848 = vadd.f32 0.0, %v4847
        %v4849 = vpop.f32.mrb[0].mxu0
        %4850 = vmatprep.mubr.bf16.mxu0 0
        %4851 = vmatmul.mubr.bf16.gmra.mrb[0].mxu0 %v4646
        %v4852 = vpop.f32.mrb[0].mxu0
        %v4853 = vadd.f32 0.0, %v4852
        %v4854 = vpop.f32.mrb[0].mxu0
        %v4855 = vpop.f32.mrb[0].mxu0
        %v4856 = vadd.f32 0.0, %v4855
        %v4857 = vpop.f32.mrb[0].mxu0
        %4858 = vmatprep.mubr.bf16.mxu0 0
        %4859 = vmatmul.mubr.bf16.gmra.mrb[0].mxu0 %v4647
        %v4860 = vpop.f32.mrb[0].mxu0
        %v4861 = vadd.f32 0.0, %v4860
        %v4862 = vpop.f32.mrb[0].mxu0
        %v4863 = vpop.f32.mrb[0].mxu0
        %v4864 = vadd.f32 0.0, %v4863
        %v4865 = vpop.f32.mrb[0].mxu0
        %4866 = vmatprep.mubr.bf16.mxu0 0
        %4867 = vmatmul.mubr.bf16.gmra.mrb[0].mxu0 %v4648
        %v4868 = vpop.f32.mrb[0].mxu0
        %v4869 = vadd.f32 0.0, %v4868
        %v4870 = vpop.f32.mrb[0].mxu0
        %v4871 = vpop.f32.mrb[0].mxu0
        %v4872 = vadd.f32 0.0, %v4871
        %v4873 = vpop.f32.mrb[0].mxu0
        %4874 = vdwg.mxu0
        %v4875 = vadd.f32 %v4601, %v4749
        %v4876 = vadd.f32 %v4602, %v4752
        %v4877 = vadd.f32 %v4603, %v4757
        %v4878 = vadd.f32 %v4604, %v4760
        %v4879 = vadd.f32 %v4605, %v4765
        %v4880 = vadd.f32 %v4606, %v4768
        %v4881 = vadd.f32 %v4607, %v4773
        %v4882 = vadd.f32 %v4608, %v4776
        %v4883 = vadd.f32 %v4609, %v4781
        %v4884 = vadd.f32 %v4610, %v4784
        %v4885 = vadd.f32 %v4611, %v4789
        %v4886 = vadd.f32 %v4612, %v4792
        %v4887 = vadd.f32 %v4613, %v4797
        %v4888 = vadd.f32 %v4614, %v4800
        %v4889 = vadd.f32 %v4615, %v4805
        %v4890 = vadd.f32 %v4616, %v4808
        %v4891 = vadd.f32 %v4617, %v4813
        %v4892 = vadd.f32 %v4618, %v4816
        %v4893 = vadd.f32 %v4619, %v4821
        %v4894 = vadd.f32 %v4620, %v4824
        %v4895 = vadd.f32 %v4621, %v4829
        %v4896 = vadd.f32 %v4622, %v4832
        %v4897 = vadd.f32 %v4623, %v4837
        %v4898 = vadd.f32 %v4624, %v4840
        %v4899 = vadd.f32 %v4625, %v4845
        %v4900 = vadd.f32 %v4626, %v4848
        %v4901 = vadd.f32 %v4627, %v4853
        %v4902 = vadd.f32 %v4628, %v4856
        %v4903 = vadd.f32 %v4629, %v4861
        %v4904 = vadd.f32 %v4630, %v4864
        %v4905 = vadd.f32 %v4631, %v4869
        %v4906 = vadd.f32 %v4632, %v4872
        %v4907 = vld [vmem:[#allocation4 + $0x8] sm:$0xff]
        %v4908 = vld [vmem:[#allocation4 + $0x10] sm:$0xff]
        %v4909 = vld [vmem:[#allocation4 + $0x18] sm:$0xff]
        %v4910 = vld [vmem:[#allocation4 + $0x20] sm:$0xff]
        %v4911 = vld [vmem:[#allocation4 + $0x28] sm:$0xff]
        %v4912 = vld [vmem:[#allocation4 + $0x30] sm:$0xff]
        %v4913 = vld [vmem:[#allocation4 + $0x38] sm:$0xff]
        %v4914 = vld [vmem:[#allocation4 + $0x40] sm:$0xff]
        %v4915 = vld [vmem:[#allocation4 + $0x48] sm:$0xff]
        %v4916 = vld [vmem:[#allocation4 + $0x50] sm:$0xff]
        %v4917 = vld [vmem:[#allocation4 + $0x58] sm:$0xff]
        %v4918 = vld [vmem:[#allocation4 + $0x60] sm:$0xff]
        %v4919 = vld [vmem:[#allocation4 + $0x68] sm:$0xff]
        %v4920 = vld [vmem:[#allocation4 + $0x70] sm:$0xff]
        %v4921 = vld [vmem:[#allocation4 + $0x78] sm:$0xff]
        %v4922 = vld [vmem:[#allocation4 + $0x80] sm:$0xff]
        %s4923 = scalar_lea.vmem [#allocation10], 320
        %v4924 = vld [vmem:[%s4923] sm:$0xf]
        %v4925 = vld [vmem:[%s4923 + $0x4] sm:$0xf]
        %v4926 = vld [vmem:[%s4923 + $0x8] sm:$0xf]
        %v4927 = vld [vmem:[%s4923 + $0xc] sm:$0xf]
        %v4928 = vld [vmem:[%s4923 + $0x10] sm:$0xf]
        %v4929 = vld [vmem:[%s4923 + $0x14] sm:$0xf]
        %v4930 = vld [vmem:[%s4923 + $0x18] sm:$0xf]
        %v4931 = vld [vmem:[%s4923 + $0x1c] sm:$0xf]
        %v4932 = vld [vmem:[%s4923 + $0x20] sm:$0xf]
        %v4933 = vld [vmem:[%s4923 + $0x24] sm:$0xf]
        %v4934 = vld [vmem:[%s4923 + $0x28] sm:$0xf]
        %v4935 = vld [vmem:[%s4923 + $0x2c] sm:$0xf]
        %v4936 = vld [vmem:[%s4923 + $0x30] sm:$0xf]
        %v4937 = vld [vmem:[%s4923 + $0x34] sm:$0xf]
        %v4938 = vld [vmem:[%s4923 + $0x38] sm:$0xf]
        %v4939 = vld [vmem:[%s4923 + $0x3c] sm:$0xf]
        %v4956 = vunpack.c.l.b16 %v4924
        %v4957 = vunpack.c.l.b16 %v4925
        %v4958 = vunpack.c.l.b16 %v4926
        %v4959 = vunpack.c.l.b16 %v4927
        %v4960 = vunpack.c.l.b16 %v4928
        %v4961 = vunpack.c.l.b16 %v4929
        %v4962 = vunpack.c.l.b16 %v4930
        %v4963 = vunpack.c.l.b16 %v4931
        %v4964 = vunpack.c.l.b16 %v4932
        %v4965 = vunpack.c.l.b16 %v4933
        %v4966 = vunpack.c.l.b16 %v4934
        %v4967 = vunpack.c.l.b16 %v4935
        %v4968 = vunpack.c.l.b16 %v4936
        %v4969 = vunpack.c.l.b16 %v4937
        %v4970 = vunpack.c.l.b16 %v4938
        %v4971 = vunpack.c.l.b16 %v4939
        %v4972 = vpack.c.b16 %v4957, %v4956
        %v4973 = vpack.c.b16 %v4959, %v4958
        %v4974 = vpack.c.b16 %v4961, %v4960
        %v4975 = vpack.c.b16 %v4963, %v4962
        %v4976 = vpack.c.b16 %v4965, %v4964
        %v4977 = vpack.c.b16 %v4967, %v4966
        %v4978 = vpack.c.b16 %v4969, %v4968
        %v4979 = vpack.c.b16 %v4971, %v4970
        %4988 = vmatprep.subr.bf16.mxu0 0
        %4989 = vmatpush1.bf16.msra.mxu0 %v4972
        %4990 = vmatprep.subr.bf16.mxu0 0
        %4991 = vmatpush1.bf16.msra.mxu0 %v4973
        %4992 = vmatprep.subr.bf16.mxu0 0
        %4993 = vmatpush1.bf16.msra.mxu0 %v4974
        %4994 = vmatprep.subr.bf16.mxu0 0
        %4995 = vmatpush1.bf16.msra.mxu0 %v4975
        %4996 = vmatprep.subr.bf16.mxu0 0
        %4997 = vmatpush1.bf16.msra.mxu0 %v4976
        %4998 = vmatprep.subr.bf16.mxu0 0
        %4999 = vmatpush1.bf16.msra.mxu0 %v4977
        %5000 = vmatprep.subr.bf16.mxu0 0
        %5001 = vmatpush1.bf16.msra.mxu0 %v4978
        %5002 = vmatprep.subr.bf16.mxu0 0
        %5003 = vmatpush1.bf16.msra.mxu0 %v4979
        %5004 = vmatprep.subr.bf16.mxu0 0
        %5005 = vmatpush1.bf16.msra.mxu0 0
        %5006 = vmatprep.subr.bf16.mxu0 0
        %5007 = vmatpush1.bf16.msra.mxu0 0
        %5008 = vmatprep.subr.bf16.mxu0 0
        %5009 = vmatpush1.bf16.msra.mxu0 0
        %5010 = vmatprep.subr.bf16.mxu0 0
        %5011 = vmatpush1.bf16.msra.mxu0 0
        %5012 = vmatprep.subr.bf16.mxu0 0
        %5013 = vmatpush1.bf16.msra.mxu0 0
        %5014 = vmatprep.subr.bf16.mxu0 0
        %5015 = vmatpush1.bf16.msra.mxu0 0
        %5016 = vmatprep.subr.bf16.mxu0 0
        %5017 = vmatpush1.bf16.msra.mxu0 0
        %5018 = vmatprep.subr.bf16.mxu0 0
        %5019 = vmatpush1.bf16.msra.mxu0 0
        %5020 = vmatprep.mubr.bf16.mxu0 0
        %5021 = vmatmul.mubr.bf16.gmra.mrb[0].mxu0 %v4907
        %v5022 = vpop.f32.mrb[0].mxu0
        %v5023 = vadd.f32 0.0, %v5022
        %v5024 = vpop.f32.mrb[0].mxu0
        %v5025 = vpop.f32.mrb[0].mxu0
        %v5026 = vadd.f32 0.0, %v5025
        %v5027 = vpop.f32.mrb[0].mxu0
        %5028 = vmatprep.mubr.bf16.mxu0 0
        %5029 = vmatmul.mubr.bf16.gmra.mrb[0].mxu0 %v4908
        %v5030 = vpop.f32.mrb[0].mxu0
        %v5031 = vadd.f32 0.0, %v5030
        %v5032 = vpop.f32.mrb[0].mxu0
        %v5033 = vpop.f32.mrb[0].mxu0
        %v5034 = vadd.f32 0.0, %v5033
        %v5035 = vpop.f32.mrb[0].mxu0
        %5036 = vmatprep.mubr.bf16.mxu0 0
        %5037 = vmatmul.mubr.bf16.gmra.mrb[0].mxu0 %v4909
        %v5038 = vpop.f32.mrb[0].mxu0
        %v5039 = vadd.f32 0.0, %v5038
        %v5040 = vpop.f32.mrb[0].mxu0
        %v5041 = vpop.f32.mrb[0].mxu0
        %v5042 = vadd.f32 0.0, %v5041
        %v5043 = vpop.f32.mrb[0].mxu0
        %5044 = vmatprep.mubr.bf16.mxu0 0
        %5045 = vmatmul.mubr.bf16.gmra.mrb[0].mxu0 %v4910
        %v5046 = vpop.f32.mrb[0].mxu0
        %v5047 = vadd.f32 0.0, %v5046
        %v5048 = vpop.f32.mrb[0].mxu0
        %v5049 = vpop.f32.mrb[0].mxu0
        %v5050 = vadd.f32 0.0, %v5049
        %v5051 = vpop.f32.mrb[0].mxu0
        %5052 = vmatprep.mubr.bf16.mxu0 0
        %5053 = vmatmul.mubr.bf16.gmra.mrb[0].mxu0 %v4911
        %v5054 = vpop.f32.mrb[0].mxu0
        %v5055 = vadd.f32 0.0, %v5054
        %v5056 = vpop.f32.mrb[0].mxu0
        %v5057 = vpop.f32.mrb[0].mxu0
        %v5058 = vadd.f32 0.0, %v5057
        %v5059 = vpop.f32.mrb[0].mxu0
        %5060 = vmatprep.mubr.bf16.mxu0 0
        %5061 = vmatmul.mubr.bf16.gmra.mrb[0].mxu0 %v4912
        %v5062 = vpop.f32.mrb[0].mxu0
        %v5063 = vadd.f32 0.0, %v5062
        %v5064 = vpop.f32.mrb[0].mxu0
        %v5065 = vpop.f32.mrb[0].mxu0
        %v5066 = vadd.f32 0.0, %v5065
        %v5067 = vpop.f32.mrb[0].mxu0
        %5068 = vmatprep.mubr.bf16.mxu0 0
        %5069 = vmatmul.mubr.bf16.gmra.mrb[0].mxu0 %v4913
        %v5070 = vpop.f32.mrb[0].mxu0
        %v5071 = vadd.f32 0.0, %v5070
        %v5072 = vpop.f32.mrb[0].mxu0
        %v5073 = vpop.f32.mrb[0].mxu0
        %v5074 = vadd.f32 0.0, %v5073
        %v5075 = vpop.f32.mrb[0].mxu0
        %5076 = vmatprep.mubr.bf16.mxu0 0
        %5077 = vmatmul.mubr.bf16.gmra.mrb[0].mxu0 %v4914
        %v5078 = vpop.f32.mrb[0].mxu0
        %v5079 = vadd.f32 0.0, %v5078
        %v5080 = vpop.f32.mrb[0].mxu0
        %v5081 = vpop.f32.mrb[0].mxu0
        %v5082 = vadd.f32 0.0, %v5081
        %v5083 = vpop.f32.mrb[0].mxu0
        %5084 = vmatprep.mubr.bf16.mxu0 0
        %5085 = vmatmul.mubr.bf16.gmra.mrb[0].mxu0 %v4915
        %v5086 = vpop.f32.mrb[0].mxu0
        %v5087 = vadd.f32 0.0, %v5086
        %v5088 = vpop.f32.mrb[0].mxu0
        %v5089 = vpop.f32.mrb[0].mxu0
        %v5090 = vadd.f32 0.0, %v5089
        %v5091 = vpop.f32.mrb[0].mxu0
        %5092 = vmatprep.mubr.bf16.mxu0 0
        %5093 = vmatmul.mubr.bf16.gmra.mrb[0].mxu0 %v4916
        %v5094 = vpop.f32.mrb[0].mxu0
        %v5095 = vadd.f32 0.0, %v5094
        %v5096 = vpop.f32.mrb[0].mxu0
        %v5097 = vpop.f32.mrb[0].mxu0
        %v5098 = vadd.f32 0.0, %v5097
        %v5099 = vpop.f32.mrb[0].mxu0
        %5100 = vmatprep.mubr.bf16.mxu0 0
        %5101 = vmatmul.mubr.bf16.gmra.mrb[0].mxu0 %v4917
        %v5102 = vpop.f32.mrb[0].mxu0
        %v5103 = vadd.f32 0.0, %v5102
        %v5104 = vpop.f32.mrb[0].mxu0
        %v5105 = vpop.f32.mrb[0].mxu0
        %v5106 = vadd.f32 0.0, %v5105
        %v5107 = vpop.f32.mrb[0].mxu0
        %5108 = vmatprep.mubr.bf16.mxu0 0
        %5109 = vmatmul.mubr.bf16.gmra.mrb[0].mxu0 %v4918
        %v5110 = vpop.f32.mrb[0].mxu0
        %v5111 = vadd.f32 0.0, %v5110
        %v5112 = vpop.f32.mrb[0].mxu0
        %v5113 = vpop.f32.mrb[0].mxu0
        %v5114 = vadd.f32 0.0, %v5113
        %v5115 = vpop.f32.mrb[0].mxu0
        %5116 = vmatprep.mubr.bf16.mxu0 0
        %5117 = vmatmul.mubr.bf16.gmra.mrb[0].mxu0 %v4919
        %v5118 = vpop.f32.mrb[0].mxu0
        %v5119 = vadd.f32 0.0, %v5118
        %v5120 = vpop.f32.mrb[0].mxu0
        %v5121 = vpop.f32.mrb[0].mxu0
        %v5122 = vadd.f32 0.0, %v5121
        %v5123 = vpop.f32.mrb[0].mxu0
        %5124 = vmatprep.mubr.bf16.mxu0 0
        %5125 = vmatmul.mubr.bf16.gmra.mrb[0].mxu0 %v4920
        %v5126 = vpop.f32.mrb[0].mxu0
        %v5127 = vadd.f32 0.0, %v5126
        %v5128 = vpop.f32.mrb[0].mxu0
        %v5129 = vpop.f32.mrb[0].mxu0
        %v5130 = vadd.f32 0.0, %v5129
        %v5131 = vpop.f32.mrb[0].mxu0
        %5132 = vmatprep.mubr.bf16.mxu0 0
        %5133 = vmatmul.mubr.bf16.gmra.mrb[0].mxu0 %v4921
        %v5134 = vpop.f32.mrb[0].mxu0
        %v5135 = vadd.f32 0.0, %v5134
        %v5136 = vpop.f32.mrb[0].mxu0
        %v5137 = vpop.f32.mrb[0].mxu0
        %v5138 = vadd.f32 0.0, %v5137
        %v5139 = vpop.f32.mrb[0].mxu0
        %5140 = vmatprep.mubr.bf16.mxu0 0
        %5141 = vmatmul.mubr.bf16.gmra.mrb[0].mxu0 %v4922
        %v5142 = vpop.f32.mrb[0].mxu0
        %v5143 = vadd.f32 0.0, %v5142
        %v5144 = vpop.f32.mrb[0].mxu0
        %v5145 = vpop.f32.mrb[0].mxu0
        %v5146 = vadd.f32 0.0, %v5145
        %v5147 = vpop.f32.mrb[0].mxu0
        %5148 = vdwg.mxu0
        %v5149 = vadd.f32 %v4875, %v5023
        %v5150 = vadd.f32 %v4876, %v5026
        %v5151 = vadd.f32 %v4877, %v5031
        %v5152 = vadd.f32 %v4878, %v5034
        %v5153 = vadd.f32 %v4879, %v5039
        %v5154 = vadd.f32 %v4880, %v5042
        %v5155 = vadd.f32 %v4881, %v5047
        %v5156 = vadd.f32 %v4882, %v5050
        %v5157 = vadd.f32 %v4883, %v5055
        %v5158 = vadd.f32 %v4884, %v5058
        %v5159 = vadd.f32 %v4885, %v5063
        %v5160 = vadd.f32 %v4886, %v5066
        %v5161 = vadd.f32 %v4887, %v5071
        %v5162 = vadd.f32 %v4888, %v5074
        %v5163 = vadd.f32 %v4889, %v5079
        %v5164 = vadd.f32 %v4890, %v5082
        %v5165 = vadd.f32 %v4891, %v5087
        %v5166 = vadd.f32 %v4892, %v5090
        %v5167 = vadd.f32 %v4893, %v5095
        %v5168 = vadd.f32 %v4894, %v5098
        %v5169 = vadd.f32 %v4895, %v5103
        %v5170 = vadd.f32 %v4896, %v5106
        %v5171 = vadd.f32 %v4897, %v5111
        %v5172 = vadd.f32 %v4898, %v5114
        %v5173 = vadd.f32 %v4899, %v5119
        %v5174 = vadd.f32 %v4900, %v5122
        %v5175 = vadd.f32 %v4901, %v5127
        %v5176 = vadd.f32 %v4902, %v5130
        %v5177 = vadd.f32 %v4903, %v5135
        %v5178 = vadd.f32 %v4904, %v5138
        %v5179 = vadd.f32 %v4905, %v5143
        %v5180 = vadd.f32 %v4906, %v5146
        %v5181 = vld [vmem:[#allocation3 + $0x10] sm:$0xff]
        %v5182 = vld [vmem:[#allocation3 + $0x18] sm:$0xff]
        %v5183 = vld [vmem:[#allocation3 + $0x20] sm:$0xff]
        %v5184 = vld [vmem:[#allocation3 + $0x28] sm:$0xff]
        %v5185 = vld [vmem:[#allocation3 + $0x30] sm:$0xff]
        %v5186 = vld [vmem:[#allocation3 + $0x38] sm:$0xff]
        %v5187 = vld [vmem:[#allocation3 + $0x40] sm:$0xff]
        %v5188 = vld [vmem:[#allocation3 + $0x48] sm:$0xff]
        %v5189 = vld [vmem:[#allocation3 + $0x50] sm:$0xff]
        %v5190 = vld [vmem:[#allocation3 + $0x58] sm:$0xff]
        %v5191 = vld [vmem:[#allocation3 + $0x60] sm:$0xff]
        %v5192 = vld [vmem:[#allocation3 + $0x68] sm:$0xff]
        %v5193 = vld [vmem:[#allocation3 + $0x70] sm:$0xff]
        %v5194 = vld [vmem:[#allocation3 + $0x78] sm:$0xff]
        %v5195 = vld [vmem:[#allocation3 + $0x80] sm:$0xff]
        %v5196 = vld [vmem:[#allocation3 + $0x88] sm:$0xff]
        %s5197 = scalar_lea.vmem [#allocation10], 384
        %v5198 = vld [vmem:[%s5197] sm:$0xf]
        %v5199 = vld [vmem:[%s5197 + $0x4] sm:$0xf]
        %v5200 = vld [vmem:[%s5197 + $0x8] sm:$0xf]
        %v5201 = vld [vmem:[%s5197 + $0xc] sm:$0xf]
        %v5202 = vld [vmem:[%s5197 + $0x10] sm:$0xf]
        %v5203 = vld [vmem:[%s5197 + $0x14] sm:$0xf]
        %v5204 = vld [vmem:[%s5197 + $0x18] sm:$0xf]
        %v5205 = vld [vmem:[%s5197 + $0x1c] sm:$0xf]
        %v5206 = vld [vmem:[%s5197 + $0x20] sm:$0xf]
        %v5207 = vld [vmem:[%s5197 + $0x24] sm:$0xf]
        %v5208 = vld [vmem:[%s5197 + $0x28] sm:$0xf]
        %v5209 = vld [vmem:[%s5197 + $0x2c] sm:$0xf]
        %v5210 = vld [vmem:[%s5197 + $0x30] sm:$0xf]
        %v5211 = vld [vmem:[%s5197 + $0x34] sm:$0xf]
        %v5212 = vld [vmem:[%s5197 + $0x38] sm:$0xf]
        %v5213 = vld [vmem:[%s5197 + $0x3c] sm:$0xf]
        %v5230 = vunpack.c.l.b16 %v5198
        %v5231 = vunpack.c.l.b16 %v5199
        %v5232 = vunpack.c.l.b16 %v5200
        %v5233 = vunpack.c.l.b16 %v5201
        %v5234 = vunpack.c.l.b16 %v5202
        %v5235 = vunpack.c.l.b16 %v5203
        %v5236 = vunpack.c.l.b16 %v5204
        %v5237 = vunpack.c.l.b16 %v5205
        %v5238 = vunpack.c.l.b16 %v5206
        %v5239 = vunpack.c.l.b16 %v5207
        %v5240 = vunpack.c.l.b16 %v5208
        %v5241 = vunpack.c.l.b16 %v5209
        %v5242 = vunpack.c.l.b16 %v5210
        %v5243 = vunpack.c.l.b16 %v5211
        %v5244 = vunpack.c.l.b16 %v5212
        %v5245 = vunpack.c.l.b16 %v5213
        %v5246 = vpack.c.b16 %v5231, %v5230
        %v5247 = vpack.c.b16 %v5233, %v5232
        %v5248 = vpack.c.b16 %v5235, %v5234
        %v5249 = vpack.c.b16 %v5237, %v5236
        %v5250 = vpack.c.b16 %v5239, %v5238
        %v5251 = vpack.c.b16 %v5241, %v5240
        %v5252 = vpack.c.b16 %v5243, %v5242
        %v5253 = vpack.c.b16 %v5245, %v5244
        %5262 = vmatprep.subr.bf16.mxu0 0
        %5263 = vmatpush1.bf16.msra.mxu0 %v5246
        %5264 = vmatprep.subr.bf16.mxu0 0
        %5265 = vmatpush1.bf16.msra.mxu0 %v5247
        %5266 = vmatprep.subr.bf16.mxu0 0
        %5267 = vmatpush1.bf16.msra.mxu0 %v5248
        %5268 = vmatprep.subr.bf16.mxu0 0
        %5269 = vmatpush1.bf16.msra.mxu0 %v5249
        %5270 = vmatprep.subr.bf16.mxu0 0
        %5271 = vmatpush1.bf16.msra.mxu0 %v5250
        %5272 = vmatprep.subr.bf16.mxu0 0
        %5273 = vmatpush1.bf16.msra.mxu0 %v5251
        %5274 = vmatprep.subr.bf16.mxu0 0
        %5275 = vmatpush1.bf16.msra.mxu0 %v5252
        %5276 = vmatprep.subr.bf16.mxu0 0
        %5277 = vmatpush1.bf16.msra.mxu0 %v5253
        %5278 = vmatprep.subr.bf16.mxu0 0
        %5279 = vmatpush1.bf16.msra.mxu0 0
        %5280 = vmatprep.subr.bf16.mxu0 0
        %5281 = vmatpush1.bf16.msra.mxu0 0
        %5282 = vmatprep.subr.bf16.mxu0 0
        %5283 = vmatpush1.bf16.msra.mxu0 0
        %5284 = vmatprep.subr.bf16.mxu0 0
        %5285 = vmatpush1.bf16.msra.mxu0 0
        %5286 = vmatprep.subr.bf16.mxu0 0
        %5287 = vmatpush1.bf16.msra.mxu0 0
        %5288 = vmatprep.subr.bf16.mxu0 0
        %5289 = vmatpush1.bf16.msra.mxu0 0
        %5290 = vmatprep.subr.bf16.mxu0 0
        %5291 = vmatpush1.bf16.msra.mxu0 0
        %5292 = vmatprep.subr.bf16.mxu0 0
        %5293 = vmatpush1.bf16.msra.mxu0 0
        %5294 = vmatprep.mubr.bf16.mxu0 0
        %5295 = vmatmul.mubr.bf16.gmra.mrb[0].mxu0 %v5181
        %v5296 = vpop.f32.mrb[0].mxu0
        %v5297 = vadd.f32 0.0, %v5296
        %v5298 = vpop.f32.mrb[0].mxu0
        %v5299 = vpop.f32.mrb[0].mxu0
        %v5300 = vadd.f32 0.0, %v5299
        %v5301 = vpop.f32.mrb[0].mxu0
        %5302 = vmatprep.mubr.bf16.mxu0 0
        %5303 = vmatmul.mubr.bf16.gmra.mrb[0].mxu0 %v5182
        %v5304 = vpop.f32.mrb[0].mxu0
        %v5305 = vadd.f32 0.0, %v5304
        %v5306 = vpop.f32.mrb[0].mxu0
        %v5307 = vpop.f32.mrb[0].mxu0
        %v5308 = vadd.f32 0.0, %v5307
        %v5309 = vpop.f32.mrb[0].mxu0
        %5310 = vmatprep.mubr.bf16.mxu0 0
        %5311 = vmatmul.mubr.bf16.gmra.mrb[0].mxu0 %v5183
        %v5312 = vpop.f32.mrb[0].mxu0
        %v5313 = vadd.f32 0.0, %v5312
        %v5314 = vpop.f32.mrb[0].mxu0
        %v5315 = vpop.f32.mrb[0].mxu0
        %v5316 = vadd.f32 0.0, %v5315
        %v5317 = vpop.f32.mrb[0].mxu0
        %5318 = vmatprep.mubr.bf16.mxu0 0
        %5319 = vmatmul.mubr.bf16.gmra.mrb[0].mxu0 %v5184
        %v5320 = vpop.f32.mrb[0].mxu0
        %v5321 = vadd.f32 0.0, %v5320
        %v5322 = vpop.f32.mrb[0].mxu0
        %v5323 = vpop.f32.mrb[0].mxu0
        %v5324 = vadd.f32 0.0, %v5323
        %v5325 = vpop.f32.mrb[0].mxu0
        %5326 = vmatprep.mubr.bf16.mxu0 0
        %5327 = vmatmul.mubr.bf16.gmra.mrb[0].mxu0 %v5185
        %v5328 = vpop.f32.mrb[0].mxu0
        %v5329 = vadd.f32 0.0, %v5328
        %v5330 = vpop.f32.mrb[0].mxu0
        %v5331 = vpop.f32.mrb[0].mxu0
        %v5332 = vadd.f32 0.0, %v5331
        %v5333 = vpop.f32.mrb[0].mxu0
        %5334 = vmatprep.mubr.bf16.mxu0 0
        %5335 = vmatmul.mubr.bf16.gmra.mrb[0].mxu0 %v5186
        %v5336 = vpop.f32.mrb[0].mxu0
        %v5337 = vadd.f32 0.0, %v5336
        %v5338 = vpop.f32.mrb[0].mxu0
        %v5339 = vpop.f32.mrb[0].mxu0
        %v5340 = vadd.f32 0.0, %v5339
        %v5341 = vpop.f32.mrb[0].mxu0
        %5342 = vmatprep.mubr.bf16.mxu0 0
        %5343 = vmatmul.mubr.bf16.gmra.mrb[0].mxu0 %v5187
        %v5344 = vpop.f32.mrb[0].mxu0
        %v5345 = vadd.f32 0.0, %v5344
        %v5346 = vpop.f32.mrb[0].mxu0
        %v5347 = vpop.f32.mrb[0].mxu0
        %v5348 = vadd.f32 0.0, %v5347
        %v5349 = vpop.f32.mrb[0].mxu0
        %5350 = vmatprep.mubr.bf16.mxu0 0
        %5351 = vmatmul.mubr.bf16.gmra.mrb[0].mxu0 %v5188
        %v5352 = vpop.f32.mrb[0].mxu0
        %v5353 = vadd.f32 0.0, %v5352
        %v5354 = vpop.f32.mrb[0].mxu0
        %v5355 = vpop.f32.mrb[0].mxu0
        %v5356 = vadd.f32 0.0, %v5355
        %v5357 = vpop.f32.mrb[0].mxu0
        %5358 = vmatprep.mubr.bf16.mxu0 0
        %5359 = vmatmul.mubr.bf16.gmra.mrb[0].mxu0 %v5189
        %v5360 = vpop.f32.mrb[0].mxu0
        %v5361 = vadd.f32 0.0, %v5360
        %v5362 = vpop.f32.mrb[0].mxu0
        %v5363 = vpop.f32.mrb[0].mxu0
        %v5364 = vadd.f32 0.0, %v5363
        %v5365 = vpop.f32.mrb[0].mxu0
        %5366 = vmatprep.mubr.bf16.mxu0 0
        %5367 = vmatmul.mubr.bf16.gmra.mrb[0].mxu0 %v5190
        %v5368 = vpop.f32.mrb[0].mxu0
        %v5369 = vadd.f32 0.0, %v5368
        %v5370 = vpop.f32.mrb[0].mxu0
        %v5371 = vpop.f32.mrb[0].mxu0
        %v5372 = vadd.f32 0.0, %v5371
        %v5373 = vpop.f32.mrb[0].mxu0
        %5374 = vmatprep.mubr.bf16.mxu0 0
        %5375 = vmatmul.mubr.bf16.gmra.mrb[0].mxu0 %v5191
        %v5376 = vpop.f32.mrb[0].mxu0
        %v5377 = vadd.f32 0.0, %v5376
        %v5378 = vpop.f32.mrb[0].mxu0
        %v5379 = vpop.f32.mrb[0].mxu0
        %v5380 = vadd.f32 0.0, %v5379
        %v5381 = vpop.f32.mrb[0].mxu0
        %5382 = vmatprep.mubr.bf16.mxu0 0
        %5383 = vmatmul.mubr.bf16.gmra.mrb[0].mxu0 %v5192
        %v5384 = vpop.f32.mrb[0].mxu0
        %v5385 = vadd.f32 0.0, %v5384
        %v5386 = vpop.f32.mrb[0].mxu0
        %v5387 = vpop.f32.mrb[0].mxu0
        %v5388 = vadd.f32 0.0, %v5387
        %v5389 = vpop.f32.mrb[0].mxu0
        %5390 = vmatprep.mubr.bf16.mxu0 0
        %5391 = vmatmul.mubr.bf16.gmra.mrb[0].mxu0 %v5193
        %v5392 = vpop.f32.mrb[0].mxu0
        %v5393 = vadd.f32 0.0, %v5392
        %v5394 = vpop.f32.mrb[0].mxu0
        %v5395 = vpop.f32.mrb[0].mxu0
        %v5396 = vadd.f32 0.0, %v5395
        %v5397 = vpop.f32.mrb[0].mxu0
        %5398 = vmatprep.mubr.bf16.mxu0 0
        %5399 = vmatmul.mubr.bf16.gmra.mrb[0].mxu0 %v5194
        %v5400 = vpop.f32.mrb[0].mxu0
        %v5401 = vadd.f32 0.0, %v5400
        %v5402 = vpop.f32.mrb[0].mxu0
        %v5403 = vpop.f32.mrb[0].mxu0
        %v5404 = vadd.f32 0.0, %v5403
        %v5405 = vpop.f32.mrb[0].mxu0
        %5406 = vmatprep.mubr.bf16.mxu0 0
        %5407 = vmatmul.mubr.bf16.gmra.mrb[0].mxu0 %v5195
        %v5408 = vpop.f32.mrb[0].mxu0
        %v5409 = vadd.f32 0.0, %v5408
        %v5410 = vpop.f32.mrb[0].mxu0
        %v5411 = vpop.f32.mrb[0].mxu0
        %v5412 = vadd.f32 0.0, %v5411
        %v5413 = vpop.f32.mrb[0].mxu0
        %5414 = vmatprep.mubr.bf16.mxu0 0
        %5415 = vmatmul.mubr.bf16.gmra.mrb[0].mxu0 %v5196
        %v5416 = vpop.f32.mrb[0].mxu0
        %v5417 = vadd.f32 0.0, %v5416
        %v5418 = vpop.f32.mrb[0].mxu0
        %v5419 = vpop.f32.mrb[0].mxu0
        %v5420 = vadd.f32 0.0, %v5419
        %v5421 = vpop.f32.mrb[0].mxu0
        %5422 = vdwg.mxu0
        %v5423 = vadd.f32 %v5149, %v5297
        %v5424 = vadd.f32 %v5150, %v5300
        %v5425 = vadd.f32 %v5151, %v5305
        %v5426 = vadd.f32 %v5152, %v5308
        %v5427 = vadd.f32 %v5153, %v5313
        %v5428 = vadd.f32 %v5154, %v5316
        %v5429 = vadd.f32 %v5155, %v5321
        %v5430 = vadd.f32 %v5156, %v5324
        %v5431 = vadd.f32 %v5157, %v5329
        %v5432 = vadd.f32 %v5158, %v5332
        %v5433 = vadd.f32 %v5159, %v5337
        %v5434 = vadd.f32 %v5160, %v5340
        %v5435 = vadd.f32 %v5161, %v5345
        %v5436 = vadd.f32 %v5162, %v5348
        %v5437 = vadd.f32 %v5163, %v5353
        %v5438 = vadd.f32 %v5164, %v5356
        %v5439 = vadd.f32 %v5165, %v5361
        %v5440 = vadd.f32 %v5166, %v5364
        %v5441 = vadd.f32 %v5167, %v5369
        %v5442 = vadd.f32 %v5168, %v5372
        %v5443 = vadd.f32 %v5169, %v5377
        %v5444 = vadd.f32 %v5170, %v5380
        %v5445 = vadd.f32 %v5171, %v5385
        %v5446 = vadd.f32 %v5172, %v5388
        %v5447 = vadd.f32 %v5173, %v5393
        %v5448 = vadd.f32 %v5174, %v5396
        %v5449 = vadd.f32 %v5175, %v5401
        %v5450 = vadd.f32 %v5176, %v5404
        %v5451 = vadd.f32 %v5177, %v5409
        %v5452 = vadd.f32 %v5178, %v5412
        %v5453 = vadd.f32 %v5179, %v5417
        %v5454 = vadd.f32 %v5180, %v5420
        %v5455 = vld [vmem:[#allocation2 + $0x10] sm:$0xff]
        %v5456 = vld [vmem:[#allocation2 + $0x18] sm:$0xff]
        %v5457 = vld [vmem:[#allocation2 + $0x20] sm:$0xff]
        %v5458 = vld [vmem:[#allocation2 + $0x28] sm:$0xff]
        %v5459 = vld [vmem:[#allocation2 + $0x30] sm:$0xff]
        %v5460 = vld [vmem:[#allocation2 + $0x38] sm:$0xff]
        %v5461 = vld [vmem:[#allocation2 + $0x40] sm:$0xff]
        %v5462 = vld [vmem:[#allocation2 + $0x48] sm:$0xff]
        %v5463 = vld [vmem:[#allocation2 + $0x50] sm:$0xff]
        %v5464 = vld [vmem:[#allocation2 + $0x58] sm:$0xff]
        %v5465 = vld [vmem:[#allocation2 + $0x60] sm:$0xff]
        %v5466 = vld [vmem:[#allocation2 + $0x68] sm:$0xff]
        %v5467 = vld [vmem:[#allocation2 + $0x70] sm:$0xff]
        %v5468 = vld [vmem:[#allocation2 + $0x78] sm:$0xff]
        %v5469 = vld [vmem:[#allocation2 + $0x80] sm:$0xff]
        %v5470 = vld [vmem:[#allocation2 + $0x88] sm:$0xff]
        %s5471 = scalar_lea.vmem [#allocation10], 448
        %v5472 = vld [vmem:[%s5471] sm:$0xf]
        %v5473 = vld [vmem:[%s5471 + $0x4] sm:$0xf]
        %v5474 = vld [vmem:[%s5471 + $0x8] sm:$0xf]
        %v5475 = vld [vmem:[%s5471 + $0xc] sm:$0xf]
        %v5476 = vld [vmem:[%s5471 + $0x10] sm:$0xf]
        %v5477 = vld [vmem:[%s5471 + $0x14] sm:$0xf]
        %v5478 = vld [vmem:[%s5471 + $0x18] sm:$0xf]
        %v5479 = vld [vmem:[%s5471 + $0x1c] sm:$0xf]
        %v5480 = vld [vmem:[%s5471 + $0x20] sm:$0xf]
        %v5481 = vld [vmem:[%s5471 + $0x24] sm:$0xf]
        %v5482 = vld [vmem:[%s5471 + $0x28] sm:$0xf]
        %v5483 = vld [vmem:[%s5471 + $0x2c] sm:$0xf]
        %v5484 = vld [vmem:[%s5471 + $0x30] sm:$0xf]
        %v5485 = vld [vmem:[%s5471 + $0x34] sm:$0xf]
        %v5486 = vld [vmem:[%s5471 + $0x38] sm:$0xf]
        %v5487 = vld [vmem:[%s5471 + $0x3c] sm:$0xf]
        %v5504 = vunpack.c.l.b16 %v5472
        %v5505 = vunpack.c.l.b16 %v5473
        %v5506 = vunpack.c.l.b16 %v5474
        %v5507 = vunpack.c.l.b16 %v5475
        %v5508 = vunpack.c.l.b16 %v5476
        %v5509 = vunpack.c.l.b16 %v5477
        %v5510 = vunpack.c.l.b16 %v5478
        %v5511 = vunpack.c.l.b16 %v5479
        %v5512 = vunpack.c.l.b16 %v5480
        %v5513 = vunpack.c.l.b16 %v5481
        %v5514 = vunpack.c.l.b16 %v5482
        %v5515 = vunpack.c.l.b16 %v5483
        %v5516 = vunpack.c.l.b16 %v5484
        %v5517 = vunpack.c.l.b16 %v5485
        %v5518 = vunpack.c.l.b16 %v5486
        %v5519 = vunpack.c.l.b16 %v5487
        %v5520 = vpack.c.b16 %v5505, %v5504
        %v5521 = vpack.c.b16 %v5507, %v5506
        %v5522 = vpack.c.b16 %v5509, %v5508
        %v5523 = vpack.c.b16 %v5511, %v5510
        %v5524 = vpack.c.b16 %v5513, %v5512
        %v5525 = vpack.c.b16 %v5515, %v5514
        %v5526 = vpack.c.b16 %v5517, %v5516
        %v5527 = vpack.c.b16 %v5519, %v5518
        %5536 = vmatprep.subr.bf16.mxu0 0
        %5537 = vmatpush1.bf16.msra.mxu0 %v5520
        %5538 = vmatprep.subr.bf16.mxu0 0
        %5539 = vmatpush1.bf16.msra.mxu0 %v5521
        %5540 = vmatprep.subr.bf16.mxu0 0
        %5541 = vmatpush1.bf16.msra.mxu0 %v5522
        %5542 = vmatprep.subr.bf16.mxu0 0
        %5543 = vmatpush1.bf16.msra.mxu0 %v5523
        %5544 = vmatprep.subr.bf16.mxu0 0
        %5545 = vmatpush1.bf16.msra.mxu0 %v5524
        %5546 = vmatprep.subr.bf16.mxu0 0
        %5547 = vmatpush1.bf16.msra.mxu0 %v5525
        %5548 = vmatprep.subr.bf16.mxu0 0
        %5549 = vmatpush1.bf16.msra.mxu0 %v5526
        %5550 = vmatprep.subr.bf16.mxu0 0
        %5551 = vmatpush1.bf16.msra.mxu0 %v5527
        %5552 = vmatprep.subr.bf16.mxu0 0
        %5553 = vmatpush1.bf16.msra.mxu0 0
        %5554 = vmatprep.subr.bf16.mxu0 0
        %5555 = vmatpush1.bf16.msra.mxu0 0
        %5556 = vmatprep.subr.bf16.mxu0 0
        %5557 = vmatpush1.bf16.msra.mxu0 0
        %5558 = vmatprep.subr.bf16.mxu0 0
        %5559 = vmatpush1.bf16.msra.mxu0 0
        %5560 = vmatprep.subr.bf16.mxu0 0
        %5561 = vmatpush1.bf16.msra.mxu0 0
        %5562 = vmatprep.subr.bf16.mxu0 0
        %5563 = vmatpush1.bf16.msra.mxu0 0
        %5564 = vmatprep.subr.bf16.mxu0 0
        %5565 = vmatpush1.bf16.msra.mxu0 0
        %5566 = vmatprep.subr.bf16.mxu0 0
        %5567 = vmatpush1.bf16.msra.mxu0 0
        %5568 = vmatprep.mubr.bf16.mxu0 0
        %5569 = vmatmul.mubr.bf16.gmra.mrb[0].mxu0 %v5455
        %v5570 = vpop.f32.mrb[0].mxu0
        %v5571 = vadd.f32 0.0, %v5570
        %v5572 = vpop.f32.mrb[0].mxu0
        %v5573 = vpop.f32.mrb[0].mxu0
        %v5574 = vadd.f32 0.0, %v5573
        %v5575 = vpop.f32.mrb[0].mxu0
        %5576 = vmatprep.mubr.bf16.mxu0 0
        %5577 = vmatmul.mubr.bf16.gmra.mrb[0].mxu0 %v5456
        %v5578 = vpop.f32.mrb[0].mxu0
        %v5579 = vadd.f32 0.0, %v5578
        %v5580 = vpop.f32.mrb[0].mxu0
        %v5581 = vpop.f32.mrb[0].mxu0
        %v5582 = vadd.f32 0.0, %v5581
        %v5583 = vpop.f32.mrb[0].mxu0
        %5584 = vmatprep.mubr.bf16.mxu0 0
        %5585 = vmatmul.mubr.bf16.gmra.mrb[0].mxu0 %v5457
        %v5586 = vpop.f32.mrb[0].mxu0
        %v5587 = vadd.f32 0.0, %v5586
        %v5588 = vpop.f32.mrb[0].mxu0
        %v5589 = vpop.f32.mrb[0].mxu0
        %v5590 = vadd.f32 0.0, %v5589
        %v5591 = vpop.f32.mrb[0].mxu0
        %5592 = vmatprep.mubr.bf16.mxu0 0
        %5593 = vmatmul.mubr.bf16.gmra.mrb[0].mxu0 %v5458
        %v5594 = vpop.f32.mrb[0].mxu0
        %v5595 = vadd.f32 0.0, %v5594
        %v5596 = vpop.f32.mrb[0].mxu0
        %v5597 = vpop.f32.mrb[0].mxu0
        %v5598 = vadd.f32 0.0, %v5597
        %v5599 = vpop.f32.mrb[0].mxu0
        %5600 = vmatprep.mubr.bf16.mxu0 0
        %5601 = vmatmul.mubr.bf16.gmra.mrb[0].mxu0 %v5459
        %v5602 = vpop.f32.mrb[0].mxu0
        %v5603 = vadd.f32 0.0, %v5602
        %v5604 = vpop.f32.mrb[0].mxu0
        %v5605 = vpop.f32.mrb[0].mxu0
        %v5606 = vadd.f32 0.0, %v5605
        %v5607 = vpop.f32.mrb[0].mxu0
        %5608 = vmatprep.mubr.bf16.mxu0 0
        %5609 = vmatmul.mubr.bf16.gmra.mrb[0].mxu0 %v5460
        %v5610 = vpop.f32.mrb[0].mxu0
        %v5611 = vadd.f32 0.0, %v5610
        %v5612 = vpop.f32.mrb[0].mxu0
        %v5613 = vpop.f32.mrb[0].mxu0
        %v5614 = vadd.f32 0.0, %v5613
        %v5615 = vpop.f32.mrb[0].mxu0
        %5616 = vmatprep.mubr.bf16.mxu0 0
        %5617 = vmatmul.mubr.bf16.gmra.mrb[0].mxu0 %v5461
        %v5618 = vpop.f32.mrb[0].mxu0
        %v5619 = vadd.f32 0.0, %v5618
        %v5620 = vpop.f32.mrb[0].mxu0
        %v5621 = vpop.f32.mrb[0].mxu0
        %v5622 = vadd.f32 0.0, %v5621
        %v5623 = vpop.f32.mrb[0].mxu0
        %5624 = vmatprep.mubr.bf16.mxu0 0
        %5625 = vmatmul.mubr.bf16.gmra.mrb[0].mxu0 %v5462
        %v5626 = vpop.f32.mrb[0].mxu0
        %v5627 = vadd.f32 0.0, %v5626
        %v5628 = vpop.f32.mrb[0].mxu0
        %v5629 = vpop.f32.mrb[0].mxu0
        %v5630 = vadd.f32 0.0, %v5629
        %v5631 = vpop.f32.mrb[0].mxu0
        %5632 = vmatprep.mubr.bf16.mxu0 0
        %5633 = vmatmul.mubr.bf16.gmra.mrb[0].mxu0 %v5463
        %v5634 = vpop.f32.mrb[0].mxu0
        %v5635 = vadd.f32 0.0, %v5634
        %v5636 = vpop.f32.mrb[0].mxu0
        %v5637 = vpop.f32.mrb[0].mxu0
        %v5638 = vadd.f32 0.0, %v5637
        %v5639 = vpop.f32.mrb[0].mxu0
        %5640 = vmatprep.mubr.bf16.mxu0 0
        %5641 = vmatmul.mubr.bf16.gmra.mrb[0].mxu0 %v5464
        %v5642 = vpop.f32.mrb[0].mxu0
        %v5643 = vadd.f32 0.0, %v5642
        %v5644 = vpop.f32.mrb[0].mxu0
        %v5645 = vpop.f32.mrb[0].mxu0
        %v5646 = vadd.f32 0.0, %v5645
        %v5647 = vpop.f32.mrb[0].mxu0
        %5648 = vmatprep.mubr.bf16.mxu0 0
        %5649 = vmatmul.mubr.bf16.gmra.mrb[0].mxu0 %v5465
        %v5650 = vpop.f32.mrb[0].mxu0
        %v5651 = vadd.f32 0.0, %v5650
        %v5652 = vpop.f32.mrb[0].mxu0
        %v5653 = vpop.f32.mrb[0].mxu0
        %v5654 = vadd.f32 0.0, %v5653
        %v5655 = vpop.f32.mrb[0].mxu0
        %5656 = vmatprep.mubr.bf16.mxu0 0
        %5657 = vmatmul.mubr.bf16.gmra.mrb[0].mxu0 %v5466
        %v5658 = vpop.f32.mrb[0].mxu0
        %v5659 = vadd.f32 0.0, %v5658
        %v5660 = vpop.f32.mrb[0].mxu0
        %v5661 = vpop.f32.mrb[0].mxu0
        %v5662 = vadd.f32 0.0, %v5661
        %v5663 = vpop.f32.mrb[0].mxu0
        %5664 = vmatprep.mubr.bf16.mxu0 0
        %5665 = vmatmul.mubr.bf16.gmra.mrb[0].mxu0 %v5467
        %v5666 = vpop.f32.mrb[0].mxu0
        %v5667 = vadd.f32 0.0, %v5666
        %v5668 = vpop.f32.mrb[0].mxu0
        %v5669 = vpop.f32.mrb[0].mxu0
        %v5670 = vadd.f32 0.0, %v5669
        %v5671 = vpop.f32.mrb[0].mxu0
        %5672 = vmatprep.mubr.bf16.mxu0 0
        %5673 = vmatmul.mubr.bf16.gmra.mrb[0].mxu0 %v5468
        %v5674 = vpop.f32.mrb[0].mxu0
        %v5675 = vadd.f32 0.0, %v5674
        %v5676 = vpop.f32.mrb[0].mxu0
        %v5677 = vpop.f32.mrb[0].mxu0
        %v5678 = vadd.f32 0.0, %v5677
        %v5679 = vpop.f32.mrb[0].mxu0
        %5680 = vmatprep.mubr.bf16.mxu0 0
        %5681 = vmatmul.mubr.bf16.gmra.mrb[0].mxu0 %v5469
        %v5682 = vpop.f32.mrb[0].mxu0
        %v5683 = vadd.f32 0.0, %v5682
        %v5684 = vpop.f32.mrb[0].mxu0
        %v5685 = vpop.f32.mrb[0].mxu0
        %v5686 = vadd.f32 0.0, %v5685
        %v5687 = vpop.f32.mrb[0].mxu0
        %5688 = vmatprep.mubr.bf16.mxu0 0
        %5689 = vmatmul.mubr.bf16.gmra.mrb[0].mxu0 %v5470
        %v5690 = vpop.f32.mrb[0].mxu0
        %v5691 = vadd.f32 0.0, %v5690
        %v5692 = vpop.f32.mrb[0].mxu0
        %v5693 = vpop.f32.mrb[0].mxu0
        %v5694 = vadd.f32 0.0, %v5693
        %v5695 = vpop.f32.mrb[0].mxu0
        %5696 = vdwg.mxu0
        %v5697 = vadd.f32 %v5423, %v5571
        %v5698 = vadd.f32 %v5424, %v5574
        %v5699 = vadd.f32 %v5425, %v5579
        %v5700 = vadd.f32 %v5426, %v5582
        %v5701 = vadd.f32 %v5427, %v5587
        %v5702 = vadd.f32 %v5428, %v5590
        %v5703 = vadd.f32 %v5429, %v5595
        %v5704 = vadd.f32 %v5430, %v5598
        %v5705 = vadd.f32 %v5431, %v5603
        %v5706 = vadd.f32 %v5432, %v5606
        %v5707 = vadd.f32 %v5433, %v5611
        %v5708 = vadd.f32 %v5434, %v5614
        %v5709 = vadd.f32 %v5435, %v5619
        %v5710 = vadd.f32 %v5436, %v5622
        %v5711 = vadd.f32 %v5437, %v5627
        %v5712 = vadd.f32 %v5438, %v5630
        %v5713 = vadd.f32 %v5439, %v5635
        %v5714 = vadd.f32 %v5440, %v5638
        %v5715 = vadd.f32 %v5441, %v5643
        %v5716 = vadd.f32 %v5442, %v5646
        %v5717 = vadd.f32 %v5443, %v5651
        %v5718 = vadd.f32 %v5444, %v5654
        %v5719 = vadd.f32 %v5445, %v5659
        %v5720 = vadd.f32 %v5446, %v5662
        %v5721 = vadd.f32 %v5447, %v5667
        %v5722 = vadd.f32 %v5448, %v5670
        %v5723 = vadd.f32 %v5449, %v5675
        %v5724 = vadd.f32 %v5450, %v5678
        %v5725 = vadd.f32 %v5451, %v5683
        %v5726 = vadd.f32 %v5452, %v5686
        %v5727 = vadd.f32 %v5453, %v5691
        %v5728 = vadd.f32 %v5454, %v5694
        %v5729 = vld [vmem:[#allocation4 + $0x10] sm:$0xff]
        %v5730 = vld [vmem:[#allocation4 + $0x18] sm:$0xff]
        %v5731 = vld [vmem:[#allocation4 + $0x20] sm:$0xff]
        %v5732 = vld [vmem:[#allocation4 + $0x28] sm:$0xff]
        %v5733 = vld [vmem:[#allocation4 + $0x30] sm:$0xff]
        %v5734 = vld [vmem:[#allocation4 + $0x38] sm:$0xff]
        %v5735 = vld [vmem:[#allocation4 + $0x40] sm:$0xff]
        %v5736 = vld [vmem:[#allocation4 + $0x48] sm:$0xff]
        %v5737 = vld [vmem:[#allocation4 + $0x50] sm:$0xff]
        %v5738 = vld [vmem:[#allocation4 + $0x58] sm:$0xff]
        %v5739 = vld [vmem:[#allocation4 + $0x60] sm:$0xff]
        %v5740 = vld [vmem:[#allocation4 + $0x68] sm:$0xff]
        %v5741 = vld [vmem:[#allocation4 + $0x70] sm:$0xff]
        %v5742 = vld [vmem:[#allocation4 + $0x78] sm:$0xff]
        %v5743 = vld [vmem:[#allocation4 + $0x80] sm:$0xff]
        %v5744 = vld [vmem:[#allocation4 + $0x88] sm:$0xff]
        %s5745 = scalar_lea.vmem [#allocation10], 512
        %v5746 = vld [vmem:[%s5745] sm:$0xf]
        %v5747 = vld [vmem:[%s5745 + $0x4] sm:$0xf]
        %v5748 = vld [vmem:[%s5745 + $0x8] sm:$0xf]
        %v5749 = vld [vmem:[%s5745 + $0xc] sm:$0xf]
        %v5750 = vld [vmem:[%s5745 + $0x10] sm:$0xf]
        %v5751 = vld [vmem:[%s5745 + $0x14] sm:$0xf]
        %v5752 = vld [vmem:[%s5745 + $0x18] sm:$0xf]
        %v5753 = vld [vmem:[%s5745 + $0x1c] sm:$0xf]
        %v5754 = vld [vmem:[%s5745 + $0x20] sm:$0xf]
        %v5755 = vld [vmem:[%s5745 + $0x24] sm:$0xf]
        %v5756 = vld [vmem:[%s5745 + $0x28] sm:$0xf]
        %v5757 = vld [vmem:[%s5745 + $0x2c] sm:$0xf]
        %v5758 = vld [vmem:[%s5745 + $0x30] sm:$0xf]
        %v5759 = vld [vmem:[%s5745 + $0x34] sm:$0xf]
        %v5760 = vld [vmem:[%s5745 + $0x38] sm:$0xf]
        %v5761 = vld [vmem:[%s5745 + $0x3c] sm:$0xf]
        %v5778 = vunpack.c.l.b16 %v5746
        %v5779 = vunpack.c.l.b16 %v5747
        %v5780 = vunpack.c.l.b16 %v5748
        %v5781 = vunpack.c.l.b16 %v5749
        %v5782 = vunpack.c.l.b16 %v5750
        %v5783 = vunpack.c.l.b16 %v5751
        %v5784 = vunpack.c.l.b16 %v5752
        %v5785 = vunpack.c.l.b16 %v5753
        %v5786 = vunpack.c.l.b16 %v5754
        %v5787 = vunpack.c.l.b16 %v5755
        %v5788 = vunpack.c.l.b16 %v5756
        %v5789 = vunpack.c.l.b16 %v5757
        %v5790 = vunpack.c.l.b16 %v5758
        %v5791 = vunpack.c.l.b16 %v5759
        %v5792 = vunpack.c.l.b16 %v5760
        %v5793 = vunpack.c.l.b16 %v5761
        %v5794 = vpack.c.b16 %v5779, %v5778
        %v5795 = vpack.c.b16 %v5781, %v5780
        %v5796 = vpack.c.b16 %v5783, %v5782
        %v5797 = vpack.c.b16 %v5785, %v5784
        %v5798 = vpack.c.b16 %v5787, %v5786
        %v5799 = vpack.c.b16 %v5789, %v5788
        %v5800 = vpack.c.b16 %v5791, %v5790
        %v5801 = vpack.c.b16 %v5793, %v5792
        %5810 = vmatprep.subr.bf16.mxu0 0
        %5811 = vmatpush1.bf16.msra.mxu0 %v5794
        %5812 = vmatprep.subr.bf16.mxu0 0
        %5813 = vmatpush1.bf16.msra.mxu0 %v5795
        %5814 = vmatprep.subr.bf16.mxu0 0
        %5815 = vmatpush1.bf16.msra.mxu0 %v5796
        %5816 = vmatprep.subr.bf16.mxu0 0
        %5817 = vmatpush1.bf16.msra.mxu0 %v5797
        %5818 = vmatprep.subr.bf16.mxu0 0
        %5819 = vmatpush1.bf16.msra.mxu0 %v5798
        %5820 = vmatprep.subr.bf16.mxu0 0
        %5821 = vmatpush1.bf16.msra.mxu0 %v5799
        %5822 = vmatprep.subr.bf16.mxu0 0
        %5823 = vmatpush1.bf16.msra.mxu0 %v5800
        %5824 = vmatprep.subr.bf16.mxu0 0
        %5825 = vmatpush1.bf16.msra.mxu0 %v5801
        %5826 = vmatprep.subr.bf16.mxu0 0
        %5827 = vmatpush1.bf16.msra.mxu0 0
        %5828 = vmatprep.subr.bf16.mxu0 0
        %5829 = vmatpush1.bf16.msra.mxu0 0
        %5830 = vmatprep.subr.bf16.mxu0 0
        %5831 = vmatpush1.bf16.msra.mxu0 0
        %5832 = vmatprep.subr.bf16.mxu0 0
        %5833 = vmatpush1.bf16.msra.mxu0 0
        %5834 = vmatprep.subr.bf16.mxu0 0
        %5835 = vmatpush1.bf16.msra.mxu0 0
        %5836 = vmatprep.subr.bf16.mxu0 0
        %5837 = vmatpush1.bf16.msra.mxu0 0
        %5838 = vmatprep.subr.bf16.mxu0 0
        %5839 = vmatpush1.bf16.msra.mxu0 0
        %5840 = vmatprep.subr.bf16.mxu0 0
        %5841 = vmatpush1.bf16.msra.mxu0 0
        %5842 = vmatprep.mubr.bf16.mxu0 0
        %5843 = vmatmul.mubr.bf16.gmra.mrb[0].mxu0 %v5729
        %v5844 = vpop.f32.mrb[0].mxu0
        %v5845 = vadd.f32 0.0, %v5844
        %v5846 = vpop.f32.mrb[0].mxu0
        %v5847 = vpop.f32.mrb[0].mxu0
        %v5848 = vadd.f32 0.0, %v5847
        %v5849 = vpop.f32.mrb[0].mxu0
        %5850 = vmatprep.mubr.bf16.mxu0 0
        %5851 = vmatmul.mubr.bf16.gmra.mrb[0].mxu0 %v5730
        %v5852 = vpop.f32.mrb[0].mxu0
        %v5853 = vadd.f32 0.0, %v5852
        %v5854 = vpop.f32.mrb[0].mxu0
        %v5855 = vpop.f32.mrb[0].mxu0
        %v5856 = vadd.f32 0.0, %v5855
        %v5857 = vpop.f32.mrb[0].mxu0
        %5858 = vmatprep.mubr.bf16.mxu0 0
        %5859 = vmatmul.mubr.bf16.gmra.mrb[0].mxu0 %v5731
        %v5860 = vpop.f32.mrb[0].mxu0
        %v5861 = vadd.f32 0.0, %v5860
        %v5862 = vpop.f32.mrb[0].mxu0
        %v5863 = vpop.f32.mrb[0].mxu0
        %v5864 = vadd.f32 0.0, %v5863
        %v5865 = vpop.f32.mrb[0].mxu0
        %5866 = vmatprep.mubr.bf16.mxu0 0
        %5867 = vmatmul.mubr.bf16.gmra.mrb[0].mxu0 %v5732
        %v5868 = vpop.f32.mrb[0].mxu0
        %v5869 = vadd.f32 0.0, %v5868
        %v5870 = vpop.f32.mrb[0].mxu0
        %v5871 = vpop.f32.mrb[0].mxu0
        %v5872 = vadd.f32 0.0, %v5871
        %v5873 = vpop.f32.mrb[0].mxu0
        %5874 = vmatprep.mubr.bf16.mxu0 0
        %5875 = vmatmul.mubr.bf16.gmra.mrb[0].mxu0 %v5733
        %v5876 = vpop.f32.mrb[0].mxu0
        %v5877 = vadd.f32 0.0, %v5876
        %v5878 = vpop.f32.mrb[0].mxu0
        %v5879 = vpop.f32.mrb[0].mxu0
        %v5880 = vadd.f32 0.0, %v5879
        %v5881 = vpop.f32.mrb[0].mxu0
        %5882 = vmatprep.mubr.bf16.mxu0 0
        %5883 = vmatmul.mubr.bf16.gmra.mrb[0].mxu0 %v5734
        %v5884 = vpop.f32.mrb[0].mxu0
        %v5885 = vadd.f32 0.0, %v5884
        %v5886 = vpop.f32.mrb[0].mxu0
        %v5887 = vpop.f32.mrb[0].mxu0
        %v5888 = vadd.f32 0.0, %v5887
        %v5889 = vpop.f32.mrb[0].mxu0
        %5890 = vmatprep.mubr.bf16.mxu0 0
        %5891 = vmatmul.mubr.bf16.gmra.mrb[0].mxu0 %v5735
        %v5892 = vpop.f32.mrb[0].mxu0
        %v5893 = vadd.f32 0.0, %v5892
        %v5894 = vpop.f32.mrb[0].mxu0
        %v5895 = vpop.f32.mrb[0].mxu0
        %v5896 = vadd.f32 0.0, %v5895
        %v5897 = vpop.f32.mrb[0].mxu0
        %5898 = vmatprep.mubr.bf16.mxu0 0
        %5899 = vmatmul.mubr.bf16.gmra.mrb[0].mxu0 %v5736
        %v5900 = vpop.f32.mrb[0].mxu0
        %v5901 = vadd.f32 0.0, %v5900
        %v5902 = vpop.f32.mrb[0].mxu0
        %v5903 = vpop.f32.mrb[0].mxu0
        %v5904 = vadd.f32 0.0, %v5903
        %v5905 = vpop.f32.mrb[0].mxu0
        %5906 = vmatprep.mubr.bf16.mxu0 0
        %5907 = vmatmul.mubr.bf16.gmra.mrb[0].mxu0 %v5737
        %v5908 = vpop.f32.mrb[0].mxu0
        %v5909 = vadd.f32 0.0, %v5908
        %v5910 = vpop.f32.mrb[0].mxu0
        %v5911 = vpop.f32.mrb[0].mxu0
        %v5912 = vadd.f32 0.0, %v5911
        %v5913 = vpop.f32.mrb[0].mxu0
        %5914 = vmatprep.mubr.bf16.mxu0 0
        %5915 = vmatmul.mubr.bf16.gmra.mrb[0].mxu0 %v5738
        %v5916 = vpop.f32.mrb[0].mxu0
        %v5917 = vadd.f32 0.0, %v5916
        %v5918 = vpop.f32.mrb[0].mxu0
        %v5919 = vpop.f32.mrb[0].mxu0
        %v5920 = vadd.f32 0.0, %v5919
        %v5921 = vpop.f32.mrb[0].mxu0
        %5922 = vmatprep.mubr.bf16.mxu0 0
        %5923 = vmatmul.mubr.bf16.gmra.mrb[0].mxu0 %v5739
        %v5924 = vpop.f32.mrb[0].mxu0
        %v5925 = vadd.f32 0.0, %v5924
        %v5926 = vpop.f32.mrb[0].mxu0
        %v5927 = vpop.f32.mrb[0].mxu0
        %v5928 = vadd.f32 0.0, %v5927
        %v5929 = vpop.f32.mrb[0].mxu0
        %5930 = vmatprep.mubr.bf16.mxu0 0
        %5931 = vmatmul.mubr.bf16.gmra.mrb[0].mxu0 %v5740
        %v5932 = vpop.f32.mrb[0].mxu0
        %v5933 = vadd.f32 0.0, %v5932
        %v5934 = vpop.f32.mrb[0].mxu0
        %v5935 = vpop.f32.mrb[0].mxu0
        %v5936 = vadd.f32 0.0, %v5935
        %v5937 = vpop.f32.mrb[0].mxu0
        %5938 = vmatprep.mubr.bf16.mxu0 0
        %5939 = vmatmul.mubr.bf16.gmra.mrb[0].mxu0 %v5741
        %v5940 = vpop.f32.mrb[0].mxu0
        %v5941 = vadd.f32 0.0, %v5940
        %v5942 = vpop.f32.mrb[0].mxu0
        %v5943 = vpop.f32.mrb[0].mxu0
        %v5944 = vadd.f32 0.0, %v5943
        %v5945 = vpop.f32.mrb[0].mxu0
        %5946 = vmatprep.mubr.bf16.mxu0 0
        %5947 = vmatmul.mubr.bf16.gmra.mrb[0].mxu0 %v5742
        %v5948 = vpop.f32.mrb[0].mxu0
        %v5949 = vadd.f32 0.0, %v5948
        %v5950 = vpop.f32.mrb[0].mxu0
        %v5951 = vpop.f32.mrb[0].mxu0
        %v5952 = vadd.f32 0.0, %v5951
        %v5953 = vpop.f32.mrb[0].mxu0
        %5954 = vmatprep.mubr.bf16.mxu0 0
        %5955 = vmatmul.mubr.bf16.gmra.mrb[0].mxu0 %v5743
        %v5956 = vpop.f32.mrb[0].mxu0
        %v5957 = vadd.f32 0.0, %v5956
        %v5958 = vpop.f32.mrb[0].mxu0
        %v5959 = vpop.f32.mrb[0].mxu0
        %v5960 = vadd.f32 0.0, %v5959
        %v5961 = vpop.f32.mrb[0].mxu0
        %5962 = vmatprep.mubr.bf16.mxu0 0
        %5963 = vmatmul.mubr.bf16.gmra.mrb[0].mxu0 %v5744
        %v5964 = vpop.f32.mrb[0].mxu0
        %v5965 = vadd.f32 0.0, %v5964
        %v5966 = vpop.f32.mrb[0].mxu0
        %v5967 = vpop.f32.mrb[0].mxu0
        %v5968 = vadd.f32 0.0, %v5967
        %v5969 = vpop.f32.mrb[0].mxu0
        %5970 = vdwg.mxu0
        %v5971 = vadd.f32 %v5697, %v5845
        %v5972 = vadd.f32 %v5698, %v5848
        %v5973 = vadd.f32 %v5699, %v5853
        %v5974 = vadd.f32 %v5700, %v5856
        %v5975 = vadd.f32 %v5701, %v5861
        %v5976 = vadd.f32 %v5702, %v5864
        %v5977 = vadd.f32 %v5703, %v5869
        %v5978 = vadd.f32 %v5704, %v5872
        %v5979 = vadd.f32 %v5705, %v5877
        %v5980 = vadd.f32 %v5706, %v5880
        %v5981 = vadd.f32 %v5707, %v5885
        %v5982 = vadd.f32 %v5708, %v5888
        %v5983 = vadd.f32 %v5709, %v5893
        %v5984 = vadd.f32 %v5710, %v5896
        %v5985 = vadd.f32 %v5711, %v5901
        %v5986 = vadd.f32 %v5712, %v5904
        %v5987 = vadd.f32 %v5713, %v5909
        %v5988 = vadd.f32 %v5714, %v5912
        %v5989 = vadd.f32 %v5715, %v5917
        %v5990 = vadd.f32 %v5716, %v5920
        %v5991 = vadd.f32 %v5717, %v5925
        %v5992 = vadd.f32 %v5718, %v5928
        %v5993 = vadd.f32 %v5719, %v5933
        %v5994 = vadd.f32 %v5720, %v5936
        %v5995 = vadd.f32 %v5721, %v5941
        %v5996 = vadd.f32 %v5722, %v5944
        %v5997 = vadd.f32 %v5723, %v5949
        %v5998 = vadd.f32 %v5724, %v5952
        %v5999 = vadd.f32 %v5725, %v5957
        %v6000 = vadd.f32 %v5726, %v5960
        %v6001 = vadd.f32 %v5727, %v5965
        %v6002 = vadd.f32 %v5728, %v5968
        %v6003 = vld [vmem:[%s4] sm:$0x1]
        %v6005 = vlaneseq
        %v6006 = vshrl.u32 %v6005, 7
        %v6007 = vsub.s32 0, %v6006
        %v6008 = vrot.slane %v6003, %v6007
        %v6010 = vadd.f32 %v5971, %v6008
        %v6011 = vadd.f32 %v5972, %v6008
        %v6012 = vadd.f32 %v5973, %v6008
        %v6013 = vadd.f32 %v5974, %v6008
        %v6014 = vadd.f32 %v5975, %v6008
        %v6015 = vadd.f32 %v5976, %v6008
        %v6016 = vadd.f32 %v5977, %v6008
        %v6017 = vadd.f32 %v5978, %v6008
        %v6018 = vadd.f32 %v5979, %v6008
        %v6019 = vadd.f32 %v5980, %v6008
        %v6020 = vadd.f32 %v5981, %v6008
        %v6021 = vadd.f32 %v5982, %v6008
        %v6022 = vadd.f32 %v5983, %v6008
        %v6023 = vadd.f32 %v5984, %v6008
        %v6024 = vadd.f32 %v5985, %v6008
        %v6025 = vadd.f32 %v5986, %v6008
        %v6026 = vadd.f32 %v5987, %v6008
        %v6027 = vadd.f32 %v5988, %v6008
        %v6028 = vadd.f32 %v5989, %v6008
        %v6029 = vadd.f32 %v5990, %v6008
        %v6030 = vadd.f32 %v5991, %v6008
        %v6031 = vadd.f32 %v5992, %v6008
        %v6032 = vadd.f32 %v5993, %v6008
        %v6033 = vadd.f32 %v5994, %v6008
        %v6034 = vadd.f32 %v5995, %v6008
        %v6035 = vadd.f32 %v5996, %v6008
        %v6036 = vadd.f32 %v5997, %v6008
        %v6037 = vadd.f32 %v5998, %v6008
        %v6038 = vadd.f32 %v5999, %v6008
        %v6039 = vadd.f32 %v6000, %v6008
        %v6040 = vadd.f32 %v6001, %v6008
        %v6041 = vadd.f32 %v6002, %v6008
        %v6042 = vld [vmem:[%s237] sm:$0xf]
        %v6043 = vld [vmem:[%s237 + $0x4] sm:$0xf]
        %v6044 = vld [vmem:[%s237 + $0x8] sm:$0xf]
        %v6045 = vld [vmem:[%s237 + $0xc] sm:$0xf]
        %v6046 = vld [vmem:[%s237 + $0x10] sm:$0xf]
        %v6047 = vld [vmem:[%s237 + $0x14] sm:$0xf]
        %v6048 = vld [vmem:[%s237 + $0x18] sm:$0xf]
        %v6049 = vld [vmem:[%s237 + $0x1c] sm:$0xf]
        %v6050 = vld [vmem:[%s237 + $0x20] sm:$0xf]
        %v6051 = vld [vmem:[%s237 + $0x24] sm:$0xf]
        %v6052 = vld [vmem:[%s237 + $0x28] sm:$0xf]
        %v6053 = vld [vmem:[%s237 + $0x2c] sm:$0xf]
        %v6054 = vld [vmem:[%s237 + $0x30] sm:$0xf]
        %v6055 = vld [vmem:[%s237 + $0x34] sm:$0xf]
        %v6056 = vld [vmem:[%s237 + $0x38] sm:$0xf]
        %v6057 = vld [vmem:[%s237 + $0x3c] sm:$0xf]
        %v6058 = vld [vmem:[%s237 + $0x40] sm:$0xf]
        %v6059 = vld [vmem:[%s237 + $0x44] sm:$0xf]
        %v6060 = vld [vmem:[%s237 + $0x48] sm:$0xf]
        %v6061 = vld [vmem:[%s237 + $0x4c] sm:$0xf]
        %v6062 = vld [vmem:[%s237 + $0x50] sm:$0xf]
        %v6063 = vld [vmem:[%s237 + $0x54] sm:$0xf]
        %v6064 = vld [vmem:[%s237 + $0x58] sm:$0xf]
        %v6065 = vld [vmem:[%s237 + $0x5c] sm:$0xf]
        %v6066 = vld [vmem:[%s237 + $0x60] sm:$0xf]
        %v6067 = vld [vmem:[%s237 + $0x64] sm:$0xf]
        %v6068 = vld [vmem:[%s237 + $0x68] sm:$0xf]
        %v6069 = vld [vmem:[%s237 + $0x6c] sm:$0xf]
        %v6070 = vld [vmem:[%s237 + $0x70] sm:$0xf]
        %v6071 = vld [vmem:[%s237 + $0x74] sm:$0xf]
        %v6072 = vld [vmem:[%s237 + $0x78] sm:$0xf]
        %v6073 = vld [vmem:[%s237 + $0x7c] sm:$0xf]
        %v6074 = vunpack.c.l.bf16 %v6042
        %v6075 = vunpack.c.l.bf16 %v6043
        %v6076 = vunpack.c.l.bf16 %v6044
        %v6077 = vunpack.c.l.bf16 %v6045
        %v6078 = vunpack.c.l.bf16 %v6046
        %v6079 = vunpack.c.l.bf16 %v6047
        %v6080 = vunpack.c.l.bf16 %v6048
        %v6081 = vunpack.c.l.bf16 %v6049
        %v6082 = vunpack.c.l.bf16 %v6050
        %v6083 = vunpack.c.l.bf16 %v6051
        %v6084 = vunpack.c.l.bf16 %v6052
        %v6085 = vunpack.c.l.bf16 %v6053
        %v6086 = vunpack.c.l.bf16 %v6054
        %v6087 = vunpack.c.l.bf16 %v6055
        %v6088 = vunpack.c.l.bf16 %v6056
        %v6089 = vunpack.c.l.bf16 %v6057
        %v6090 = vunpack.c.l.bf16 %v6058
        %v6091 = vunpack.c.l.bf16 %v6059
        %v6092 = vunpack.c.l.bf16 %v6060
        %v6093 = vunpack.c.l.bf16 %v6061
        %v6094 = vunpack.c.l.bf16 %v6062
        %v6095 = vunpack.c.l.bf16 %v6063
        %v6096 = vunpack.c.l.bf16 %v6064
        %v6097 = vunpack.c.l.bf16 %v6065
        %v6098 = vunpack.c.l.bf16 %v6066
        %v6099 = vunpack.c.l.bf16 %v6067
        %v6100 = vunpack.c.l.bf16 %v6068
        %v6101 = vunpack.c.l.bf16 %v6069
        %v6102 = vunpack.c.l.bf16 %v6070
        %v6103 = vunpack.c.l.bf16 %v6071
        %v6104 = vunpack.c.l.bf16 %v6072
        %v6105 = vunpack.c.l.bf16 %v6073
        %v6106 = vadd.f32 %v6010, %v6074
        %v6107 = vadd.f32 %v6011, %v6075
        %v6108 = vadd.f32 %v6012, %v6076
        %v6109 = vadd.f32 %v6013, %v6077
        %v6110 = vadd.f32 %v6014, %v6078
        %v6111 = vadd.f32 %v6015, %v6079
        %v6112 = vadd.f32 %v6016, %v6080
        %v6113 = vadd.f32 %v6017, %v6081
        %v6114 = vadd.f32 %v6018, %v6082
        %v6115 = vadd.f32 %v6019, %v6083
        %v6116 = vadd.f32 %v6020, %v6084
        %v6117 = vadd.f32 %v6021, %v6085
        %v6118 = vadd.f32 %v6022, %v6086
        %v6119 = vadd.f32 %v6023, %v6087
        %v6120 = vadd.f32 %v6024, %v6088
        %v6121 = vadd.f32 %v6025, %v6089
        %v6122 = vadd.f32 %v6026, %v6090
        %v6123 = vadd.f32 %v6027, %v6091
        %v6124 = vadd.f32 %v6028, %v6092
        %v6125 = vadd.f32 %v6029, %v6093
        %v6126 = vadd.f32 %v6030, %v6094
        %v6127 = vadd.f32 %v6031, %v6095
        %v6128 = vadd.f32 %v6032, %v6096
        %v6129 = vadd.f32 %v6033, %v6097
        %v6130 = vadd.f32 %v6034, %v6098
        %v6131 = vadd.f32 %v6035, %v6099
        %v6132 = vadd.f32 %v6036, %v6100
        %v6133 = vadd.f32 %v6037, %v6101
        %v6134 = vadd.f32 %v6038, %v6102
        %v6135 = vadd.f32 %v6039, %v6103
        %v6136 = vadd.f32 %v6040, %v6104
        %v6137 = vadd.f32 %v6041, %v6105
        %v6138 = vmax.f32 %v6106, 0.0
        %v6139 = vmax.f32 %v6107, 0.0
        %v6140 = vmax.f32 %v6108, 0.0
        %v6141 = vmax.f32 %v6109, 0.0
        %v6142 = vmax.f32 %v6110, 0.0
        %v6143 = vmax.f32 %v6111, 0.0
        %v6144 = vmax.f32 %v6112, 0.0
        %v6145 = vmax.f32 %v6113, 0.0
        %v6146 = vmax.f32 %v6114, 0.0
        %v6147 = vmax.f32 %v6115, 0.0
        %v6148 = vmax.f32 %v6116, 0.0
        %v6149 = vmax.f32 %v6117, 0.0
        %v6150 = vmax.f32 %v6118, 0.0
        %v6151 = vmax.f32 %v6119, 0.0
        %v6152 = vmax.f32 %v6120, 0.0
        %v6153 = vmax.f32 %v6121, 0.0
        %v6154 = vmax.f32 %v6122, 0.0
        %v6155 = vmax.f32 %v6123, 0.0
        %v6156 = vmax.f32 %v6124, 0.0
        %v6157 = vmax.f32 %v6125, 0.0
        %v6158 = vmax.f32 %v6126, 0.0
        %v6159 = vmax.f32 %v6127, 0.0
        %v6160 = vmax.f32 %v6128, 0.0
        %v6161 = vmax.f32 %v6129, 0.0
        %v6162 = vmax.f32 %v6130, 0.0
        %v6163 = vmax.f32 %v6131, 0.0
        %v6164 = vmax.f32 %v6132, 0.0
        %v6165 = vmax.f32 %v6133, 0.0
        %v6166 = vmax.f32 %v6134, 0.0
        %v6167 = vmax.f32 %v6135, 0.0
        %v6168 = vmax.f32 %v6136, 0.0
        %v6169 = vmax.f32 %v6137, 0.0
        %v6170 = vpack.c.bf16 %v6139, %v6138
        %v6171 = vpack.c.bf16 %v6141, %v6140
        %v6172 = vpack.c.bf16 %v6143, %v6142
        %v6173 = vpack.c.bf16 %v6145, %v6144
        %v6174 = vpack.c.bf16 %v6147, %v6146
        %v6175 = vpack.c.bf16 %v6149, %v6148
        %v6176 = vpack.c.bf16 %v6151, %v6150
        %v6177 = vpack.c.bf16 %v6153, %v6152
        %v6178 = vpack.c.bf16 %v6155, %v6154
        %v6179 = vpack.c.bf16 %v6157, %v6156
        %v6180 = vpack.c.bf16 %v6159, %v6158
        %v6181 = vpack.c.bf16 %v6161, %v6160
        %v6182 = vpack.c.bf16 %v6163, %v6162
        %v6183 = vpack.c.bf16 %v6165, %v6164
        %v6184 = vpack.c.bf16 %v6167, %v6166
        %v6185 = vpack.c.bf16 %v6169, %v6168
        %v6202 = vunpack.c.l.b16 %v6170
        %v6203 = vunpack.c.h.b16 %v6170
        %v6204 = vunpack.c.l.b16 %v6171
        %v6205 = vunpack.c.h.b16 %v6171
        %v6206 = vunpack.c.l.b16 %v6172
        %v6207 = vunpack.c.h.b16 %v6172
        %v6208 = vunpack.c.l.b16 %v6173
        %v6209 = vunpack.c.h.b16 %v6173
        %v6210 = vunpack.c.l.b16 %v6174
        %v6211 = vunpack.c.h.b16 %v6174
        %v6212 = vunpack.c.l.b16 %v6175
        %v6213 = vunpack.c.h.b16 %v6175
        %v6214 = vunpack.c.l.b16 %v6176
        %v6215 = vunpack.c.h.b16 %v6176
        %v6216 = vunpack.c.l.b16 %v6177
        %v6217 = vunpack.c.h.b16 %v6177
        %v6218 = vunpack.c.l.b16 %v6178
        %v6219 = vunpack.c.h.b16 %v6178
        %v6220 = vunpack.c.l.b16 %v6179
        %v6221 = vunpack.c.h.b16 %v6179
        %v6222 = vunpack.c.l.b16 %v6180
        %v6223 = vunpack.c.h.b16 %v6180
        %v6224 = vunpack.c.l.b16 %v6181
        %v6225 = vunpack.c.h.b16 %v6181
        %v6226 = vunpack.c.l.b16 %v6182
        %v6227 = vunpack.c.h.b16 %v6182
        %v6228 = vunpack.c.l.b16 %v6183
        %v6229 = vunpack.c.h.b16 %v6183
        %v6230 = vunpack.c.l.b16 %v6184
        %v6231 = vunpack.c.h.b16 %v6184
        %v6232 = vunpack.c.l.b16 %v6185
        %v6233 = vunpack.c.h.b16 %v6185
        %v6234 = vpack.c.b16 %v6202, %v6202
        %v6235 = vpack.c.b16 %v6203, %v6203
        %v6236 = vpack.c.b16 %v6204, %v6204
        %v6237 = vpack.c.b16 %v6205, %v6205
        %v6238 = vpack.c.b16 %v6206, %v6206
        %v6239 = vpack.c.b16 %v6207, %v6207
        %v6240 = vpack.c.b16 %v6208, %v6208
        %v6241 = vpack.c.b16 %v6209, %v6209
        %v6242 = vpack.c.b16 %v6210, %v6210
        %v6243 = vpack.c.b16 %v6211, %v6211
        %v6244 = vpack.c.b16 %v6212, %v6212
        %v6245 = vpack.c.b16 %v6213, %v6213
        %v6246 = vpack.c.b16 %v6214, %v6214
        %v6247 = vpack.c.b16 %v6215, %v6215
        %v6248 = vpack.c.b16 %v6216, %v6216
        %v6249 = vpack.c.b16 %v6217, %v6217
        %v6250 = vpack.c.b16 %v6218, %v6218
        %v6251 = vpack.c.b16 %v6219, %v6219
        %v6252 = vpack.c.b16 %v6220, %v6220
        %v6253 = vpack.c.b16 %v6221, %v6221
        %v6254 = vpack.c.b16 %v6222, %v6222
        %v6255 = vpack.c.b16 %v6223, %v6223
        %v6256 = vpack.c.b16 %v6224, %v6224
        %v6257 = vpack.c.b16 %v6225, %v6225
        %v6258 = vpack.c.b16 %v6226, %v6226
        %v6259 = vpack.c.b16 %v6227, %v6227
        %v6260 = vpack.c.b16 %v6228, %v6228
        %v6261 = vpack.c.b16 %v6229, %v6229
        %v6262 = vpack.c.b16 %v6230, %v6230
        %v6263 = vpack.c.b16 %v6231, %v6231
        %v6264 = vpack.c.b16 %v6232, %v6232
        %v6265 = vpack.c.b16 %v6233, %v6233
        %6298 = vst [vmem:[%s271] sm:$0xf] %v6234
        %6299 = vst [vmem:[%s271 + $0x4] sm:$0xf] %v6235
        %6300 = vst [vmem:[%s271 + $0x8] sm:$0xf] %v6236
        %6301 = vst [vmem:[%s271 + $0xc] sm:$0xf] %v6237
        %6302 = vst [vmem:[%s271 + $0x10] sm:$0xf] %v6238
        %6303 = vst [vmem:[%s271 + $0x14] sm:$0xf] %v6239
        %6304 = vst [vmem:[%s271 + $0x18] sm:$0xf] %v6240
        %6305 = vst [vmem:[%s271 + $0x1c] sm:$0xf] %v6241
        %6306 = vst [vmem:[%s271 + $0x20] sm:$0xf] %v6242
        %6307 = vst [vmem:[%s271 + $0x24] sm:$0xf] %v6243
        %6308 = vst [vmem:[%s271 + $0x28] sm:$0xf] %v6244
        %6309 = vst [vmem:[%s271 + $0x2c] sm:$0xf] %v6245
        %6310 = vst [vmem:[%s271 + $0x30] sm:$0xf] %v6246
        %6311 = vst [vmem:[%s271 + $0x34] sm:$0xf] %v6247
        %6312 = vst [vmem:[%s271 + $0x38] sm:$0xf] %v6248
        %6313 = vst [vmem:[%s271 + $0x3c] sm:$0xf] %v6249
        %6314 = vst [vmem:[%s271 + $0x40] sm:$0xf] %v6250
        %6315 = vst [vmem:[%s271 + $0x44] sm:$0xf] %v6251
        %6316 = vst [vmem:[%s271 + $0x48] sm:$0xf] %v6252
        %6317 = vst [vmem:[%s271 + $0x4c] sm:$0xf] %v6253
        %6318 = vst [vmem:[%s271 + $0x50] sm:$0xf] %v6254
        %6319 = vst [vmem:[%s271 + $0x54] sm:$0xf] %v6255
        %6320 = vst [vmem:[%s271 + $0x58] sm:$0xf] %v6256
        %6321 = vst [vmem:[%s271 + $0x5c] sm:$0xf] %v6257
        %6322 = vst [vmem:[%s271 + $0x60] sm:$0xf] %v6258
        %6323 = vst [vmem:[%s271 + $0x64] sm:$0xf] %v6259
        %6324 = vst [vmem:[%s271 + $0x68] sm:$0xf] %v6260
        %6325 = vst [vmem:[%s271 + $0x6c] sm:$0xf] %v6261
        %6326 = vst [vmem:[%s271 + $0x70] sm:$0xf] %v6262
        %6327 = vst [vmem:[%s271 + $0x74] sm:$0xf] %v6263
        %6328 = vst [vmem:[%s271 + $0x78] sm:$0xf] %v6264
        %6329 = vst [vmem:[%s271 + $0x7c] sm:$0xf] %v6265
        %s6330 = sand.u32 %s141, 1
        %s6331 = scalar_lea.sflag [#allocation7], %s6330
        %s6332 = sand.u32 %s141, 1
        %s6333 = smul.addr %s6332, 128
        %s6334 = scalar_lea.vmem [#allocation11], %s6333
        // Predicated region
        $region53: #{tpu_custom_call.1} parent=39 // pred_check
          %p6335 = pneg %p151
        $region54: #{tpu_custom_call.1} parent=39 // pred_check_branch
          %6337 = sbr.rel (%p6335) target = $region56
        $region55: #{tpu_custom_call.1} parent=39 // pred_region
          %s6339 = ssub.s32 2048, 2048
          %6340 = vsyncadd %s6331, %s6339
          %s6341 = smul.addr %s23, 32
          %s6342 = smul.addr %s6341, 64
          %s6343 = scalar_lea.hbm %s5, %s6342
          %s6344 = sshll.u32 %s6334, 4
          %s6345 = int_to_ptr.vmem [resolvable:$true] %s6344
          %6350 = dma.vmem_to_hbm [thread:$0]  %s6345, 2048, %s6343, %s6331, 64, 64, 4
        $region56: #{tpu_custom_call.1} parent=39 // pred_fallthru
          _
      $region40: #{tpu_custom_call.1} parent=5 // pred_fallthru
        _
      %p6351 = scmp.le.s32.totalorder 2, %s18
      // Predicated region
      $region57: #{tpu_custom_call.1} parent=5 // pred_check
        %p6352 = pneg %p6351
      $region58: #{tpu_custom_call.1} parent=5 // pred_check_branch
        %6354 = sbr.rel (%p6352) target = $region60
      $region59: #{tpu_custom_call.1} parent=5 // pred_region
        %s6355 = ssub.s32 %s18, 2
        // Predicated region
        $region61: #{tpu_custom_call.1} parent=59 // pred_check
          %p6356 = pneg %p157
        $region62: #{tpu_custom_call.1} parent=59 // pred_check_branch
          %6358 = sbr.rel (%p6356) target = $region64
        $region63: #{tpu_custom_call.1} parent=59 // pred_region
          %s6359 = sand.u32 %s142, 1
          %s6360 = scalar_lea.sflag [#allocation7], %s6359
          %s6361 = sand.u32 %s142, 1
          %s6362 = smul.addr %s6361, 128
          %s6363 = scalar_lea.vmem [#allocation11], %s6362
          %6364 = dma.done %s6360, 2048
        $region64: #{tpu_custom_call.1} parent=59 // pred_fallthru
          _
      $region60: #{tpu_custom_call.1} parent=5 // pred_fallthru
        _
    $region6: #{tpu_custom_call.1} parent=1 // loop_footer
      %s22 = sadd.s32 1, %s18
    $region7: #{tpu_custom_call.1} parent=1 // loop_footer_branch
      %17 = sbr.rel target = $region3
    $region8: #{tpu_custom_call.1} parent=1 // loop_exit
      _
    %6365 = vsyncpa [#allocation6], 1
    %s6366 = scalar_lea.sflag [#allocation6], 1
    %6367 = vsyncpa %s6366, 1
    %6368 = vsyncpa [#allocation9], 1
    %6369 = vsyncpa [#allocation7], 1
    %s6370 = scalar_lea.sflag [#allocation7], 1
    %6371 = vsyncpa %s6370, 1

</llo_original>
